<compile_context>
chip_gen: v7x
topology: tpu7x:2x2x1
jax: 0.10.0
libtpu: 0.0.40
codegen_flags: <defaults>
</compile_context>

<pallas_src>
import functools

import jax
import jax.numpy as jnp
import numpy as np
from jax import lax
from jax.experimental import pallas as pl
from jax.experimental.pallas import tpu as pltpu


def _round_up(x, m):
    return (x + m - 1) // m * m


def basic_block_kernel(xflat_ref, w1_ref, w2_ref, s1_ref, b1_ref, s2_ref,
                       b2_ref, mask_ref, out_ref, mid_ref, *, H, W, Cp):
    """One batch element per grid step (flat padded-plane formulation).

    xflat_ref : (plane_rows, Cp)  flattened padded input, channels on lanes (MXU dtype)
                plane_rows = (H+3)*Wp, Wp = W+2  (1 top / 2 bottom / 1+1 side pad)
    w1_ref    : (9*Cp, Cp)        conv1 im2col weight [(kh*3+kw)*Cp + cin, cout]
    w2_ref    : (9*Cp, Cp)        conv2 im2col weight
    s*/b*     : (1, Cp)           folded BatchNorm scale / bias (f32)
    mask_ref  : (H*Wp, 1)         1.0 on the W valid columns of each flat row, else 0.0
    out_ref   : (H*Wp, Cp)        flat output (junk columns cropped in the wrapper), f32
    mid_ref   : (plane_rows, Cp)  VMEM scratch: re-padded conv1 output plane (MXU dtype)
    """
    Wp = W + 2
    L = H * Wp                       # flat output rows per image
    rows = mid_ref.shape[0]          # (H + 3) * Wp
    mdt = mid_ref.dtype

    # Keep the halo rows of the mid plane that the dense y1 store never touches
    # at zero.  Two small dense row-range stores; done every step so it remains
    # correct when the "parallel" batch axis is split across TensorCores.
    top = Wp + 1                                    # rows [0, Wp+1)
    bot = (H + 1) * Wp + 1                          # rows [(H+1)*Wp+1, rows)
    mid_ref[pl.ds(0, top), :] = jnp.zeros((top, Cp), mdt)
    mid_ref[pl.ds(bot, rows - bot), :] = jnp.zeros((rows - bot, Cp), mdt)

    def conv3x3(src_ref, w_ref):
        # im2col over the flat plane: each 3x3 tap is a pure sublane-offset
        # slice; the 9 taps are folded into the contraction dim so the conv is
        # a single K = 9*Cp matmul (fills the 256-deep MXU on v6e/v7x).
        taps = [src_ref[pl.ds(kh * Wp + kw, L), :]
                for kh in range(3) for kw in range(3)]
        lhs = jnp.concatenate(taps, axis=-1)              # (L, 9*Cp), 128-aligned pieces
        return jnp.dot(lhs, w_ref[...], preferred_element_type=jnp.float32)

    # ---- conv1 (3x3, stride 1, pad 1, no bias) + BN1 (folded) + ReLU --------
    y1 = jnp.maximum(conv3x3(xflat_ref, w1_ref) * s1_ref[...] + b1_ref[...], 0.0)
    # Zero the 2 junk columns per row so they land as halo zeros inside `mid`.
    y1 = y1 * mask_ref[...]
    # One dense store re-pads the intermediate: flat row r of y1 maps to padded
    # plane position r + Wp + 1 (i.e. row+1, col+1).
    mid_ref[pl.ds(Wp + 1, L), :] = y1.astype(mdt)

    # ---- conv2 + BN2 (folded) + identity shortcut + final ReLU --------------
    y2 = conv3x3(mid_ref, w2_ref) * s2_ref[...] + b2_ref[...]
    ident = xflat_ref[pl.ds(Wp + 1, L), :].astype(jnp.float32)   # interior of the input plane
    out_ref[...] = jnp.maximum(y2 + ident, 0.0)


def prepare_block_params(params, mxu_dtype=jnp.bfloat16, eps=1e-5):
    """One-time weight / BN preprocessing (hoisted off the per-call path)."""
    cout, cin = params["w1"].shape[:2]
    assert cin == cout, "identity shortcut requires in_filters == out_filters"
    Cp = _round_up(cout, 128)            # channels -> lane dim, padded to 128 multiple

    def conv_w(w_oihw):
        co, ci = w_oihw.shape[0], w_oihw.shape[1]
        w = jnp.transpose(w_oihw, (2, 3, 1, 0))                       # (kh, kw, cin, cout)
        w = jnp.pad(w, ((0, 0), (0, 0), (0, Cp - ci), (0, Cp - co)))
        return w.reshape(9 * Cp, Cp).astype(mxu_dtype)                # im2col layout

    def fold_bn(g, b, m, v):
        s = g / jnp.sqrt(v + eps)
        bias = b - m * s
        pad = (0, Cp - cout)
        return (jnp.pad(s, pad).reshape(1, Cp).astype(jnp.float32),
                jnp.pad(bias, pad).reshape(1, Cp).astype(jnp.float32))

    s1, b1 = fold_bn(params["bn1_gamma"], params["bn1_beta"],
                     params["bn1_mean"], params["bn1_var"])
    s2, b2 = fold_bn(params["bn2_gamma"], params["bn2_beta"],
                     params["bn2_mean"], params["bn2_var"])
    return {"w1": conv_w(params["w1"]), "w2": conv_w(params["w2"]),
            "s1": s1, "b1": b1, "s2": s2, "b2": b2}


@functools.partial(jax.jit, static_argnames=("cout", "single_buffer_invariants"))
def basic_block_forward(x_nchw, prep, *, cout, single_buffer_invariants=True):
    """BasicBlock(downsample=None, stride=1) forward.  x_nchw: (N, C, H, W) f32."""
    N, Cin, H, W = x_nchw.shape
    Wp = W + 2
    rows = (H + 3) * Wp          # 1 top + 2 bottom padding rows (keeps tap slices in-bounds)
    L = H * Wp
    Cp = prep["w1"].shape[-1]
    mxu_dtype = prep["w1"].dtype

    x_nhwc = jnp.transpose(x_nchw, (0, 2, 3, 1)).astype(jnp.float32)
    xpad = jnp.pad(x_nhwc, ((0, 0), (1, 2), (1, 1), (0, Cp - Cin)))
    xflat = xpad.reshape(N, rows, Cp).astype(mxu_dtype)

    # 1.0 on the W valid output columns of each flat row, 0.0 on the 2 junk columns.
    colmask = jnp.tile((jnp.arange(Wp) < W).astype(jnp.float32), H).reshape(L, 1)

    inv_kwargs = ({"pipeline_mode": pl.Buffered(1)}
                  if single_buffer_invariants else {})

    def inv_spec(shape):
        # Grid-invariant input: constant index_map, optionally single-buffered.
        return pl.BlockSpec(shape, lambda n: (0,) * len(shape), **inv_kwargs)

    kernel = functools.partial(basic_block_kernel, H=H, W=W, Cp=Cp)
    out = pl.pallas_call(
        kernel,
        out_shape=jax.ShapeDtypeStruct((N, L, Cp), jnp.float32),
        grid_spec=pltpu.PrefetchScalarGridSpec(
            num_scalar_prefetch=0,
            grid=(N,),
            in_specs=[
                pl.BlockSpec((None, rows, Cp), lambda n: (n, 0, 0)),
                inv_spec((9 * Cp, Cp)),      # w1
                inv_spec((9 * Cp, Cp)),      # w2
                inv_spec((1, Cp)),           # s1
                inv_spec((1, Cp)),           # b1
                inv_spec((1, Cp)),           # s2
                inv_spec((1, Cp)),           # b2
                inv_spec((L, 1)),            # column mask
            ],
            out_specs=pl.BlockSpec((None, L, Cp), lambda n: (n, 0, 0)),
            scratch_shapes=[pltpu.VMEM((rows, Cp), mxu_dtype)],
        ),
        compiler_params=pltpu.CompilerParams(
            dimension_semantics=("parallel",),
            vmem_limit_bytes=32 * 1024 * 1024,   # safe on all generations (v7x <= 64 MiB)
        ),
    )(xflat, prep["w1"], prep["w2"], prep["s1"], prep["b1"],
      prep["s2"], prep["b2"], colmask)

    out_nhwc = out.reshape(N, H, Wp, Cp)[:, :, :W, :cout]   # crop junk cols + channel pad
    return jnp.transpose(out_nhwc, (0, 3, 1, 2))            # back to NCHW


def run_forward(x, prep, cout):
    try:
        return jax.block_until_ready(
            basic_block_forward(x, prep, cout=cout, single_buffer_invariants=True))
    except Exception:
        # Graceful fallback if this Pallas version rejects pl.Buffered(1) for
        # the grid-invariant inputs: use default double-buffering instead.
        return jax.block_until_ready(
            basic_block_forward(x, prep, cout=cout, single_buffer_invariants=False))


def basic_block_reference(x, p, eps=1e-5):
    """Pure-JAX reference (eval-mode BN), NCHW."""
    dn = lax.conv_dimension_numbers(x.shape, p["w1"].shape,
                                    ("NCHW", "OIHW", "NCHW"))

    def bn(y, g, b, m, v):
        g, b, m, v = (t[None, :, None, None] for t in (g, b, m, v))
        return (y - m) / jnp.sqrt(v + eps) * g + b

    y = lax.conv_general_dilated(x, p["w1"], (1, 1), ((1, 1), (1, 1)),
                                 dimension_numbers=dn)
    y = jnp.maximum(bn(y, p["bn1_gamma"], p["bn1_beta"],
                       p["bn1_mean"], p["bn1_var"]), 0.0)
    y = lax.conv_general_dilated(y, p["w2"], (1, 1), ((1, 1), (1, 1)),
                                 dimension_numbers=dn)
    y = bn(y, p["bn2_gamma"], p["bn2_beta"], p["bn2_mean"], p["bn2_var"])
    return jnp.maximum(y + x, 0.0)


if __name__ == "__main__":
    N, C, H, W = 2, 4, 16, 16   # in_filters == out_filters, stride=1, downsample=None
    keys = jax.random.split(jax.random.PRNGKey(0), 12)

    x = jax.random.normal(keys[0], (N, C, H, W), jnp.float32)
    params = {
        "w1": 0.1 * jax.random.normal(keys[1], (C, C, 3, 3), jnp.float32),
        "w2": 0.1 * jax.random.normal(keys[2], (C, C, 3, 3), jnp.float32),
        "bn1_gamma": 1.0 + 0.1 * jax.random.normal(keys[3], (C,), jnp.float32),
        "bn1_beta": 0.1 * jax.random.normal(keys[4], (C,), jnp.float32),
        "bn1_mean": 0.1 * jax.random.normal(keys[5], (C,), jnp.float32),
        "bn1_var": 0.5 + jax.random.uniform(keys[6], (C,), jnp.float32),
        "bn2_gamma": 1.0 + 0.1 * jax.random.normal(keys[7], (C,), jnp.float32),
        "bn2_beta": 0.1 * jax.random.normal(keys[8], (C,), jnp.float32),
        "bn2_mean": 0.1 * jax.random.normal(keys[9], (C,), jnp.float32),
        "bn2_var": 0.5 + jax.random.uniform(keys[10], (C,), jnp.float32),
    }

    ref = jax.block_until_ready(basic_block_reference(x, params))

    # 1) Exact-semantics check: f32 MXU operands, tight tolerance.
    prep_f32 = prepare_block_params(params, mxu_dtype=jnp.float32)
    out_f32 = run_forward(x, prep_f32, C)
    np.testing.assert_allclose(np.asarray(out_f32), np.asarray(ref),
                               rtol=1e-3, atol=1e-3)

    # 2) Performance path: bf16 MXU operands (conv inputs, weights, identity),
    #    f32 accumulation / elementwise.  bf16 rounding -> looser tolerance.
    prep_bf16 = prepare_block_params(params, mxu_dtype=jnp.bfloat16)
    out = run_forward(x, prep_bf16, C)
    np.testing.assert_allclose(np.asarray(out), np.asarray(ref),
                               rtol=3e-2, atol=3e-2)

    assert out.shape == (N, C, H, W) and out.dtype == jnp.float32
    print("KERNEL_OK")
</pallas_src>

<mosaic_0001>
module attributes {stable_mosaic.version = 11 : i64} {
  func.func @basic_block_kernel(%arg0: i32, %arg1: memref<1x342x128xf32, #tpu.memory_space<vmem>>, %arg2: memref<1152x128xf32, #tpu.memory_space<vmem>>, %arg3: memref<1152x128xf32, #tpu.memory_space<vmem>>, %arg4: memref<1x128xf32, #tpu.memory_space<vmem>>, %arg5: memref<1x128xf32, #tpu.memory_space<vmem>>, %arg6: memref<1x128xf32, #tpu.memory_space<vmem>>, %arg7: memref<1x128xf32, #tpu.memory_space<vmem>>, %arg8: memref<288x1xf32, #tpu.memory_space<vmem>>, %arg9: memref<1x288x128xf32, #tpu.memory_space<vmem>>, %arg10: memref<342x128xf32, #tpu.memory_space<vmem>>) attributes {dimension_semantics = [#tpu.dimension_semantics<parallel>], iteration_bounds = array<i64: 2>, scalar_prefetch = 0 : i64, scratch_operands = 1 : i64, tpu.core_type = #tpu.core_type<tc>, window_params = [{transform_indices = @transform_0, window_bounds = array<i64: 1, 342, 128>}, {pipeline_mode = #tpu.pipeline_mode<synchronous>, transform_indices = @transform_1, window_bounds = array<i64: 1152, 128>}, {pipeline_mode = #tpu.pipeline_mode<synchronous>, transform_indices = @transform_2, window_bounds = array<i64: 1152, 128>}, {pipeline_mode = #tpu.pipeline_mode<synchronous>, transform_indices = @transform_3, window_bounds = array<i64: 1, 128>}, {pipeline_mode = #tpu.pipeline_mode<synchronous>, transform_indices = @transform_4, window_bounds = array<i64: 1, 128>}, {pipeline_mode = #tpu.pipeline_mode<synchronous>, transform_indices = @transform_5, window_bounds = array<i64: 1, 128>}, {pipeline_mode = #tpu.pipeline_mode<synchronous>, transform_indices = @transform_6, window_bounds = array<i64: 1, 128>}, {pipeline_mode = #tpu.pipeline_mode<synchronous>, transform_indices = @transform_7, window_bounds = array<i64: 288, 1>}, {transform_indices = @transform_8, window_bounds = array<i64: 1, 288, 128>}]} {
    %cst = arith.constant 0.000000e+00 : f32
    %0 = vector.broadcast %cst : f32 to vector<19x128xf32>
    %c0 = arith.constant 0 : index
    %c0_0 = arith.constant 0 : index
    %1 = vector.load %arg10[%c0, %c0_0] : memref<342x128xf32, #tpu.memory_space<vmem>>, vector<19x128xf32>
    tpu.vector_store %arg10[%c0, %c0_0], %0 {strides = array<i32>} : memref<342x128xf32, #tpu.memory_space<vmem>>, vector<19x128xf32>,
    %cst_1 = arith.constant 0.000000e+00 : f32
    %2 = vector.broadcast %cst_1 : f32 to vector<35x128xf32>
    %c307 = arith.constant 307 : index
    %c0_2 = arith.constant 0 : index
    %3 = vector.load %arg10[%c307, %c0_2] : memref<342x128xf32, #tpu.memory_space<vmem>>, vector<35x128xf32>
    tpu.vector_store %arg10[%c307, %c0_2], %2 {strides = array<i32>} : memref<342x128xf32, #tpu.memory_space<vmem>>, vector<35x128xf32>,
    %c0_3 = arith.constant 0 : index
    %c0_4 = arith.constant 0 : index
    %c0_5 = arith.constant 0 : index
    %4 = vector.load %arg1[%c0_3, %c0_4, %c0_5] : memref<1x342x128xf32, #tpu.memory_space<vmem>>, vector<1x288x128xf32>
    %5 = vector.shape_cast %4 : vector<1x288x128xf32> to vector<288x128xf32>
    %c0_6 = arith.constant 0 : index
    %c1 = arith.constant 1 : index
    %c0_7 = arith.constant 0 : index
    %6 = vector.load %arg1[%c0_6, %c1, %c0_7] : memref<1x342x128xf32, #tpu.memory_space<vmem>>, vector<1x288x128xf32>
    %7 = vector.shape_cast %6 : vector<1x288x128xf32> to vector<288x128xf32>
    %c0_8 = arith.constant 0 : index
    %c2 = arith.constant 2 : index
    %c0_9 = arith.constant 0 : index
    %8 = vector.load %arg1[%c0_8, %c2, %c0_9] : memref<1x342x128xf32, #tpu.memory_space<vmem>>, vector<1x288x128xf32>
    %9 = vector.shape_cast %8 : vector<1x288x128xf32> to vector<288x128xf32>
    %c0_10 = arith.constant 0 : index
    %c18 = arith.constant 18 : index
    %c0_11 = arith.constant 0 : index
    %10 = vector.load %arg1[%c0_10, %c18, %c0_11] : memref<1x342x128xf32, #tpu.memory_space<vmem>>, vector<1x288x128xf32>
    %11 = vector.shape_cast %10 : vector<1x288x128xf32> to vector<288x128xf32>
    %c0_12 = arith.constant 0 : index
    %c19 = arith.constant 19 : index
    %c0_13 = arith.constant 0 : index
    %12 = vector.load %arg1[%c0_12, %c19, %c0_13] : memref<1x342x128xf32, #tpu.memory_space<vmem>>, vector<1x288x128xf32>
    %13 = vector.shape_cast %12 : vector<1x288x128xf32> to vector<288x128xf32>
    %c0_14 = arith.constant 0 : index
    %c20 = arith.constant 20 : index
    %c0_15 = arith.constant 0 : index
    %14 = vector.load %arg1[%c0_14, %c20, %c0_15] : memref<1x342x128xf32, #tpu.memory_space<vmem>>, vector<1x288x128xf32>
    %15 = vector.shape_cast %14 : vector<1x288x128xf32> to vector<288x128xf32>
    %c0_16 = arith.constant 0 : index
    %c36 = arith.constant 36 : index
    %c0_17 = arith.constant 0 : index
    %16 = vector.load %arg1[%c0_16, %c36, %c0_17] : memref<1x342x128xf32, #tpu.memory_space<vmem>>, vector<1x288x128xf32>
    %17 = vector.shape_cast %16 : vector<1x288x128xf32> to vector<288x128xf32>
    %c0_18 = arith.constant 0 : index
    %c37 = arith.constant 37 : index
    %c0_19 = arith.constant 0 : index
    %18 = vector.load %arg1[%c0_18, %c37, %c0_19] : memref<1x342x128xf32, #tpu.memory_space<vmem>>, vector<1x288x128xf32>
    %19 = vector.shape_cast %18 : vector<1x288x128xf32> to vector<288x128xf32>
    %c0_20 = arith.constant 0 : index
    %c38 = arith.constant 38 : index
    %c0_21 = arith.constant 0 : index
    %20 = vector.load %arg1[%c0_20, %c38, %c0_21] : memref<1x342x128xf32, #tpu.memory_space<vmem>>, vector<1x288x128xf32>
    %21 = vector.shape_cast %20 : vector<1x288x128xf32> to vector<288x128xf32>
    %22 = tpu.concatenate %5, %7, %9, %11, %13, %15, %17, %19, %21 in 1 : vector<288x128xf32>, vector<288x128xf32>, vector<288x128xf32>, vector<288x128xf32>, vector<288x128xf32>, vector<288x128xf32>, vector<288x128xf32>, vector<288x128xf32>, vector<288x128xf32> -> vector<288x1152xf32>
    %c0_22 = arith.constant 0 : index
    %c0_23 = arith.constant 0 : index
    %23 = vector.load %arg2[%c0_22, %c0_23] : memref<1152x128xf32, #tpu.memory_space<vmem>>, vector<1152x128xf32>
    %cst_24 = arith.constant dense<0.000000e+00> : vector<288x128xf32>
    %24 = tpu.matmul %22, %23, %cst_24 {dimension_numbers = #tpu.dot_dimension_numbers<[1], [0], [0], [1], [0, 0, 1, 1], [], []>} : vector<288x1152xf32>, vector<1152x128xf32>, vector<288x128xf32> -> vector<288x128xf32>
    %c0_25 = arith.constant 0 : index
    %c0_26 = arith.constant 0 : index
    %25 = vector.load %arg4[%c0_25, %c0_26] : memref<1x128xf32, #tpu.memory_space<vmem>>, vector<1x128xf32>
    %26 = vector.broadcast %25 : vector<1x128xf32> to vector<288x128xf32>
    %27 = arith.mulf %24, %26 : vector<288x128xf32>
    %c0_27 = arith.constant 0 : index
    %c0_28 = arith.constant 0 : index
    %28 = vector.load %arg5[%c0_27, %c0_28] : memref<1x128xf32, #tpu.memory_space<vmem>>, vector<1x128xf32>
    %29 = vector.broadcast %28 : vector<1x128xf32> to vector<288x128xf32>
    %30 = arith.addf %27, %29 : vector<288x128xf32>
    %cst_29 = arith.constant 0.000000e+00 : f32
    %31 = vector.broadcast %cst_29 : f32 to vector<288x128xf32>
    %32 = arith.maximumf %30, %31 : vector<288x128xf32>
    %c0_30 = arith.constant 0 : index
    %c0_31 = arith.constant 0 : index
    %33 = vector.load %arg8[%c0_30, %c0_31] : memref<288x1xf32, #tpu.memory_space<vmem>>, vector<288x1xf32>
    %34 = vector.broadcast %33 : vector<288x1xf32> to vector<288x128xf32>
    %35 = arith.mulf %32, %34 : vector<288x128xf32>
    %c19_32 = arith.constant 19 : index
    %c0_33 = arith.constant 0 : index
    %36 = vector.load %arg10[%c19_32, %c0_33] : memref<342x128xf32, #tpu.memory_space<vmem>>, vector<288x128xf32>
    tpu.vector_store %arg10[%c19_32, %c0_33], %35 {strides = array<i32>} : memref<342x128xf32, #tpu.memory_space<vmem>>, vector<288x128xf32>,
    %c0_34 = arith.constant 0 : index
    %c0_35 = arith.constant 0 : index
    %37 = vector.load %arg10[%c0_34, %c0_35] : memref<342x128xf32, #tpu.memory_space<vmem>>, vector<288x128xf32>
    %c1_36 = arith.constant 1 : index
    %c0_37 = arith.constant 0 : index
    %38 = vector.load %arg10[%c1_36, %c0_37] : memref<342x128xf32, #tpu.memory_space<vmem>>, vector<288x128xf32>
    %c2_38 = arith.constant 2 : index
    %c0_39 = arith.constant 0 : index
    %39 = vector.load %arg10[%c2_38, %c0_39] : memref<342x128xf32, #tpu.memory_space<vmem>>, vector<288x128xf32>
    %c18_40 = arith.constant 18 : index
    %c0_41 = arith.constant 0 : index
    %40 = vector.load %arg10[%c18_40, %c0_41] : memref<342x128xf32, #tpu.memory_space<vmem>>, vector<288x128xf32>
    %c19_42 = arith.constant 19 : index
    %c0_43 = arith.constant 0 : index
    %41 = vector.load %arg10[%c19_42, %c0_43] : memref<342x128xf32, #tpu.memory_space<vmem>>, vector<288x128xf32>
    %c20_44 = arith.constant 20 : index
    %c0_45 = arith.constant 0 : index
    %42 = vector.load %arg10[%c20_44, %c0_45] : memref<342x128xf32, #tpu.memory_space<vmem>>, vector<288x128xf32>
    %c36_46 = arith.constant 36 : index
    %c0_47 = arith.constant 0 : index
    %43 = vector.load %arg10[%c36_46, %c0_47] : memref<342x128xf32, #tpu.memory_space<vmem>>, vector<288x128xf32>
    %c37_48 = arith.constant 37 : index
    %c0_49 = arith.constant 0 : index
    %44 = vector.load %arg10[%c37_48, %c0_49] : memref<342x128xf32, #tpu.memory_space<vmem>>, vector<288x128xf32>
    %c38_50 = arith.constant 38 : index
    %c0_51 = arith.constant 0 : index
    %45 = vector.load %arg10[%c38_50, %c0_51] : memref<342x128xf32, #tpu.memory_space<vmem>>, vector<288x128xf32>
    %46 = tpu.concatenate %37, %38, %39, %40, %41, %42, %43, %44, %45 in 1 : vector<288x128xf32>, vector<288x128xf32>, vector<288x128xf32>, vector<288x128xf32>, vector<288x128xf32>, vector<288x128xf32>, vector<288x128xf32>, vector<288x128xf32>, vector<288x128xf32> -> vector<288x1152xf32>
    %c0_52 = arith.constant 0 : index
    %c0_53 = arith.constant 0 : index
    %47 = vector.load %arg3[%c0_52, %c0_53] : memref<1152x128xf32, #tpu.memory_space<vmem>>, vector<1152x128xf32>
    %cst_54 = arith.constant dense<0.000000e+00> : vector<288x128xf32>
    %48 = tpu.matmul %46, %47, %cst_54 {dimension_numbers = #tpu.dot_dimension_numbers<[1], [0], [0], [1], [0, 0, 1, 1], [], []>} : vector<288x1152xf32>, vector<1152x128xf32>, vector<288x128xf32> -> vector<288x128xf32>
    %c0_55 = arith.constant 0 : index
    %c0_56 = arith.constant 0 : index
    %49 = vector.load %arg6[%c0_55, %c0_56] : memref<1x128xf32, #tpu.memory_space<vmem>>, vector<1x128xf32>
    %50 = vector.broadcast %49 : vector<1x128xf32> to vector<288x128xf32>
    %51 = arith.mulf %48, %50 : vector<288x128xf32>
    %c0_57 = arith.constant 0 : index
    %c0_58 = arith.constant 0 : index
    %52 = vector.load %arg7[%c0_57, %c0_58] : memref<1x128xf32, #tpu.memory_space<vmem>>, vector<1x128xf32>
    %53 = vector.broadcast %52 : vector<1x128xf32> to vector<288x128xf32>
    %54 = arith.addf %51, %53 : vector<288x128xf32>
    %c0_59 = arith.constant 0 : index
    %c19_60 = arith.constant 19 : index
    %c0_61 = arith.constant 0 : index
    %55 = vector.load %arg1[%c0_59, %c19_60, %c0_61] : memref<1x342x128xf32, #tpu.memory_space<vmem>>, vector<1x288x128xf32>
    %56 = vector.shape_cast %55 : vector<1x288x128xf32> to vector<288x128xf32>
    %57 = arith.addf %54, %56 : vector<288x128xf32>
    %cst_62 = arith.constant 0.000000e+00 : f32
    %58 = vector.broadcast %cst_62 : f32 to vector<288x128xf32>
    %59 = arith.maximumf %57, %58 : vector<288x128xf32>
    %c0_63 = arith.constant 0 : index
    %c0_64 = arith.constant 0 : index
    %c0_65 = arith.constant 0 : index
    %60 = vector.load %arg9[%c0_63, %c0_64, %c0_65] : memref<1x288x128xf32, #tpu.memory_space<vmem>>, vector<1x288x128xf32>
    %61 = vector.shape_cast %60 : vector<1x288x128xf32> to vector<288x128xf32>
    %62 = vector.shape_cast %59 : vector<288x128xf32> to vector<1x288x128xf32>
    tpu.vector_store %arg9[%c0_63, %c0_64, %c0_65], %62 {strides = array<i32>} : memref<1x288x128xf32, #tpu.memory_space<vmem>>, vector<1x288x128xf32>,
    return
  }
  func.func @transform_0(%arg0: i32) -> (i32, i32, i32) {
    %c0_i32 = arith.constant 0 : i32
    %c0_i32_0 = arith.constant 0 : i32
    %c0_i32_1 = arith.constant 0 : i32
    return %arg0, %c0_i32, %c0_i32_0 : i32, i32, i32
  }
  func.func @transform_1(%arg0: i32) -> (i32, i32) {
    %c0_i32 = arith.constant 0 : i32
    %c0_i32_0 = arith.constant 0 : i32
    %c0_i32_1 = arith.constant 0 : i32
    return %c0_i32, %c0_i32_0 : i32, i32
  }
  func.func @transform_2(%arg0: i32) -> (i32, i32) {
    %c0_i32 = arith.constant 0 : i32
    %c0_i32_0 = arith.constant 0 : i32
    %c0_i32_1 = arith.constant 0 : i32
    return %c0_i32, %c0_i32_0 : i32, i32
  }
  func.func @transform_3(%arg0: i32) -> (i32, i32) {
    %c0_i32 = arith.constant 0 : i32
    %c0_i32_0 = arith.constant 0 : i32
    %c0_i32_1 = arith.constant 0 : i32
    return %c0_i32, %c0_i32_0 : i32, i32
  }
  func.func @transform_4(%arg0: i32) -> (i32, i32) {
    %c0_i32 = arith.constant 0 : i32
    %c0_i32_0 = arith.constant 0 : i32
    %c0_i32_1 = arith.constant 0 : i32
    return %c0_i32, %c0_i32_0 : i32, i32
  }
  func.func @transform_5(%arg0: i32) -> (i32, i32) {
    %c0_i32 = arith.constant 0 : i32
    %c0_i32_0 = arith.constant 0 : i32
    %c0_i32_1 = arith.constant 0 : i32
    return %c0_i32, %c0_i32_0 : i32, i32
  }
  func.func @transform_6(%arg0: i32) -> (i32, i32) {
    %c0_i32 = arith.constant 0 : i32
    %c0_i32_0 = arith.constant 0 : i32
    %c0_i32_1 = arith.constant 0 : i32
    return %c0_i32, %c0_i32_0 : i32, i32
  }
  func.func @transform_7(%arg0: i32) -> (i32, i32) {
    %c0_i32 = arith.constant 0 : i32
    %c0_i32_0 = arith.constant 0 : i32
    %c0_i32_1 = arith.constant 0 : i32
    return %c0_i32, %c0_i32_0 : i32, i32
  }
  func.func @transform_8(%arg0: i32) -> (i32, i32, i32) {
    %c0_i32 = arith.constant 0 : i32
    %c0_i32_0 = arith.constant 0 : i32
    %c0_i32_1 = arith.constant 0 : i32
    return %arg0, %c0_i32, %c0_i32_0 : i32, i32, i32
  }
}

module attributes {stable_mosaic.version = 11 : i64} {
  func.func @basic_block_kernel(%arg0: i32, %arg1: memref<1x342x128xf32, #tpu.memory_space<vmem>>, %arg2: memref<1152x128xf32, #tpu.memory_space<vmem>>, %arg3: memref<1152x128xf32, #tpu.memory_space<vmem>>, %arg4: memref<1x128xf32, #tpu.memory_space<vmem>>, %arg5: memref<1x128xf32, #tpu.memory_space<vmem>>, %arg6: memref<1x128xf32, #tpu.memory_space<vmem>>, %arg7: memref<1x128xf32, #tpu.memory_space<vmem>>, %arg8: memref<288x1xf32, #tpu.memory_space<vmem>>, %arg9: memref<1x288x128xf32, #tpu.memory_space<vmem>>, %arg10: memref<342x128xf32, #tpu.memory_space<vmem>>) attributes {dimension_semantics = [#tpu.dimension_semantics<parallel>], iteration_bounds = array<i64: 2>, scalar_prefetch = 0 : i64, scratch_operands = 1 : i64, tpu.core_type = #tpu.core_type<tc>, window_params = [{transform_indices = @transform_0, window_bounds = array<i64: 1, 342, 128>}, {pipeline_mode = #tpu.pipeline_mode<synchronous>, transform_indices = @transform_1, window_bounds = array<i64: 1152, 128>}, {pipeline_mode = #tpu.pipeline_mode<synchronous>, transform_indices = @transform_2, window_bounds = array<i64: 1152, 128>}, {pipeline_mode = #tpu.pipeline_mode<synchronous>, transform_indices = @transform_3, window_bounds = array<i64: 1, 128>}, {pipeline_mode = #tpu.pipeline_mode<synchronous>, transform_indices = @transform_4, window_bounds = array<i64: 1, 128>}, {pipeline_mode = #tpu.pipeline_mode<synchronous>, transform_indices = @transform_5, window_bounds = array<i64: 1, 128>}, {pipeline_mode = #tpu.pipeline_mode<synchronous>, transform_indices = @transform_6, window_bounds = array<i64: 1, 128>}, {pipeline_mode = #tpu.pipeline_mode<synchronous>, transform_indices = @transform_7, window_bounds = array<i64: 288, 1>}, {transform_indices = @transform_8, window_bounds = array<i64: 1, 288, 128>}]} {
    %cst = arith.constant 0.000000e+00 : f32
    %0 = vector.broadcast %cst : f32 to vector<19x128xf32>
    %c0 = arith.constant 0 : index
    %c0_0 = arith.constant 0 : index
    %1 = vector.load %arg10[%c0, %c0_0] : memref<342x128xf32, #tpu.memory_space<vmem>>, vector<19x128xf32>
    tpu.vector_store %arg10[%c0, %c0_0], %0 {strides = array<i32>} : memref<342x128xf32, #tpu.memory_space<vmem>>, vector<19x128xf32>,
    %cst_1 = arith.constant 0.000000e+00 : f32
    %2 = vector.broadcast %cst_1 : f32 to vector<35x128xf32>
    %c307 = arith.constant 307 : index
    %c0_2 = arith.constant 0 : index
    %3 = vector.load %arg10[%c307, %c0_2] : memref<342x128xf32, #tpu.memory_space<vmem>>, vector<35x128xf32>
    tpu.vector_store %arg10[%c307, %c0_2], %2 {strides = array<i32>} : memref<342x128xf32, #tpu.memory_space<vmem>>, vector<35x128xf32>,
    %c0_3 = arith.constant 0 : index
    %c0_4 = arith.constant 0 : index
    %c0_5 = arith.constant 0 : index
    %4 = vector.load %arg1[%c0_3, %c0_4, %c0_5] : memref<1x342x128xf32, #tpu.memory_space<vmem>>, vector<1x288x128xf32>
    %5 = vector.shape_cast %4 : vector<1x288x128xf32> to vector<288x128xf32>
    %c0_6 = arith.constant 0 : index
    %c1 = arith.constant 1 : index
    %c0_7 = arith.constant 0 : index
    %6 = vector.load %arg1[%c0_6, %c1, %c0_7] : memref<1x342x128xf32, #tpu.memory_space<vmem>>, vector<1x288x128xf32>
    %7 = vector.shape_cast %6 : vector<1x288x128xf32> to vector<288x128xf32>
    %c0_8 = arith.constant 0 : index
    %c2 = arith.constant 2 : index
    %c0_9 = arith.constant 0 : index
    %8 = vector.load %arg1[%c0_8, %c2, %c0_9] : memref<1x342x128xf32, #tpu.memory_space<vmem>>, vector<1x288x128xf32>
    %9 = vector.shape_cast %8 : vector<1x288x128xf32> to vector<288x128xf32>
    %c0_10 = arith.constant 0 : index
    %c18 = arith.constant 18 : index
    %c0_11 = arith.constant 0 : index
    %10 = vector.load %arg1[%c0_10, %c18, %c0_11] : memref<1x342x128xf32, #tpu.memory_space<vmem>>, vector<1x288x128xf32>
    %11 = vector.shape_cast %10 : vector<1x288x128xf32> to vector<288x128xf32>
    %c0_12 = arith.constant 0 : index
    %c19 = arith.constant 19 : index
    %c0_13 = arith.constant 0 : index
    %12 = vector.load %arg1[%c0_12, %c19, %c0_13] : memref<1x342x128xf32, #tpu.memory_space<vmem>>, vector<1x288x128xf32>
    %13 = vector.shape_cast %12 : vector<1x288x128xf32> to vector<288x128xf32>
    %c0_14 = arith.constant 0 : index
    %c20 = arith.constant 20 : index
    %c0_15 = arith.constant 0 : index
    %14 = vector.load %arg1[%c0_14, %c20, %c0_15] : memref<1x342x128xf32, #tpu.memory_space<vmem>>, vector<1x288x128xf32>
    %15 = vector.shape_cast %14 : vector<1x288x128xf32> to vector<288x128xf32>
    %c0_16 = arith.constant 0 : index
    %c36 = arith.constant 36 : index
    %c0_17 = arith.constant 0 : index
    %16 = vector.load %arg1[%c0_16, %c36, %c0_17] : memref<1x342x128xf32, #tpu.memory_space<vmem>>, vector<1x288x128xf32>
    %17 = vector.shape_cast %16 : vector<1x288x128xf32> to vector<288x128xf32>
    %c0_18 = arith.constant 0 : index
    %c37 = arith.constant 37 : index
    %c0_19 = arith.constant 0 : index
    %18 = vector.load %arg1[%c0_18, %c37, %c0_19] : memref<1x342x128xf32, #tpu.memory_space<vmem>>, vector<1x288x128xf32>
    %19 = vector.shape_cast %18 : vector<1x288x128xf32> to vector<288x128xf32>
    %c0_20 = arith.constant 0 : index
    %c38 = arith.constant 38 : index
    %c0_21 = arith.constant 0 : index
    %20 = vector.load %arg1[%c0_20, %c38, %c0_21] : memref<1x342x128xf32, #tpu.memory_space<vmem>>, vector<1x288x128xf32>
    %21 = vector.shape_cast %20 : vector<1x288x128xf32> to vector<288x128xf32>
    %22 = tpu.concatenate %5, %7, %9, %11, %13, %15, %17, %19, %21 in 1 : vector<288x128xf32>, vector<288x128xf32>, vector<288x128xf32>, vector<288x128xf32>, vector<288x128xf32>, vector<288x128xf32>, vector<288x128xf32>, vector<288x128xf32>, vector<288x128xf32> -> vector<288x1152xf32>
    %c0_22 = arith.constant 0 : index
    %c0_23 = arith.constant 0 : index
    %23 = vector.load %arg2[%c0_22, %c0_23] : memref<1152x128xf32, #tpu.memory_space<vmem>>, vector<1152x128xf32>
    %cst_24 = arith.constant dense<0.000000e+00> : vector<288x128xf32>
    %24 = tpu.matmul %22, %23, %cst_24 {dimension_numbers = #tpu.dot_dimension_numbers<[1], [0], [0], [1], [0, 0, 1, 1], [], []>} : vector<288x1152xf32>, vector<1152x128xf32>, vector<288x128xf32> -> vector<288x128xf32>
    %c0_25 = arith.constant 0 : index
    %c0_26 = arith.constant 0 : index
    %25 = vector.load %arg4[%c0_25, %c0_26] : memref<1x128xf32, #tpu.memory_space<vmem>>, vector<1x128xf32>
    %26 = vector.broadcast %25 : vector<1x128xf32> to vector<288x128xf32>
    %27 = arith.mulf %24, %26 : vector<288x128xf32>
    %c0_27 = arith.constant 0 : index
    %c0_28 = arith.constant 0 : index
    %28 = vector.load %arg5[%c0_27, %c0_28] : memref<1x128xf32, #tpu.memory_space<vmem>>, vector<1x128xf32>
    %29 = vector.broadcast %28 : vector<1x128xf32> to vector<288x128xf32>
    %30 = arith.addf %27, %29 : vector<288x128xf32>
    %cst_29 = arith.constant 0.000000e+00 : f32
    %31 = vector.broadcast %cst_29 : f32 to vector<288x128xf32>
    %32 = arith.maximumf %30, %31 : vector<288x128xf32>
    %c0_30 = arith.constant 0 : index
    %c0_31 = arith.constant 0 : index
    %33 = vector.load %arg8[%c0_30, %c0_31] : memref<288x1xf32, #tpu.memory_space<vmem>>, vector<288x1xf32>
    %34 = vector.broadcast %33 : vector<288x1xf32> to vector<288x128xf32>
    %35 = arith.mulf %32, %34 : vector<288x128xf32>
    %c19_32 = arith.constant 19 : index
    %c0_33 = arith.constant 0 : index
    %36 = vector.load %arg10[%c19_32, %c0_33] : memref<342x128xf32, #tpu.memory_space<vmem>>, vector<288x128xf32>
    tpu.vector_store %arg10[%c19_32, %c0_33], %35 {strides = array<i32>} : memref<342x128xf32, #tpu.memory_space<vmem>>, vector<288x128xf32>,
    %c0_34 = arith.constant 0 : index
    %c0_35 = arith.constant 0 : index
    %37 = vector.load %arg10[%c0_34, %c0_35] : memref<342x128xf32, #tpu.memory_space<vmem>>, vector<288x128xf32>
    %c1_36 = arith.constant 1 : index
    %c0_37 = arith.constant 0 : index
    %38 = vector.load %arg10[%c1_36, %c0_37] : memref<342x128xf32, #tpu.memory_space<vmem>>, vector<288x128xf32>
    %c2_38 = arith.constant 2 : index
    %c0_39 = arith.constant 0 : index
    %39 = vector.load %arg10[%c2_38, %c0_39] : memref<342x128xf32, #tpu.memory_space<vmem>>, vector<288x128xf32>
    %c18_40 = arith.constant 18 : index
    %c0_41 = arith.constant 0 : index
    %40 = vector.load %arg10[%c18_40, %c0_41] : memref<342x128xf32, #tpu.memory_space<vmem>>, vector<288x128xf32>
    %c19_42 = arith.constant 19 : index
    %c0_43 = arith.constant 0 : index
    %41 = vector.load %arg10[%c19_42, %c0_43] : memref<342x128xf32, #tpu.memory_space<vmem>>, vector<288x128xf32>
    %c20_44 = arith.constant 20 : index
    %c0_45 = arith.constant 0 : index
    %42 = vector.load %arg10[%c20_44, %c0_45] : memref<342x128xf32, #tpu.memory_space<vmem>>, vector<288x128xf32>
    %c36_46 = arith.constant 36 : index
    %c0_47 = arith.constant 0 : index
    %43 = vector.load %arg10[%c36_46, %c0_47] : memref<342x128xf32, #tpu.memory_space<vmem>>, vector<288x128xf32>
    %c37_48 = arith.constant 37 : index
    %c0_49 = arith.constant 0 : index
    %44 = vector.load %arg10[%c37_48, %c0_49] : memref<342x128xf32, #tpu.memory_space<vmem>>, vector<288x128xf32>
    %c38_50 = arith.constant 38 : index
    %c0_51 = arith.constant 0 : index
    %45 = vector.load %arg10[%c38_50, %c0_51] : memref<342x128xf32, #tpu.memory_space<vmem>>, vector<288x128xf32>
    %46 = tpu.concatenate %37, %38, %39, %40, %41, %42, %43, %44, %45 in 1 : vector<288x128xf32>, vector<288x128xf32>, vector<288x128xf32>, vector<288x128xf32>, vector<288x128xf32>, vector<288x128xf32>, vector<288x128xf32>, vector<288x128xf32>, vector<288x128xf32> -> vector<288x1152xf32>
    %c0_52 = arith.constant 0 : index
    %c0_53 = arith.constant 0 : index
    %47 = vector.load %arg3[%c0_52, %c0_53] : memref<1152x128xf32, #tpu.memory_space<vmem>>, vector<1152x128xf32>
    %cst_54 = arith.constant dense<0.000000e+00> : vector<288x128xf32>
    %48 = tpu.matmul %46, %47, %cst_54 {dimension_numbers = #tpu.dot_dimension_numbers<[1], [0], [0], [1], [0, 0, 1, 1], [], []>} : vector<288x1152xf32>, vector<1152x128xf32>, vector<288x128xf32> -> vector<288x128xf32>
    %c0_55 = arith.constant 0 : index
    %c0_56 = arith.constant 0 : index
    %49 = vector.load %arg6[%c0_55, %c0_56] : memref<1x128xf32, #tpu.memory_space<vmem>>, vector<1x128xf32>
    %50 = vector.broadcast %49 : vector<1x128xf32> to vector<288x128xf32>
    %51 = arith.mulf %48, %50 : vector<288x128xf32>
    %c0_57 = arith.constant 0 : index
    %c0_58 = arith.constant 0 : index
    %52 = vector.load %arg7[%c0_57, %c0_58] : memref<1x128xf32, #tpu.memory_space<vmem>>, vector<1x128xf32>
    %53 = vector.broadcast %52 : vector<1x128xf32> to vector<288x128xf32>
    %54 = arith.addf %51, %53 : vector<288x128xf32>
    %c0_59 = arith.constant 0 : index
    %c19_60 = arith.constant 19 : index
    %c0_61 = arith.constant 0 : index
    %55 = vector.load %arg1[%c0_59, %c19_60, %c0_61] : memref<1x342x128xf32, #tpu.memory_space<vmem>>, vector<1x288x128xf32>
    %56 = vector.shape_cast %55 : vector<1x288x128xf32> to vector<288x128xf32>
    %57 = arith.addf %54, %56 : vector<288x128xf32>
    %cst_62 = arith.constant 0.000000e+00 : f32
    %58 = vector.broadcast %cst_62 : f32 to vector<288x128xf32>
    %59 = arith.maximumf %57, %58 : vector<288x128xf32>
    %c0_63 = arith.constant 0 : index
    %c0_64 = arith.constant 0 : index
    %c0_65 = arith.constant 0 : index
    %60 = vector.load %arg9[%c0_63, %c0_64, %c0_65] : memref<1x288x128xf32, #tpu.memory_space<vmem>>, vector<1x288x128xf32>
    %61 = vector.shape_cast %60 : vector<1x288x128xf32> to vector<288x128xf32>
    %62 = vector.shape_cast %59 : vector<288x128xf32> to vector<1x288x128xf32>
    tpu.vector_store %arg9[%c0_63, %c0_64, %c0_65], %62 {strides = array<i32>} : memref<1x288x128xf32, #tpu.memory_space<vmem>>, vector<1x288x128xf32>,
    return
  }
  func.func @transform_0(%arg0: i32) -> (i32, i32, i32) {
    %c0_i32 = arith.constant 0 : i32
    %c0_i32_0 = arith.constant 0 : i32
    %c0_i32_1 = arith.constant 0 : i32
    return %arg0, %c0_i32, %c0_i32_0 : i32, i32, i32
  }
  func.func @transform_1(%arg0: i32) -> (i32, i32) {
    %c0_i32 = arith.constant 0 : i32
    %c0_i32_0 = arith.constant 0 : i32
    %c0_i32_1 = arith.constant 0 : i32
    return %c0_i32, %c0_i32_0 : i32, i32
  }
  func.func @transform_2(%arg0: i32) -> (i32, i32) {
    %c0_i32 = arith.constant 0 : i32
    %c0_i32_0 = arith.constant 0 : i32
    %c0_i32_1 = arith.constant 0 : i32
    return %c0_i32, %c0_i32_0 : i32, i32
  }
  func.func @transform_3(%arg0: i32) -> (i32, i32) {
    %c0_i32 = arith.constant 0 : i32
    %c0_i32_0 = arith.constant 0 : i32
    %c0_i32_1 = arith.constant 0 : i32
    return %c0_i32, %c0_i32_0 : i32, i32
  }
  func.func @transform_4(%arg0: i32) -> (i32, i32) {
    %c0_i32 = arith.constant 0 : i32
    %c0_i32_0 = arith.constant 0 : i32
    %c0_i32_1 = arith.constant 0 : i32
    return %c0_i32, %c0_i32_0 : i32, i32
  }
  func.func @transform_5(%arg0: i32) -> (i32, i32) {
    %c0_i32 = arith.constant 0 : i32
    %c0_i32_0 = arith.constant 0 : i32
    %c0_i32_1 = arith.constant 0 : i32
    return %c0_i32, %c0_i32_0 : i32, i32
  }
  func.func @transform_6(%arg0: i32) -> (i32, i32) {
    %c0_i32 = arith.constant 0 : i32
    %c0_i32_0 = arith.constant 0 : i32
    %c0_i32_1 = arith.constant 0 : i32
    return %c0_i32, %c0_i32_0 : i32, i32
  }
  func.func @transform_7(%arg0: i32) -> (i32, i32) {
    %c0_i32 = arith.constant 0 : i32
    %c0_i32_0 = arith.constant 0 : i32
    %c0_i32_1 = arith.constant 0 : i32
    return %c0_i32, %c0_i32_0 : i32, i32
  }
  func.func @transform_8(%arg0: i32) -> (i32, i32, i32) {
    %c0_i32 = arith.constant 0 : i32
    %c0_i32_0 = arith.constant 0 : i32
    %c0_i32_1 = arith.constant 0 : i32
    return %arg0, %c0_i32, %c0_i32_0 : i32, i32, i32
  }
}

</mosaic_0001>

<llo_original>
// kernel: tile.8
$region0: #{tile.8}
  #allocation0 [shape = 's32[1]{0}', space=sflag, size = 0x4, scoped, tag = 'scoped memory for tile.8']
  %s0 = inlined_call_operand.vmem [shape: f32[18], index: 0, kind: input, shape index: {}]
  %s1 = inlined_call_operand.vmem [shape: f32[16,18], index: 1, kind: output, shape index: {}]
  // Predicated region
  $region2: #{tile.8} parent=0 // pred_check
    _
  $region3: #{tile.8} parent=0 // pred_check_branch
    %3 = sbr.rel (0) target = $region5
  $region4: #{tile.8} parent=0 // pred_region
    _
  $region5: #{tile.8} parent=0 // pred_fallthru
    _
  %v4 = vld [vmem:[%s0] ss:$0 sm:$0xff]
  %5 = vst [vmem:[%s1] sm:$0xff] %v4
  %s6 = scalar_lea.vmem %s1, 8
  %7 = vst [vmem:[%s6] sm:$0xff] %v4

// kernel: tile.0
$region0: #{tile.0}
  %s0 = inlined_call_operand.vmem [shape: f32[16,18], index: 0, kind: input, shape index: {}]
  %s1 = inlined_call_operand.vmem [shape: f32[288,1], index: 1, kind: output, shape index: {}]
  %v2 = vld [vmem:[%s0] sm:$0xff]
  %vm3 = vcmask 7168
  %4 = vst.msk [vmem:[%s1] ss:$18 sm:$0xff] %vm3, %v2
  %s5 = scalar_lea.vmem %s0, 8
  %v6 = vld [vmem:[%s5] sm:$0xff]
  %vm7 = vcmask 7168
  %s8 = scalar_lea.vmem %s1, 144
  %9 = vst.msk [vmem:[%s8] ss:$18 sm:$0xff] %vm7, %v6
  %v10 = vld.sshfl [vmem:[%s0] sm:$0xff pattern:$0xf6d4b290]
  %11 = vrot.lane.b32.xlu0 %v10, 127
  %v12 = vpop.permute.xlu0 %11
  %vm13 = vcmask 7168
  %s14 = scalar_lea.vmem %s1, 1
  %15 = vst.msk [vmem:[%s14] ss:$162 sm:$0x3] %vm13, %v12
  %s16 = scalar_lea.vmem %s1, 4294967009
  %17 = vst.msk [vmem:[%s16] ss:$162 sm:$0xc] %vm13, %v12
  %s18 = scalar_lea.vmem %s1, 4294966721
  %19 = vst.msk [vmem:[%s18] ss:$162 sm:$0x30] %vm13, %v12
  %s20 = scalar_lea.vmem %s1, 4294966433
  %21 = vst.msk [vmem:[%s20] ss:$162 sm:$0xc0] %vm13, %v12
  %s22 = scalar_lea.vmem %s0, 1
  %v23 = vld.sshfl [vmem:[%s22] sm:$0xff pattern:$0x6d4b2907]
  %24 = vrot.lane.b32.xlu0 %v23, 127
  %v25 = vpop.permute.xlu0 %24
  %vm26 = vcmask 7168
  %s27 = scalar_lea.vmem %s1, 145
  %28 = vst.msk [vmem:[%s27] ss:$-126 sm:$0x3] %vm26, %v25
  %s29 = scalar_lea.vmem %s1, 433
  %30 = vst.msk [vmem:[%s29] ss:$-126 sm:$0xc] %vm26, %v25
  %s31 = scalar_lea.vmem %s1, 721
  %32 = vst.msk [vmem:[%s31] ss:$-126 sm:$0x30] %vm26, %v25
  %s33 = scalar_lea.vmem %s1, 1009
  %34 = vst.msk [vmem:[%s33] ss:$-126 sm:$0xc0] %vm26, %v25
  %v35 = vld.sshfl [vmem:[%s0] sm:$0xff pattern:$0x6d4b2907]
  %36 = vrot.lane.b32.xlu0 %v35, 126
  %v37 = vpop.permute.xlu0 %36
  %vm38 = vcmask 7168
  %s39 = scalar_lea.vmem %s1, 128
  %40 = vst.msk [vmem:[%s39] ss:$-126 sm:$0x3] %vm38, %v37
  %s41 = scalar_lea.vmem %s1, 416
  %42 = vst.msk [vmem:[%s41] ss:$-126 sm:$0xc] %vm38, %v37
  %s43 = scalar_lea.vmem %s1, 704
  %44 = vst.msk [vmem:[%s43] ss:$-126 sm:$0x30] %vm38, %v37
  %s45 = scalar_lea.vmem %s1, 992
  %46 = vst.msk [vmem:[%s45] ss:$-126 sm:$0xc0] %vm38, %v37
  %s47 = scalar_lea.vmem %s0, 1
  %v48 = vld.sshfl [vmem:[%s47] sm:$0xff pattern:$0xd4b2907e]
  %49 = vrot.lane.b32.xlu0 %v48, 126
  %v50 = vpop.permute.xlu0 %49
  %vm51 = vcmask 7168
  %s52 = scalar_lea.vmem %s1, 272
  %53 = vst.msk [vmem:[%s52] ss:$-126 sm:$0x7] %vm51, %v50
  %s54 = scalar_lea.vmem %s1, 560
  %55 = vst.msk [vmem:[%s54] ss:$-126 sm:$0x18] %vm51, %v50
  %s56 = scalar_lea.vmem %s1, 848
  %57 = vst.msk [vmem:[%s56] ss:$-126 sm:$0x60] %vm51, %v50
  %s58 = scalar_lea.vmem %s1, 247
  %59 = vst.msk [vmem:[%s58] sm:$0x80] %vm51, %v50
  %v60 = vld.sshfl [vmem:[%s0] sm:$0xff pattern:$0x6d4b2907]
  %61 = vrot.lane.b32.xlu0 %v60, 125
  %v62 = vpop.permute.xlu0 %61
  %vm63 = vcmask 7168
  %s64 = scalar_lea.vmem %s1, 129
  %65 = vst.msk [vmem:[%s64] ss:$-126 sm:$0x3] %vm63, %v62
  %s66 = scalar_lea.vmem %s1, 417
  %67 = vst.msk [vmem:[%s66] ss:$-126 sm:$0xc] %vm63, %v62
  %s68 = scalar_lea.vmem %s1, 705
  %69 = vst.msk [vmem:[%s68] ss:$-126 sm:$0x30] %vm63, %v62
  %s70 = scalar_lea.vmem %s1, 993
  %71 = vst.msk [vmem:[%s70] ss:$-126 sm:$0xc0] %vm63, %v62
  %s72 = scalar_lea.vmem %s0, 1
  %v73 = vld.sshfl [vmem:[%s72] sm:$0xff pattern:$0xd4b2907e]
  %74 = vrot.lane.b32.xlu0 %v73, 125
  %v75 = vpop.permute.xlu0 %74
  %vm76 = vcmask 7168
  %s77 = scalar_lea.vmem %s1, 273
  %78 = vst.msk [vmem:[%s77] ss:$-126 sm:$0x7] %vm76, %v75
  %s79 = scalar_lea.vmem %s1, 561
  %80 = vst.msk [vmem:[%s79] ss:$-126 sm:$0x18] %vm76, %v75
  %s81 = scalar_lea.vmem %s1, 849
  %82 = vst.msk [vmem:[%s81] ss:$-126 sm:$0x60] %vm76, %v75
  %s83 = scalar_lea.vmem %s1, 248
  %84 = vst.msk [vmem:[%s83] sm:$0x80] %vm76, %v75
  %v85 = vld.sshfl [vmem:[%s0] sm:$0xff pattern:$0xd4b2907e]
  %86 = vrot.lane.b32.xlu0 %v85, 124
  %v87 = vpop.permute.xlu0 %86
  %vm88 = vcmask 7168
  %s89 = scalar_lea.vmem %s1, 256
  %90 = vst.msk [vmem:[%s89] ss:$-126 sm:$0x7] %vm88, %v87
  %s91 = scalar_lea.vmem %s1, 544
  %92 = vst.msk [vmem:[%s91] ss:$-126 sm:$0x18] %vm88, %v87
  %s93 = scalar_lea.vmem %s1, 832
  %94 = vst.msk [vmem:[%s93] ss:$-126 sm:$0x60] %vm88, %v87
  %s95 = scalar_lea.vmem %s1, 231
  %96 = vst.msk [vmem:[%s95] sm:$0x80] %vm88, %v87
  %s97 = scalar_lea.vmem %s0, 1
  %v98 = vld.sshfl [vmem:[%s97] sm:$0xff pattern:$0x4b2907e5]
  %99 = vrot.lane.b32.xlu0 %v98, 124
  %v100 = vpop.permute.xlu0 %99
  %vm101 = vcmask 7168
  %s102 = scalar_lea.vmem %s1, 112
  %103 = vst.msk [vmem:[%s102] ss:$162 sm:$0x3] %vm101, %v100
  %s104 = scalar_lea.vmem %s1, 400
  %105 = vst.msk [vmem:[%s104] ss:$-126 sm:$0xc] %vm101, %v100
  %s106 = scalar_lea.vmem %s1, 688
  %107 = vst.msk [vmem:[%s106] ss:$-126 sm:$0x30] %vm101, %v100
  %s108 = scalar_lea.vmem %s1, 976
  %109 = vst.msk [vmem:[%s108] ss:$-126 sm:$0xc0] %vm101, %v100
  %v110 = vld.sshfl [vmem:[%s0] sm:$0xff pattern:$0xd4b2907e]
  %111 = vrot.lane.b32.xlu0 %v110, 123
  %v112 = vpop.permute.xlu0 %111
  %vm113 = vcmask 7168
  %s114 = scalar_lea.vmem %s1, 257
  %115 = vst.msk [vmem:[%s114] ss:$-126 sm:$0x7] %vm113, %v112
  %s116 = scalar_lea.vmem %s1, 545
  %117 = vst.msk [vmem:[%s116] ss:$-126 sm:$0x18] %vm113, %v112
  %s118 = scalar_lea.vmem %s1, 833
  %119 = vst.msk [vmem:[%s118] ss:$-126 sm:$0x60] %vm113, %v112
  %s120 = scalar_lea.vmem %s1, 232
  %121 = vst.msk [vmem:[%s120] sm:$0x80] %vm113, %v112
  %s122 = scalar_lea.vmem %s0, 1
  %v123 = vld.sshfl [vmem:[%s122] sm:$0xff pattern:$0x4b2907e5]
  %124 = vrot.lane.b32.xlu0 %v123, 123
  %v125 = vpop.permute.xlu0 %124
  %vm126 = vcmask 7168
  %s127 = scalar_lea.vmem %s1, 113
  %128 = vst.msk [vmem:[%s127] ss:$162 sm:$0x3] %vm126, %v125
  %s129 = scalar_lea.vmem %s1, 401
  %130 = vst.msk [vmem:[%s129] ss:$-126 sm:$0xc] %vm126, %v125
  %s131 = scalar_lea.vmem %s1, 689
  %132 = vst.msk [vmem:[%s131] ss:$-126 sm:$0x30] %vm126, %v125
  %s133 = scalar_lea.vmem %s1, 977
  %134 = vst.msk [vmem:[%s133] ss:$-126 sm:$0xc0] %vm126, %v125
  %v135 = vld.sshfl [vmem:[%s0] sm:$0xff pattern:$0x4b2907e5]
  %136 = vrot.lane.b32.xlu0 %v135, 122
  %v137 = vpop.permute.xlu0 %136
  %vm138 = vcmask 7168
  %s139 = scalar_lea.vmem %s1, 96
  %140 = vst.msk [vmem:[%s139] ss:$162 sm:$0x3] %vm138, %v137
  %s141 = scalar_lea.vmem %s1, 384
  %142 = vst.msk [vmem:[%s141] ss:$-126 sm:$0xc] %vm138, %v137
  %s143 = scalar_lea.vmem %s1, 672
  %144 = vst.msk [vmem:[%s143] ss:$-126 sm:$0x30] %vm138, %v137
  %s145 = scalar_lea.vmem %s1, 960
  %146 = vst.msk [vmem:[%s145] ss:$-126 sm:$0xc0] %vm138, %v137
  %s147 = scalar_lea.vmem %s0, 1
  %v148 = vld.sshfl [vmem:[%s147] sm:$0xff pattern:$0xb2907e5c]
  %149 = vrot.lane.b32.xlu0 %v148, 122
  %v150 = vpop.permute.xlu0 %149
  %vm151 = vcmask 7168
  %s152 = scalar_lea.vmem %s1, 240
  %153 = vst.msk [vmem:[%s152] ss:$-126 sm:$0x3] %vm151, %v150
  %s154 = scalar_lea.vmem %s1, 528
  %155 = vst.msk [vmem:[%s154] ss:$-126 sm:$0x1c] %vm151, %v150
  %s156 = scalar_lea.vmem %s1, 816
  %157 = vst.msk [vmem:[%s156] ss:$-126 sm:$0x60] %vm151, %v150
  %s158 = scalar_lea.vmem %s1, 215
  %159 = vst.msk [vmem:[%s158] sm:$0x80] %vm151, %v150
  %v160 = vld.sshfl [vmem:[%s0] sm:$0xff pattern:$0x4b2907e5]
  %161 = vrot.lane.b32.xlu0 %v160, 121
  %v162 = vpop.permute.xlu0 %161
  %vm163 = vcmask 7168
  %s164 = scalar_lea.vmem %s1, 97
  %165 = vst.msk [vmem:[%s164] ss:$162 sm:$0x3] %vm163, %v162
  %s166 = scalar_lea.vmem %s1, 385
  %167 = vst.msk [vmem:[%s166] ss:$-126 sm:$0xc] %vm163, %v162
  %s168 = scalar_lea.vmem %s1, 673
  %169 = vst.msk [vmem:[%s168] ss:$-126 sm:$0x30] %vm163, %v162
  %s170 = scalar_lea.vmem %s1, 961
  %171 = vst.msk [vmem:[%s170] ss:$-126 sm:$0xc0] %vm163, %v162
  %s172 = scalar_lea.vmem %s0, 1
  %v173 = vld.sshfl [vmem:[%s172] sm:$0xff pattern:$0xb2907e5c]
  %174 = vrot.lane.b32.xlu0 %v173, 121
  %v175 = vpop.permute.xlu0 %174
  %vm176 = vcmask 7168
  %s177 = scalar_lea.vmem %s1, 241
  %178 = vst.msk [vmem:[%s177] ss:$-126 sm:$0x3] %vm176, %v175
  %s179 = scalar_lea.vmem %s1, 529
  %180 = vst.msk [vmem:[%s179] ss:$-126 sm:$0x1c] %vm176, %v175
  %s181 = scalar_lea.vmem %s1, 817
  %182 = vst.msk [vmem:[%s181] ss:$-126 sm:$0x60] %vm176, %v175
  %s183 = scalar_lea.vmem %s1, 216
  %184 = vst.msk [vmem:[%s183] sm:$0x80] %vm176, %v175
  %v185 = vld.sshfl [vmem:[%s0] sm:$0xff pattern:$0xb2907e5c]
  %186 = vrot.lane.b32.xlu0 %v185, 120
  %v187 = vpop.permute.xlu0 %186
  %vm188 = vcmask 7168
  %s189 = scalar_lea.vmem %s1, 224
  %190 = vst.msk [vmem:[%s189] ss:$-126 sm:$0x3] %vm188, %v187
  %s191 = scalar_lea.vmem %s1, 512
  %192 = vst.msk [vmem:[%s191] ss:$-126 sm:$0x1c] %vm188, %v187
  %s193 = scalar_lea.vmem %s1, 800
  %194 = vst.msk [vmem:[%s193] ss:$-126 sm:$0x60] %vm188, %v187
  %s195 = scalar_lea.vmem %s1, 199
  %196 = vst.msk [vmem:[%s195] sm:$0x80] %vm188, %v187
  %s197 = scalar_lea.vmem %s0, 1
  %v198 = vld.sshfl [vmem:[%s197] sm:$0xff pattern:$0x2907e5c3]
  %199 = vrot.lane.b32.xlu0 %v198, 120
  %v200 = vpop.permute.xlu0 %199
  %vm201 = vcmask 7168
  %s202 = scalar_lea.vmem %s1, 80
  %203 = vst.msk [vmem:[%s202] ss:$162 sm:$0x3] %vm201, %v200
  %s204 = scalar_lea.vmem %s1, 4294967088
  %205 = vst.msk [vmem:[%s204] ss:$162 sm:$0xc] %vm201, %v200
  %s206 = scalar_lea.vmem %s1, 656
  %207 = vst.msk [vmem:[%s206] ss:$-126 sm:$0x30] %vm201, %v200
  %s208 = scalar_lea.vmem %s1, 944
  %209 = vst.msk [vmem:[%s208] ss:$-126 sm:$0xc0] %vm201, %v200
  %v210 = vld.sshfl [vmem:[%s0] sm:$0xff pattern:$0xb2907e5c]
  %211 = vrot.lane.b32.xlu0 %v210, 119
  %v212 = vpop.permute.xlu0 %211
  %vm213 = vcmask 7168
  %s214 = scalar_lea.vmem %s1, 225
  %215 = vst.msk [vmem:[%s214] ss:$-126 sm:$0x3] %vm213, %v212
  %s216 = scalar_lea.vmem %s1, 513
  %217 = vst.msk [vmem:[%s216] ss:$-126 sm:$0x1c] %vm213, %v212
  %s218 = scalar_lea.vmem %s1, 801
  %219 = vst.msk [vmem:[%s218] ss:$-126 sm:$0x60] %vm213, %v212
  %s220 = scalar_lea.vmem %s1, 200
  %221 = vst.msk [vmem:[%s220] sm:$0x80] %vm213, %v212
  %s222 = scalar_lea.vmem %s0, 1
  %v223 = vld.sshfl [vmem:[%s222] sm:$0xff pattern:$0x2907e5c3]
  %224 = vrot.lane.b32.xlu0 %v223, 119
  %v225 = vpop.permute.xlu0 %224
  %vm226 = vcmask 7168
  %s227 = scalar_lea.vmem %s1, 81
  %228 = vst.msk [vmem:[%s227] ss:$162 sm:$0x3] %vm226, %v225
  %s229 = scalar_lea.vmem %s1, 4294967089
  %230 = vst.msk [vmem:[%s229] ss:$162 sm:$0xc] %vm226, %v225
  %s231 = scalar_lea.vmem %s1, 657
  %232 = vst.msk [vmem:[%s231] ss:$-126 sm:$0x30] %vm226, %v225
  %s233 = scalar_lea.vmem %s1, 945
  %234 = vst.msk [vmem:[%s233] ss:$-126 sm:$0xc0] %vm226, %v225
  %v235 = vld.sshfl [vmem:[%s0] sm:$0xff pattern:$0x2907e5c3]
  %236 = vrot.lane.b32.xlu0 %v235, 118
  %v237 = vpop.permute.xlu0 %236
  %vm238 = vcmask 7168
  %s239 = scalar_lea.vmem %s1, 64
  %240 = vst.msk [vmem:[%s239] ss:$162 sm:$0x3] %vm238, %v237
  %s241 = scalar_lea.vmem %s1, 4294967072
  %242 = vst.msk [vmem:[%s241] ss:$162 sm:$0xc] %vm238, %v237
  %s243 = scalar_lea.vmem %s1, 640
  %244 = vst.msk [vmem:[%s243] ss:$-126 sm:$0x30] %vm238, %v237
  %s245 = scalar_lea.vmem %s1, 928
  %246 = vst.msk [vmem:[%s245] ss:$-126 sm:$0xc0] %vm238, %v237
  %s247 = scalar_lea.vmem %s0, 1
  %v248 = vld.sshfl [vmem:[%s247] sm:$0xff pattern:$0x907e5c3a]
  %249 = vrot.lane.b32.xlu0 %v248, 118
  %v250 = vpop.permute.xlu0 %249
  %vm251 = vcmask 7168
  %s252 = scalar_lea.vmem %s1, 208
  %253 = vst.msk [vmem:[%s252] ss:$-126 sm:$0x3] %vm251, %v250
  %s254 = scalar_lea.vmem %s1, 496
  %255 = vst.msk [vmem:[%s254] ss:$-126 sm:$0xc] %vm251, %v250
  %s256 = scalar_lea.vmem %s1, 784
  %257 = vst.msk [vmem:[%s256] ss:$-126 sm:$0x70] %vm251, %v250
  %s258 = scalar_lea.vmem %s1, 183
  %259 = vst.msk [vmem:[%s258] sm:$0x80] %vm251, %v250
  %v260 = vld.sshfl [vmem:[%s0] sm:$0xff pattern:$0x2907e5c3]
  %261 = vrot.lane.b32.xlu0 %v260, 117
  %v262 = vpop.permute.xlu0 %261
  %vm263 = vcmask 7168
  %s264 = scalar_lea.vmem %s1, 65
  %265 = vst.msk [vmem:[%s264] ss:$162 sm:$0x3] %vm263, %v262
  %s266 = scalar_lea.vmem %s1, 4294967073
  %267 = vst.msk [vmem:[%s266] ss:$162 sm:$0xc] %vm263, %v262
  %s268 = scalar_lea.vmem %s1, 641
  %269 = vst.msk [vmem:[%s268] ss:$-126 sm:$0x30] %vm263, %v262
  %s270 = scalar_lea.vmem %s1, 929
  %271 = vst.msk [vmem:[%s270] ss:$-126 sm:$0xc0] %vm263, %v262
  %s272 = scalar_lea.vmem %s0, 1
  %v273 = vld.sshfl [vmem:[%s272] sm:$0xff pattern:$0x907e5c3a]
  %274 = vrot.lane.b32.xlu0 %v273, 117
  %v275 = vpop.permute.xlu0 %274
  %vm276 = vcmask 7168
  %s277 = scalar_lea.vmem %s1, 209
  %278 = vst.msk [vmem:[%s277] ss:$-126 sm:$0x3] %vm276, %v275
  %s279 = scalar_lea.vmem %s1, 497
  %280 = vst.msk [vmem:[%s279] ss:$-126 sm:$0xc] %vm276, %v275
  %s281 = scalar_lea.vmem %s1, 785
  %282 = vst.msk [vmem:[%s281] ss:$-126 sm:$0x70] %vm276, %v275
  %s283 = scalar_lea.vmem %s1, 184
  %284 = vst.msk [vmem:[%s283] sm:$0x80] %vm276, %v275
  %v285 = vld.sshfl [vmem:[%s0] sm:$0xff pattern:$0x907e5c3a]
  %286 = vrot.lane.b32.xlu0 %v285, 116
  %v287 = vpop.permute.xlu0 %286
  %vm288 = vcmask 7168
  %s289 = scalar_lea.vmem %s1, 192
  %290 = vst.msk [vmem:[%s289] ss:$-126 sm:$0x3] %vm288, %v287
  %s291 = scalar_lea.vmem %s1, 480
  %292 = vst.msk [vmem:[%s291] ss:$-126 sm:$0xc] %vm288, %v287
  %s293 = scalar_lea.vmem %s1, 768
  %294 = vst.msk [vmem:[%s293] ss:$-126 sm:$0x70] %vm288, %v287
  %s295 = scalar_lea.vmem %s1, 167
  %296 = vst.msk [vmem:[%s295] sm:$0x80] %vm288, %v287
  %s297 = scalar_lea.vmem %s0, 1
  %v298 = vld.sshfl [vmem:[%s297] sm:$0xff pattern:$0x7e5c3a1]
  %299 = vrot.lane.b32.xlu0 %v298, 116
  %v300 = vpop.permute.xlu0 %299
  %vm301 = vcmask 7168
  %s302 = scalar_lea.vmem %s1, 48
  %303 = vst.msk [vmem:[%s302] ss:$162 sm:$0x3] %vm301, %v300
  %s304 = scalar_lea.vmem %s1, 4294967056
  %305 = vst.msk [vmem:[%s304] ss:$162 sm:$0xc] %vm301, %v300
  %s306 = scalar_lea.vmem %s1, 4294966768
  %307 = vst.msk [vmem:[%s306] ss:$162 sm:$0x30] %vm301, %v300
  %s308 = scalar_lea.vmem %s1, 912
  %309 = vst.msk [vmem:[%s308] ss:$-126 sm:$0xc0] %vm301, %v300
  %v310 = vld.sshfl [vmem:[%s0] sm:$0xff pattern:$0x907e5c3a]
  %311 = vrot.lane.b32.xlu0 %v310, 115
  %v312 = vpop.permute.xlu0 %311
  %vm313 = vcmask 7168
  %s314 = scalar_lea.vmem %s1, 193
  %315 = vst.msk [vmem:[%s314] ss:$-126 sm:$0x3] %vm313, %v312
  %s316 = scalar_lea.vmem %s1, 481
  %317 = vst.msk [vmem:[%s316] ss:$-126 sm:$0xc] %vm313, %v312
  %s318 = scalar_lea.vmem %s1, 769
  %319 = vst.msk [vmem:[%s318] ss:$-126 sm:$0x70] %vm313, %v312
  %s320 = scalar_lea.vmem %s1, 168
  %321 = vst.msk [vmem:[%s320] sm:$0x80] %vm313, %v312
  %s322 = scalar_lea.vmem %s0, 1
  %v323 = vld.sshfl [vmem:[%s322] sm:$0xff pattern:$0x7e5c3a1]
  %324 = vrot.lane.b32.xlu0 %v323, 115
  %v325 = vpop.permute.xlu0 %324
  %vm326 = vcmask 7168
  %s327 = scalar_lea.vmem %s1, 49
  %328 = vst.msk [vmem:[%s327] ss:$162 sm:$0x3] %vm326, %v325
  %s329 = scalar_lea.vmem %s1, 4294967057
  %330 = vst.msk [vmem:[%s329] ss:$162 sm:$0xc] %vm326, %v325
  %s331 = scalar_lea.vmem %s1, 4294966769
  %332 = vst.msk [vmem:[%s331] ss:$162 sm:$0x30] %vm326, %v325
  %s333 = scalar_lea.vmem %s1, 913
  %334 = vst.msk [vmem:[%s333] ss:$-126 sm:$0xc0] %vm326, %v325
  %v335 = vld.sshfl [vmem:[%s0] sm:$0xff pattern:$0x7e5c3a1]
  %336 = vrot.lane.b32.xlu0 %v335, 114
  %v337 = vpop.permute.xlu0 %336
  %vm338 = vcmask 7168
  %s339 = scalar_lea.vmem %s1, 32
  %340 = vst.msk [vmem:[%s339] ss:$162 sm:$0x3] %vm338, %v337
  %s341 = scalar_lea.vmem %s1, 4294967040
  %342 = vst.msk [vmem:[%s341] ss:$162 sm:$0xc] %vm338, %v337
  %s343 = scalar_lea.vmem %s1, 4294966752
  %344 = vst.msk [vmem:[%s343] ss:$162 sm:$0x30] %vm338, %v337
  %s345 = scalar_lea.vmem %s1, 896
  %346 = vst.msk [vmem:[%s345] ss:$-126 sm:$0xc0] %vm338, %v337
  %s347 = scalar_lea.vmem %s0, 2
  %v348 = vld.sshfl [vmem:[%s347] sm:$0xff pattern:$0x6d4b2907]
  %349 = vrot.lane.b32.xlu0 %v348, 114
  %v350 = vpop.permute.xlu0 %349
  %vm351 = vcmask 7168
  %s352 = scalar_lea.vmem %s1, 176
  %353 = vst.msk [vmem:[%s352] ss:$-126 sm:$0x3] %vm351, %v350
  %s354 = scalar_lea.vmem %s1, 464
  %355 = vst.msk [vmem:[%s354] ss:$-126 sm:$0xc] %vm351, %v350
  %s356 = scalar_lea.vmem %s1, 752
  %357 = vst.msk [vmem:[%s356] ss:$-126 sm:$0x30] %vm351, %v350
  %s358 = scalar_lea.vmem %s1, 1040
  %359 = vst.msk [vmem:[%s358] ss:$-126 sm:$0xc0] %vm351, %v350
  %v360 = vld.sshfl [vmem:[%s0] sm:$0xff pattern:$0x7e5c3a1]
  %361 = vrot.lane.b32.xlu0 %v360, 113
  %v362 = vpop.permute.xlu0 %361
  %vm363 = vcmask 7168
  %s364 = scalar_lea.vmem %s1, 33
  %365 = vst.msk [vmem:[%s364] ss:$162 sm:$0x3] %vm363, %v362
  %s366 = scalar_lea.vmem %s1, 4294967041
  %367 = vst.msk [vmem:[%s366] ss:$162 sm:$0xc] %vm363, %v362
  %s368 = scalar_lea.vmem %s1, 4294966753
  %369 = vst.msk [vmem:[%s368] ss:$162 sm:$0x30] %vm363, %v362
  %s370 = scalar_lea.vmem %s1, 897
  %371 = vst.msk [vmem:[%s370] ss:$-126 sm:$0xc0] %vm363, %v362
  %s372 = scalar_lea.vmem %s0, 2
  %v373 = vld.sshfl [vmem:[%s372] sm:$0xff pattern:$0x6d4b2907]
  %374 = vrot.lane.b32.xlu0 %v373, 113
  %v375 = vpop.permute.xlu0 %374
  %vm376 = vcmask 7168
  %s377 = scalar_lea.vmem %s1, 177
  %378 = vst.msk [vmem:[%s377] ss:$-126 sm:$0x3] %vm376, %v375
  %s379 = scalar_lea.vmem %s1, 465
  %380 = vst.msk [vmem:[%s379] ss:$-126 sm:$0xc] %vm376, %v375
  %s381 = scalar_lea.vmem %s1, 753
  %382 = vst.msk [vmem:[%s381] ss:$-126 sm:$0x30] %vm376, %v375
  %s383 = scalar_lea.vmem %s1, 1041
  %384 = vst.msk [vmem:[%s383] ss:$-126 sm:$0xc0] %vm376, %v375
  %s385 = scalar_lea.vmem %s0, 1
  %v386 = vld.sshfl [vmem:[%s385] sm:$0xff pattern:$0x6d4b2907]
  %387 = vrot.lane.b32.xlu0 %v386, 112
  %v388 = vpop.permute.xlu0 %387
  %vm389 = vcmask 7168
  %s390 = scalar_lea.vmem %s1, 160
  %391 = vst.msk [vmem:[%s390] ss:$-126 sm:$0x3] %vm389, %v388
  %s392 = scalar_lea.vmem %s1, 448
  %393 = vst.msk [vmem:[%s392] ss:$-126 sm:$0xc] %vm389, %v388
  %s394 = scalar_lea.vmem %s1, 736
  %395 = vst.msk [vmem:[%s394] ss:$-126 sm:$0x30] %vm389, %v388
  %s396 = scalar_lea.vmem %s1, 1024
  %397 = vst.msk [vmem:[%s396] ss:$-126 sm:$0xc0] %vm389, %v388
  %v398 = vld.sshfl [vmem:[%s0] sm:$0xff pattern:$0xf6d4b290]
  %399 = vrot.lane.b32.xlu0 %v398, 112
  %v400 = vpop.permute.xlu0 %399
  %vm401 = vcmask 7168
  %s402 = scalar_lea.vmem %s1, 16
  %403 = vst.msk [vmem:[%s402] ss:$162 sm:$0x3] %vm401, %v400
  %s404 = scalar_lea.vmem %s1, 4294967024
  %405 = vst.msk [vmem:[%s404] ss:$162 sm:$0xc] %vm401, %v400
  %s406 = scalar_lea.vmem %s1, 4294966736
  %407 = vst.msk [vmem:[%s406] ss:$162 sm:$0x30] %vm401, %v400
  %s408 = scalar_lea.vmem %s1, 4294966448
  %409 = vst.msk [vmem:[%s408] ss:$162 sm:$0xc0] %vm401, %v400
  %s410 = scalar_lea.vmem %s0, 1
  %v411 = vld.sshfl [vmem:[%s410] sm:$0xff pattern:$0x6d4b2907]
  %412 = vrot.lane.b32.xlu0 %v411, 111
  %v413 = vpop.permute.xlu0 %412
  %vm414 = vcmask 7168
  %s415 = scalar_lea.vmem %s1, 161
  %416 = vst.msk [vmem:[%s415] ss:$-126 sm:$0x3] %vm414, %v413
  %s417 = scalar_lea.vmem %s1, 449
  %418 = vst.msk [vmem:[%s417] ss:$-126 sm:$0xc] %vm414, %v413
  %s419 = scalar_lea.vmem %s1, 737
  %420 = vst.msk [vmem:[%s419] ss:$-126 sm:$0x30] %vm414, %v413
  %s421 = scalar_lea.vmem %s1, 1025
  %422 = vst.msk [vmem:[%s421] ss:$-126 sm:$0xc0] %vm414, %v413
  %v423 = vld.sshfl [vmem:[%s0] sm:$0xff pattern:$0xf6d4b290]
  %424 = vrot.lane.b32.xlu0 %v423, 111
  %v425 = vpop.permute.xlu0 %424
  %vm426 = vcmask 7168
  %s427 = scalar_lea.vmem %s1, 17
  %428 = vst.msk [vmem:[%s427] ss:$162 sm:$0x3] %vm426, %v425
  %s429 = scalar_lea.vmem %s1, 4294967025
  %430 = vst.msk [vmem:[%s429] ss:$162 sm:$0xc] %vm426, %v425
  %s431 = scalar_lea.vmem %s1, 4294966737
  %432 = vst.msk [vmem:[%s431] ss:$162 sm:$0x30] %vm426, %v425
  %s433 = scalar_lea.vmem %s1, 4294966449
  %434 = vst.msk [vmem:[%s433] ss:$162 sm:$0xc0] %vm426, %v425

// kernel: basic_block_forward.1
$region0: #{basic_block_forward.1}
  #allocation0 [shape = 'u32[]', space=smem, size = 0x4, offset = 0x4, fixed_abs, tag = 'smem constant byte address 0x4 - core index']
  #allocation1 [shape = 'u32[144,128]{1,0:T(1,128)}', space=vmem, size = 0x12000, scoped, tag = 'internal scratch']
  #allocation2 [shape = 'f32[342,128]{1,0:T(8,128)}', space=vmem, size = 0x2b000, scoped, tag = 'scratch operand']
  %s0 = inlined_call_operand.vmem [shape: f32[2,342,128], index: 0, kind: input, shape index: {}]
  %s1 = inlined_call_operand.vmem [shape: f32[1152,128], index: 1, kind: input, shape index: {}]
  %s2 = inlined_call_operand.vmem [shape: f32[1152,128], index: 2, kind: input, shape index: {}]
  %s3 = inlined_call_operand.vmem [shape: f32[1,128], index: 3, kind: input, shape index: {}]
  %s4 = inlined_call_operand.vmem [shape: f32[1,128], index: 4, kind: input, shape index: {}]
  %s5 = inlined_call_operand.vmem [shape: f32[1,128], index: 5, kind: input, shape index: {}]
  %s6 = inlined_call_operand.vmem [shape: f32[1,128], index: 6, kind: input, shape index: {}]
  %s7 = inlined_call_operand.vmem [shape: f32[288,1], index: 7, kind: input, shape index: {}]
  %s8 = inlined_call_operand.vmem [shape: f32[2,288,128], index: 8, kind: output, shape index: {}]
  %s9 = sld [smem:[#allocation0]]
  $region65: #{basic_block_forward.1} parent=0
    _
  %s11 = ssub.s32 1, %s9
  %s12 = scalar_select 0, %s11, %s9
  loop: start=0, step=1, limit=4
  $region2: #{basic_block_forward.1} parent=0 // loop_pre_header
    _
  $region3: #{basic_block_forward.1} parent=0 // loop_header
    %s14 = sphi 0, %s18
    %p15 = scmp.ge.s32.totalorder %s14, 4
    %s24 = sphi 0, %s26
    %s27 = sphi 0, %s24
    %s28 = sphi 0, %s27
    %s44 = sphi 0, %s28
    %s48 = sphi 0, %s48
    %s50 = sphi 0, %s48
    %s51 = sphi 0, %s50
    %s65 = sphi 0, %s51
    %s69 = sphi 0, %s69
    %s71 = sphi 0, %s69
    %s72 = sphi 0, %s71
    %s86 = sphi 0, %s72
    %s90 = sphi 0, %s90
    %s92 = sphi 0, %s90
    %s93 = sphi 0, %s92
    %s107 = sphi 0, %s93
    %s111 = sphi 0, %s111
    %s113 = sphi 0, %s111
    %s114 = sphi 0, %s113
    %s128 = sphi 0, %s114
    %s132 = sphi 0, %s132
    %s134 = sphi 0, %s132
    %s135 = sphi 0, %s134
    %s149 = sphi 0, %s135
    %s153 = sphi 0, %s153
    %s155 = sphi 0, %s153
    %s156 = sphi 0, %s155
    %s170 = sphi 0, %s156
    %s174 = sphi 0, %s174
    %s176 = sphi 0, %s174
    %s177 = sphi 0, %s176
    %s191 = sphi 0, %s177
    %s197 = sphi 0, %s199
    %s200 = sphi 0, %s197
    %s201 = sphi 0, %s200
    %s217 = sphi 0, %s201
  $region4: #{basic_block_forward.1} parent=0 // loop_header_branch
    %17 = sbr.rel (%p15) target = $region8
  $region5: #{basic_block_forward.1} parent=0 // loop_body
    %s19 = ssub.s32 %s14, 1
    %s20 = ssub.s32 %s14, 2
    %s21 = sadd.s32 %s14, 1
    %s22 = ssub.s32 %s14, %s21
    %p23 = scmp.eq.s32.totalorder %s22, 0
    %s25 = sadd.s32 %s24, 1
    %s26 = scalar_select %p23, %s24, %s25
    %p29 = pneg %p23
    %p30 = scmp.eq.s32.totalorder %s14, 1
    %p31 = por %p29, %p30
    %p32 = scmp.ne.s32.totalorder %s24, %s27
    %p33 = scmp.eq.s32.totalorder %s14, 0
    %p34 = por %p32, %p33
    %p35 = scmp.ne.s32.totalorder %s24, %s27
    %p36 = scmp.eq.s32.totalorder %s19, 1
    %p37 = por %p35, %p36
    %p38 = scmp.ne.s32.totalorder %s27, %s28
    %p39 = scmp.eq.s32.totalorder %s19, 0
    %p40 = por %p38, %p39
    %p41 = scmp.ne.s32.totalorder %s27, %s28
    %p42 = scmp.eq.s32.totalorder %s20, 1
    %p43 = por %p41, %p42
    %p45 = scmp.ne.s32.totalorder %s28, %s44
    %p46 = scmp.eq.s32.totalorder %s20, 0
    %p47 = por %p45, %p46
    %s49 = sadd.s32 %s48, 1
    %p52 = scmp.eq.s32.totalorder %s14, 1
    %p53 = scmp.ne.s32.totalorder %s48, %s50
    %p54 = scmp.eq.s32.totalorder %s14, 0
    %p55 = por %p53, %p54
    %p56 = scmp.ne.s32.totalorder %s48, %s50
    %p57 = scmp.eq.s32.totalorder %s19, 1
    %p58 = por %p56, %p57
    %p59 = scmp.ne.s32.totalorder %s50, %s51
    %p60 = scmp.eq.s32.totalorder %s19, 0
    %p61 = por %p59, %p60
    %p62 = scmp.ne.s32.totalorder %s50, %s51
    %p63 = scmp.eq.s32.totalorder %s20, 1
    %p64 = por %p62, %p63
    %p66 = scmp.ne.s32.totalorder %s51, %s65
    %p67 = scmp.eq.s32.totalorder %s20, 0
    %p68 = por %p66, %p67
    %s70 = sadd.s32 %s69, 1
    %p73 = scmp.eq.s32.totalorder %s14, 1
    %p74 = scmp.ne.s32.totalorder %s69, %s71
    %p75 = scmp.eq.s32.totalorder %s14, 0
    %p76 = por %p74, %p75
    %p77 = scmp.ne.s32.totalorder %s69, %s71
    %p78 = scmp.eq.s32.totalorder %s19, 1
    %p79 = por %p77, %p78
    %p80 = scmp.ne.s32.totalorder %s71, %s72
    %p81 = scmp.eq.s32.totalorder %s19, 0
    %p82 = por %p80, %p81
    %p83 = scmp.ne.s32.totalorder %s71, %s72
    %p84 = scmp.eq.s32.totalorder %s20, 1
    %p85 = por %p83, %p84
    %p87 = scmp.ne.s32.totalorder %s72, %s86
    %p88 = scmp.eq.s32.totalorder %s20, 0
    %p89 = por %p87, %p88
    %s91 = sadd.s32 %s90, 1
    %p94 = scmp.eq.s32.totalorder %s14, 1
    %p95 = scmp.ne.s32.totalorder %s90, %s92
    %p96 = scmp.eq.s32.totalorder %s14, 0
    %p97 = por %p95, %p96
    %p98 = scmp.ne.s32.totalorder %s90, %s92
    %p99 = scmp.eq.s32.totalorder %s19, 1
    %p100 = por %p98, %p99
    %p101 = scmp.ne.s32.totalorder %s92, %s93
    %p102 = scmp.eq.s32.totalorder %s19, 0
    %p103 = por %p101, %p102
    %p104 = scmp.ne.s32.totalorder %s92, %s93
    %p105 = scmp.eq.s32.totalorder %s20, 1
    %p106 = por %p104, %p105
    %p108 = scmp.ne.s32.totalorder %s93, %s107
    %p109 = scmp.eq.s32.totalorder %s20, 0
    %p110 = por %p108, %p109
    %s112 = sadd.s32 %s111, 1
    %p115 = scmp.eq.s32.totalorder %s14, 1
    %p116 = scmp.ne.s32.totalorder %s111, %s113
    %p117 = scmp.eq.s32.totalorder %s14, 0
    %p118 = por %p116, %p117
    %p119 = scmp.ne.s32.totalorder %s111, %s113
    %p120 = scmp.eq.s32.totalorder %s19, 1
    %p121 = por %p119, %p120
    %p122 = scmp.ne.s32.totalorder %s113, %s114
    %p123 = scmp.eq.s32.totalorder %s19, 0
    %p124 = por %p122, %p123
    %p125 = scmp.ne.s32.totalorder %s113, %s114
    %p126 = scmp.eq.s32.totalorder %s20, 1
    %p127 = por %p125, %p126
    %p129 = scmp.ne.s32.totalorder %s114, %s128
    %p130 = scmp.eq.s32.totalorder %s20, 0
    %p131 = por %p129, %p130
    %s133 = sadd.s32 %s132, 1
    %p136 = scmp.eq.s32.totalorder %s14, 1
    %p137 = scmp.ne.s32.totalorder %s132, %s134
    %p138 = scmp.eq.s32.totalorder %s14, 0
    %p139 = por %p137, %p138
    %p140 = scmp.ne.s32.totalorder %s132, %s134
    %p141 = scmp.eq.s32.totalorder %s19, 1
    %p142 = por %p140, %p141
    %p143 = scmp.ne.s32.totalorder %s134, %s135
    %p144 = scmp.eq.s32.totalorder %s19, 0
    %p145 = por %p143, %p144
    %p146 = scmp.ne.s32.totalorder %s134, %s135
    %p147 = scmp.eq.s32.totalorder %s20, 1
    %p148 = por %p146, %p147
    %p150 = scmp.ne.s32.totalorder %s135, %s149
    %p151 = scmp.eq.s32.totalorder %s20, 0
    %p152 = por %p150, %p151
    %s154 = sadd.s32 %s153, 1
    %p157 = scmp.eq.s32.totalorder %s14, 1
    %p158 = scmp.ne.s32.totalorder %s153, %s155
    %p159 = scmp.eq.s32.totalorder %s14, 0
    %p160 = por %p158, %p159
    %p161 = scmp.ne.s32.totalorder %s153, %s155
    %p162 = scmp.eq.s32.totalorder %s19, 1
    %p163 = por %p161, %p162
    %p164 = scmp.ne.s32.totalorder %s155, %s156
    %p165 = scmp.eq.s32.totalorder %s19, 0
    %p166 = por %p164, %p165
    %p167 = scmp.ne.s32.totalorder %s155, %s156
    %p168 = scmp.eq.s32.totalorder %s20, 1
    %p169 = por %p167, %p168
    %p171 = scmp.ne.s32.totalorder %s156, %s170
    %p172 = scmp.eq.s32.totalorder %s20, 0
    %p173 = por %p171, %p172
    %s175 = sadd.s32 %s174, 1
    %p178 = scmp.eq.s32.totalorder %s14, 1
    %p179 = scmp.ne.s32.totalorder %s174, %s176
    %p180 = scmp.eq.s32.totalorder %s14, 0
    %p181 = por %p179, %p180
    %p182 = scmp.ne.s32.totalorder %s174, %s176
    %p183 = scmp.eq.s32.totalorder %s19, 1
    %p184 = por %p182, %p183
    %p185 = scmp.ne.s32.totalorder %s176, %s177
    %p186 = scmp.eq.s32.totalorder %s19, 0
    %p187 = por %p185, %p186
    %p188 = scmp.ne.s32.totalorder %s176, %s177
    %p189 = scmp.eq.s32.totalorder %s20, 1
    %p190 = por %p188, %p189
    %p192 = scmp.ne.s32.totalorder %s177, %s191
    %p193 = scmp.eq.s32.totalorder %s20, 0
    %p194 = por %p192, %p193
    %s195 = ssub.s32 %s14, %s21
    %p196 = scmp.eq.s32.totalorder %s195, 0
    %s198 = sadd.s32 %s197, 1
    %s199 = scalar_select %p196, %s197, %s198
    %p202 = pneg %p196
    %p203 = scmp.eq.s32.totalorder %s14, 1
    %p204 = por %p202, %p203
    %p205 = scmp.ne.s32.totalorder %s197, %s200
    %p206 = scmp.eq.s32.totalorder %s14, 0
    %p207 = por %p205, %p206
    %p208 = scmp.ne.s32.totalorder %s197, %s200
    %p209 = scmp.eq.s32.totalorder %s19, 1
    %p210 = por %p208, %p209
    %p211 = scmp.ne.s32.totalorder %s200, %s201
    %p212 = scmp.eq.s32.totalorder %s19, 0
    %p213 = por %p211, %p212
    %p214 = scmp.ne.s32.totalorder %s200, %s201
    %p215 = scmp.eq.s32.totalorder %s20, 1
    %p216 = por %p214, %p215
    %p218 = scmp.ne.s32.totalorder %s201, %s217
    %p219 = scmp.eq.s32.totalorder %s20, 0
    %p220 = por %p218, %p219
    %p221 = scmp.le.s32.totalorder 1, %s14
    %p222 = scmp.lt.s32.totalorder %s14, 3
    %p223 = pnand %p221, %p222
    %p224 = pneg %p223
    // Predicated region
    $region9: #{basic_block_forward.1} parent=5 // pred_check
      _
    $region10: #{basic_block_forward.1} parent=5 // pred_check_branch
      %226 = sbr.rel (%p223) target = $region12
    $region11: #{basic_block_forward.1} parent=5 // pred_region
      %s227 = ssub.s32 %s14, 1
      // Predicated region
      $region13: #{basic_block_forward.1} parent=11 // pred_check
        %p228 = pneg %p61
      $region14: #{basic_block_forward.1} parent=11 // pred_check_branch
        %230 = sbr.rel (%p228) target = $region16
      $region15: #{basic_block_forward.1} parent=11 // pred_region
        _
      $region16: #{basic_block_forward.1} parent=11 // pred_fallthru
        _
      // Predicated region
      $region17: #{basic_block_forward.1} parent=11 // pred_check
        %p231 = pneg %p82
      $region18: #{basic_block_forward.1} parent=11 // pred_check_branch
        %233 = sbr.rel (%p231) target = $region20
      $region19: #{basic_block_forward.1} parent=11 // pred_region
        _
      $region20: #{basic_block_forward.1} parent=11 // pred_fallthru
        _
      // Predicated region
      $region21: #{basic_block_forward.1} parent=11 // pred_check
        %p234 = pneg %p103
      $region22: #{basic_block_forward.1} parent=11 // pred_check_branch
        %236 = sbr.rel (%p234) target = $region24
      $region23: #{basic_block_forward.1} parent=11 // pred_region
        _
      $region24: #{basic_block_forward.1} parent=11 // pred_fallthru
        _
      // Predicated region
      $region25: #{basic_block_forward.1} parent=11 // pred_check
        %p237 = pneg %p124
      $region26: #{basic_block_forward.1} parent=11 // pred_check_branch
        %239 = sbr.rel (%p237) target = $region28
      $region27: #{basic_block_forward.1} parent=11 // pred_region
        _
      $region28: #{basic_block_forward.1} parent=11 // pred_fallthru
        _
      // Predicated region
      $region29: #{basic_block_forward.1} parent=11 // pred_check
        %p240 = pneg %p145
      $region30: #{basic_block_forward.1} parent=11 // pred_check_branch
        %242 = sbr.rel (%p240) target = $region32
      $region31: #{basic_block_forward.1} parent=11 // pred_region
        _
      $region32: #{basic_block_forward.1} parent=11 // pred_fallthru
        _
      // Predicated region
      $region33: #{basic_block_forward.1} parent=11 // pred_check
        %p243 = pneg %p166
      $region34: #{basic_block_forward.1} parent=11 // pred_check_branch
        %245 = sbr.rel (%p243) target = $region36
      $region35: #{basic_block_forward.1} parent=11 // pred_region
        _
      $region36: #{basic_block_forward.1} parent=11 // pred_fallthru
        _
      // Predicated region
      $region37: #{basic_block_forward.1} parent=11 // pred_check
        %p246 = pneg %p187
      $region38: #{basic_block_forward.1} parent=11 // pred_check_branch
        %248 = sbr.rel (%p246) target = $region40
      $region39: #{basic_block_forward.1} parent=11 // pred_region
        _
      $region40: #{basic_block_forward.1} parent=11 // pred_fallthru
        _
    $region12: #{basic_block_forward.1} parent=5 // pred_fallthru
      _
    %p249 = scmp.lt.s32.totalorder %s14, 2
    // Predicated region
    $region41: #{basic_block_forward.1} parent=5 // pred_check
      %p250 = pneg %p249
    $region42: #{basic_block_forward.1} parent=5 // pred_check_branch
      %252 = sbr.rel (%p250) target = $region44
    $region43: #{basic_block_forward.1} parent=5 // pred_region
      // Predicated region
      $region45: #{basic_block_forward.1} parent=43 // pred_check
        %p253 = pneg %p34
      $region46: #{basic_block_forward.1} parent=43 // pred_check_branch
        %255 = sbr.rel (%p253) target = $region48
      $region47: #{basic_block_forward.1} parent=43 // pred_region
        %p256 = scmp.lt.s32.totalorder %s14, 1
        %s257 = scalar_select %p256, %s14, 1
        %s258 = smul.addr %s257, 43
        %s259 = smul.addr %s258, 8
        %s260 = scalar_lea.vmem %s0, %s259
      $region48: #{basic_block_forward.1} parent=43 // pred_fallthru
        _
    $region44: #{basic_block_forward.1} parent=5 // pred_fallthru
      _
    %p261 = scmp.le.s32.totalorder 1, %s14
    %p262 = scmp.lt.s32.totalorder %s14, 3
    %p263 = pnand %p261, %p262
    %p264 = pneg %p263
    // Predicated region
    $region49: #{basic_block_forward.1} parent=5 // pred_check
      _
    $region50: #{basic_block_forward.1} parent=5 // pred_check_branch
      %266 = sbr.rel (%p263) target = $region52
    $region51: #{basic_block_forward.1} parent=5 // pred_region
      %s267 = ssub.s32 %s14, 1
      %p268 = scmp.lt.s32.totalorder %s19, 1
      %s269 = scalar_select %p268, %s19, 1
      %s270 = smul.addr %s269, 43
      %s271 = smul.addr %s270, 8
      %s272 = scalar_lea.vmem %s0, %s271
      %p273 = pneg %p40
      %p274 = pneg %p37
      %p275 = pneg %p61
      %p276 = pneg %p58
      %p277 = pneg %p82
      %p278 = pneg %p79
      %p279 = pneg %p103
      %p280 = pneg %p100
      %p281 = pneg %p124
      %p282 = pneg %p121
      %p283 = pneg %p145
      %p284 = pneg %p142
      %p285 = pneg %p166
      %p286 = pneg %p163
      %p287 = pneg %p187
      %p288 = pneg %p184
      %p289 = pneg %p213
      %p290 = pneg %p210
      %p291 = scmp.lt.s32.totalorder %s19, 1
      %s292 = scalar_select %p291, %s19, 1
      %s293 = smul.addr %s292, 36
      %s294 = smul.addr %s293, 8
      %s295 = scalar_lea.vmem %s8, %s294
      %p296 = scmp.lt.s32.totalorder %s19, 1
      %s297 = scalar_select %p296, %s19, 1
      %s298 = smul.addr %s297, 43
      %s299 = smul.addr %s298, 8
      %s300 = scalar_lea.vmem %s0, %s299
      %p301 = scmp.lt.s32.totalorder %s19, 1
      %s302 = scalar_select %p301, %s19, 1
      %s303 = smul.addr %s302, 36
      %s304 = smul.addr %s303, 8
      %s305 = scalar_lea.vmem %s8, %s304
      %306 = vst [vmem:[#allocation2] sm:$0xff] 0.0
      %307 = vst [vmem:[#allocation2 + $0x8] sm:$0xff] 0.0
      %308 = vst [vmem:[#allocation2 + $0x10] sm:$0x7] 0.0
      %309 = vst [vmem:[#allocation2 + $0x133] sm:$0xff] 0.0
      %310 = vst [vmem:[#allocation2 + $0x13b] sm:$0xff] 0.0
      %311 = vst [vmem:[#allocation2 + $0x143] sm:$0xff] 0.0
      %312 = vst [vmem:[#allocation2 + $0x14b] sm:$0xff] 0.0
      %313 = vst [vmem:[#allocation2 + $0x153] sm:$0x7] 0.0
      %v314 = vld [vmem:[%s300] sm:$0xff]
      %v315 = vld [vmem:[%s300 + $0x8] sm:$0xff]
      %v316 = vld [vmem:[%s300 + $0x10] sm:$0xff]
      %v317 = vld [vmem:[%s300 + $0x18] sm:$0xff]
      %v318 = vld [vmem:[%s300 + $0x20] sm:$0xff]
      %v319 = vld [vmem:[%s300 + $0x28] sm:$0xff]
      %v320 = vld [vmem:[%s300 + $0x30] sm:$0xff]
      %v321 = vld [vmem:[%s300 + $0x38] sm:$0xff]
      %v322 = vld [vmem:[%s300 + $0x40] sm:$0xff]
      %v323 = vld [vmem:[%s300 + $0x48] sm:$0xff]
      %v324 = vld [vmem:[%s300 + $0x50] sm:$0xff]
      %v325 = vld [vmem:[%s300 + $0x58] sm:$0xff]
      %v326 = vld [vmem:[%s300 + $0x60] sm:$0xff]
      %v327 = vld [vmem:[%s300 + $0x68] sm:$0xff]
      %v328 = vld [vmem:[%s300 + $0x70] sm:$0xff]
      %v329 = vld [vmem:[%s300 + $0x78] sm:$0xff]
      %v330 = vld [vmem:[%s300 + $0x80] sm:$0xff]
      %v331 = vld [vmem:[%s300 + $0x88] sm:$0xff]
      %v332 = vld [vmem:[%s300 + $0x90] sm:$0xff]
      %v333 = vld [vmem:[%s300 + $0x98] sm:$0xff]
      %v334 = vld [vmem:[%s300 + $0xa0] sm:$0xff]
      %v335 = vld [vmem:[%s300 + $0xa8] sm:$0xff]
      %v336 = vld [vmem:[%s300 + $0xb0] sm:$0xff]
      %v337 = vld [vmem:[%s300 + $0xb8] sm:$0xff]
      %v338 = vld [vmem:[%s300 + $0xc0] sm:$0xff]
      %v339 = vld [vmem:[%s300 + $0xc8] sm:$0xff]
      %v340 = vld [vmem:[%s300 + $0xd0] sm:$0xff]
      %v341 = vld [vmem:[%s300 + $0xd8] sm:$0xff]
      %v342 = vld [vmem:[%s300 + $0xe0] sm:$0xff]
      %v343 = vld [vmem:[%s300 + $0xe8] sm:$0xff]
      %v344 = vld [vmem:[%s300 + $0xf0] sm:$0xff]
      %v345 = vld [vmem:[%s300 + $0xf8] sm:$0xff]
      %v346 = vld [vmem:[%s300 + $0x100] sm:$0xff]
      %v347 = vld [vmem:[%s300 + $0x108] sm:$0xff]
      %v348 = vld [vmem:[%s300 + $0x110] sm:$0xff]
      %v349 = vld [vmem:[%s300 + $0x118] sm:$0xff]
      %v350 = vld [vmem:[%s300 + $0x1] sm:$0xff]
      %v351 = vld [vmem:[%s300 + $0x9] sm:$0xff]
      %v352 = vld [vmem:[%s300 + $0x11] sm:$0xff]
      %v353 = vld [vmem:[%s300 + $0x19] sm:$0xff]
      %v354 = vld [vmem:[%s300 + $0x21] sm:$0xff]
      %v355 = vld [vmem:[%s300 + $0x29] sm:$0xff]
      %v356 = vld [vmem:[%s300 + $0x31] sm:$0xff]
      %v357 = vld [vmem:[%s300 + $0x39] sm:$0xff]
      %v358 = vld [vmem:[%s300 + $0x41] sm:$0xff]
      %v359 = vld [vmem:[%s300 + $0x49] sm:$0xff]
      %v360 = vld [vmem:[%s300 + $0x51] sm:$0xff]
      %v361 = vld [vmem:[%s300 + $0x59] sm:$0xff]
      %v362 = vld [vmem:[%s300 + $0x61] sm:$0xff]
      %v363 = vld [vmem:[%s300 + $0x69] sm:$0xff]
      %v364 = vld [vmem:[%s300 + $0x71] sm:$0xff]
      %v365 = vld [vmem:[%s300 + $0x79] sm:$0xff]
      %v366 = vld [vmem:[%s300 + $0x81] sm:$0xff]
      %v367 = vld [vmem:[%s300 + $0x89] sm:$0xff]
      %v368 = vld [vmem:[%s300 + $0x91] sm:$0xff]
      %v369 = vld [vmem:[%s300 + $0x99] sm:$0xff]
      %v370 = vld [vmem:[%s300 + $0xa1] sm:$0xff]
      %v371 = vld [vmem:[%s300 + $0xa9] sm:$0xff]
      %v372 = vld [vmem:[%s300 + $0xb1] sm:$0xff]
      %v373 = vld [vmem:[%s300 + $0xb9] sm:$0xff]
      %v374 = vld [vmem:[%s300 + $0xc1] sm:$0xff]
      %v375 = vld [vmem:[%s300 + $0xc9] sm:$0xff]
      %v376 = vld [vmem:[%s300 + $0xd1] sm:$0xff]
      %v377 = vld [vmem:[%s300 + $0xd9] sm:$0xff]
      %v378 = vld [vmem:[%s300 + $0xe1] sm:$0xff]
      %v379 = vld [vmem:[%s300 + $0xe9] sm:$0xff]
      %v380 = vld [vmem:[%s300 + $0xf1] sm:$0xff]
      %v381 = vld [vmem:[%s300 + $0xf9] sm:$0xff]
      %v382 = vld [vmem:[%s300 + $0x101] sm:$0xff]
      %v383 = vld [vmem:[%s300 + $0x109] sm:$0xff]
      %v384 = vld [vmem:[%s300 + $0x111] sm:$0xff]
      %v385 = vld [vmem:[%s300 + $0x119] sm:$0xff]
      %v386 = vld [vmem:[%s300 + $0x2] sm:$0xff]
      %v387 = vld [vmem:[%s300 + $0xa] sm:$0xff]
      %v388 = vld [vmem:[%s300 + $0x12] sm:$0xff]
      %v389 = vld [vmem:[%s300 + $0x1a] sm:$0xff]
      %v390 = vld [vmem:[%s300 + $0x22] sm:$0xff]
      %v391 = vld [vmem:[%s300 + $0x2a] sm:$0xff]
      %v392 = vld [vmem:[%s300 + $0x32] sm:$0xff]
      %v393 = vld [vmem:[%s300 + $0x3a] sm:$0xff]
      %v394 = vld [vmem:[%s300 + $0x42] sm:$0xff]
      %v395 = vld [vmem:[%s300 + $0x4a] sm:$0xff]
      %v396 = vld [vmem:[%s300 + $0x52] sm:$0xff]
      %v397 = vld [vmem:[%s300 + $0x5a] sm:$0xff]
      %v398 = vld [vmem:[%s300 + $0x62] sm:$0xff]
      %v399 = vld [vmem:[%s300 + $0x6a] sm:$0xff]
      %v400 = vld [vmem:[%s300 + $0x72] sm:$0xff]
      %v401 = vld [vmem:[%s300 + $0x7a] sm:$0xff]
      %v402 = vld [vmem:[%s300 + $0x82] sm:$0xff]
      %v403 = vld [vmem:[%s300 + $0x8a] sm:$0xff]
      %v404 = vld [vmem:[%s300 + $0x92] sm:$0xff]
      %v405 = vld [vmem:[%s300 + $0x9a] sm:$0xff]
      %v406 = vld [vmem:[%s300 + $0xa2] sm:$0xff]
      %v407 = vld [vmem:[%s300 + $0xaa] sm:$0xff]
      %v408 = vld [vmem:[%s300 + $0xb2] sm:$0xff]
      %v409 = vld [vmem:[%s300 + $0xba] sm:$0xff]
      %v410 = vld [vmem:[%s300 + $0xc2] sm:$0xff]
      %v411 = vld [vmem:[%s300 + $0xca] sm:$0xff]
      %v412 = vld [vmem:[%s300 + $0xd2] sm:$0xff]
      %v413 = vld [vmem:[%s300 + $0xda] sm:$0xff]
      %v414 = vld [vmem:[%s300 + $0xe2] sm:$0xff]
      %v415 = vld [vmem:[%s300 + $0xea] sm:$0xff]
      %v416 = vld [vmem:[%s300 + $0xf2] sm:$0xff]
      %v417 = vld [vmem:[%s300 + $0xfa] sm:$0xff]
      %v418 = vld [vmem:[%s300 + $0x102] sm:$0xff]
      %v419 = vld [vmem:[%s300 + $0x10a] sm:$0xff]
      %v420 = vld [vmem:[%s300 + $0x112] sm:$0xff]
      %v421 = vld [vmem:[%s300 + $0x11a] sm:$0xff]
      %v422 = vld [vmem:[%s300 + $0x122] sm:$0xff]
      %v423 = vld [vmem:[%s300 + $0x12a] sm:$0xff]
      %v424 = vld [vmem:[%s300 + $0x13] sm:$0xff]
      %v425 = vld [vmem:[%s300 + $0x1b] sm:$0xff]
      %v426 = vld [vmem:[%s300 + $0x23] sm:$0xff]
      %v427 = vld [vmem:[%s300 + $0x2b] sm:$0xff]
      %v428 = vld [vmem:[%s300 + $0x33] sm:$0xff]
      %v429 = vld [vmem:[%s300 + $0x3b] sm:$0xff]
      %v430 = vld [vmem:[%s300 + $0x43] sm:$0xff]
      %v431 = vld [vmem:[%s300 + $0x4b] sm:$0xff]
      %v432 = vld [vmem:[%s300 + $0x53] sm:$0xff]
      %v433 = vld [vmem:[%s300 + $0x5b] sm:$0xff]
      %v434 = vld [vmem:[%s300 + $0x63] sm:$0xff]
      %v435 = vld [vmem:[%s300 + $0x6b] sm:$0xff]
      %v436 = vld [vmem:[%s300 + $0x73] sm:$0xff]
      %v437 = vld [vmem:[%s300 + $0x7b] sm:$0xff]
      %v438 = vld [vmem:[%s300 + $0x83] sm:$0xff]
      %v439 = vld [vmem:[%s300 + $0x8b] sm:$0xff]
      %v440 = vld [vmem:[%s300 + $0x93] sm:$0xff]
      %v441 = vld [vmem:[%s300 + $0x9b] sm:$0xff]
      %v442 = vld [vmem:[%s300 + $0xa3] sm:$0xff]
      %v443 = vld [vmem:[%s300 + $0xab] sm:$0xff]
      %v444 = vld [vmem:[%s300 + $0xb3] sm:$0xff]
      %v445 = vld [vmem:[%s300 + $0xbb] sm:$0xff]
      %v446 = vld [vmem:[%s300 + $0xc3] sm:$0xff]
      %v447 = vld [vmem:[%s300 + $0xcb] sm:$0xff]
      %v448 = vld [vmem:[%s300 + $0xd3] sm:$0xff]
      %v449 = vld [vmem:[%s300 + $0xdb] sm:$0xff]
      %v450 = vld [vmem:[%s300 + $0xe3] sm:$0xff]
      %v451 = vld [vmem:[%s300 + $0xeb] sm:$0xff]
      %v452 = vld [vmem:[%s300 + $0xf3] sm:$0xff]
      %v453 = vld [vmem:[%s300 + $0xfb] sm:$0xff]
      %v454 = vld [vmem:[%s300 + $0x103] sm:$0xff]
      %v455 = vld [vmem:[%s300 + $0x10b] sm:$0xff]
      %v456 = vld [vmem:[%s300 + $0x113] sm:$0xff]
      %v457 = vld [vmem:[%s300 + $0x11b] sm:$0xff]
      %v458 = vld [vmem:[%s300 + $0x123] sm:$0xff]
      %v459 = vld [vmem:[%s300 + $0x12b] sm:$0xff]
      %v460 = vld [vmem:[%s300 + $0x14] sm:$0xff]
      %v461 = vld [vmem:[%s300 + $0x1c] sm:$0xff]
      %v462 = vld [vmem:[%s300 + $0x24] sm:$0xff]
      %v463 = vld [vmem:[%s300 + $0x2c] sm:$0xff]
      %v464 = vld [vmem:[%s300 + $0x34] sm:$0xff]
      %v465 = vld [vmem:[%s300 + $0x3c] sm:$0xff]
      %v466 = vld [vmem:[%s300 + $0x44] sm:$0xff]
      %v467 = vld [vmem:[%s300 + $0x4c] sm:$0xff]
      %v468 = vld [vmem:[%s300 + $0x54] sm:$0xff]
      %v469 = vld [vmem:[%s300 + $0x5c] sm:$0xff]
      %v470 = vld [vmem:[%s300 + $0x64] sm:$0xff]
      %v471 = vld [vmem:[%s300 + $0x6c] sm:$0xff]
      %v472 = vld [vmem:[%s300 + $0x74] sm:$0xff]
      %v473 = vld [vmem:[%s300 + $0x7c] sm:$0xff]
      %v474 = vld [vmem:[%s300 + $0x84] sm:$0xff]
      %v475 = vld [vmem:[%s300 + $0x8c] sm:$0xff]
      %v476 = vld [vmem:[%s300 + $0x94] sm:$0xff]
      %v477 = vld [vmem:[%s300 + $0x9c] sm:$0xff]
      %v478 = vld [vmem:[%s300 + $0xa4] sm:$0xff]
      %v479 = vld [vmem:[%s300 + $0xac] sm:$0xff]
      %v480 = vld [vmem:[%s300 + $0xb4] sm:$0xff]
      %v481 = vld [vmem:[%s300 + $0xbc] sm:$0xff]
      %v482 = vld [vmem:[%s300 + $0xc4] sm:$0xff]
      %v483 = vld [vmem:[%s300 + $0xcc] sm:$0xff]
      %v484 = vld [vmem:[%s300 + $0xd4] sm:$0xff]
      %v485 = vld [vmem:[%s300 + $0xdc] sm:$0xff]
      %v486 = vld [vmem:[%s300 + $0xe4] sm:$0xff]
      %v487 = vld [vmem:[%s300 + $0xec] sm:$0xff]
      %v488 = vld [vmem:[%s300 + $0xf4] sm:$0xff]
      %v489 = vld [vmem:[%s300 + $0xfc] sm:$0xff]
      %v490 = vld [vmem:[%s300 + $0x104] sm:$0xff]
      %v491 = vld [vmem:[%s300 + $0x10c] sm:$0xff]
      %v492 = vld [vmem:[%s300 + $0x114] sm:$0xff]
      %v493 = vld [vmem:[%s300 + $0x11c] sm:$0xff]
      %v494 = vld [vmem:[%s300 + $0x124] sm:$0xff]
      %v495 = vld [vmem:[%s300 + $0x12c] sm:$0xff]
      %v496 = vld [vmem:[%s300 + $0x134] sm:$0xff]
      %v497 = vld [vmem:[%s300 + $0x13c] sm:$0xff]
      %v498 = vld [vmem:[%s300 + $0x25] sm:$0xff]
      %v499 = vld [vmem:[%s300 + $0x2d] sm:$0xff]
      %v500 = vld [vmem:[%s300 + $0x35] sm:$0xff]
      %v501 = vld [vmem:[%s300 + $0x3d] sm:$0xff]
      %v502 = vld [vmem:[%s300 + $0x45] sm:$0xff]
      %v503 = vld [vmem:[%s300 + $0x4d] sm:$0xff]
      %v504 = vld [vmem:[%s300 + $0x55] sm:$0xff]
      %v505 = vld [vmem:[%s300 + $0x5d] sm:$0xff]
      %v506 = vld [vmem:[%s300 + $0x65] sm:$0xff]
      %v507 = vld [vmem:[%s300 + $0x6d] sm:$0xff]
      %v508 = vld [vmem:[%s300 + $0x75] sm:$0xff]
      %v509 = vld [vmem:[%s300 + $0x7d] sm:$0xff]
      %v510 = vld [vmem:[%s300 + $0x85] sm:$0xff]
      %v511 = vld [vmem:[%s300 + $0x8d] sm:$0xff]
      %v512 = vld [vmem:[%s300 + $0x95] sm:$0xff]
      %v513 = vld [vmem:[%s300 + $0x9d] sm:$0xff]
      %v514 = vld [vmem:[%s300 + $0xa5] sm:$0xff]
      %v515 = vld [vmem:[%s300 + $0xad] sm:$0xff]
      %v516 = vld [vmem:[%s300 + $0xb5] sm:$0xff]
      %v517 = vld [vmem:[%s300 + $0xbd] sm:$0xff]
      %v518 = vld [vmem:[%s300 + $0xc5] sm:$0xff]
      %v519 = vld [vmem:[%s300 + $0xcd] sm:$0xff]
      %v520 = vld [vmem:[%s300 + $0xd5] sm:$0xff]
      %v521 = vld [vmem:[%s300 + $0xdd] sm:$0xff]
      %v522 = vld [vmem:[%s300 + $0xe5] sm:$0xff]
      %v523 = vld [vmem:[%s300 + $0xed] sm:$0xff]
      %v524 = vld [vmem:[%s300 + $0xf5] sm:$0xff]
      %v525 = vld [vmem:[%s300 + $0xfd] sm:$0xff]
      %v526 = vld [vmem:[%s300 + $0x105] sm:$0xff]
      %v527 = vld [vmem:[%s300 + $0x10d] sm:$0xff]
      %v528 = vld [vmem:[%s300 + $0x115] sm:$0xff]
      %v529 = vld [vmem:[%s300 + $0x11d] sm:$0xff]
      %v530 = vld [vmem:[%s300 + $0x125] sm:$0xff]
      %v531 = vld [vmem:[%s300 + $0x12d] sm:$0xff]
      %v532 = vld [vmem:[%s300 + $0x135] sm:$0xff]
      %v533 = vld [vmem:[%s300 + $0x13d] sm:$0xff]
      %v534 = vld [vmem:[%s300 + $0x26] sm:$0xff]
      %v535 = vld [vmem:[%s300 + $0x2e] sm:$0xff]
      %v536 = vld [vmem:[%s300 + $0x36] sm:$0xff]
      %v537 = vld [vmem:[%s300 + $0x3e] sm:$0xff]
      %v538 = vld [vmem:[%s300 + $0x46] sm:$0xff]
      %v539 = vld [vmem:[%s300 + $0x4e] sm:$0xff]
      %v540 = vld [vmem:[%s300 + $0x56] sm:$0xff]
      %v541 = vld [vmem:[%s300 + $0x5e] sm:$0xff]
      %v542 = vld [vmem:[%s300 + $0x66] sm:$0xff]
      %v543 = vld [vmem:[%s300 + $0x6e] sm:$0xff]
      %v544 = vld [vmem:[%s300 + $0x76] sm:$0xff]
      %v545 = vld [vmem:[%s300 + $0x7e] sm:$0xff]
      %v546 = vld [vmem:[%s300 + $0x86] sm:$0xff]
      %v547 = vld [vmem:[%s300 + $0x8e] sm:$0xff]
      %v548 = vld [vmem:[%s300 + $0x96] sm:$0xff]
      %v549 = vld [vmem:[%s300 + $0x9e] sm:$0xff]
      %v550 = vld [vmem:[%s300 + $0xa6] sm:$0xff]
      %v551 = vld [vmem:[%s300 + $0xae] sm:$0xff]
      %v552 = vld [vmem:[%s300 + $0xb6] sm:$0xff]
      %v553 = vld [vmem:[%s300 + $0xbe] sm:$0xff]
      %v554 = vld [vmem:[%s300 + $0xc6] sm:$0xff]
      %v555 = vld [vmem:[%s300 + $0xce] sm:$0xff]
      %v556 = vld [vmem:[%s300 + $0xd6] sm:$0xff]
      %v557 = vld [vmem:[%s300 + $0xde] sm:$0xff]
      %v558 = vld [vmem:[%s300 + $0xe6] sm:$0xff]
      %v559 = vld [vmem:[%s300 + $0xee] sm:$0xff]
      %v560 = vld [vmem:[%s300 + $0xf6] sm:$0xff]
      %v561 = vld [vmem:[%s300 + $0xfe] sm:$0xff]
      %v562 = vld [vmem:[%s300 + $0x106] sm:$0xff]
      %v563 = vld [vmem:[%s300 + $0x10e] sm:$0xff]
      %v564 = vld [vmem:[%s300 + $0x116] sm:$0xff]
      %v565 = vld [vmem:[%s300 + $0x11e] sm:$0xff]
      %v566 = vld [vmem:[%s300 + $0x126] sm:$0xff]
      %v567 = vld [vmem:[%s300 + $0x12e] sm:$0xff]
      %v568 = vld [vmem:[%s300 + $0x136] sm:$0xff]
      %v569 = vld [vmem:[%s300 + $0x13e] sm:$0xff]
      %v570 = vld [vmem:[%s1] sm:$0xff]
      %v571 = vld [vmem:[%s1 + $0x8] sm:$0xff]
      %v572 = vld [vmem:[%s1 + $0x10] sm:$0xff]
      %v573 = vld [vmem:[%s1 + $0x18] sm:$0xff]
      %v574 = vld [vmem:[%s1 + $0x20] sm:$0xff]
      %v575 = vld [vmem:[%s1 + $0x28] sm:$0xff]
      %v576 = vld [vmem:[%s1 + $0x30] sm:$0xff]
      %v577 = vld [vmem:[%s1 + $0x38] sm:$0xff]
      %v578 = vld [vmem:[%s1 + $0x40] sm:$0xff]
      %v579 = vld [vmem:[%s1 + $0x48] sm:$0xff]
      %v580 = vld [vmem:[%s1 + $0x50] sm:$0xff]
      %v581 = vld [vmem:[%s1 + $0x58] sm:$0xff]
      %v582 = vld [vmem:[%s1 + $0x60] sm:$0xff]
      %v583 = vld [vmem:[%s1 + $0x68] sm:$0xff]
      %v584 = vld [vmem:[%s1 + $0x70] sm:$0xff]
      %v585 = vld [vmem:[%s1 + $0x78] sm:$0xff]
      %v586 = vld [vmem:[%s1 + $0x80] sm:$0xff]
      %v587 = vld [vmem:[%s1 + $0x88] sm:$0xff]
      %v588 = vld [vmem:[%s1 + $0x90] sm:$0xff]
      %v589 = vld [vmem:[%s1 + $0x98] sm:$0xff]
      %v590 = vld [vmem:[%s1 + $0xa0] sm:$0xff]
      %v591 = vld [vmem:[%s1 + $0xa8] sm:$0xff]
      %v592 = vld [vmem:[%s1 + $0xb0] sm:$0xff]
      %v593 = vld [vmem:[%s1 + $0xb8] sm:$0xff]
      %v594 = vld [vmem:[%s1 + $0xc0] sm:$0xff]
      %v595 = vld [vmem:[%s1 + $0xc8] sm:$0xff]
      %v596 = vld [vmem:[%s1 + $0xd0] sm:$0xff]
      %v597 = vld [vmem:[%s1 + $0xd8] sm:$0xff]
      %v598 = vld [vmem:[%s1 + $0xe0] sm:$0xff]
      %v599 = vld [vmem:[%s1 + $0xe8] sm:$0xff]
      %v600 = vld [vmem:[%s1 + $0xf0] sm:$0xff]
      %v601 = vld [vmem:[%s1 + $0xf8] sm:$0xff]
      %v602 = vld [vmem:[%s1 + $0x100] sm:$0xff]
      %v603 = vld [vmem:[%s1 + $0x108] sm:$0xff]
      %v604 = vld [vmem:[%s1 + $0x110] sm:$0xff]
      %v605 = vld [vmem:[%s1 + $0x118] sm:$0xff]
      %v606 = vld [vmem:[%s1 + $0x120] sm:$0xff]
      %v607 = vld [vmem:[%s1 + $0x128] sm:$0xff]
      %v608 = vld [vmem:[%s1 + $0x130] sm:$0xff]
      %v609 = vld [vmem:[%s1 + $0x138] sm:$0xff]
      %v610 = vld [vmem:[%s1 + $0x140] sm:$0xff]
      %v611 = vld [vmem:[%s1 + $0x148] sm:$0xff]
      %v612 = vld [vmem:[%s1 + $0x150] sm:$0xff]
      %v613 = vld [vmem:[%s1 + $0x158] sm:$0xff]
      %v614 = vld [vmem:[%s1 + $0x160] sm:$0xff]
      %v615 = vld [vmem:[%s1 + $0x168] sm:$0xff]
      %v616 = vld [vmem:[%s1 + $0x170] sm:$0xff]
      %v617 = vld [vmem:[%s1 + $0x178] sm:$0xff]
      %v618 = vld [vmem:[%s1 + $0x180] sm:$0xff]
      %v619 = vld [vmem:[%s1 + $0x188] sm:$0xff]
      %v620 = vld [vmem:[%s1 + $0x190] sm:$0xff]
      %v621 = vld [vmem:[%s1 + $0x198] sm:$0xff]
      %v622 = vld [vmem:[%s1 + $0x1a0] sm:$0xff]
      %v623 = vld [vmem:[%s1 + $0x1a8] sm:$0xff]
      %v624 = vld [vmem:[%s1 + $0x1b0] sm:$0xff]
      %v625 = vld [vmem:[%s1 + $0x1b8] sm:$0xff]
      %v626 = vld [vmem:[%s1 + $0x1c0] sm:$0xff]
      %v627 = vld [vmem:[%s1 + $0x1c8] sm:$0xff]
      %v628 = vld [vmem:[%s1 + $0x1d0] sm:$0xff]
      %v629 = vld [vmem:[%s1 + $0x1d8] sm:$0xff]
      %v630 = vld [vmem:[%s1 + $0x1e0] sm:$0xff]
      %v631 = vld [vmem:[%s1 + $0x1e8] sm:$0xff]
      %v632 = vld [vmem:[%s1 + $0x1f0] sm:$0xff]
      %v633 = vld [vmem:[%s1 + $0x1f8] sm:$0xff]
      %v634 = vld [vmem:[%s1 + $0x200] sm:$0xff]
      %v635 = vld [vmem:[%s1 + $0x208] sm:$0xff]
      %v636 = vld [vmem:[%s1 + $0x210] sm:$0xff]
      %v637 = vld [vmem:[%s1 + $0x218] sm:$0xff]
      %v638 = vld [vmem:[%s1 + $0x220] sm:$0xff]
      %v639 = vld [vmem:[%s1 + $0x228] sm:$0xff]
      %v640 = vld [vmem:[%s1 + $0x230] sm:$0xff]
      %v641 = vld [vmem:[%s1 + $0x238] sm:$0xff]
      %v642 = vld [vmem:[%s1 + $0x240] sm:$0xff]
      %v643 = vld [vmem:[%s1 + $0x248] sm:$0xff]
      %v644 = vld [vmem:[%s1 + $0x250] sm:$0xff]
      %v645 = vld [vmem:[%s1 + $0x258] sm:$0xff]
      %v646 = vld [vmem:[%s1 + $0x260] sm:$0xff]
      %v647 = vld [vmem:[%s1 + $0x268] sm:$0xff]
      %v648 = vld [vmem:[%s1 + $0x270] sm:$0xff]
      %v649 = vld [vmem:[%s1 + $0x278] sm:$0xff]
      %v650 = vld [vmem:[%s1 + $0x280] sm:$0xff]
      %v651 = vld [vmem:[%s1 + $0x288] sm:$0xff]
      %v652 = vld [vmem:[%s1 + $0x290] sm:$0xff]
      %v653 = vld [vmem:[%s1 + $0x298] sm:$0xff]
      %v654 = vld [vmem:[%s1 + $0x2a0] sm:$0xff]
      %v655 = vld [vmem:[%s1 + $0x2a8] sm:$0xff]
      %v656 = vld [vmem:[%s1 + $0x2b0] sm:$0xff]
      %v657 = vld [vmem:[%s1 + $0x2b8] sm:$0xff]
      %v658 = vld [vmem:[%s1 + $0x2c0] sm:$0xff]
      %v659 = vld [vmem:[%s1 + $0x2c8] sm:$0xff]
      %v660 = vld [vmem:[%s1 + $0x2d0] sm:$0xff]
      %v661 = vld [vmem:[%s1 + $0x2d8] sm:$0xff]
      %v662 = vld [vmem:[%s1 + $0x2e0] sm:$0xff]
      %v663 = vld [vmem:[%s1 + $0x2e8] sm:$0xff]
      %v664 = vld [vmem:[%s1 + $0x2f0] sm:$0xff]
      %v665 = vld [vmem:[%s1 + $0x2f8] sm:$0xff]
      %v666 = vld [vmem:[%s1 + $0x300] sm:$0xff]
      %v667 = vld [vmem:[%s1 + $0x308] sm:$0xff]
      %v668 = vld [vmem:[%s1 + $0x310] sm:$0xff]
      %v669 = vld [vmem:[%s1 + $0x318] sm:$0xff]
      %v670 = vld [vmem:[%s1 + $0x320] sm:$0xff]
      %v671 = vld [vmem:[%s1 + $0x328] sm:$0xff]
      %v672 = vld [vmem:[%s1 + $0x330] sm:$0xff]
      %v673 = vld [vmem:[%s1 + $0x338] sm:$0xff]
      %v674 = vld [vmem:[%s1 + $0x340] sm:$0xff]
      %v675 = vld [vmem:[%s1 + $0x348] sm:$0xff]
      %v676 = vld [vmem:[%s1 + $0x350] sm:$0xff]
      %v677 = vld [vmem:[%s1 + $0x358] sm:$0xff]
      %v678 = vld [vmem:[%s1 + $0x360] sm:$0xff]
      %v679 = vld [vmem:[%s1 + $0x368] sm:$0xff]
      %v680 = vld [vmem:[%s1 + $0x370] sm:$0xff]
      %v681 = vld [vmem:[%s1 + $0x378] sm:$0xff]
      %v682 = vld [vmem:[%s1 + $0x380] sm:$0xff]
      %v683 = vld [vmem:[%s1 + $0x388] sm:$0xff]
      %v684 = vld [vmem:[%s1 + $0x390] sm:$0xff]
      %v685 = vld [vmem:[%s1 + $0x398] sm:$0xff]
      %v686 = vld [vmem:[%s1 + $0x3a0] sm:$0xff]
      %v687 = vld [vmem:[%s1 + $0x3a8] sm:$0xff]
      %v688 = vld [vmem:[%s1 + $0x3b0] sm:$0xff]
      %v689 = vld [vmem:[%s1 + $0x3b8] sm:$0xff]
      %v690 = vld [vmem:[%s1 + $0x3c0] sm:$0xff]
      %v691 = vld [vmem:[%s1 + $0x3c8] sm:$0xff]
      %v692 = vld [vmem:[%s1 + $0x3d0] sm:$0xff]
      %v693 = vld [vmem:[%s1 + $0x3d8] sm:$0xff]
      %v694 = vld [vmem:[%s1 + $0x3e0] sm:$0xff]
      %v695 = vld [vmem:[%s1 + $0x3e8] sm:$0xff]
      %v696 = vld [vmem:[%s1 + $0x3f0] sm:$0xff]
      %v697 = vld [vmem:[%s1 + $0x3f8] sm:$0xff]
      %v698 = vld [vmem:[%s1 + $0x400] sm:$0xff]
      %v699 = vld [vmem:[%s1 + $0x408] sm:$0xff]
      %v700 = vld [vmem:[%s1 + $0x410] sm:$0xff]
      %v701 = vld [vmem:[%s1 + $0x418] sm:$0xff]
      %v702 = vld [vmem:[%s1 + $0x420] sm:$0xff]
      %v703 = vld [vmem:[%s1 + $0x428] sm:$0xff]
      %v704 = vld [vmem:[%s1 + $0x430] sm:$0xff]
      %v705 = vld [vmem:[%s1 + $0x438] sm:$0xff]
      %v706 = vld [vmem:[%s1 + $0x440] sm:$0xff]
      %v707 = vld [vmem:[%s1 + $0x448] sm:$0xff]
      %v708 = vld [vmem:[%s1 + $0x450] sm:$0xff]
      %v709 = vld [vmem:[%s1 + $0x458] sm:$0xff]
      %v710 = vld [vmem:[%s1 + $0x460] sm:$0xff]
      %v711 = vld [vmem:[%s1 + $0x468] sm:$0xff]
      %v712 = vld [vmem:[%s1 + $0x470] sm:$0xff]
      %v713 = vld [vmem:[%s1 + $0x478] sm:$0xff]
      %714 = vmatprep.subr.mxu0 0.0
      %715 = vmatpush1.msra.mxu0 %v570
      %716 = vmatprep.subr.mxu0 0.0
      %717 = vmatpush1.msra.mxu0 %v571
      %718 = vmatprep.subr.mxu0 0.0
      %719 = vmatpush1.msra.mxu0 %v572
      %720 = vmatprep.subr.mxu0 0.0
      %721 = vmatpush1.msra.mxu0 %v573
      %722 = vmatprep.subr.mxu0 0.0
      %723 = vmatpush1.msra.mxu0 %v574
      %724 = vmatprep.subr.mxu0 0.0
      %725 = vmatpush1.msra.mxu0 %v575
      %726 = vmatprep.subr.mxu0 0.0
      %727 = vmatpush1.msra.mxu0 %v576
      %728 = vmatprep.subr.mxu0 0.0
      %729 = vmatpush1.msra.mxu0 %v577
      %730 = vmatprep.subr.mxu0 0.0
      %731 = vmatpush1.msra.mxu0 %v578
      %732 = vmatprep.subr.mxu0 0.0
      %733 = vmatpush1.msra.mxu0 %v579
      %734 = vmatprep.subr.mxu0 0.0
      %735 = vmatpush1.msra.mxu0 %v580
      %736 = vmatprep.subr.mxu0 0.0
      %737 = vmatpush1.msra.mxu0 %v581
      %738 = vmatprep.subr.mxu0 0.0
      %739 = vmatpush1.msra.mxu0 %v582
      %740 = vmatprep.subr.mxu0 0.0
      %741 = vmatpush1.msra.mxu0 %v583
      %742 = vmatprep.subr.mxu0 0.0
      %743 = vmatpush1.msra.mxu0 %v584
      %744 = vmatprep.subr.mxu0 0.0
      %745 = vmatpush1.msra.mxu0 %v585
      %746 = vmatprep.subr.mxu0 0.0
      %747 = vmatpush1.msra.mxu0 %v586
      %748 = vmatprep.subr.mxu0 0.0
      %749 = vmatpush1.msra.mxu0 %v587
      %750 = vmatprep.subr.mxu0 0.0
      %751 = vmatpush1.msra.mxu0 %v588
      %752 = vmatprep.subr.mxu0 0.0
      %753 = vmatpush1.msra.mxu0 %v589
      %754 = vmatprep.subr.mxu0 0.0
      %755 = vmatpush1.msra.mxu0 %v590
      %756 = vmatprep.subr.mxu0 0.0
      %757 = vmatpush1.msra.mxu0 %v591
      %758 = vmatprep.subr.mxu0 0.0
      %759 = vmatpush1.msra.mxu0 %v592
      %760 = vmatprep.subr.mxu0 0.0
      %761 = vmatpush1.msra.mxu0 %v593
      %762 = vmatprep.subr.mxu0 0.0
      %763 = vmatpush1.msra.mxu0 %v594
      %764 = vmatprep.subr.mxu0 0.0
      %765 = vmatpush1.msra.mxu0 %v595
      %766 = vmatprep.subr.mxu0 0.0
      %767 = vmatpush1.msra.mxu0 %v596
      %768 = vmatprep.subr.mxu0 0.0
      %769 = vmatpush1.msra.mxu0 %v597
      %770 = vmatprep.subr.mxu0 0.0
      %771 = vmatpush1.msra.mxu0 %v598
      %772 = vmatprep.subr.mxu0 0.0
      %773 = vmatpush1.msra.mxu0 %v599
      %774 = vmatprep.subr.mxu0 0.0
      %775 = vmatpush1.msra.mxu0 %v600
      %776 = vmatprep.subr.mxu0 0.0
      %777 = vmatpush1.msra.mxu0 %v601
      %778 = vmatprep.mubr.f32.mxu0 %v350
      %779 = vmatmul.mubr.f32.gmra.mrb[0].mxu0 %v314
      %v780 = vpop.f32.mrb[0].mxu0
      %v781 = vadd.f32 0.0, %v780
      %v782 = vpop.f32.mrb[0].mxu0
      %783 = vmatprep.mubr.f32.mxu0 %v351
      %784 = vmatmul.mubr.f32.gmra.mrb[0].mxu0 %v315
      %v785 = vpop.f32.mrb[0].mxu0
      %v786 = vadd.f32 0.0, %v785
      %v787 = vpop.f32.mrb[0].mxu0
      %788 = vmatprep.mubr.f32.mxu0 %v352
      %789 = vmatmul.mubr.f32.gmra.mrb[0].mxu0 %v316
      %v790 = vpop.f32.mrb[0].mxu0
      %v791 = vadd.f32 0.0, %v790
      %v792 = vpop.f32.mrb[0].mxu0
      %793 = vmatprep.mubr.f32.mxu0 %v353
      %794 = vmatmul.mubr.f32.gmra.mrb[0].mxu0 %v317
      %v795 = vpop.f32.mrb[0].mxu0
      %v796 = vadd.f32 0.0, %v795
      %v797 = vpop.f32.mrb[0].mxu0
      %798 = vmatprep.mubr.f32.mxu0 %v354
      %799 = vmatmul.mubr.f32.gmra.mrb[0].mxu0 %v318
      %v800 = vpop.f32.mrb[0].mxu0
      %v801 = vadd.f32 0.0, %v800
      %v802 = vpop.f32.mrb[0].mxu0
      %803 = vmatprep.mubr.f32.mxu0 %v355
      %804 = vmatmul.mubr.f32.gmra.mrb[0].mxu0 %v319
      %v805 = vpop.f32.mrb[0].mxu0
      %v806 = vadd.f32 0.0, %v805
      %v807 = vpop.f32.mrb[0].mxu0
      %808 = vmatprep.mubr.f32.mxu0 %v356
      %809 = vmatmul.mubr.f32.gmra.mrb[0].mxu0 %v320
      %v810 = vpop.f32.mrb[0].mxu0
      %v811 = vadd.f32 0.0, %v810
      %v812 = vpop.f32.mrb[0].mxu0
      %813 = vmatprep.mubr.f32.mxu0 %v357
      %814 = vmatmul.mubr.f32.gmra.mrb[0].mxu0 %v321
      %v815 = vpop.f32.mrb[0].mxu0
      %v816 = vadd.f32 0.0, %v815
      %v817 = vpop.f32.mrb[0].mxu0
      %818 = vmatprep.mubr.f32.mxu0 %v358
      %819 = vmatmul.mubr.f32.gmra.mrb[0].mxu0 %v322
      %v820 = vpop.f32.mrb[0].mxu0
      %v821 = vadd.f32 0.0, %v820
      %v822 = vpop.f32.mrb[0].mxu0
      %823 = vmatprep.mubr.f32.mxu0 %v359
      %824 = vmatmul.mubr.f32.gmra.mrb[0].mxu0 %v323
      %v825 = vpop.f32.mrb[0].mxu0
      %v826 = vadd.f32 0.0, %v825
      %v827 = vpop.f32.mrb[0].mxu0
      %828 = vmatprep.mubr.f32.mxu0 %v360
      %829 = vmatmul.mubr.f32.gmra.mrb[0].mxu0 %v324
      %v830 = vpop.f32.mrb[0].mxu0
      %v831 = vadd.f32 0.0, %v830
      %v832 = vpop.f32.mrb[0].mxu0
      %833 = vmatprep.mubr.f32.mxu0 %v361
      %834 = vmatmul.mubr.f32.gmra.mrb[0].mxu0 %v325
      %v835 = vpop.f32.mrb[0].mxu0
      %v836 = vadd.f32 0.0, %v835
      %v837 = vpop.f32.mrb[0].mxu0
      %838 = vmatprep.mubr.f32.mxu0 %v362
      %839 = vmatmul.mubr.f32.gmra.mrb[0].mxu0 %v326
      %v840 = vpop.f32.mrb[0].mxu0
      %v841 = vadd.f32 0.0, %v840
      %v842 = vpop.f32.mrb[0].mxu0
      %843 = vmatprep.mubr.f32.mxu0 %v363
      %844 = vmatmul.mubr.f32.gmra.mrb[0].mxu0 %v327
      %v845 = vpop.f32.mrb[0].mxu0
      %v846 = vadd.f32 0.0, %v845
      %v847 = vpop.f32.mrb[0].mxu0
      %848 = vmatprep.mubr.f32.mxu0 %v364
      %849 = vmatmul.mubr.f32.gmra.mrb[0].mxu0 %v328
      %v850 = vpop.f32.mrb[0].mxu0
      %v851 = vadd.f32 0.0, %v850
      %v852 = vpop.f32.mrb[0].mxu0
      %853 = vmatprep.mubr.f32.mxu0 %v365
      %854 = vmatmul.mubr.f32.gmra.mrb[0].mxu0 %v329
      %v855 = vpop.f32.mrb[0].mxu0
      %v856 = vadd.f32 0.0, %v855
      %v857 = vpop.f32.mrb[0].mxu0
      %858 = vmatprep.mubr.f32.mxu0 %v366
      %859 = vmatmul.mubr.f32.gmra.mrb[0].mxu0 %v330
      %v860 = vpop.f32.mrb[0].mxu0
      %v861 = vadd.f32 0.0, %v860
      %v862 = vpop.f32.mrb[0].mxu0
      %863 = vmatprep.mubr.f32.mxu0 %v367
      %864 = vmatmul.mubr.f32.gmra.mrb[0].mxu0 %v331
      %v865 = vpop.f32.mrb[0].mxu0
      %v866 = vadd.f32 0.0, %v865
      %v867 = vpop.f32.mrb[0].mxu0
      %868 = vmatprep.mubr.f32.mxu0 %v368
      %869 = vmatmul.mubr.f32.gmra.mrb[0].mxu0 %v332
      %v870 = vpop.f32.mrb[0].mxu0
      %v871 = vadd.f32 0.0, %v870
      %v872 = vpop.f32.mrb[0].mxu0
      %873 = vmatprep.mubr.f32.mxu0 %v369
      %874 = vmatmul.mubr.f32.gmra.mrb[0].mxu0 %v333
      %v875 = vpop.f32.mrb[0].mxu0
      %v876 = vadd.f32 0.0, %v875
      %v877 = vpop.f32.mrb[0].mxu0
      %878 = vmatprep.mubr.f32.mxu0 %v370
      %879 = vmatmul.mubr.f32.gmra.mrb[0].mxu0 %v334
      %v880 = vpop.f32.mrb[0].mxu0
      %v881 = vadd.f32 0.0, %v880
      %v882 = vpop.f32.mrb[0].mxu0
      %883 = vmatprep.mubr.f32.mxu0 %v371
      %884 = vmatmul.mubr.f32.gmra.mrb[0].mxu0 %v335
      %v885 = vpop.f32.mrb[0].mxu0
      %v886 = vadd.f32 0.0, %v885
      %v887 = vpop.f32.mrb[0].mxu0
      %888 = vmatprep.mubr.f32.mxu0 %v372
      %889 = vmatmul.mubr.f32.gmra.mrb[0].mxu0 %v336
      %v890 = vpop.f32.mrb[0].mxu0
      %v891 = vadd.f32 0.0, %v890
      %v892 = vpop.f32.mrb[0].mxu0
      %893 = vmatprep.mubr.f32.mxu0 %v373
      %894 = vmatmul.mubr.f32.gmra.mrb[0].mxu0 %v337
      %v895 = vpop.f32.mrb[0].mxu0
      %v896 = vadd.f32 0.0, %v895
      %v897 = vpop.f32.mrb[0].mxu0
      %898 = vmatprep.mubr.f32.mxu0 %v374
      %899 = vmatmul.mubr.f32.gmra.mrb[0].mxu0 %v338
      %v900 = vpop.f32.mrb[0].mxu0
      %v901 = vadd.f32 0.0, %v900
      %v902 = vpop.f32.mrb[0].mxu0
      %903 = vmatprep.mubr.f32.mxu0 %v375
      %904 = vmatmul.mubr.f32.gmra.mrb[0].mxu0 %v339
      %v905 = vpop.f32.mrb[0].mxu0
      %v906 = vadd.f32 0.0, %v905
      %v907 = vpop.f32.mrb[0].mxu0
      %908 = vmatprep.mubr.f32.mxu0 %v376
      %909 = vmatmul.mubr.f32.gmra.mrb[0].mxu0 %v340
      %v910 = vpop.f32.mrb[0].mxu0
      %v911 = vadd.f32 0.0, %v910
      %v912 = vpop.f32.mrb[0].mxu0
      %913 = vmatprep.mubr.f32.mxu0 %v377
      %914 = vmatmul.mubr.f32.gmra.mrb[0].mxu0 %v341
      %v915 = vpop.f32.mrb[0].mxu0
      %v916 = vadd.f32 0.0, %v915
      %v917 = vpop.f32.mrb[0].mxu0
      %918 = vmatprep.mubr.f32.mxu0 %v378
      %919 = vmatmul.mubr.f32.gmra.mrb[0].mxu0 %v342
      %v920 = vpop.f32.mrb[0].mxu0
      %v921 = vadd.f32 0.0, %v920
      %v922 = vpop.f32.mrb[0].mxu0
      %923 = vmatprep.mubr.f32.mxu0 %v379
      %924 = vmatmul.mubr.f32.gmra.mrb[0].mxu0 %v343
      %v925 = vpop.f32.mrb[0].mxu0
      %v926 = vadd.f32 0.0, %v925
      %v927 = vpop.f32.mrb[0].mxu0
      %928 = vmatprep.mubr.f32.mxu0 %v380
      %929 = vmatmul.mubr.f32.gmra.mrb[0].mxu0 %v344
      %v930 = vpop.f32.mrb[0].mxu0
      %v931 = vadd.f32 0.0, %v930
      %v932 = vpop.f32.mrb[0].mxu0
      %933 = vmatprep.mubr.f32.mxu0 %v381
      %934 = vmatmul.mubr.f32.gmra.mrb[0].mxu0 %v345
      %v935 = vpop.f32.mrb[0].mxu0
      %v936 = vadd.f32 0.0, %v935
      %v937 = vpop.f32.mrb[0].mxu0
      %938 = vmatprep.mubr.f32.mxu0 %v382
      %939 = vmatmul.mubr.f32.gmra.mrb[0].mxu0 %v346
      %v940 = vpop.f32.mrb[0].mxu0
      %v941 = vadd.f32 0.0, %v940
      %v942 = vpop.f32.mrb[0].mxu0
      %943 = vmatprep.mubr.f32.mxu0 %v383
      %944 = vmatmul.mubr.f32.gmra.mrb[0].mxu0 %v347
      %v945 = vpop.f32.mrb[0].mxu0
      %v946 = vadd.f32 0.0, %v945
      %v947 = vpop.f32.mrb[0].mxu0
      %948 = vmatprep.mubr.f32.mxu0 %v384
      %949 = vmatmul.mubr.f32.gmra.mrb[0].mxu0 %v348
      %v950 = vpop.f32.mrb[0].mxu0
      %v951 = vadd.f32 0.0, %v950
      %v952 = vpop.f32.mrb[0].mxu0
      %953 = vmatprep.mubr.f32.mxu0 %v385
      %954 = vmatmul.mubr.f32.gmra.mrb[0].mxu0 %v349
      %v955 = vpop.f32.mrb[0].mxu0
      %v956 = vadd.f32 0.0, %v955
      %v957 = vpop.f32.mrb[0].mxu0
      %958 = vdwg.mxu0
      %959 = vmatprep.subr.mxu0 0.0
      %960 = vmatpush1.msra.mxu0 %v602
      %961 = vmatprep.subr.mxu0 0.0
      %962 = vmatpush1.msra.mxu0 %v603
      %963 = vmatprep.subr.mxu0 0.0
      %964 = vmatpush1.msra.mxu0 %v604
      %965 = vmatprep.subr.mxu0 0.0
      %966 = vmatpush1.msra.mxu0 %v605
      %967 = vmatprep.subr.mxu0 0.0
      %968 = vmatpush1.msra.mxu0 %v606
      %969 = vmatprep.subr.mxu0 0.0
      %970 = vmatpush1.msra.mxu0 %v607
      %971 = vmatprep.subr.mxu0 0.0
      %972 = vmatpush1.msra.mxu0 %v608
      %973 = vmatprep.subr.mxu0 0.0
      %974 = vmatpush1.msra.mxu0 %v609
      %975 = vmatprep.subr.mxu0 0.0
      %976 = vmatpush1.msra.mxu0 %v610
      %977 = vmatprep.subr.mxu0 0.0
      %978 = vmatpush1.msra.mxu0 %v611
      %979 = vmatprep.subr.mxu0 0.0
      %980 = vmatpush1.msra.mxu0 %v612
      %981 = vmatprep.subr.mxu0 0.0
      %982 = vmatpush1.msra.mxu0 %v613
      %983 = vmatprep.subr.mxu0 0.0
      %984 = vmatpush1.msra.mxu0 %v614
      %985 = vmatprep.subr.mxu0 0.0
      %986 = vmatpush1.msra.mxu0 %v615
      %987 = vmatprep.subr.mxu0 0.0
      %988 = vmatpush1.msra.mxu0 %v616
      %989 = vmatprep.subr.mxu0 0.0
      %990 = vmatpush1.msra.mxu0 %v617
      %991 = vmatprep.subr.mxu0 0.0
      %992 = vmatpush1.msra.mxu0 %v618
      %993 = vmatprep.subr.mxu0 0.0
      %994 = vmatpush1.msra.mxu0 %v619
      %995 = vmatprep.subr.mxu0 0.0
      %996 = vmatpush1.msra.mxu0 %v620
      %997 = vmatprep.subr.mxu0 0.0
      %998 = vmatpush1.msra.mxu0 %v621
      %999 = vmatprep.subr.mxu0 0.0
      %1000 = vmatpush1.msra.mxu0 %v622
      %1001 = vmatprep.subr.mxu0 0.0
      %1002 = vmatpush1.msra.mxu0 %v623
      %1003 = vmatprep.subr.mxu0 0.0
      %1004 = vmatpush1.msra.mxu0 %v624
      %1005 = vmatprep.subr.mxu0 0.0
      %1006 = vmatpush1.msra.mxu0 %v625
      %1007 = vmatprep.subr.mxu0 0.0
      %1008 = vmatpush1.msra.mxu0 %v626
      %1009 = vmatprep.subr.mxu0 0.0
      %1010 = vmatpush1.msra.mxu0 %v627
      %1011 = vmatprep.subr.mxu0 0.0
      %1012 = vmatpush1.msra.mxu0 %v628
      %1013 = vmatprep.subr.mxu0 0.0
      %1014 = vmatpush1.msra.mxu0 %v629
      %1015 = vmatprep.subr.mxu0 0.0
      %1016 = vmatpush1.msra.mxu0 %v630
      %1017 = vmatprep.subr.mxu0 0.0
      %1018 = vmatpush1.msra.mxu0 %v631
      %1019 = vmatprep.subr.mxu0 0.0
      %1020 = vmatpush1.msra.mxu0 %v632
      %1021 = vmatprep.subr.mxu0 0.0
      %1022 = vmatpush1.msra.mxu0 %v633
      %1023 = vmatprep.mubr.f32.mxu0 %v388
      %1024 = vmatmul.mubr.f32.gmra.mrb[0].mxu0 %v386
      %v1025 = vpop.f32.mrb[0].mxu0
      %v1026 = vadd.f32 %v781, %v1025
      %v1027 = vpop.f32.mrb[0].mxu0
      %1028 = vmatprep.mubr.f32.mxu0 %v389
      %1029 = vmatmul.mubr.f32.gmra.mrb[0].mxu0 %v387
      %v1030 = vpop.f32.mrb[0].mxu0
      %v1031 = vadd.f32 %v786, %v1030
      %v1032 = vpop.f32.mrb[0].mxu0
      %1033 = vmatprep.mubr.f32.mxu0 %v390
      %1034 = vmatmul.mubr.f32.gmra.mrb[0].mxu0 %v388
      %v1035 = vpop.f32.mrb[0].mxu0
      %v1036 = vadd.f32 %v791, %v1035
      %v1037 = vpop.f32.mrb[0].mxu0
      %1038 = vmatprep.mubr.f32.mxu0 %v391
      %1039 = vmatmul.mubr.f32.gmra.mrb[0].mxu0 %v389
      %v1040 = vpop.f32.mrb[0].mxu0
      %v1041 = vadd.f32 %v796, %v1040
      %v1042 = vpop.f32.mrb[0].mxu0
      %1043 = vmatprep.mubr.f32.mxu0 %v392
      %1044 = vmatmul.mubr.f32.gmra.mrb[0].mxu0 %v390
      %v1045 = vpop.f32.mrb[0].mxu0
      %v1046 = vadd.f32 %v801, %v1045
      %v1047 = vpop.f32.mrb[0].mxu0
      %1048 = vmatprep.mubr.f32.mxu0 %v393
      %1049 = vmatmul.mubr.f32.gmra.mrb[0].mxu0 %v391
      %v1050 = vpop.f32.mrb[0].mxu0
      %v1051 = vadd.f32 %v806, %v1050
      %v1052 = vpop.f32.mrb[0].mxu0
      %1053 = vmatprep.mubr.f32.mxu0 %v394
      %1054 = vmatmul.mubr.f32.gmra.mrb[0].mxu0 %v392
      %v1055 = vpop.f32.mrb[0].mxu0
      %v1056 = vadd.f32 %v811, %v1055
      %v1057 = vpop.f32.mrb[0].mxu0
      %1058 = vmatprep.mubr.f32.mxu0 %v395
      %1059 = vmatmul.mubr.f32.gmra.mrb[0].mxu0 %v393
      %v1060 = vpop.f32.mrb[0].mxu0
      %v1061 = vadd.f32 %v816, %v1060
      %v1062 = vpop.f32.mrb[0].mxu0
      %1063 = vmatprep.mubr.f32.mxu0 %v396
      %1064 = vmatmul.mubr.f32.gmra.mrb[0].mxu0 %v394
      %v1065 = vpop.f32.mrb[0].mxu0
      %v1066 = vadd.f32 %v821, %v1065
      %v1067 = vpop.f32.mrb[0].mxu0
      %1068 = vmatprep.mubr.f32.mxu0 %v397
      %1069 = vmatmul.mubr.f32.gmra.mrb[0].mxu0 %v395
      %v1070 = vpop.f32.mrb[0].mxu0
      %v1071 = vadd.f32 %v826, %v1070
      %v1072 = vpop.f32.mrb[0].mxu0
      %1073 = vmatprep.mubr.f32.mxu0 %v398
      %1074 = vmatmul.mubr.f32.gmra.mrb[0].mxu0 %v396
      %v1075 = vpop.f32.mrb[0].mxu0
      %v1076 = vadd.f32 %v831, %v1075
      %v1077 = vpop.f32.mrb[0].mxu0
      %1078 = vmatprep.mubr.f32.mxu0 %v399
      %1079 = vmatmul.mubr.f32.gmra.mrb[0].mxu0 %v397
      %v1080 = vpop.f32.mrb[0].mxu0
      %v1081 = vadd.f32 %v836, %v1080
      %v1082 = vpop.f32.mrb[0].mxu0
      %1083 = vmatprep.mubr.f32.mxu0 %v400
      %1084 = vmatmul.mubr.f32.gmra.mrb[0].mxu0 %v398
      %v1085 = vpop.f32.mrb[0].mxu0
      %v1086 = vadd.f32 %v841, %v1085
      %v1087 = vpop.f32.mrb[0].mxu0
      %1088 = vmatprep.mubr.f32.mxu0 %v401
      %1089 = vmatmul.mubr.f32.gmra.mrb[0].mxu0 %v399
      %v1090 = vpop.f32.mrb[0].mxu0
      %v1091 = vadd.f32 %v846, %v1090
      %v1092 = vpop.f32.mrb[0].mxu0
      %1093 = vmatprep.mubr.f32.mxu0 %v402
      %1094 = vmatmul.mubr.f32.gmra.mrb[0].mxu0 %v400
      %v1095 = vpop.f32.mrb[0].mxu0
      %v1096 = vadd.f32 %v851, %v1095
      %v1097 = vpop.f32.mrb[0].mxu0
      %1098 = vmatprep.mubr.f32.mxu0 %v403
      %1099 = vmatmul.mubr.f32.gmra.mrb[0].mxu0 %v401
      %v1100 = vpop.f32.mrb[0].mxu0
      %v1101 = vadd.f32 %v856, %v1100
      %v1102 = vpop.f32.mrb[0].mxu0
      %1103 = vmatprep.mubr.f32.mxu0 %v404
      %1104 = vmatmul.mubr.f32.gmra.mrb[0].mxu0 %v402
      %v1105 = vpop.f32.mrb[0].mxu0
      %v1106 = vadd.f32 %v861, %v1105
      %v1107 = vpop.f32.mrb[0].mxu0
      %1108 = vmatprep.mubr.f32.mxu0 %v405
      %1109 = vmatmul.mubr.f32.gmra.mrb[0].mxu0 %v403
      %v1110 = vpop.f32.mrb[0].mxu0
      %v1111 = vadd.f32 %v866, %v1110
      %v1112 = vpop.f32.mrb[0].mxu0
      %1113 = vmatprep.mubr.f32.mxu0 %v406
      %1114 = vmatmul.mubr.f32.gmra.mrb[0].mxu0 %v404
      %v1115 = vpop.f32.mrb[0].mxu0
      %v1116 = vadd.f32 %v871, %v1115
      %v1117 = vpop.f32.mrb[0].mxu0
      %1118 = vmatprep.mubr.f32.mxu0 %v407
      %1119 = vmatmul.mubr.f32.gmra.mrb[0].mxu0 %v405
      %v1120 = vpop.f32.mrb[0].mxu0
      %v1121 = vadd.f32 %v876, %v1120
      %v1122 = vpop.f32.mrb[0].mxu0
      %1123 = vmatprep.mubr.f32.mxu0 %v408
      %1124 = vmatmul.mubr.f32.gmra.mrb[0].mxu0 %v406
      %v1125 = vpop.f32.mrb[0].mxu0
      %v1126 = vadd.f32 %v881, %v1125
      %v1127 = vpop.f32.mrb[0].mxu0
      %1128 = vmatprep.mubr.f32.mxu0 %v409
      %1129 = vmatmul.mubr.f32.gmra.mrb[0].mxu0 %v407
      %v1130 = vpop.f32.mrb[0].mxu0
      %v1131 = vadd.f32 %v886, %v1130
      %v1132 = vpop.f32.mrb[0].mxu0
      %1133 = vmatprep.mubr.f32.mxu0 %v410
      %1134 = vmatmul.mubr.f32.gmra.mrb[0].mxu0 %v408
      %v1135 = vpop.f32.mrb[0].mxu0
      %v1136 = vadd.f32 %v891, %v1135
      %v1137 = vpop.f32.mrb[0].mxu0
      %1138 = vmatprep.mubr.f32.mxu0 %v411
      %1139 = vmatmul.mubr.f32.gmra.mrb[0].mxu0 %v409
      %v1140 = vpop.f32.mrb[0].mxu0
      %v1141 = vadd.f32 %v896, %v1140
      %v1142 = vpop.f32.mrb[0].mxu0
      %1143 = vmatprep.mubr.f32.mxu0 %v412
      %1144 = vmatmul.mubr.f32.gmra.mrb[0].mxu0 %v410
      %v1145 = vpop.f32.mrb[0].mxu0
      %v1146 = vadd.f32 %v901, %v1145
      %v1147 = vpop.f32.mrb[0].mxu0
      %1148 = vmatprep.mubr.f32.mxu0 %v413
      %1149 = vmatmul.mubr.f32.gmra.mrb[0].mxu0 %v411
      %v1150 = vpop.f32.mrb[0].mxu0
      %v1151 = vadd.f32 %v906, %v1150
      %v1152 = vpop.f32.mrb[0].mxu0
      %1153 = vmatprep.mubr.f32.mxu0 %v414
      %1154 = vmatmul.mubr.f32.gmra.mrb[0].mxu0 %v412
      %v1155 = vpop.f32.mrb[0].mxu0
      %v1156 = vadd.f32 %v911, %v1155
      %v1157 = vpop.f32.mrb[0].mxu0
      %1158 = vmatprep.mubr.f32.mxu0 %v415
      %1159 = vmatmul.mubr.f32.gmra.mrb[0].mxu0 %v413
      %v1160 = vpop.f32.mrb[0].mxu0
      %v1161 = vadd.f32 %v916, %v1160
      %v1162 = vpop.f32.mrb[0].mxu0
      %1163 = vmatprep.mubr.f32.mxu0 %v416
      %1164 = vmatmul.mubr.f32.gmra.mrb[0].mxu0 %v414
      %v1165 = vpop.f32.mrb[0].mxu0
      %v1166 = vadd.f32 %v921, %v1165
      %v1167 = vpop.f32.mrb[0].mxu0
      %1168 = vmatprep.mubr.f32.mxu0 %v417
      %1169 = vmatmul.mubr.f32.gmra.mrb[0].mxu0 %v415
      %v1170 = vpop.f32.mrb[0].mxu0
      %v1171 = vadd.f32 %v926, %v1170
      %v1172 = vpop.f32.mrb[0].mxu0
      %1173 = vmatprep.mubr.f32.mxu0 %v418
      %1174 = vmatmul.mubr.f32.gmra.mrb[0].mxu0 %v416
      %v1175 = vpop.f32.mrb[0].mxu0
      %v1176 = vadd.f32 %v931, %v1175
      %v1177 = vpop.f32.mrb[0].mxu0
      %1178 = vmatprep.mubr.f32.mxu0 %v419
      %1179 = vmatmul.mubr.f32.gmra.mrb[0].mxu0 %v417
      %v1180 = vpop.f32.mrb[0].mxu0
      %v1181 = vadd.f32 %v936, %v1180
      %v1182 = vpop.f32.mrb[0].mxu0
      %1183 = vmatprep.mubr.f32.mxu0 %v420
      %1184 = vmatmul.mubr.f32.gmra.mrb[0].mxu0 %v418
      %v1185 = vpop.f32.mrb[0].mxu0
      %v1186 = vadd.f32 %v941, %v1185
      %v1187 = vpop.f32.mrb[0].mxu0
      %1188 = vmatprep.mubr.f32.mxu0 %v421
      %1189 = vmatmul.mubr.f32.gmra.mrb[0].mxu0 %v419
      %v1190 = vpop.f32.mrb[0].mxu0
      %v1191 = vadd.f32 %v946, %v1190
      %v1192 = vpop.f32.mrb[0].mxu0
      %1193 = vmatprep.mubr.f32.mxu0 %v422
      %1194 = vmatmul.mubr.f32.gmra.mrb[0].mxu0 %v420
      %v1195 = vpop.f32.mrb[0].mxu0
      %v1196 = vadd.f32 %v951, %v1195
      %v1197 = vpop.f32.mrb[0].mxu0
      %1198 = vmatprep.mubr.f32.mxu0 %v423
      %1199 = vmatmul.mubr.f32.gmra.mrb[0].mxu0 %v421
      %v1200 = vpop.f32.mrb[0].mxu0
      %v1201 = vadd.f32 %v956, %v1200
      %v1202 = vpop.f32.mrb[0].mxu0
      %1203 = vdwg.mxu0
      %1204 = vmatprep.subr.mxu0 0.0
      %1205 = vmatpush1.msra.mxu0 %v634
      %1206 = vmatprep.subr.mxu0 0.0
      %1207 = vmatpush1.msra.mxu0 %v635
      %1208 = vmatprep.subr.mxu0 0.0
      %1209 = vmatpush1.msra.mxu0 %v636
      %1210 = vmatprep.subr.mxu0 0.0
      %1211 = vmatpush1.msra.mxu0 %v637
      %1212 = vmatprep.subr.mxu0 0.0
      %1213 = vmatpush1.msra.mxu0 %v638
      %1214 = vmatprep.subr.mxu0 0.0
      %1215 = vmatpush1.msra.mxu0 %v639
      %1216 = vmatprep.subr.mxu0 0.0
      %1217 = vmatpush1.msra.mxu0 %v640
      %1218 = vmatprep.subr.mxu0 0.0
      %1219 = vmatpush1.msra.mxu0 %v641
      %1220 = vmatprep.subr.mxu0 0.0
      %1221 = vmatpush1.msra.mxu0 %v642
      %1222 = vmatprep.subr.mxu0 0.0
      %1223 = vmatpush1.msra.mxu0 %v643
      %1224 = vmatprep.subr.mxu0 0.0
      %1225 = vmatpush1.msra.mxu0 %v644
      %1226 = vmatprep.subr.mxu0 0.0
      %1227 = vmatpush1.msra.mxu0 %v645
      %1228 = vmatprep.subr.mxu0 0.0
      %1229 = vmatpush1.msra.mxu0 %v646
      %1230 = vmatprep.subr.mxu0 0.0
      %1231 = vmatpush1.msra.mxu0 %v647
      %1232 = vmatprep.subr.mxu0 0.0
      %1233 = vmatpush1.msra.mxu0 %v648
      %1234 = vmatprep.subr.mxu0 0.0
      %1235 = vmatpush1.msra.mxu0 %v649
      %1236 = vmatprep.subr.mxu0 0.0
      %1237 = vmatpush1.msra.mxu0 %v650
      %1238 = vmatprep.subr.mxu0 0.0
      %1239 = vmatpush1.msra.mxu0 %v651
      %1240 = vmatprep.subr.mxu0 0.0
      %1241 = vmatpush1.msra.mxu0 %v652
      %1242 = vmatprep.subr.mxu0 0.0
      %1243 = vmatpush1.msra.mxu0 %v653
      %1244 = vmatprep.subr.mxu0 0.0
      %1245 = vmatpush1.msra.mxu0 %v654
      %1246 = vmatprep.subr.mxu0 0.0
      %1247 = vmatpush1.msra.mxu0 %v655
      %1248 = vmatprep.subr.mxu0 0.0
      %1249 = vmatpush1.msra.mxu0 %v656
      %1250 = vmatprep.subr.mxu0 0.0
      %1251 = vmatpush1.msra.mxu0 %v657
      %1252 = vmatprep.subr.mxu0 0.0
      %1253 = vmatpush1.msra.mxu0 %v658
      %1254 = vmatprep.subr.mxu0 0.0
      %1255 = vmatpush1.msra.mxu0 %v659
      %1256 = vmatprep.subr.mxu0 0.0
      %1257 = vmatpush1.msra.mxu0 %v660
      %1258 = vmatprep.subr.mxu0 0.0
      %1259 = vmatpush1.msra.mxu0 %v661
      %1260 = vmatprep.subr.mxu0 0.0
      %1261 = vmatpush1.msra.mxu0 %v662
      %1262 = vmatprep.subr.mxu0 0.0
      %1263 = vmatpush1.msra.mxu0 %v663
      %1264 = vmatprep.subr.mxu0 0.0
      %1265 = vmatpush1.msra.mxu0 %v664
      %1266 = vmatprep.subr.mxu0 0.0
      %1267 = vmatpush1.msra.mxu0 %v665
      %1268 = vmatprep.mubr.f32.mxu0 %v460
      %1269 = vmatmul.mubr.f32.gmra.mrb[0].mxu0 %v424
      %v1270 = vpop.f32.mrb[0].mxu0
      %v1271 = vadd.f32 %v1026, %v1270
      %v1272 = vpop.f32.mrb[0].mxu0
      %1273 = vmatprep.mubr.f32.mxu0 %v461
      %1274 = vmatmul.mubr.f32.gmra.mrb[0].mxu0 %v425
      %v1275 = vpop.f32.mrb[0].mxu0
      %v1276 = vadd.f32 %v1031, %v1275
      %v1277 = vpop.f32.mrb[0].mxu0
      %1278 = vmatprep.mubr.f32.mxu0 %v462
      %1279 = vmatmul.mubr.f32.gmra.mrb[0].mxu0 %v426
      %v1280 = vpop.f32.mrb[0].mxu0
      %v1281 = vadd.f32 %v1036, %v1280
      %v1282 = vpop.f32.mrb[0].mxu0
      %1283 = vmatprep.mubr.f32.mxu0 %v463
      %1284 = vmatmul.mubr.f32.gmra.mrb[0].mxu0 %v427
      %v1285 = vpop.f32.mrb[0].mxu0
      %v1286 = vadd.f32 %v1041, %v1285
      %v1287 = vpop.f32.mrb[0].mxu0
      %1288 = vmatprep.mubr.f32.mxu0 %v464
      %1289 = vmatmul.mubr.f32.gmra.mrb[0].mxu0 %v428
      %v1290 = vpop.f32.mrb[0].mxu0
      %v1291 = vadd.f32 %v1046, %v1290
      %v1292 = vpop.f32.mrb[0].mxu0
      %1293 = vmatprep.mubr.f32.mxu0 %v465
      %1294 = vmatmul.mubr.f32.gmra.mrb[0].mxu0 %v429
      %v1295 = vpop.f32.mrb[0].mxu0
      %v1296 = vadd.f32 %v1051, %v1295
      %v1297 = vpop.f32.mrb[0].mxu0
      %1298 = vmatprep.mubr.f32.mxu0 %v466
      %1299 = vmatmul.mubr.f32.gmra.mrb[0].mxu0 %v430
      %v1300 = vpop.f32.mrb[0].mxu0
      %v1301 = vadd.f32 %v1056, %v1300
      %v1302 = vpop.f32.mrb[0].mxu0
      %1303 = vmatprep.mubr.f32.mxu0 %v467
      %1304 = vmatmul.mubr.f32.gmra.mrb[0].mxu0 %v431
      %v1305 = vpop.f32.mrb[0].mxu0
      %v1306 = vadd.f32 %v1061, %v1305
      %v1307 = vpop.f32.mrb[0].mxu0
      %1308 = vmatprep.mubr.f32.mxu0 %v468
      %1309 = vmatmul.mubr.f32.gmra.mrb[0].mxu0 %v432
      %v1310 = vpop.f32.mrb[0].mxu0
      %v1311 = vadd.f32 %v1066, %v1310
      %v1312 = vpop.f32.mrb[0].mxu0
      %1313 = vmatprep.mubr.f32.mxu0 %v469
      %1314 = vmatmul.mubr.f32.gmra.mrb[0].mxu0 %v433
      %v1315 = vpop.f32.mrb[0].mxu0
      %v1316 = vadd.f32 %v1071, %v1315
      %v1317 = vpop.f32.mrb[0].mxu0
      %1318 = vmatprep.mubr.f32.mxu0 %v470
      %1319 = vmatmul.mubr.f32.gmra.mrb[0].mxu0 %v434
      %v1320 = vpop.f32.mrb[0].mxu0
      %v1321 = vadd.f32 %v1076, %v1320
      %v1322 = vpop.f32.mrb[0].mxu0
      %1323 = vmatprep.mubr.f32.mxu0 %v471
      %1324 = vmatmul.mubr.f32.gmra.mrb[0].mxu0 %v435
      %v1325 = vpop.f32.mrb[0].mxu0
      %v1326 = vadd.f32 %v1081, %v1325
      %v1327 = vpop.f32.mrb[0].mxu0
      %1328 = vmatprep.mubr.f32.mxu0 %v472
      %1329 = vmatmul.mubr.f32.gmra.mrb[0].mxu0 %v436
      %v1330 = vpop.f32.mrb[0].mxu0
      %v1331 = vadd.f32 %v1086, %v1330
      %v1332 = vpop.f32.mrb[0].mxu0
      %1333 = vmatprep.mubr.f32.mxu0 %v473
      %1334 = vmatmul.mubr.f32.gmra.mrb[0].mxu0 %v437
      %v1335 = vpop.f32.mrb[0].mxu0
      %v1336 = vadd.f32 %v1091, %v1335
      %v1337 = vpop.f32.mrb[0].mxu0
      %1338 = vmatprep.mubr.f32.mxu0 %v474
      %1339 = vmatmul.mubr.f32.gmra.mrb[0].mxu0 %v438
      %v1340 = vpop.f32.mrb[0].mxu0
      %v1341 = vadd.f32 %v1096, %v1340
      %v1342 = vpop.f32.mrb[0].mxu0
      %1343 = vmatprep.mubr.f32.mxu0 %v475
      %1344 = vmatmul.mubr.f32.gmra.mrb[0].mxu0 %v439
      %v1345 = vpop.f32.mrb[0].mxu0
      %v1346 = vadd.f32 %v1101, %v1345
      %v1347 = vpop.f32.mrb[0].mxu0
      %1348 = vmatprep.mubr.f32.mxu0 %v476
      %1349 = vmatmul.mubr.f32.gmra.mrb[0].mxu0 %v440
      %v1350 = vpop.f32.mrb[0].mxu0
      %v1351 = vadd.f32 %v1106, %v1350
      %v1352 = vpop.f32.mrb[0].mxu0
      %1353 = vmatprep.mubr.f32.mxu0 %v477
      %1354 = vmatmul.mubr.f32.gmra.mrb[0].mxu0 %v441
      %v1355 = vpop.f32.mrb[0].mxu0
      %v1356 = vadd.f32 %v1111, %v1355
      %v1357 = vpop.f32.mrb[0].mxu0
      %1358 = vmatprep.mubr.f32.mxu0 %v478
      %1359 = vmatmul.mubr.f32.gmra.mrb[0].mxu0 %v442
      %v1360 = vpop.f32.mrb[0].mxu0
      %v1361 = vadd.f32 %v1116, %v1360
      %v1362 = vpop.f32.mrb[0].mxu0
      %1363 = vmatprep.mubr.f32.mxu0 %v479
      %1364 = vmatmul.mubr.f32.gmra.mrb[0].mxu0 %v443
      %v1365 = vpop.f32.mrb[0].mxu0
      %v1366 = vadd.f32 %v1121, %v1365
      %v1367 = vpop.f32.mrb[0].mxu0
      %1368 = vmatprep.mubr.f32.mxu0 %v480
      %1369 = vmatmul.mubr.f32.gmra.mrb[0].mxu0 %v444
      %v1370 = vpop.f32.mrb[0].mxu0
      %v1371 = vadd.f32 %v1126, %v1370
      %v1372 = vpop.f32.mrb[0].mxu0
      %1373 = vmatprep.mubr.f32.mxu0 %v481
      %1374 = vmatmul.mubr.f32.gmra.mrb[0].mxu0 %v445
      %v1375 = vpop.f32.mrb[0].mxu0
      %v1376 = vadd.f32 %v1131, %v1375
      %v1377 = vpop.f32.mrb[0].mxu0
      %1378 = vmatprep.mubr.f32.mxu0 %v482
      %1379 = vmatmul.mubr.f32.gmra.mrb[0].mxu0 %v446
      %v1380 = vpop.f32.mrb[0].mxu0
      %v1381 = vadd.f32 %v1136, %v1380
      %v1382 = vpop.f32.mrb[0].mxu0
      %1383 = vmatprep.mubr.f32.mxu0 %v483
      %1384 = vmatmul.mubr.f32.gmra.mrb[0].mxu0 %v447
      %v1385 = vpop.f32.mrb[0].mxu0
      %v1386 = vadd.f32 %v1141, %v1385
      %v1387 = vpop.f32.mrb[0].mxu0
      %1388 = vmatprep.mubr.f32.mxu0 %v484
      %1389 = vmatmul.mubr.f32.gmra.mrb[0].mxu0 %v448
      %v1390 = vpop.f32.mrb[0].mxu0
      %v1391 = vadd.f32 %v1146, %v1390
      %v1392 = vpop.f32.mrb[0].mxu0
      %1393 = vmatprep.mubr.f32.mxu0 %v485
      %1394 = vmatmul.mubr.f32.gmra.mrb[0].mxu0 %v449
      %v1395 = vpop.f32.mrb[0].mxu0
      %v1396 = vadd.f32 %v1151, %v1395
      %v1397 = vpop.f32.mrb[0].mxu0
      %1398 = vmatprep.mubr.f32.mxu0 %v486
      %1399 = vmatmul.mubr.f32.gmra.mrb[0].mxu0 %v450
      %v1400 = vpop.f32.mrb[0].mxu0
      %v1401 = vadd.f32 %v1156, %v1400
      %v1402 = vpop.f32.mrb[0].mxu0
      %1403 = vmatprep.mubr.f32.mxu0 %v487
      %1404 = vmatmul.mubr.f32.gmra.mrb[0].mxu0 %v451
      %v1405 = vpop.f32.mrb[0].mxu0
      %v1406 = vadd.f32 %v1161, %v1405
      %v1407 = vpop.f32.mrb[0].mxu0
      %1408 = vmatprep.mubr.f32.mxu0 %v488
      %1409 = vmatmul.mubr.f32.gmra.mrb[0].mxu0 %v452
      %v1410 = vpop.f32.mrb[0].mxu0
      %v1411 = vadd.f32 %v1166, %v1410
      %v1412 = vpop.f32.mrb[0].mxu0
      %1413 = vmatprep.mubr.f32.mxu0 %v489
      %1414 = vmatmul.mubr.f32.gmra.mrb[0].mxu0 %v453
      %v1415 = vpop.f32.mrb[0].mxu0
      %v1416 = vadd.f32 %v1171, %v1415
      %v1417 = vpop.f32.mrb[0].mxu0
      %1418 = vmatprep.mubr.f32.mxu0 %v490
      %1419 = vmatmul.mubr.f32.gmra.mrb[0].mxu0 %v454
      %v1420 = vpop.f32.mrb[0].mxu0
      %v1421 = vadd.f32 %v1176, %v1420
      %v1422 = vpop.f32.mrb[0].mxu0
      %1423 = vmatprep.mubr.f32.mxu0 %v491
      %1424 = vmatmul.mubr.f32.gmra.mrb[0].mxu0 %v455
      %v1425 = vpop.f32.mrb[0].mxu0
      %v1426 = vadd.f32 %v1181, %v1425
      %v1427 = vpop.f32.mrb[0].mxu0
      %1428 = vmatprep.mubr.f32.mxu0 %v492
      %1429 = vmatmul.mubr.f32.gmra.mrb[0].mxu0 %v456
      %v1430 = vpop.f32.mrb[0].mxu0
      %v1431 = vadd.f32 %v1186, %v1430
      %v1432 = vpop.f32.mrb[0].mxu0
      %1433 = vmatprep.mubr.f32.mxu0 %v493
      %1434 = vmatmul.mubr.f32.gmra.mrb[0].mxu0 %v457
      %v1435 = vpop.f32.mrb[0].mxu0
      %v1436 = vadd.f32 %v1191, %v1435
      %v1437 = vpop.f32.mrb[0].mxu0
      %1438 = vmatprep.mubr.f32.mxu0 %v494
      %1439 = vmatmul.mubr.f32.gmra.mrb[0].mxu0 %v458
      %v1440 = vpop.f32.mrb[0].mxu0
      %v1441 = vadd.f32 %v1196, %v1440
      %v1442 = vpop.f32.mrb[0].mxu0
      %1443 = vmatprep.mubr.f32.mxu0 %v495
      %1444 = vmatmul.mubr.f32.gmra.mrb[0].mxu0 %v459
      %v1445 = vpop.f32.mrb[0].mxu0
      %v1446 = vadd.f32 %v1201, %v1445
      %v1447 = vpop.f32.mrb[0].mxu0
      %1448 = vdwg.mxu0
      %1449 = vmatprep.subr.mxu0 0.0
      %1450 = vmatpush1.msra.mxu0 %v666
      %1451 = vmatprep.subr.mxu0 0.0
      %1452 = vmatpush1.msra.mxu0 %v667
      %1453 = vmatprep.subr.mxu0 0.0
      %1454 = vmatpush1.msra.mxu0 %v668
      %1455 = vmatprep.subr.mxu0 0.0
      %1456 = vmatpush1.msra.mxu0 %v669
      %1457 = vmatprep.subr.mxu0 0.0
      %1458 = vmatpush1.msra.mxu0 %v670
      %1459 = vmatprep.subr.mxu0 0.0
      %1460 = vmatpush1.msra.mxu0 %v671
      %1461 = vmatprep.subr.mxu0 0.0
      %1462 = vmatpush1.msra.mxu0 %v672
      %1463 = vmatprep.subr.mxu0 0.0
      %1464 = vmatpush1.msra.mxu0 %v673
      %1465 = vmatprep.subr.mxu0 0.0
      %1466 = vmatpush1.msra.mxu0 %v674
      %1467 = vmatprep.subr.mxu0 0.0
      %1468 = vmatpush1.msra.mxu0 %v675
      %1469 = vmatprep.subr.mxu0 0.0
      %1470 = vmatpush1.msra.mxu0 %v676
      %1471 = vmatprep.subr.mxu0 0.0
      %1472 = vmatpush1.msra.mxu0 %v677
      %1473 = vmatprep.subr.mxu0 0.0
      %1474 = vmatpush1.msra.mxu0 %v678
      %1475 = vmatprep.subr.mxu0 0.0
      %1476 = vmatpush1.msra.mxu0 %v679
      %1477 = vmatprep.subr.mxu0 0.0
      %1478 = vmatpush1.msra.mxu0 %v680
      %1479 = vmatprep.subr.mxu0 0.0
      %1480 = vmatpush1.msra.mxu0 %v681
      %1481 = vmatprep.subr.mxu0 0.0
      %1482 = vmatpush1.msra.mxu0 %v682
      %1483 = vmatprep.subr.mxu0 0.0
      %1484 = vmatpush1.msra.mxu0 %v683
      %1485 = vmatprep.subr.mxu0 0.0
      %1486 = vmatpush1.msra.mxu0 %v684
      %1487 = vmatprep.subr.mxu0 0.0
      %1488 = vmatpush1.msra.mxu0 %v685
      %1489 = vmatprep.subr.mxu0 0.0
      %1490 = vmatpush1.msra.mxu0 %v686
      %1491 = vmatprep.subr.mxu0 0.0
      %1492 = vmatpush1.msra.mxu0 %v687
      %1493 = vmatprep.subr.mxu0 0.0
      %1494 = vmatpush1.msra.mxu0 %v688
      %1495 = vmatprep.subr.mxu0 0.0
      %1496 = vmatpush1.msra.mxu0 %v689
      %1497 = vmatprep.subr.mxu0 0.0
      %1498 = vmatpush1.msra.mxu0 %v690
      %1499 = vmatprep.subr.mxu0 0.0
      %1500 = vmatpush1.msra.mxu0 %v691
      %1501 = vmatprep.subr.mxu0 0.0
      %1502 = vmatpush1.msra.mxu0 %v692
      %1503 = vmatprep.subr.mxu0 0.0
      %1504 = vmatpush1.msra.mxu0 %v693
      %1505 = vmatprep.subr.mxu0 0.0
      %1506 = vmatpush1.msra.mxu0 %v694
      %1507 = vmatprep.subr.mxu0 0.0
      %1508 = vmatpush1.msra.mxu0 %v695
      %1509 = vmatprep.subr.mxu0 0.0
      %1510 = vmatpush1.msra.mxu0 %v696
      %1511 = vmatprep.subr.mxu0 0.0
      %1512 = vmatpush1.msra.mxu0 %v697
      %1513 = vmatprep.mubr.f32.mxu0 %v498
      %1514 = vmatmul.mubr.f32.gmra.mrb[0].mxu0 %v462
      %v1515 = vpop.f32.mrb[0].mxu0
      %v1516 = vadd.f32 %v1271, %v1515
      %v1517 = vpop.f32.mrb[0].mxu0
      %1518 = vmatprep.mubr.f32.mxu0 %v499
      %1519 = vmatmul.mubr.f32.gmra.mrb[0].mxu0 %v463
      %v1520 = vpop.f32.mrb[0].mxu0
      %v1521 = vadd.f32 %v1276, %v1520
      %v1522 = vpop.f32.mrb[0].mxu0
      %1523 = vmatprep.mubr.f32.mxu0 %v500
      %1524 = vmatmul.mubr.f32.gmra.mrb[0].mxu0 %v464
      %v1525 = vpop.f32.mrb[0].mxu0
      %v1526 = vadd.f32 %v1281, %v1525
      %v1527 = vpop.f32.mrb[0].mxu0
      %1528 = vmatprep.mubr.f32.mxu0 %v501
      %1529 = vmatmul.mubr.f32.gmra.mrb[0].mxu0 %v465
      %v1530 = vpop.f32.mrb[0].mxu0
      %v1531 = vadd.f32 %v1286, %v1530
      %v1532 = vpop.f32.mrb[0].mxu0
      %1533 = vmatprep.mubr.f32.mxu0 %v502
      %1534 = vmatmul.mubr.f32.gmra.mrb[0].mxu0 %v466
      %v1535 = vpop.f32.mrb[0].mxu0
      %v1536 = vadd.f32 %v1291, %v1535
      %v1537 = vpop.f32.mrb[0].mxu0
      %1538 = vmatprep.mubr.f32.mxu0 %v503
      %1539 = vmatmul.mubr.f32.gmra.mrb[0].mxu0 %v467
      %v1540 = vpop.f32.mrb[0].mxu0
      %v1541 = vadd.f32 %v1296, %v1540
      %v1542 = vpop.f32.mrb[0].mxu0
      %1543 = vmatprep.mubr.f32.mxu0 %v504
      %1544 = vmatmul.mubr.f32.gmra.mrb[0].mxu0 %v468
      %v1545 = vpop.f32.mrb[0].mxu0
      %v1546 = vadd.f32 %v1301, %v1545
      %v1547 = vpop.f32.mrb[0].mxu0
      %1548 = vmatprep.mubr.f32.mxu0 %v505
      %1549 = vmatmul.mubr.f32.gmra.mrb[0].mxu0 %v469
      %v1550 = vpop.f32.mrb[0].mxu0
      %v1551 = vadd.f32 %v1306, %v1550
      %v1552 = vpop.f32.mrb[0].mxu0
      %1553 = vmatprep.mubr.f32.mxu0 %v506
      %1554 = vmatmul.mubr.f32.gmra.mrb[0].mxu0 %v470
      %v1555 = vpop.f32.mrb[0].mxu0
      %v1556 = vadd.f32 %v1311, %v1555
      %v1557 = vpop.f32.mrb[0].mxu0
      %1558 = vmatprep.mubr.f32.mxu0 %v507
      %1559 = vmatmul.mubr.f32.gmra.mrb[0].mxu0 %v471
      %v1560 = vpop.f32.mrb[0].mxu0
      %v1561 = vadd.f32 %v1316, %v1560
      %v1562 = vpop.f32.mrb[0].mxu0
      %1563 = vmatprep.mubr.f32.mxu0 %v508
      %1564 = vmatmul.mubr.f32.gmra.mrb[0].mxu0 %v472
      %v1565 = vpop.f32.mrb[0].mxu0
      %v1566 = vadd.f32 %v1321, %v1565
      %v1567 = vpop.f32.mrb[0].mxu0
      %1568 = vmatprep.mubr.f32.mxu0 %v509
      %1569 = vmatmul.mubr.f32.gmra.mrb[0].mxu0 %v473
      %v1570 = vpop.f32.mrb[0].mxu0
      %v1571 = vadd.f32 %v1326, %v1570
      %v1572 = vpop.f32.mrb[0].mxu0
      %1573 = vmatprep.mubr.f32.mxu0 %v510
      %1574 = vmatmul.mubr.f32.gmra.mrb[0].mxu0 %v474
      %v1575 = vpop.f32.mrb[0].mxu0
      %v1576 = vadd.f32 %v1331, %v1575
      %v1577 = vpop.f32.mrb[0].mxu0
      %1578 = vmatprep.mubr.f32.mxu0 %v511
      %1579 = vmatmul.mubr.f32.gmra.mrb[0].mxu0 %v475
      %v1580 = vpop.f32.mrb[0].mxu0
      %v1581 = vadd.f32 %v1336, %v1580
      %v1582 = vpop.f32.mrb[0].mxu0
      %1583 = vmatprep.mubr.f32.mxu0 %v512
      %1584 = vmatmul.mubr.f32.gmra.mrb[0].mxu0 %v476
      %v1585 = vpop.f32.mrb[0].mxu0
      %v1586 = vadd.f32 %v1341, %v1585
      %v1587 = vpop.f32.mrb[0].mxu0
      %1588 = vmatprep.mubr.f32.mxu0 %v513
      %1589 = vmatmul.mubr.f32.gmra.mrb[0].mxu0 %v477
      %v1590 = vpop.f32.mrb[0].mxu0
      %v1591 = vadd.f32 %v1346, %v1590
      %v1592 = vpop.f32.mrb[0].mxu0
      %1593 = vmatprep.mubr.f32.mxu0 %v514
      %1594 = vmatmul.mubr.f32.gmra.mrb[0].mxu0 %v478
      %v1595 = vpop.f32.mrb[0].mxu0
      %v1596 = vadd.f32 %v1351, %v1595
      %v1597 = vpop.f32.mrb[0].mxu0
      %1598 = vmatprep.mubr.f32.mxu0 %v515
      %1599 = vmatmul.mubr.f32.gmra.mrb[0].mxu0 %v479
      %v1600 = vpop.f32.mrb[0].mxu0
      %v1601 = vadd.f32 %v1356, %v1600
      %v1602 = vpop.f32.mrb[0].mxu0
      %1603 = vmatprep.mubr.f32.mxu0 %v516
      %1604 = vmatmul.mubr.f32.gmra.mrb[0].mxu0 %v480
      %v1605 = vpop.f32.mrb[0].mxu0
      %v1606 = vadd.f32 %v1361, %v1605
      %v1607 = vpop.f32.mrb[0].mxu0
      %1608 = vmatprep.mubr.f32.mxu0 %v517
      %1609 = vmatmul.mubr.f32.gmra.mrb[0].mxu0 %v481
      %v1610 = vpop.f32.mrb[0].mxu0
      %v1611 = vadd.f32 %v1366, %v1610
      %v1612 = vpop.f32.mrb[0].mxu0
      %1613 = vmatprep.mubr.f32.mxu0 %v518
      %1614 = vmatmul.mubr.f32.gmra.mrb[0].mxu0 %v482
      %v1615 = vpop.f32.mrb[0].mxu0
      %v1616 = vadd.f32 %v1371, %v1615
      %v1617 = vpop.f32.mrb[0].mxu0
      %1618 = vmatprep.mubr.f32.mxu0 %v519
      %1619 = vmatmul.mubr.f32.gmra.mrb[0].mxu0 %v483
      %v1620 = vpop.f32.mrb[0].mxu0
      %v1621 = vadd.f32 %v1376, %v1620
      %v1622 = vpop.f32.mrb[0].mxu0
      %1623 = vmatprep.mubr.f32.mxu0 %v520
      %1624 = vmatmul.mubr.f32.gmra.mrb[0].mxu0 %v484
      %v1625 = vpop.f32.mrb[0].mxu0
      %v1626 = vadd.f32 %v1381, %v1625
      %v1627 = vpop.f32.mrb[0].mxu0
      %1628 = vmatprep.mubr.f32.mxu0 %v521
      %1629 = vmatmul.mubr.f32.gmra.mrb[0].mxu0 %v485
      %v1630 = vpop.f32.mrb[0].mxu0
      %v1631 = vadd.f32 %v1386, %v1630
      %v1632 = vpop.f32.mrb[0].mxu0
      %1633 = vmatprep.mubr.f32.mxu0 %v522
      %1634 = vmatmul.mubr.f32.gmra.mrb[0].mxu0 %v486
      %v1635 = vpop.f32.mrb[0].mxu0
      %v1636 = vadd.f32 %v1391, %v1635
      %v1637 = vpop.f32.mrb[0].mxu0
      %1638 = vmatprep.mubr.f32.mxu0 %v523
      %1639 = vmatmul.mubr.f32.gmra.mrb[0].mxu0 %v487
      %v1640 = vpop.f32.mrb[0].mxu0
      %v1641 = vadd.f32 %v1396, %v1640
      %v1642 = vpop.f32.mrb[0].mxu0
      %1643 = vmatprep.mubr.f32.mxu0 %v524
      %1644 = vmatmul.mubr.f32.gmra.mrb[0].mxu0 %v488
      %v1645 = vpop.f32.mrb[0].mxu0
      %v1646 = vadd.f32 %v1401, %v1645
      %v1647 = vpop.f32.mrb[0].mxu0
      %1648 = vmatprep.mubr.f32.mxu0 %v525
      %1649 = vmatmul.mubr.f32.gmra.mrb[0].mxu0 %v489
      %v1650 = vpop.f32.mrb[0].mxu0
      %v1651 = vadd.f32 %v1406, %v1650
      %v1652 = vpop.f32.mrb[0].mxu0
      %1653 = vmatprep.mubr.f32.mxu0 %v526
      %1654 = vmatmul.mubr.f32.gmra.mrb[0].mxu0 %v490
      %v1655 = vpop.f32.mrb[0].mxu0
      %v1656 = vadd.f32 %v1411, %v1655
      %v1657 = vpop.f32.mrb[0].mxu0
      %1658 = vmatprep.mubr.f32.mxu0 %v527
      %1659 = vmatmul.mubr.f32.gmra.mrb[0].mxu0 %v491
      %v1660 = vpop.f32.mrb[0].mxu0
      %v1661 = vadd.f32 %v1416, %v1660
      %v1662 = vpop.f32.mrb[0].mxu0
      %1663 = vmatprep.mubr.f32.mxu0 %v528
      %1664 = vmatmul.mubr.f32.gmra.mrb[0].mxu0 %v492
      %v1665 = vpop.f32.mrb[0].mxu0
      %v1666 = vadd.f32 %v1421, %v1665
      %v1667 = vpop.f32.mrb[0].mxu0
      %1668 = vmatprep.mubr.f32.mxu0 %v529
      %1669 = vmatmul.mubr.f32.gmra.mrb[0].mxu0 %v493
      %v1670 = vpop.f32.mrb[0].mxu0
      %v1671 = vadd.f32 %v1426, %v1670
      %v1672 = vpop.f32.mrb[0].mxu0
      %1673 = vmatprep.mubr.f32.mxu0 %v530
      %1674 = vmatmul.mubr.f32.gmra.mrb[0].mxu0 %v494
      %v1675 = vpop.f32.mrb[0].mxu0
      %v1676 = vadd.f32 %v1431, %v1675
      %v1677 = vpop.f32.mrb[0].mxu0
      %1678 = vmatprep.mubr.f32.mxu0 %v531
      %1679 = vmatmul.mubr.f32.gmra.mrb[0].mxu0 %v495
      %v1680 = vpop.f32.mrb[0].mxu0
      %v1681 = vadd.f32 %v1436, %v1680
      %v1682 = vpop.f32.mrb[0].mxu0
      %1683 = vmatprep.mubr.f32.mxu0 %v532
      %1684 = vmatmul.mubr.f32.gmra.mrb[0].mxu0 %v496
      %v1685 = vpop.f32.mrb[0].mxu0
      %v1686 = vadd.f32 %v1441, %v1685
      %v1687 = vpop.f32.mrb[0].mxu0
      %1688 = vmatprep.mubr.f32.mxu0 %v533
      %1689 = vmatmul.mubr.f32.gmra.mrb[0].mxu0 %v497
      %v1690 = vpop.f32.mrb[0].mxu0
      %v1691 = vadd.f32 %v1446, %v1690
      %v1692 = vpop.f32.mrb[0].mxu0
      %1693 = vdwg.mxu0
      %1694 = vmatprep.subr.mxu0 0.0
      %1695 = vmatpush1.msra.mxu0 %v698
      %1696 = vmatprep.subr.mxu0 0.0
      %1697 = vmatpush1.msra.mxu0 %v699
      %1698 = vmatprep.subr.mxu0 0.0
      %1699 = vmatpush1.msra.mxu0 %v700
      %1700 = vmatprep.subr.mxu0 0.0
      %1701 = vmatpush1.msra.mxu0 %v701
      %1702 = vmatprep.subr.mxu0 0.0
      %1703 = vmatpush1.msra.mxu0 %v702
      %1704 = vmatprep.subr.mxu0 0.0
      %1705 = vmatpush1.msra.mxu0 %v703
      %1706 = vmatprep.subr.mxu0 0.0
      %1707 = vmatpush1.msra.mxu0 %v704
      %1708 = vmatprep.subr.mxu0 0.0
      %1709 = vmatpush1.msra.mxu0 %v705
      %1710 = vmatprep.subr.mxu0 0.0
      %1711 = vmatpush1.msra.mxu0 %v706
      %1712 = vmatprep.subr.mxu0 0.0
      %1713 = vmatpush1.msra.mxu0 %v707
      %1714 = vmatprep.subr.mxu0 0.0
      %1715 = vmatpush1.msra.mxu0 %v708
      %1716 = vmatprep.subr.mxu0 0.0
      %1717 = vmatpush1.msra.mxu0 %v709
      %1718 = vmatprep.subr.mxu0 0.0
      %1719 = vmatpush1.msra.mxu0 %v710
      %1720 = vmatprep.subr.mxu0 0.0
      %1721 = vmatpush1.msra.mxu0 %v711
      %1722 = vmatprep.subr.mxu0 0.0
      %1723 = vmatpush1.msra.mxu0 %v712
      %1724 = vmatprep.subr.mxu0 0.0
      %1725 = vmatpush1.msra.mxu0 %v713
      %1726 = vmatprep.subr.mxu0 0.0
      %1727 = vmatpush1.msra.mxu0 0.0
      %1728 = vmatprep.subr.mxu0 0.0
      %1729 = vmatpush1.msra.mxu0 0.0
      %1730 = vmatprep.subr.mxu0 0.0
      %1731 = vmatpush1.msra.mxu0 0.0
      %1732 = vmatprep.subr.mxu0 0.0
      %1733 = vmatpush1.msra.mxu0 0.0
      %1734 = vmatprep.subr.mxu0 0.0
      %1735 = vmatpush1.msra.mxu0 0.0
      %1736 = vmatprep.subr.mxu0 0.0
      %1737 = vmatpush1.msra.mxu0 0.0
      %1738 = vmatprep.subr.mxu0 0.0
      %1739 = vmatpush1.msra.mxu0 0.0
      %1740 = vmatprep.subr.mxu0 0.0
      %1741 = vmatpush1.msra.mxu0 0.0
      %1742 = vmatprep.subr.mxu0 0.0
      %1743 = vmatpush1.msra.mxu0 0.0
      %1744 = vmatprep.subr.mxu0 0.0
      %1745 = vmatpush1.msra.mxu0 0.0
      %1746 = vmatprep.subr.mxu0 0.0
      %1747 = vmatpush1.msra.mxu0 0.0
      %1748 = vmatprep.subr.mxu0 0.0
      %1749 = vmatpush1.msra.mxu0 0.0
      %1750 = vmatprep.subr.mxu0 0.0
      %1751 = vmatpush1.msra.mxu0 0.0
      %1752 = vmatprep.subr.mxu0 0.0
      %1753 = vmatpush1.msra.mxu0 0.0
      %1754 = vmatprep.subr.mxu0 0.0
      %1755 = vmatpush1.msra.mxu0 0.0
      %1756 = vmatprep.subr.mxu0 0.0
      %1757 = vmatpush1.msra.mxu0 0.0
      %1758 = vmatprep.mubr.f32.mxu0 0.0
      %1759 = vmatmul.mubr.f32.gmra.mrb[0].mxu0 %v534
      %v1760 = vpop.f32.mrb[0].mxu0
      %v1761 = vadd.f32 %v1516, %v1760
      %v1762 = vpop.f32.mrb[0].mxu0
      %1763 = vmatprep.mubr.f32.mxu0 0.0
      %1764 = vmatmul.mubr.f32.gmra.mrb[0].mxu0 %v535
      %v1765 = vpop.f32.mrb[0].mxu0
      %v1766 = vadd.f32 %v1521, %v1765
      %v1767 = vpop.f32.mrb[0].mxu0
      %1768 = vmatprep.mubr.f32.mxu0 0.0
      %1769 = vmatmul.mubr.f32.gmra.mrb[0].mxu0 %v536
      %v1770 = vpop.f32.mrb[0].mxu0
      %v1771 = vadd.f32 %v1526, %v1770
      %v1772 = vpop.f32.mrb[0].mxu0
      %1773 = vmatprep.mubr.f32.mxu0 0.0
      %1774 = vmatmul.mubr.f32.gmra.mrb[0].mxu0 %v537
      %v1775 = vpop.f32.mrb[0].mxu0
      %v1776 = vadd.f32 %v1531, %v1775
      %v1777 = vpop.f32.mrb[0].mxu0
      %1778 = vmatprep.mubr.f32.mxu0 0.0
      %1779 = vmatmul.mubr.f32.gmra.mrb[0].mxu0 %v538
      %v1780 = vpop.f32.mrb[0].mxu0
      %v1781 = vadd.f32 %v1536, %v1780
      %v1782 = vpop.f32.mrb[0].mxu0
      %1783 = vmatprep.mubr.f32.mxu0 0.0
      %1784 = vmatmul.mubr.f32.gmra.mrb[0].mxu0 %v539
      %v1785 = vpop.f32.mrb[0].mxu0
      %v1786 = vadd.f32 %v1541, %v1785
      %v1787 = vpop.f32.mrb[0].mxu0
      %1788 = vmatprep.mubr.f32.mxu0 0.0
      %1789 = vmatmul.mubr.f32.gmra.mrb[0].mxu0 %v540
      %v1790 = vpop.f32.mrb[0].mxu0
      %v1791 = vadd.f32 %v1546, %v1790
      %v1792 = vpop.f32.mrb[0].mxu0
      %1793 = vmatprep.mubr.f32.mxu0 0.0
      %1794 = vmatmul.mubr.f32.gmra.mrb[0].mxu0 %v541
      %v1795 = vpop.f32.mrb[0].mxu0
      %v1796 = vadd.f32 %v1551, %v1795
      %v1797 = vpop.f32.mrb[0].mxu0
      %1798 = vmatprep.mubr.f32.mxu0 0.0
      %1799 = vmatmul.mubr.f32.gmra.mrb[0].mxu0 %v542
      %v1800 = vpop.f32.mrb[0].mxu0
      %v1801 = vadd.f32 %v1556, %v1800
      %v1802 = vpop.f32.mrb[0].mxu0
      %1803 = vmatprep.mubr.f32.mxu0 0.0
      %1804 = vmatmul.mubr.f32.gmra.mrb[0].mxu0 %v543
      %v1805 = vpop.f32.mrb[0].mxu0
      %v1806 = vadd.f32 %v1561, %v1805
      %v1807 = vpop.f32.mrb[0].mxu0
      %1808 = vmatprep.mubr.f32.mxu0 0.0
      %1809 = vmatmul.mubr.f32.gmra.mrb[0].mxu0 %v544
      %v1810 = vpop.f32.mrb[0].mxu0
      %v1811 = vadd.f32 %v1566, %v1810
      %v1812 = vpop.f32.mrb[0].mxu0
      %1813 = vmatprep.mubr.f32.mxu0 0.0
      %1814 = vmatmul.mubr.f32.gmra.mrb[0].mxu0 %v545
      %v1815 = vpop.f32.mrb[0].mxu0
      %v1816 = vadd.f32 %v1571, %v1815
      %v1817 = vpop.f32.mrb[0].mxu0
      %1818 = vmatprep.mubr.f32.mxu0 0.0
      %1819 = vmatmul.mubr.f32.gmra.mrb[0].mxu0 %v546
      %v1820 = vpop.f32.mrb[0].mxu0
      %v1821 = vadd.f32 %v1576, %v1820
      %v1822 = vpop.f32.mrb[0].mxu0
      %1823 = vmatprep.mubr.f32.mxu0 0.0
      %1824 = vmatmul.mubr.f32.gmra.mrb[0].mxu0 %v547
      %v1825 = vpop.f32.mrb[0].mxu0
      %v1826 = vadd.f32 %v1581, %v1825
      %v1827 = vpop.f32.mrb[0].mxu0
      %1828 = vmatprep.mubr.f32.mxu0 0.0
      %1829 = vmatmul.mubr.f32.gmra.mrb[0].mxu0 %v548
      %v1830 = vpop.f32.mrb[0].mxu0
      %v1831 = vadd.f32 %v1586, %v1830
      %v1832 = vpop.f32.mrb[0].mxu0
      %1833 = vmatprep.mubr.f32.mxu0 0.0
      %1834 = vmatmul.mubr.f32.gmra.mrb[0].mxu0 %v549
      %v1835 = vpop.f32.mrb[0].mxu0
      %v1836 = vadd.f32 %v1591, %v1835
      %v1837 = vpop.f32.mrb[0].mxu0
      %1838 = vmatprep.mubr.f32.mxu0 0.0
      %1839 = vmatmul.mubr.f32.gmra.mrb[0].mxu0 %v550
      %v1840 = vpop.f32.mrb[0].mxu0
      %v1841 = vadd.f32 %v1596, %v1840
      %v1842 = vpop.f32.mrb[0].mxu0
      %1843 = vmatprep.mubr.f32.mxu0 0.0
      %1844 = vmatmul.mubr.f32.gmra.mrb[0].mxu0 %v551
      %v1845 = vpop.f32.mrb[0].mxu0
      %v1846 = vadd.f32 %v1601, %v1845
      %v1847 = vpop.f32.mrb[0].mxu0
      %1848 = vmatprep.mubr.f32.mxu0 0.0
      %1849 = vmatmul.mubr.f32.gmra.mrb[0].mxu0 %v552
      %v1850 = vpop.f32.mrb[0].mxu0
      %v1851 = vadd.f32 %v1606, %v1850
      %v1852 = vpop.f32.mrb[0].mxu0
      %1853 = vmatprep.mubr.f32.mxu0 0.0
      %1854 = vmatmul.mubr.f32.gmra.mrb[0].mxu0 %v553
      %v1855 = vpop.f32.mrb[0].mxu0
      %v1856 = vadd.f32 %v1611, %v1855
      %v1857 = vpop.f32.mrb[0].mxu0
      %1858 = vmatprep.mubr.f32.mxu0 0.0
      %1859 = vmatmul.mubr.f32.gmra.mrb[0].mxu0 %v554
      %v1860 = vpop.f32.mrb[0].mxu0
      %v1861 = vadd.f32 %v1616, %v1860
      %v1862 = vpop.f32.mrb[0].mxu0
      %1863 = vmatprep.mubr.f32.mxu0 0.0
      %1864 = vmatmul.mubr.f32.gmra.mrb[0].mxu0 %v555
      %v1865 = vpop.f32.mrb[0].mxu0
      %v1866 = vadd.f32 %v1621, %v1865
      %v1867 = vpop.f32.mrb[0].mxu0
      %1868 = vmatprep.mubr.f32.mxu0 0.0
      %1869 = vmatmul.mubr.f32.gmra.mrb[0].mxu0 %v556
      %v1870 = vpop.f32.mrb[0].mxu0
      %v1871 = vadd.f32 %v1626, %v1870
      %v1872 = vpop.f32.mrb[0].mxu0
      %1873 = vmatprep.mubr.f32.mxu0 0.0
      %1874 = vmatmul.mubr.f32.gmra.mrb[0].mxu0 %v557
      %v1875 = vpop.f32.mrb[0].mxu0
      %v1876 = vadd.f32 %v1631, %v1875
      %v1877 = vpop.f32.mrb[0].mxu0
      %1878 = vmatprep.mubr.f32.mxu0 0.0
      %1879 = vmatmul.mubr.f32.gmra.mrb[0].mxu0 %v558
      %v1880 = vpop.f32.mrb[0].mxu0
      %v1881 = vadd.f32 %v1636, %v1880
      %v1882 = vpop.f32.mrb[0].mxu0
      %1883 = vmatprep.mubr.f32.mxu0 0.0
      %1884 = vmatmul.mubr.f32.gmra.mrb[0].mxu0 %v559
      %v1885 = vpop.f32.mrb[0].mxu0
      %v1886 = vadd.f32 %v1641, %v1885
      %v1887 = vpop.f32.mrb[0].mxu0
      %1888 = vmatprep.mubr.f32.mxu0 0.0
      %1889 = vmatmul.mubr.f32.gmra.mrb[0].mxu0 %v560
      %v1890 = vpop.f32.mrb[0].mxu0
      %v1891 = vadd.f32 %v1646, %v1890
      %v1892 = vpop.f32.mrb[0].mxu0
      %1893 = vmatprep.mubr.f32.mxu0 0.0
      %1894 = vmatmul.mubr.f32.gmra.mrb[0].mxu0 %v561
      %v1895 = vpop.f32.mrb[0].mxu0
      %v1896 = vadd.f32 %v1651, %v1895
      %v1897 = vpop.f32.mrb[0].mxu0
      %1898 = vmatprep.mubr.f32.mxu0 0.0
      %1899 = vmatmul.mubr.f32.gmra.mrb[0].mxu0 %v562
      %v1900 = vpop.f32.mrb[0].mxu0
      %v1901 = vadd.f32 %v1656, %v1900
      %v1902 = vpop.f32.mrb[0].mxu0
      %1903 = vmatprep.mubr.f32.mxu0 0.0
      %1904 = vmatmul.mubr.f32.gmra.mrb[0].mxu0 %v563
      %v1905 = vpop.f32.mrb[0].mxu0
      %v1906 = vadd.f32 %v1661, %v1905
      %v1907 = vpop.f32.mrb[0].mxu0
      %1908 = vmatprep.mubr.f32.mxu0 0.0
      %1909 = vmatmul.mubr.f32.gmra.mrb[0].mxu0 %v564
      %v1910 = vpop.f32.mrb[0].mxu0
      %v1911 = vadd.f32 %v1666, %v1910
      %v1912 = vpop.f32.mrb[0].mxu0
      %1913 = vmatprep.mubr.f32.mxu0 0.0
      %1914 = vmatmul.mubr.f32.gmra.mrb[0].mxu0 %v565
      %v1915 = vpop.f32.mrb[0].mxu0
      %v1916 = vadd.f32 %v1671, %v1915
      %v1917 = vpop.f32.mrb[0].mxu0
      %1918 = vmatprep.mubr.f32.mxu0 0.0
      %1919 = vmatmul.mubr.f32.gmra.mrb[0].mxu0 %v566
      %v1920 = vpop.f32.mrb[0].mxu0
      %v1921 = vadd.f32 %v1676, %v1920
      %v1922 = vpop.f32.mrb[0].mxu0
      %1923 = vmatprep.mubr.f32.mxu0 0.0
      %1924 = vmatmul.mubr.f32.gmra.mrb[0].mxu0 %v567
      %v1925 = vpop.f32.mrb[0].mxu0
      %v1926 = vadd.f32 %v1681, %v1925
      %v1927 = vpop.f32.mrb[0].mxu0
      %1928 = vmatprep.mubr.f32.mxu0 0.0
      %1929 = vmatmul.mubr.f32.gmra.mrb[0].mxu0 %v568
      %v1930 = vpop.f32.mrb[0].mxu0
      %v1931 = vadd.f32 %v1686, %v1930
      %v1932 = vpop.f32.mrb[0].mxu0
      %1933 = vmatprep.mubr.f32.mxu0 0.0
      %1934 = vmatmul.mubr.f32.gmra.mrb[0].mxu0 %v569
      %v1935 = vpop.f32.mrb[0].mxu0
      %v1936 = vadd.f32 %v1691, %v1935
      %v1937 = vpop.f32.mrb[0].mxu0
      %1938 = vdwg.mxu0
      %v1939 = vld [vmem:[%s3] sm:$0x1]
      %v1941 = vlaneseq
      %v1942 = vshrl.u32 %v1941, 7
      %v1943 = vsub.s32 0, %v1942
      %v1944 = vrot.slane %v1939, %v1943
      %v1946 = vmul.f32 %v1761, %v1944
      %v1947 = vmul.f32 %v1766, %v1944
      %v1948 = vmul.f32 %v1771, %v1944
      %v1949 = vmul.f32 %v1776, %v1944
      %v1950 = vmul.f32 %v1781, %v1944
      %v1951 = vmul.f32 %v1786, %v1944
      %v1952 = vmul.f32 %v1791, %v1944
      %v1953 = vmul.f32 %v1796, %v1944
      %v1954 = vmul.f32 %v1801, %v1944
      %v1955 = vmul.f32 %v1806, %v1944
      %v1956 = vmul.f32 %v1811, %v1944
      %v1957 = vmul.f32 %v1816, %v1944
      %v1958 = vmul.f32 %v1821, %v1944
      %v1959 = vmul.f32 %v1826, %v1944
      %v1960 = vmul.f32 %v1831, %v1944
      %v1961 = vmul.f32 %v1836, %v1944
      %v1962 = vmul.f32 %v1841, %v1944
      %v1963 = vmul.f32 %v1846, %v1944
      %v1964 = vmul.f32 %v1851, %v1944
      %v1965 = vmul.f32 %v1856, %v1944
      %v1966 = vmul.f32 %v1861, %v1944
      %v1967 = vmul.f32 %v1866, %v1944
      %v1968 = vmul.f32 %v1871, %v1944
      %v1969 = vmul.f32 %v1876, %v1944
      %v1970 = vmul.f32 %v1881, %v1944
      %v1971 = vmul.f32 %v1886, %v1944
      %v1972 = vmul.f32 %v1891, %v1944
      %v1973 = vmul.f32 %v1896, %v1944
      %v1974 = vmul.f32 %v1901, %v1944
      %v1975 = vmul.f32 %v1906, %v1944
      %v1976 = vmul.f32 %v1911, %v1944
      %v1977 = vmul.f32 %v1916, %v1944
      %v1978 = vmul.f32 %v1921, %v1944
      %v1979 = vmul.f32 %v1926, %v1944
      %v1980 = vmul.f32 %v1931, %v1944
      %v1981 = vmul.f32 %v1936, %v1944
      %v1982 = vld [vmem:[%s4] sm:$0x1]
      %v1984 = vlaneseq
      %v1985 = vshrl.u32 %v1984, 7
      %v1986 = vsub.s32 0, %v1985
      %v1987 = vrot.slane %v1982, %v1986
      %v1989 = vadd.f32 %v1946, %v1987
      %v1990 = vadd.f32 %v1947, %v1987
      %v1991 = vadd.f32 %v1948, %v1987
      %v1992 = vadd.f32 %v1949, %v1987
      %v1993 = vadd.f32 %v1950, %v1987
      %v1994 = vadd.f32 %v1951, %v1987
      %v1995 = vadd.f32 %v1952, %v1987
      %v1996 = vadd.f32 %v1953, %v1987
      %v1997 = vadd.f32 %v1954, %v1987
      %v1998 = vadd.f32 %v1955, %v1987
      %v1999 = vadd.f32 %v1956, %v1987
      %v2000 = vadd.f32 %v1957, %v1987
      %v2001 = vadd.f32 %v1958, %v1987
      %v2002 = vadd.f32 %v1959, %v1987
      %v2003 = vadd.f32 %v1960, %v1987
      %v2004 = vadd.f32 %v1961, %v1987
      %v2005 = vadd.f32 %v1962, %v1987
      %v2006 = vadd.f32 %v1963, %v1987
      %v2007 = vadd.f32 %v1964, %v1987
      %v2008 = vadd.f32 %v1965, %v1987
      %v2009 = vadd.f32 %v1966, %v1987
      %v2010 = vadd.f32 %v1967, %v1987
      %v2011 = vadd.f32 %v1968, %v1987
      %v2012 = vadd.f32 %v1969, %v1987
      %v2013 = vadd.f32 %v1970, %v1987
      %v2014 = vadd.f32 %v1971, %v1987
      %v2015 = vadd.f32 %v1972, %v1987
      %v2016 = vadd.f32 %v1973, %v1987
      %v2017 = vadd.f32 %v1974, %v1987
      %v2018 = vadd.f32 %v1975, %v1987
      %v2019 = vadd.f32 %v1976, %v1987
      %v2020 = vadd.f32 %v1977, %v1987
      %v2021 = vadd.f32 %v1978, %v1987
      %v2022 = vadd.f32 %v1979, %v1987
      %v2023 = vadd.f32 %v1980, %v1987
      %v2024 = vadd.f32 %v1981, %v1987
      %v2025 = vmax.f32 %v1989, 0.0
      %v2026 = vmax.f32 %v1990, 0.0
      %v2027 = vmax.f32 %v1991, 0.0
      %v2028 = vmax.f32 %v1992, 0.0
      %v2029 = vmax.f32 %v1993, 0.0
      %v2030 = vmax.f32 %v1994, 0.0
      %v2031 = vmax.f32 %v1995, 0.0
      %v2032 = vmax.f32 %v1996, 0.0
      %v2033 = vmax.f32 %v1997, 0.0
      %v2034 = vmax.f32 %v1998, 0.0
      %v2035 = vmax.f32 %v1999, 0.0
      %v2036 = vmax.f32 %v2000, 0.0
      %v2037 = vmax.f32 %v2001, 0.0
      %v2038 = vmax.f32 %v2002, 0.0
      %v2039 = vmax.f32 %v2003, 0.0
      %v2040 = vmax.f32 %v2004, 0.0
      %v2041 = vmax.f32 %v2005, 0.0
      %v2042 = vmax.f32 %v2006, 0.0
      %v2043 = vmax.f32 %v2007, 0.0
      %v2044 = vmax.f32 %v2008, 0.0
      %v2045 = vmax.f32 %v2009, 0.0
      %v2046 = vmax.f32 %v2010, 0.0
      %v2047 = vmax.f32 %v2011, 0.0
      %v2048 = vmax.f32 %v2012, 0.0
      %v2049 = vmax.f32 %v2013, 0.0
      %v2050 = vmax.f32 %v2014, 0.0
      %v2051 = vmax.f32 %v2015, 0.0
      %v2052 = vmax.f32 %v2016, 0.0
      %v2053 = vmax.f32 %v2017, 0.0
      %v2054 = vmax.f32 %v2018, 0.0
      %v2055 = vmax.f32 %v2019, 0.0
      %v2056 = vmax.f32 %v2020, 0.0
      %v2057 = vmax.f32 %v2021, 0.0
      %v2058 = vmax.f32 %v2022, 0.0
      %v2059 = vmax.f32 %v2023, 0.0
      %v2060 = vmax.f32 %v2024, 0.0
      %v2061 = vld [vmem:[%s7] sm:$0xff]
      %v2062 = vld [vmem:[%s7 + $0x8] sm:$0xff]
      %v2063 = vld [vmem:[%s7 + $0x10] sm:$0xff]
      %v2064 = vld [vmem:[%s7 + $0x18] sm:$0xff]
      %v2065 = vld [vmem:[%s7 + $0x20] sm:$0xff]
      %v2066 = vld [vmem:[%s7 + $0x28] sm:$0xff]
      %v2067 = vld [vmem:[%s7 + $0x30] sm:$0xff]
      %v2068 = vld [vmem:[%s7 + $0x38] sm:$0xff]
      %v2069 = vld [vmem:[%s7 + $0x40] sm:$0xff]
      %v2070 = vld [vmem:[%s7 + $0x48] sm:$0xff]
      %v2071 = vld [vmem:[%s7 + $0x50] sm:$0xff]
      %v2072 = vld [vmem:[%s7 + $0x58] sm:$0xff]
      %v2073 = vld [vmem:[%s7 + $0x60] sm:$0xff]
      %v2074 = vld [vmem:[%s7 + $0x68] sm:$0xff]
      %v2075 = vld [vmem:[%s7 + $0x70] sm:$0xff]
      %v2076 = vld [vmem:[%s7 + $0x78] sm:$0xff]
      %v2077 = vld [vmem:[%s7 + $0x80] sm:$0xff]
      %v2078 = vld [vmem:[%s7 + $0x88] sm:$0xff]
      %v2079 = vld [vmem:[%s7 + $0x90] sm:$0xff]
      %v2080 = vld [vmem:[%s7 + $0x98] sm:$0xff]
      %v2081 = vld [vmem:[%s7 + $0xa0] sm:$0xff]
      %v2082 = vld [vmem:[%s7 + $0xa8] sm:$0xff]
      %v2083 = vld [vmem:[%s7 + $0xb0] sm:$0xff]
      %v2084 = vld [vmem:[%s7 + $0xb8] sm:$0xff]
      %v2085 = vld [vmem:[%s7 + $0xc0] sm:$0xff]
      %v2086 = vld [vmem:[%s7 + $0xc8] sm:$0xff]
      %v2087 = vld [vmem:[%s7 + $0xd0] sm:$0xff]
      %v2088 = vld [vmem:[%s7 + $0xd8] sm:$0xff]
      %v2089 = vld [vmem:[%s7 + $0xe0] sm:$0xff]
      %v2090 = vld [vmem:[%s7 + $0xe8] sm:$0xff]
      %v2091 = vld [vmem:[%s7 + $0xf0] sm:$0xff]
      %v2092 = vld [vmem:[%s7 + $0xf8] sm:$0xff]
      %v2093 = vld [vmem:[%s7 + $0x100] sm:$0xff]
      %v2094 = vld [vmem:[%s7 + $0x108] sm:$0xff]
      %v2095 = vld [vmem:[%s7 + $0x110] sm:$0xff]
      %v2096 = vld [vmem:[%s7 + $0x118] sm:$0xff]
      %2098 = vset.pattern.permute.xlu0 0
      %2099 = vperm.xlu0 %2098, %v2061
      %v2100 = vpop.permute.xlu0 %2099
      %2103 = vset.pattern.permute.xlu0 0
      %2104 = vperm.xlu0 %2103, %v2062
      %v2105 = vpop.permute.xlu0 %2104
      %2108 = vset.pattern.permute.xlu0 0
      %2109 = vperm.xlu0 %2108, %v2063
      %v2110 = vpop.permute.xlu0 %2109
      %2113 = vset.pattern.permute.xlu0 0
      %2114 = vperm.xlu0 %2113, %v2064
      %v2115 = vpop.permute.xlu0 %2114
      %2118 = vset.pattern.permute.xlu0 0
      %2119 = vperm.xlu0 %2118, %v2065
      %v2120 = vpop.permute.xlu0 %2119
      %2123 = vset.pattern.permute.xlu0 0
      %2124 = vperm.xlu0 %2123, %v2066
      %v2125 = vpop.permute.xlu0 %2124
      %2128 = vset.pattern.permute.xlu0 0
      %2129 = vperm.xlu0 %2128, %v2067
      %v2130 = vpop.permute.xlu0 %2129
      %2133 = vset.pattern.permute.xlu0 0
      %2134 = vperm.xlu0 %2133, %v2068
      %v2135 = vpop.permute.xlu0 %2134
      %2138 = vset.pattern.permute.xlu0 0
      %2139 = vperm.xlu0 %2138, %v2069
      %v2140 = vpop.permute.xlu0 %2139
      %2143 = vset.pattern.permute.xlu0 0
      %2144 = vperm.xlu0 %2143, %v2070
      %v2145 = vpop.permute.xlu0 %2144
      %2148 = vset.pattern.permute.xlu0 0
      %2149 = vperm.xlu0 %2148, %v2071
      %v2150 = vpop.permute.xlu0 %2149
      %2153 = vset.pattern.permute.xlu0 0
      %2154 = vperm.xlu0 %2153, %v2072
      %v2155 = vpop.permute.xlu0 %2154
      %2158 = vset.pattern.permute.xlu0 0
      %2159 = vperm.xlu0 %2158, %v2073
      %v2160 = vpop.permute.xlu0 %2159
      %2163 = vset.pattern.permute.xlu0 0
      %2164 = vperm.xlu0 %2163, %v2074
      %v2165 = vpop.permute.xlu0 %2164
      %2168 = vset.pattern.permute.xlu0 0
      %2169 = vperm.xlu0 %2168, %v2075
      %v2170 = vpop.permute.xlu0 %2169
      %2173 = vset.pattern.permute.xlu0 0
      %2174 = vperm.xlu0 %2173, %v2076
      %v2175 = vpop.permute.xlu0 %2174
      %2178 = vset.pattern.permute.xlu0 0
      %2179 = vperm.xlu0 %2178, %v2077
      %v2180 = vpop.permute.xlu0 %2179
      %2183 = vset.pattern.permute.xlu0 0
      %2184 = vperm.xlu0 %2183, %v2078
      %v2185 = vpop.permute.xlu0 %2184
      %2188 = vset.pattern.permute.xlu0 0
      %2189 = vperm.xlu0 %2188, %v2079
      %v2190 = vpop.permute.xlu0 %2189
      %2193 = vset.pattern.permute.xlu0 0
      %2194 = vperm.xlu0 %2193, %v2080
      %v2195 = vpop.permute.xlu0 %2194
      %2198 = vset.pattern.permute.xlu0 0
      %2199 = vperm.xlu0 %2198, %v2081
      %v2200 = vpop.permute.xlu0 %2199
      %2203 = vset.pattern.permute.xlu0 0
      %2204 = vperm.xlu0 %2203, %v2082
      %v2205 = vpop.permute.xlu0 %2204
      %2208 = vset.pattern.permute.xlu0 0
      %2209 = vperm.xlu0 %2208, %v2083
      %v2210 = vpop.permute.xlu0 %2209
      %2213 = vset.pattern.permute.xlu0 0
      %2214 = vperm.xlu0 %2213, %v2084
      %v2215 = vpop.permute.xlu0 %2214
      %2218 = vset.pattern.permute.xlu0 0
      %2219 = vperm.xlu0 %2218, %v2085
      %v2220 = vpop.permute.xlu0 %2219
      %2223 = vset.pattern.permute.xlu0 0
      %2224 = vperm.xlu0 %2223, %v2086
      %v2225 = vpop.permute.xlu0 %2224
      %2228 = vset.pattern.permute.xlu0 0
      %2229 = vperm.xlu0 %2228, %v2087
      %v2230 = vpop.permute.xlu0 %2229
      %2233 = vset.pattern.permute.xlu0 0
      %2234 = vperm.xlu0 %2233, %v2088
      %v2235 = vpop.permute.xlu0 %2234
      %2238 = vset.pattern.permute.xlu0 0
      %2239 = vperm.xlu0 %2238, %v2089
      %v2240 = vpop.permute.xlu0 %2239
      %2243 = vset.pattern.permute.xlu0 0
      %2244 = vperm.xlu0 %2243, %v2090
      %v2245 = vpop.permute.xlu0 %2244
      %2248 = vset.pattern.permute.xlu0 0
      %2249 = vperm.xlu0 %2248, %v2091
      %v2250 = vpop.permute.xlu0 %2249
      %2253 = vset.pattern.permute.xlu0 0
      %2254 = vperm.xlu0 %2253, %v2092
      %v2255 = vpop.permute.xlu0 %2254
      %2258 = vset.pattern.permute.xlu0 0
      %2259 = vperm.xlu0 %2258, %v2093
      %v2260 = vpop.permute.xlu0 %2259
      %2263 = vset.pattern.permute.xlu0 0
      %2264 = vperm.xlu0 %2263, %v2094
      %v2265 = vpop.permute.xlu0 %2264
      %2268 = vset.pattern.permute.xlu0 0
      %2269 = vperm.xlu0 %2268, %v2095
      %v2270 = vpop.permute.xlu0 %2269
      %2273 = vset.pattern.permute.xlu0 0
      %2274 = vperm.xlu0 %2273, %v2096
      %v2275 = vpop.permute.xlu0 %2274
      %v2277 = vmul.f32 %v2025, %v2100
      %v2278 = vmul.f32 %v2026, %v2105
      %v2279 = vmul.f32 %v2027, %v2110
      %v2280 = vmul.f32 %v2028, %v2115
      %v2281 = vmul.f32 %v2029, %v2120
      %v2282 = vmul.f32 %v2030, %v2125
      %v2283 = vmul.f32 %v2031, %v2130
      %v2284 = vmul.f32 %v2032, %v2135
      %v2285 = vmul.f32 %v2033, %v2140
      %v2286 = vmul.f32 %v2034, %v2145
      %v2287 = vmul.f32 %v2035, %v2150
      %v2288 = vmul.f32 %v2036, %v2155
      %v2289 = vmul.f32 %v2037, %v2160
      %v2290 = vmul.f32 %v2038, %v2165
      %v2291 = vmul.f32 %v2039, %v2170
      %v2292 = vmul.f32 %v2040, %v2175
      %v2293 = vmul.f32 %v2041, %v2180
      %v2294 = vmul.f32 %v2042, %v2185
      %v2295 = vmul.f32 %v2043, %v2190
      %v2296 = vmul.f32 %v2044, %v2195
      %v2297 = vmul.f32 %v2045, %v2200
      %v2298 = vmul.f32 %v2046, %v2205
      %v2299 = vmul.f32 %v2047, %v2210
      %v2300 = vmul.f32 %v2048, %v2215
      %v2301 = vmul.f32 %v2049, %v2220
      %v2302 = vmul.f32 %v2050, %v2225
      %v2303 = vmul.f32 %v2051, %v2230
      %v2304 = vmul.f32 %v2052, %v2235
      %v2305 = vmul.f32 %v2053, %v2240
      %v2306 = vmul.f32 %v2054, %v2245
      %v2307 = vmul.f32 %v2055, %v2250
      %v2308 = vmul.f32 %v2056, %v2255
      %v2309 = vmul.f32 %v2057, %v2260
      %v2310 = vmul.f32 %v2058, %v2265
      %v2311 = vmul.f32 %v2059, %v2270
      %v2312 = vmul.f32 %v2060, %v2275
      %2313 = vst [vmem:[#allocation2 + $0x13] sm:$0xff] %v2277
      %2314 = vst [vmem:[#allocation2 + $0x1b] sm:$0xff] %v2278
      %2315 = vst [vmem:[#allocation2 + $0x23] sm:$0xff] %v2279
      %2316 = vst [vmem:[#allocation2 + $0x2b] sm:$0xff] %v2280
      %2317 = vst [vmem:[#allocation2 + $0x33] sm:$0xff] %v2281
      %2318 = vst [vmem:[#allocation2 + $0x3b] sm:$0xff] %v2282
      %2319 = vst [vmem:[#allocation2 + $0x43] sm:$0xff] %v2283
      %2320 = vst [vmem:[#allocation2 + $0x4b] sm:$0xff] %v2284
      %2321 = vst [vmem:[#allocation2 + $0x53] sm:$0xff] %v2285
      %2322 = vst [vmem:[#allocation2 + $0x5b] sm:$0xff] %v2286
      %2323 = vst [vmem:[#allocation2 + $0x63] sm:$0xff] %v2287
      %2324 = vst [vmem:[#allocation2 + $0x6b] sm:$0xff] %v2288
      %2325 = vst [vmem:[#allocation2 + $0x73] sm:$0xff] %v2289
      %2326 = vst [vmem:[#allocation2 + $0x7b] sm:$0xff] %v2290
      %2327 = vst [vmem:[#allocation2 + $0x83] sm:$0xff] %v2291
      %2328 = vst [vmem:[#allocation2 + $0x8b] sm:$0xff] %v2292
      %2329 = vst [vmem:[#allocation2 + $0x93] sm:$0xff] %v2293
      %2330 = vst [vmem:[#allocation2 + $0x9b] sm:$0xff] %v2294
      %2331 = vst [vmem:[#allocation2 + $0xa3] sm:$0xff] %v2295
      %2332 = vst [vmem:[#allocation2 + $0xab] sm:$0xff] %v2296
      %2333 = vst [vmem:[#allocation2 + $0xb3] sm:$0xff] %v2297
      %2334 = vst [vmem:[#allocation2 + $0xbb] sm:$0xff] %v2298
      %2335 = vst [vmem:[#allocation2 + $0xc3] sm:$0xff] %v2299
      %2336 = vst [vmem:[#allocation2 + $0xcb] sm:$0xff] %v2300
      %2337 = vst [vmem:[#allocation2 + $0xd3] sm:$0xff] %v2301
      %2338 = vst [vmem:[#allocation2 + $0xdb] sm:$0xff] %v2302
      %2339 = vst [vmem:[#allocation2 + $0xe3] sm:$0xff] %v2303
      %2340 = vst [vmem:[#allocation2 + $0xeb] sm:$0xff] %v2304
      %2341 = vst [vmem:[#allocation2 + $0xf3] sm:$0xff] %v2305
      %2342 = vst [vmem:[#allocation2 + $0xfb] sm:$0xff] %v2306
      %2343 = vst [vmem:[#allocation2 + $0x103] sm:$0xff] %v2307
      %2344 = vst [vmem:[#allocation2 + $0x10b] sm:$0xff] %v2308
      %2345 = vst [vmem:[#allocation2 + $0x113] sm:$0xff] %v2309
      %2346 = vst [vmem:[#allocation2 + $0x11b] sm:$0xff] %v2310
      %2347 = vst [vmem:[#allocation2 + $0x123] sm:$0xff] %v2311
      %2348 = vst [vmem:[#allocation2 + $0x12b] sm:$0xff] %v2312
      %v2349 = vld [vmem:[#allocation2] sm:$0xff]
      %v2350 = vld [vmem:[#allocation2 + $0x8] sm:$0xff]
      %v2351 = vld [vmem:[#allocation2 + $0x10] sm:$0xff]
      %v2352 = vld [vmem:[#allocation2 + $0x18] sm:$0xff]
      %v2353 = vld [vmem:[#allocation2 + $0x20] sm:$0xff]
      %v2354 = vld [vmem:[#allocation2 + $0x28] sm:$0xff]
      %v2355 = vld [vmem:[#allocation2 + $0x30] sm:$0xff]
      %v2356 = vld [vmem:[#allocation2 + $0x38] sm:$0xff]
      %v2357 = vld [vmem:[#allocation2 + $0x40] sm:$0xff]
      %v2358 = vld [vmem:[#allocation2 + $0x48] sm:$0xff]
      %v2359 = vld [vmem:[#allocation2 + $0x50] sm:$0xff]
      %v2360 = vld [vmem:[#allocation2 + $0x58] sm:$0xff]
      %v2361 = vld [vmem:[#allocation2 + $0x60] sm:$0xff]
      %v2362 = vld [vmem:[#allocation2 + $0x68] sm:$0xff]
      %v2363 = vld [vmem:[#allocation2 + $0x70] sm:$0xff]
      %v2364 = vld [vmem:[#allocation2 + $0x78] sm:$0xff]
      %v2365 = vld [vmem:[#allocation2 + $0x80] sm:$0xff]
      %v2366 = vld [vmem:[#allocation2 + $0x88] sm:$0xff]
      %v2367 = vld [vmem:[#allocation2 + $0x90] sm:$0xff]
      %v2368 = vld [vmem:[#allocation2 + $0x98] sm:$0xff]
      %v2369 = vld [vmem:[#allocation2 + $0xa0] sm:$0xff]
      %v2370 = vld [vmem:[#allocation2 + $0xa8] sm:$0xff]
      %v2371 = vld [vmem:[#allocation2 + $0xb0] sm:$0xff]
      %v2372 = vld [vmem:[#allocation2 + $0xb8] sm:$0xff]
      %v2373 = vld [vmem:[#allocation2 + $0xc0] sm:$0xff]
      %v2374 = vld [vmem:[#allocation2 + $0xc8] sm:$0xff]
      %v2375 = vld [vmem:[#allocation2 + $0xd0] sm:$0xff]
      %v2376 = vld [vmem:[#allocation2 + $0xd8] sm:$0xff]
      %v2377 = vld [vmem:[#allocation2 + $0xe0] sm:$0xff]
      %v2378 = vld [vmem:[#allocation2 + $0xe8] sm:$0xff]
      %v2379 = vld [vmem:[#allocation2 + $0xf0] sm:$0xff]
      %v2380 = vld [vmem:[#allocation2 + $0xf8] sm:$0xff]
      %v2381 = vld [vmem:[#allocation2 + $0x100] sm:$0xff]
      %v2382 = vld [vmem:[#allocation2 + $0x108] sm:$0xff]
      %v2383 = vld [vmem:[#allocation2 + $0x110] sm:$0xff]
      %v2384 = vld [vmem:[#allocation2 + $0x118] sm:$0xff]
      %v2385 = vld [vmem:[#allocation2 + $0x1] sm:$0xff]
      %v2386 = vld [vmem:[#allocation2 + $0x9] sm:$0xff]
      %v2387 = vld [vmem:[#allocation2 + $0x11] sm:$0xff]
      %v2388 = vld [vmem:[#allocation2 + $0x19] sm:$0xff]
      %v2389 = vld [vmem:[#allocation2 + $0x21] sm:$0xff]
      %v2390 = vld [vmem:[#allocation2 + $0x29] sm:$0xff]
      %v2391 = vld [vmem:[#allocation2 + $0x31] sm:$0xff]
      %v2392 = vld [vmem:[#allocation2 + $0x39] sm:$0xff]
      %v2393 = vld [vmem:[#allocation2 + $0x41] sm:$0xff]
      %v2394 = vld [vmem:[#allocation2 + $0x49] sm:$0xff]
      %v2395 = vld [vmem:[#allocation2 + $0x51] sm:$0xff]
      %v2396 = vld [vmem:[#allocation2 + $0x59] sm:$0xff]
      %v2397 = vld [vmem:[#allocation2 + $0x61] sm:$0xff]
      %v2398 = vld [vmem:[#allocation2 + $0x69] sm:$0xff]
      %v2399 = vld [vmem:[#allocation2 + $0x71] sm:$0xff]
      %v2400 = vld [vmem:[#allocation2 + $0x79] sm:$0xff]
      %v2401 = vld [vmem:[#allocation2 + $0x81] sm:$0xff]
      %v2402 = vld [vmem:[#allocation2 + $0x89] sm:$0xff]
      %v2403 = vld [vmem:[#allocation2 + $0x91] sm:$0xff]
      %v2404 = vld [vmem:[#allocation2 + $0x99] sm:$0xff]
      %v2405 = vld [vmem:[#allocation2 + $0xa1] sm:$0xff]
      %v2406 = vld [vmem:[#allocation2 + $0xa9] sm:$0xff]
      %v2407 = vld [vmem:[#allocation2 + $0xb1] sm:$0xff]
      %v2408 = vld [vmem:[#allocation2 + $0xb9] sm:$0xff]
      %v2409 = vld [vmem:[#allocation2 + $0xc1] sm:$0xff]
      %v2410 = vld [vmem:[#allocation2 + $0xc9] sm:$0xff]
      %v2411 = vld [vmem:[#allocation2 + $0xd1] sm:$0xff]
      %v2412 = vld [vmem:[#allocation2 + $0xd9] sm:$0xff]
      %v2413 = vld [vmem:[#allocation2 + $0xe1] sm:$0xff]
      %v2414 = vld [vmem:[#allocation2 + $0xe9] sm:$0xff]
      %v2415 = vld [vmem:[#allocation2 + $0xf1] sm:$0xff]
      %v2416 = vld [vmem:[#allocation2 + $0xf9] sm:$0xff]
      %v2417 = vld [vmem:[#allocation2 + $0x101] sm:$0xff]
      %v2418 = vld [vmem:[#allocation2 + $0x109] sm:$0xff]
      %v2419 = vld [vmem:[#allocation2 + $0x111] sm:$0xff]
      %v2420 = vld [vmem:[#allocation2 + $0x119] sm:$0xff]
      %v2421 = vld [vmem:[#allocation2 + $0x2] sm:$0xff]
      %v2422 = vld [vmem:[#allocation2 + $0xa] sm:$0xff]
      %v2423 = vld [vmem:[#allocation2 + $0x12] sm:$0xff]
      %v2424 = vld [vmem:[#allocation2 + $0x1a] sm:$0xff]
      %v2425 = vld [vmem:[#allocation2 + $0x22] sm:$0xff]
      %v2426 = vld [vmem:[#allocation2 + $0x2a] sm:$0xff]
      %v2427 = vld [vmem:[#allocation2 + $0x32] sm:$0xff]
      %v2428 = vld [vmem:[#allocation2 + $0x3a] sm:$0xff]
      %v2429 = vld [vmem:[#allocation2 + $0x42] sm:$0xff]
      %v2430 = vld [vmem:[#allocation2 + $0x4a] sm:$0xff]
      %v2431 = vld [vmem:[#allocation2 + $0x52] sm:$0xff]
      %v2432 = vld [vmem:[#allocation2 + $0x5a] sm:$0xff]
      %v2433 = vld [vmem:[#allocation2 + $0x62] sm:$0xff]
      %v2434 = vld [vmem:[#allocation2 + $0x6a] sm:$0xff]
      %v2435 = vld [vmem:[#allocation2 + $0x72] sm:$0xff]
      %v2436 = vld [vmem:[#allocation2 + $0x7a] sm:$0xff]
      %v2437 = vld [vmem:[#allocation2 + $0x82] sm:$0xff]
      %v2438 = vld [vmem:[#allocation2 + $0x8a] sm:$0xff]
      %v2439 = vld [vmem:[#allocation2 + $0x92] sm:$0xff]
      %v2440 = vld [vmem:[#allocation2 + $0x9a] sm:$0xff]
      %v2441 = vld [vmem:[#allocation2 + $0xa2] sm:$0xff]
      %v2442 = vld [vmem:[#allocation2 + $0xaa] sm:$0xff]
      %v2443 = vld [vmem:[#allocation2 + $0xb2] sm:$0xff]
      %v2444 = vld [vmem:[#allocation2 + $0xba] sm:$0xff]
      %v2445 = vld [vmem:[#allocation2 + $0xc2] sm:$0xff]
      %v2446 = vld [vmem:[#allocation2 + $0xca] sm:$0xff]
      %v2447 = vld [vmem:[#allocation2 + $0xd2] sm:$0xff]
      %v2448 = vld [vmem:[#allocation2 + $0xda] sm:$0xff]
      %v2449 = vld [vmem:[#allocation2 + $0xe2] sm:$0xff]
      %v2450 = vld [vmem:[#allocation2 + $0xea] sm:$0xff]
      %v2451 = vld [vmem:[#allocation2 + $0xf2] sm:$0xff]
      %v2452 = vld [vmem:[#allocation2 + $0xfa] sm:$0xff]
      %v2453 = vld [vmem:[#allocation2 + $0x102] sm:$0xff]
      %v2454 = vld [vmem:[#allocation2 + $0x10a] sm:$0xff]
      %v2455 = vld [vmem:[#allocation2 + $0x112] sm:$0xff]
      %v2456 = vld [vmem:[#allocation2 + $0x11a] sm:$0xff]
      %v2457 = vld [vmem:[#allocation2 + $0x122] sm:$0xff]
      %v2458 = vld [vmem:[#allocation2 + $0x12a] sm:$0xff]
      %v2459 = vld [vmem:[#allocation2 + $0x13] sm:$0xff]
      %v2460 = vld [vmem:[#allocation2 + $0x1b] sm:$0xff]
      %v2461 = vld [vmem:[#allocation2 + $0x23] sm:$0xff]
      %v2462 = vld [vmem:[#allocation2 + $0x2b] sm:$0xff]
      %v2463 = vld [vmem:[#allocation2 + $0x33] sm:$0xff]
      %v2464 = vld [vmem:[#allocation2 + $0x3b] sm:$0xff]
      %v2465 = vld [vmem:[#allocation2 + $0x43] sm:$0xff]
      %v2466 = vld [vmem:[#allocation2 + $0x4b] sm:$0xff]
      %v2467 = vld [vmem:[#allocation2 + $0x53] sm:$0xff]
      %v2468 = vld [vmem:[#allocation2 + $0x5b] sm:$0xff]
      %v2469 = vld [vmem:[#allocation2 + $0x63] sm:$0xff]
      %v2470 = vld [vmem:[#allocation2 + $0x6b] sm:$0xff]
      %v2471 = vld [vmem:[#allocation2 + $0x73] sm:$0xff]
      %v2472 = vld [vmem:[#allocation2 + $0x7b] sm:$0xff]
      %v2473 = vld [vmem:[#allocation2 + $0x83] sm:$0xff]
      %v2474 = vld [vmem:[#allocation2 + $0x8b] sm:$0xff]
      %v2475 = vld [vmem:[#allocation2 + $0x93] sm:$0xff]
      %v2476 = vld [vmem:[#allocation2 + $0x9b] sm:$0xff]
      %v2477 = vld [vmem:[#allocation2 + $0xa3] sm:$0xff]
      %v2478 = vld [vmem:[#allocation2 + $0xab] sm:$0xff]
      %v2479 = vld [vmem:[#allocation2 + $0xb3] sm:$0xff]
      %v2480 = vld [vmem:[#allocation2 + $0xbb] sm:$0xff]
      %v2481 = vld [vmem:[#allocation2 + $0xc3] sm:$0xff]
      %v2482 = vld [vmem:[#allocation2 + $0xcb] sm:$0xff]
      %v2483 = vld [vmem:[#allocation2 + $0xd3] sm:$0xff]
      %v2484 = vld [vmem:[#allocation2 + $0xdb] sm:$0xff]
      %v2485 = vld [vmem:[#allocation2 + $0xe3] sm:$0xff]
      %v2486 = vld [vmem:[#allocation2 + $0xeb] sm:$0xff]
      %v2487 = vld [vmem:[#allocation2 + $0xf3] sm:$0xff]
      %v2488 = vld [vmem:[#allocation2 + $0xfb] sm:$0xff]
      %v2489 = vld [vmem:[#allocation2 + $0x103] sm:$0xff]
      %v2490 = vld [vmem:[#allocation2 + $0x10b] sm:$0xff]
      %v2491 = vld [vmem:[#allocation2 + $0x113] sm:$0xff]
      %v2492 = vld [vmem:[#allocation2 + $0x11b] sm:$0xff]
      %v2493 = vld [vmem:[#allocation2 + $0x123] sm:$0xff]
      %v2494 = vld [vmem:[#allocation2 + $0x12b] sm:$0xff]
      %v2495 = vld [vmem:[#allocation2 + $0x14] sm:$0xff]
      %v2496 = vld [vmem:[#allocation2 + $0x1c] sm:$0xff]
      %v2497 = vld [vmem:[#allocation2 + $0x24] sm:$0xff]
      %v2498 = vld [vmem:[#allocation2 + $0x2c] sm:$0xff]
      %v2499 = vld [vmem:[#allocation2 + $0x34] sm:$0xff]
      %v2500 = vld [vmem:[#allocation2 + $0x3c] sm:$0xff]
      %v2501 = vld [vmem:[#allocation2 + $0x44] sm:$0xff]
      %v2502 = vld [vmem:[#allocation2 + $0x4c] sm:$0xff]
      %v2503 = vld [vmem:[#allocation2 + $0x54] sm:$0xff]
      %v2504 = vld [vmem:[#allocation2 + $0x5c] sm:$0xff]
      %v2505 = vld [vmem:[#allocation2 + $0x64] sm:$0xff]
      %v2506 = vld [vmem:[#allocation2 + $0x6c] sm:$0xff]
      %v2507 = vld [vmem:[#allocation2 + $0x74] sm:$0xff]
      %v2508 = vld [vmem:[#allocation2 + $0x7c] sm:$0xff]
      %v2509 = vld [vmem:[#allocation2 + $0x84] sm:$0xff]
      %v2510 = vld [vmem:[#allocation2 + $0x8c] sm:$0xff]
      %v2511 = vld [vmem:[#allocation2 + $0x94] sm:$0xff]
      %v2512 = vld [vmem:[#allocation2 + $0x9c] sm:$0xff]
      %v2513 = vld [vmem:[#allocation2 + $0xa4] sm:$0xff]
      %v2514 = vld [vmem:[#allocation2 + $0xac] sm:$0xff]
      %v2515 = vld [vmem:[#allocation2 + $0xb4] sm:$0xff]
      %v2516 = vld [vmem:[#allocation2 + $0xbc] sm:$0xff]
      %v2517 = vld [vmem:[#allocation2 + $0xc4] sm:$0xff]
      %v2518 = vld [vmem:[#allocation2 + $0xcc] sm:$0xff]
      %v2519 = vld [vmem:[#allocation2 + $0xd4] sm:$0xff]
      %v2520 = vld [vmem:[#allocation2 + $0xdc] sm:$0xff]
      %v2521 = vld [vmem:[#allocation2 + $0xe4] sm:$0xff]
      %v2522 = vld [vmem:[#allocation2 + $0xec] sm:$0xff]
      %v2523 = vld [vmem:[#allocation2 + $0xf4] sm:$0xff]
      %v2524 = vld [vmem:[#allocation2 + $0xfc] sm:$0xff]
      %v2525 = vld [vmem:[#allocation2 + $0x104] sm:$0xff]
      %v2526 = vld [vmem:[#allocation2 + $0x10c] sm:$0xff]
      %v2527 = vld [vmem:[#allocation2 + $0x114] sm:$0xff]
      %v2528 = vld [vmem:[#allocation2 + $0x11c] sm:$0xff]
      %v2529 = vld [vmem:[#allocation2 + $0x124] sm:$0xff]
      %v2530 = vld [vmem:[#allocation2 + $0x12c] sm:$0xff]
      %v2531 = vld [vmem:[#allocation2 + $0x134] sm:$0xff]
      %v2532 = vld [vmem:[#allocation2 + $0x13c] sm:$0xff]
      %v2533 = vld [vmem:[#allocation2 + $0x25] sm:$0xff]
      %v2534 = vld [vmem:[#allocation2 + $0x2d] sm:$0xff]
      %v2535 = vld [vmem:[#allocation2 + $0x35] sm:$0xff]
      %v2536 = vld [vmem:[#allocation2 + $0x3d] sm:$0xff]
      %v2537 = vld [vmem:[#allocation2 + $0x45] sm:$0xff]
      %v2538 = vld [vmem:[#allocation2 + $0x4d] sm:$0xff]
      %v2539 = vld [vmem:[#allocation2 + $0x55] sm:$0xff]
      %v2540 = vld [vmem:[#allocation2 + $0x5d] sm:$0xff]
      %v2541 = vld [vmem:[#allocation2 + $0x65] sm:$0xff]
      %v2542 = vld [vmem:[#allocation2 + $0x6d] sm:$0xff]
      %v2543 = vld [vmem:[#allocation2 + $0x75] sm:$0xff]
      %v2544 = vld [vmem:[#allocation2 + $0x7d] sm:$0xff]
      %v2545 = vld [vmem:[#allocation2 + $0x85] sm:$0xff]
      %v2546 = vld [vmem:[#allocation2 + $0x8d] sm:$0xff]
      %v2547 = vld [vmem:[#allocation2 + $0x95] sm:$0xff]
      %v2548 = vld [vmem:[#allocation2 + $0x9d] sm:$0xff]
      %v2549 = vld [vmem:[#allocation2 + $0xa5] sm:$0xff]
      %v2550 = vld [vmem:[#allocation2 + $0xad] sm:$0xff]
      %v2551 = vld [vmem:[#allocation2 + $0xb5] sm:$0xff]
      %v2552 = vld [vmem:[#allocation2 + $0xbd] sm:$0xff]
      %v2553 = vld [vmem:[#allocation2 + $0xc5] sm:$0xff]
      %v2554 = vld [vmem:[#allocation2 + $0xcd] sm:$0xff]
      %v2555 = vld [vmem:[#allocation2 + $0xd5] sm:$0xff]
      %v2556 = vld [vmem:[#allocation2 + $0xdd] sm:$0xff]
      %v2557 = vld [vmem:[#allocation2 + $0xe5] sm:$0xff]
      %v2558 = vld [vmem:[#allocation2 + $0xed] sm:$0xff]
      %v2559 = vld [vmem:[#allocation2 + $0xf5] sm:$0xff]
      %v2560 = vld [vmem:[#allocation2 + $0xfd] sm:$0xff]
      %v2561 = vld [vmem:[#allocation2 + $0x105] sm:$0xff]
      %v2562 = vld [vmem:[#allocation2 + $0x10d] sm:$0xff]
      %v2563 = vld [vmem:[#allocation2 + $0x115] sm:$0xff]
      %v2564 = vld [vmem:[#allocation2 + $0x11d] sm:$0xff]
      %v2565 = vld [vmem:[#allocation2 + $0x125] sm:$0xff]
      %v2566 = vld [vmem:[#allocation2 + $0x12d] sm:$0xff]
      %v2567 = vld [vmem:[#allocation2 + $0x135] sm:$0xff]
      %v2568 = vld [vmem:[#allocation2 + $0x13d] sm:$0xff]
      %v2569 = vld [vmem:[#allocation2 + $0x26] sm:$0xff]
      %v2570 = vld [vmem:[#allocation2 + $0x2e] sm:$0xff]
      %v2571 = vld [vmem:[#allocation2 + $0x36] sm:$0xff]
      %v2572 = vld [vmem:[#allocation2 + $0x3e] sm:$0xff]
      %v2573 = vld [vmem:[#allocation2 + $0x46] sm:$0xff]
      %v2574 = vld [vmem:[#allocation2 + $0x4e] sm:$0xff]
      %v2575 = vld [vmem:[#allocation2 + $0x56] sm:$0xff]
      %v2576 = vld [vmem:[#allocation2 + $0x5e] sm:$0xff]
      %v2577 = vld [vmem:[#allocation2 + $0x66] sm:$0xff]
      %v2578 = vld [vmem:[#allocation2 + $0x6e] sm:$0xff]
      %v2579 = vld [vmem:[#allocation2 + $0x76] sm:$0xff]
      %v2580 = vld [vmem:[#allocation2 + $0x7e] sm:$0xff]
      %v2581 = vld [vmem:[#allocation2 + $0x86] sm:$0xff]
      %v2582 = vld [vmem:[#allocation2 + $0x8e] sm:$0xff]
      %v2583 = vld [vmem:[#allocation2 + $0x96] sm:$0xff]
      %v2584 = vld [vmem:[#allocation2 + $0x9e] sm:$0xff]
      %v2585 = vld [vmem:[#allocation2 + $0xa6] sm:$0xff]
      %v2586 = vld [vmem:[#allocation2 + $0xae] sm:$0xff]
      %v2587 = vld [vmem:[#allocation2 + $0xb6] sm:$0xff]
      %v2588 = vld [vmem:[#allocation2 + $0xbe] sm:$0xff]
      %v2589 = vld [vmem:[#allocation2 + $0xc6] sm:$0xff]
      %v2590 = vld [vmem:[#allocation2 + $0xce] sm:$0xff]
      %v2591 = vld [vmem:[#allocation2 + $0xd6] sm:$0xff]
      %v2592 = vld [vmem:[#allocation2 + $0xde] sm:$0xff]
      %v2593 = vld [vmem:[#allocation2 + $0xe6] sm:$0xff]
      %v2594 = vld [vmem:[#allocation2 + $0xee] sm:$0xff]
      %v2595 = vld [vmem:[#allocation2 + $0xf6] sm:$0xff]
      %v2596 = vld [vmem:[#allocation2 + $0xfe] sm:$0xff]
      %v2597 = vld [vmem:[#allocation2 + $0x106] sm:$0xff]
      %v2598 = vld [vmem:[#allocation2 + $0x10e] sm:$0xff]
      %v2599 = vld [vmem:[#allocation2 + $0x116] sm:$0xff]
      %v2600 = vld [vmem:[#allocation2 + $0x11e] sm:$0xff]
      %v2601 = vld [vmem:[#allocation2 + $0x126] sm:$0xff]
      %v2602 = vld [vmem:[#allocation2 + $0x12e] sm:$0xff]
      %v2603 = vld [vmem:[#allocation2 + $0x136] sm:$0xff]
      %v2604 = vld [vmem:[#allocation2 + $0x13e] sm:$0xff]
      %v2605 = vld [vmem:[%s2] sm:$0xff]
      %v2606 = vld [vmem:[%s2 + $0x8] sm:$0xff]
      %v2607 = vld [vmem:[%s2 + $0x10] sm:$0xff]
      %v2608 = vld [vmem:[%s2 + $0x18] sm:$0xff]
      %v2609 = vld [vmem:[%s2 + $0x20] sm:$0xff]
      %v2610 = vld [vmem:[%s2 + $0x28] sm:$0xff]
      %v2611 = vld [vmem:[%s2 + $0x30] sm:$0xff]
      %v2612 = vld [vmem:[%s2 + $0x38] sm:$0xff]
      %v2613 = vld [vmem:[%s2 + $0x40] sm:$0xff]
      %v2614 = vld [vmem:[%s2 + $0x48] sm:$0xff]
      %v2615 = vld [vmem:[%s2 + $0x50] sm:$0xff]
      %v2616 = vld [vmem:[%s2 + $0x58] sm:$0xff]
      %v2617 = vld [vmem:[%s2 + $0x60] sm:$0xff]
      %v2618 = vld [vmem:[%s2 + $0x68] sm:$0xff]
      %v2619 = vld [vmem:[%s2 + $0x70] sm:$0xff]
      %v2620 = vld [vmem:[%s2 + $0x78] sm:$0xff]
      %v2621 = vld [vmem:[%s2 + $0x80] sm:$0xff]
      %v2622 = vld [vmem:[%s2 + $0x88] sm:$0xff]
      %v2623 = vld [vmem:[%s2 + $0x90] sm:$0xff]
      %v2624 = vld [vmem:[%s2 + $0x98] sm:$0xff]
      %v2625 = vld [vmem:[%s2 + $0xa0] sm:$0xff]
      %v2626 = vld [vmem:[%s2 + $0xa8] sm:$0xff]
      %v2627 = vld [vmem:[%s2 + $0xb0] sm:$0xff]
      %v2628 = vld [vmem:[%s2 + $0xb8] sm:$0xff]
      %v2629 = vld [vmem:[%s2 + $0xc0] sm:$0xff]
      %v2630 = vld [vmem:[%s2 + $0xc8] sm:$0xff]
      %v2631 = vld [vmem:[%s2 + $0xd0] sm:$0xff]
      %v2632 = vld [vmem:[%s2 + $0xd8] sm:$0xff]
      %v2633 = vld [vmem:[%s2 + $0xe0] sm:$0xff]
      %v2634 = vld [vmem:[%s2 + $0xe8] sm:$0xff]
      %v2635 = vld [vmem:[%s2 + $0xf0] sm:$0xff]
      %v2636 = vld [vmem:[%s2 + $0xf8] sm:$0xff]
      %v2637 = vld [vmem:[%s2 + $0x100] sm:$0xff]
      %v2638 = vld [vmem:[%s2 + $0x108] sm:$0xff]
      %v2639 = vld [vmem:[%s2 + $0x110] sm:$0xff]
      %v2640 = vld [vmem:[%s2 + $0x118] sm:$0xff]
      %v2641 = vld [vmem:[%s2 + $0x120] sm:$0xff]
      %v2642 = vld [vmem:[%s2 + $0x128] sm:$0xff]
      %v2643 = vld [vmem:[%s2 + $0x130] sm:$0xff]
      %v2644 = vld [vmem:[%s2 + $0x138] sm:$0xff]
      %v2645 = vld [vmem:[%s2 + $0x140] sm:$0xff]
      %v2646 = vld [vmem:[%s2 + $0x148] sm:$0xff]
      %v2647 = vld [vmem:[%s2 + $0x150] sm:$0xff]
      %v2648 = vld [vmem:[%s2 + $0x158] sm:$0xff]
      %v2649 = vld [vmem:[%s2 + $0x160] sm:$0xff]
      %v2650 = vld [vmem:[%s2 + $0x168] sm:$0xff]
      %v2651 = vld [vmem:[%s2 + $0x170] sm:$0xff]
      %v2652 = vld [vmem:[%s2 + $0x178] sm:$0xff]
      %v2653 = vld [vmem:[%s2 + $0x180] sm:$0xff]
      %v2654 = vld [vmem:[%s2 + $0x188] sm:$0xff]
      %v2655 = vld [vmem:[%s2 + $0x190] sm:$0xff]
      %v2656 = vld [vmem:[%s2 + $0x198] sm:$0xff]
      %v2657 = vld [vmem:[%s2 + $0x1a0] sm:$0xff]
      %v2658 = vld [vmem:[%s2 + $0x1a8] sm:$0xff]
      %v2659 = vld [vmem:[%s2 + $0x1b0] sm:$0xff]
      %v2660 = vld [vmem:[%s2 + $0x1b8] sm:$0xff]
      %v2661 = vld [vmem:[%s2 + $0x1c0] sm:$0xff]
      %v2662 = vld [vmem:[%s2 + $0x1c8] sm:$0xff]
      %v2663 = vld [vmem:[%s2 + $0x1d0] sm:$0xff]
      %v2664 = vld [vmem:[%s2 + $0x1d8] sm:$0xff]
      %v2665 = vld [vmem:[%s2 + $0x1e0] sm:$0xff]
      %v2666 = vld [vmem:[%s2 + $0x1e8] sm:$0xff]
      %v2667 = vld [vmem:[%s2 + $0x1f0] sm:$0xff]
      %v2668 = vld [vmem:[%s2 + $0x1f8] sm:$0xff]
      %v2669 = vld [vmem:[%s2 + $0x200] sm:$0xff]
      %v2670 = vld [vmem:[%s2 + $0x208] sm:$0xff]
      %v2671 = vld [vmem:[%s2 + $0x210] sm:$0xff]
      %v2672 = vld [vmem:[%s2 + $0x218] sm:$0xff]
      %v2673 = vld [vmem:[%s2 + $0x220] sm:$0xff]
      %v2674 = vld [vmem:[%s2 + $0x228] sm:$0xff]
      %v2675 = vld [vmem:[%s2 + $0x230] sm:$0xff]
      %v2676 = vld [vmem:[%s2 + $0x238] sm:$0xff]
      %v2677 = vld [vmem:[%s2 + $0x240] sm:$0xff]
      %v2678 = vld [vmem:[%s2 + $0x248] sm:$0xff]
      %v2679 = vld [vmem:[%s2 + $0x250] sm:$0xff]
      %v2680 = vld [vmem:[%s2 + $0x258] sm:$0xff]
      %v2681 = vld [vmem:[%s2 + $0x260] sm:$0xff]
      %v2682 = vld [vmem:[%s2 + $0x268] sm:$0xff]
      %v2683 = vld [vmem:[%s2 + $0x270] sm:$0xff]
      %v2684 = vld [vmem:[%s2 + $0x278] sm:$0xff]
      %v2685 = vld [vmem:[%s2 + $0x280] sm:$0xff]
      %v2686 = vld [vmem:[%s2 + $0x288] sm:$0xff]
      %v2687 = vld [vmem:[%s2 + $0x290] sm:$0xff]
      %v2688 = vld [vmem:[%s2 + $0x298] sm:$0xff]
      %v2689 = vld [vmem:[%s2 + $0x2a0] sm:$0xff]
      %v2690 = vld [vmem:[%s2 + $0x2a8] sm:$0xff]
      %v2691 = vld [vmem:[%s2 + $0x2b0] sm:$0xff]
      %v2692 = vld [vmem:[%s2 + $0x2b8] sm:$0xff]
      %v2693 = vld [vmem:[%s2 + $0x2c0] sm:$0xff]
      %v2694 = vld [vmem:[%s2 + $0x2c8] sm:$0xff]
      %v2695 = vld [vmem:[%s2 + $0x2d0] sm:$0xff]
      %v2696 = vld [vmem:[%s2 + $0x2d8] sm:$0xff]
      %v2697 = vld [vmem:[%s2 + $0x2e0] sm:$0xff]
      %v2698 = vld [vmem:[%s2 + $0x2e8] sm:$0xff]
      %v2699 = vld [vmem:[%s2 + $0x2f0] sm:$0xff]
      %v2700 = vld [vmem:[%s2 + $0x2f8] sm:$0xff]
      %v2701 = vld [vmem:[%s2 + $0x300] sm:$0xff]
      %v2702 = vld [vmem:[%s2 + $0x308] sm:$0xff]
      %v2703 = vld [vmem:[%s2 + $0x310] sm:$0xff]
      %v2704 = vld [vmem:[%s2 + $0x318] sm:$0xff]
      %v2705 = vld [vmem:[%s2 + $0x320] sm:$0xff]
      %v2706 = vld [vmem:[%s2 + $0x328] sm:$0xff]
      %v2707 = vld [vmem:[%s2 + $0x330] sm:$0xff]
      %v2708 = vld [vmem:[%s2 + $0x338] sm:$0xff]
      %v2709 = vld [vmem:[%s2 + $0x340] sm:$0xff]
      %v2710 = vld [vmem:[%s2 + $0x348] sm:$0xff]
      %v2711 = vld [vmem:[%s2 + $0x350] sm:$0xff]
      %v2712 = vld [vmem:[%s2 + $0x358] sm:$0xff]
      %v2713 = vld [vmem:[%s2 + $0x360] sm:$0xff]
      %v2714 = vld [vmem:[%s2 + $0x368] sm:$0xff]
      %v2715 = vld [vmem:[%s2 + $0x370] sm:$0xff]
      %v2716 = vld [vmem:[%s2 + $0x378] sm:$0xff]
      %v2717 = vld [vmem:[%s2 + $0x380] sm:$0xff]
      %v2718 = vld [vmem:[%s2 + $0x388] sm:$0xff]
      %v2719 = vld [vmem:[%s2 + $0x390] sm:$0xff]
      %v2720 = vld [vmem:[%s2 + $0x398] sm:$0xff]
      %v2721 = vld [vmem:[%s2 + $0x3a0] sm:$0xff]
      %v2722 = vld [vmem:[%s2 + $0x3a8] sm:$0xff]
      %v2723 = vld [vmem:[%s2 + $0x3b0] sm:$0xff]
      %v2724 = vld [vmem:[%s2 + $0x3b8] sm:$0xff]
      %v2725 = vld [vmem:[%s2 + $0x3c0] sm:$0xff]
      %v2726 = vld [vmem:[%s2 + $0x3c8] sm:$0xff]
      %v2727 = vld [vmem:[%s2 + $0x3d0] sm:$0xff]
      %v2728 = vld [vmem:[%s2 + $0x3d8] sm:$0xff]
      %v2729 = vld [vmem:[%s2 + $0x3e0] sm:$0xff]
      %v2730 = vld [vmem:[%s2 + $0x3e8] sm:$0xff]
      %v2731 = vld [vmem:[%s2 + $0x3f0] sm:$0xff]
      %v2732 = vld [vmem:[%s2 + $0x3f8] sm:$0xff]
      %v2733 = vld [vmem:[%s2 + $0x400] sm:$0xff]
      %v2734 = vld [vmem:[%s2 + $0x408] sm:$0xff]
      %v2735 = vld [vmem:[%s2 + $0x410] sm:$0xff]
      %v2736 = vld [vmem:[%s2 + $0x418] sm:$0xff]
      %v2737 = vld [vmem:[%s2 + $0x420] sm:$0xff]
      %v2738 = vld [vmem:[%s2 + $0x428] sm:$0xff]
      %v2739 = vld [vmem:[%s2 + $0x430] sm:$0xff]
      %v2740 = vld [vmem:[%s2 + $0x438] sm:$0xff]
      %v2741 = vld [vmem:[%s2 + $0x440] sm:$0xff]
      %v2742 = vld [vmem:[%s2 + $0x448] sm:$0xff]
      %v2743 = vld [vmem:[%s2 + $0x450] sm:$0xff]
      %v2744 = vld [vmem:[%s2 + $0x458] sm:$0xff]
      %v2745 = vld [vmem:[%s2 + $0x460] sm:$0xff]
      %v2746 = vld [vmem:[%s2 + $0x468] sm:$0xff]
      %v2747 = vld [vmem:[%s2 + $0x470] sm:$0xff]
      %v2748 = vld [vmem:[%s2 + $0x478] sm:$0xff]
      %2749 = vmatprep.subr.mxu0 0.0
      %2750 = vmatpush1.msra.mxu0 %v2605
      %2751 = vmatprep.subr.mxu0 0.0
      %2752 = vmatpush1.msra.mxu0 %v2606
      %2753 = vmatprep.subr.mxu0 0.0
      %2754 = vmatpush1.msra.mxu0 %v2607
      %2755 = vmatprep.subr.mxu0 0.0
      %2756 = vmatpush1.msra.mxu0 %v2608
      %2757 = vmatprep.subr.mxu0 0.0
      %2758 = vmatpush1.msra.mxu0 %v2609
      %2759 = vmatprep.subr.mxu0 0.0
      %2760 = vmatpush1.msra.mxu0 %v2610
      %2761 = vmatprep.subr.mxu0 0.0
      %2762 = vmatpush1.msra.mxu0 %v2611
      %2763 = vmatprep.subr.mxu0 0.0
      %2764 = vmatpush1.msra.mxu0 %v2612
      %2765 = vmatprep.subr.mxu0 0.0
      %2766 = vmatpush1.msra.mxu0 %v2613
      %2767 = vmatprep.subr.mxu0 0.0
      %2768 = vmatpush1.msra.mxu0 %v2614
      %2769 = vmatprep.subr.mxu0 0.0
      %2770 = vmatpush1.msra.mxu0 %v2615
      %2771 = vmatprep.subr.mxu0 0.0
      %2772 = vmatpush1.msra.mxu0 %v2616
      %2773 = vmatprep.subr.mxu0 0.0
      %2774 = vmatpush1.msra.mxu0 %v2617
      %2775 = vmatprep.subr.mxu0 0.0
      %2776 = vmatpush1.msra.mxu0 %v2618
      %2777 = vmatprep.subr.mxu0 0.0
      %2778 = vmatpush1.msra.mxu0 %v2619
      %2779 = vmatprep.subr.mxu0 0.0
      %2780 = vmatpush1.msra.mxu0 %v2620
      %2781 = vmatprep.subr.mxu0 0.0
      %2782 = vmatpush1.msra.mxu0 %v2621
      %2783 = vmatprep.subr.mxu0 0.0
      %2784 = vmatpush1.msra.mxu0 %v2622
      %2785 = vmatprep.subr.mxu0 0.0
      %2786 = vmatpush1.msra.mxu0 %v2623
      %2787 = vmatprep.subr.mxu0 0.0
      %2788 = vmatpush1.msra.mxu0 %v2624
      %2789 = vmatprep.subr.mxu0 0.0
      %2790 = vmatpush1.msra.mxu0 %v2625
      %2791 = vmatprep.subr.mxu0 0.0
      %2792 = vmatpush1.msra.mxu0 %v2626
      %2793 = vmatprep.subr.mxu0 0.0
      %2794 = vmatpush1.msra.mxu0 %v2627
      %2795 = vmatprep.subr.mxu0 0.0
      %2796 = vmatpush1.msra.mxu0 %v2628
      %2797 = vmatprep.subr.mxu0 0.0
      %2798 = vmatpush1.msra.mxu0 %v2629
      %2799 = vmatprep.subr.mxu0 0.0
      %2800 = vmatpush1.msra.mxu0 %v2630
      %2801 = vmatprep.subr.mxu0 0.0
      %2802 = vmatpush1.msra.mxu0 %v2631
      %2803 = vmatprep.subr.mxu0 0.0
      %2804 = vmatpush1.msra.mxu0 %v2632
      %2805 = vmatprep.subr.mxu0 0.0
      %2806 = vmatpush1.msra.mxu0 %v2633
      %2807 = vmatprep.subr.mxu0 0.0
      %2808 = vmatpush1.msra.mxu0 %v2634
      %2809 = vmatprep.subr.mxu0 0.0
      %2810 = vmatpush1.msra.mxu0 %v2635
      %2811 = vmatprep.subr.mxu0 0.0
      %2812 = vmatpush1.msra.mxu0 %v2636
      %2813 = vmatprep.mubr.f32.mxu0 %v2385
      %2814 = vmatmul.mubr.f32.gmra.mrb[0].mxu0 %v2349
      %v2815 = vpop.f32.mrb[0].mxu0
      %v2816 = vadd.f32 0.0, %v2815
      %v2817 = vpop.f32.mrb[0].mxu0
      %2818 = vmatprep.mubr.f32.mxu0 %v2386
      %2819 = vmatmul.mubr.f32.gmra.mrb[0].mxu0 %v2350
      %v2820 = vpop.f32.mrb[0].mxu0
      %v2821 = vadd.f32 0.0, %v2820
      %v2822 = vpop.f32.mrb[0].mxu0
      %2823 = vmatprep.mubr.f32.mxu0 %v2387
      %2824 = vmatmul.mubr.f32.gmra.mrb[0].mxu0 %v2351
      %v2825 = vpop.f32.mrb[0].mxu0
      %v2826 = vadd.f32 0.0, %v2825
      %v2827 = vpop.f32.mrb[0].mxu0
      %2828 = vmatprep.mubr.f32.mxu0 %v2388
      %2829 = vmatmul.mubr.f32.gmra.mrb[0].mxu0 %v2352
      %v2830 = vpop.f32.mrb[0].mxu0
      %v2831 = vadd.f32 0.0, %v2830
      %v2832 = vpop.f32.mrb[0].mxu0
      %2833 = vmatprep.mubr.f32.mxu0 %v2389
      %2834 = vmatmul.mubr.f32.gmra.mrb[0].mxu0 %v2353
      %v2835 = vpop.f32.mrb[0].mxu0
      %v2836 = vadd.f32 0.0, %v2835
      %v2837 = vpop.f32.mrb[0].mxu0
      %2838 = vmatprep.mubr.f32.mxu0 %v2390
      %2839 = vmatmul.mubr.f32.gmra.mrb[0].mxu0 %v2354
      %v2840 = vpop.f32.mrb[0].mxu0
      %v2841 = vadd.f32 0.0, %v2840
      %v2842 = vpop.f32.mrb[0].mxu0
      %2843 = vmatprep.mubr.f32.mxu0 %v2391
      %2844 = vmatmul.mubr.f32.gmra.mrb[0].mxu0 %v2355
      %v2845 = vpop.f32.mrb[0].mxu0
      %v2846 = vadd.f32 0.0, %v2845
      %v2847 = vpop.f32.mrb[0].mxu0
      %2848 = vmatprep.mubr.f32.mxu0 %v2392
      %2849 = vmatmul.mubr.f32.gmra.mrb[0].mxu0 %v2356
      %v2850 = vpop.f32.mrb[0].mxu0
      %v2851 = vadd.f32 0.0, %v2850
      %v2852 = vpop.f32.mrb[0].mxu0
      %2853 = vmatprep.mubr.f32.mxu0 %v2393
      %2854 = vmatmul.mubr.f32.gmra.mrb[0].mxu0 %v2357
      %v2855 = vpop.f32.mrb[0].mxu0
      %v2856 = vadd.f32 0.0, %v2855
      %v2857 = vpop.f32.mrb[0].mxu0
      %2858 = vmatprep.mubr.f32.mxu0 %v2394
      %2859 = vmatmul.mubr.f32.gmra.mrb[0].mxu0 %v2358
      %v2860 = vpop.f32.mrb[0].mxu0
      %v2861 = vadd.f32 0.0, %v2860
      %v2862 = vpop.f32.mrb[0].mxu0
      %2863 = vmatprep.mubr.f32.mxu0 %v2395
      %2864 = vmatmul.mubr.f32.gmra.mrb[0].mxu0 %v2359
      %v2865 = vpop.f32.mrb[0].mxu0
      %v2866 = vadd.f32 0.0, %v2865
      %v2867 = vpop.f32.mrb[0].mxu0
      %2868 = vmatprep.mubr.f32.mxu0 %v2396
      %2869 = vmatmul.mubr.f32.gmra.mrb[0].mxu0 %v2360
      %v2870 = vpop.f32.mrb[0].mxu0
      %v2871 = vadd.f32 0.0, %v2870
      %v2872 = vpop.f32.mrb[0].mxu0
      %2873 = vmatprep.mubr.f32.mxu0 %v2397
      %2874 = vmatmul.mubr.f32.gmra.mrb[0].mxu0 %v2361
      %v2875 = vpop.f32.mrb[0].mxu0
      %v2876 = vadd.f32 0.0, %v2875
      %v2877 = vpop.f32.mrb[0].mxu0
      %2878 = vmatprep.mubr.f32.mxu0 %v2398
      %2879 = vmatmul.mubr.f32.gmra.mrb[0].mxu0 %v2362
      %v2880 = vpop.f32.mrb[0].mxu0
      %v2881 = vadd.f32 0.0, %v2880
      %v2882 = vpop.f32.mrb[0].mxu0
      %2883 = vmatprep.mubr.f32.mxu0 %v2399
      %2884 = vmatmul.mubr.f32.gmra.mrb[0].mxu0 %v2363
      %v2885 = vpop.f32.mrb[0].mxu0
      %v2886 = vadd.f32 0.0, %v2885
      %v2887 = vpop.f32.mrb[0].mxu0
      %2888 = vmatprep.mubr.f32.mxu0 %v2400
      %2889 = vmatmul.mubr.f32.gmra.mrb[0].mxu0 %v2364
      %v2890 = vpop.f32.mrb[0].mxu0
      %v2891 = vadd.f32 0.0, %v2890
      %v2892 = vpop.f32.mrb[0].mxu0
      %2893 = vmatprep.mubr.f32.mxu0 %v2401
      %2894 = vmatmul.mubr.f32.gmra.mrb[0].mxu0 %v2365
      %v2895 = vpop.f32.mrb[0].mxu0
      %v2896 = vadd.f32 0.0, %v2895
      %v2897 = vpop.f32.mrb[0].mxu0
      %2898 = vmatprep.mubr.f32.mxu0 %v2402
      %2899 = vmatmul.mubr.f32.gmra.mrb[0].mxu0 %v2366
      %v2900 = vpop.f32.mrb[0].mxu0
      %v2901 = vadd.f32 0.0, %v2900
      %v2902 = vpop.f32.mrb[0].mxu0
      %2903 = vmatprep.mubr.f32.mxu0 %v2403
      %2904 = vmatmul.mubr.f32.gmra.mrb[0].mxu0 %v2367
      %v2905 = vpop.f32.mrb[0].mxu0
      %v2906 = vadd.f32 0.0, %v2905
      %v2907 = vpop.f32.mrb[0].mxu0
      %2908 = vmatprep.mubr.f32.mxu0 %v2404
      %2909 = vmatmul.mubr.f32.gmra.mrb[0].mxu0 %v2368
      %v2910 = vpop.f32.mrb[0].mxu0
      %v2911 = vadd.f32 0.0, %v2910
      %v2912 = vpop.f32.mrb[0].mxu0
      %2913 = vmatprep.mubr.f32.mxu0 %v2405
      %2914 = vmatmul.mubr.f32.gmra.mrb[0].mxu0 %v2369
      %v2915 = vpop.f32.mrb[0].mxu0
      %v2916 = vadd.f32 0.0, %v2915
      %v2917 = vpop.f32.mrb[0].mxu0
      %2918 = vmatprep.mubr.f32.mxu0 %v2406
      %2919 = vmatmul.mubr.f32.gmra.mrb[0].mxu0 %v2370
      %v2920 = vpop.f32.mrb[0].mxu0
      %v2921 = vadd.f32 0.0, %v2920
      %v2922 = vpop.f32.mrb[0].mxu0
      %2923 = vmatprep.mubr.f32.mxu0 %v2407
      %2924 = vmatmul.mubr.f32.gmra.mrb[0].mxu0 %v2371
      %v2925 = vpop.f32.mrb[0].mxu0
      %v2926 = vadd.f32 0.0, %v2925
      %v2927 = vpop.f32.mrb[0].mxu0
      %2928 = vmatprep.mubr.f32.mxu0 %v2408
      %2929 = vmatmul.mubr.f32.gmra.mrb[0].mxu0 %v2372
      %v2930 = vpop.f32.mrb[0].mxu0
      %v2931 = vadd.f32 0.0, %v2930
      %v2932 = vpop.f32.mrb[0].mxu0
      %2933 = vmatprep.mubr.f32.mxu0 %v2409
      %2934 = vmatmul.mubr.f32.gmra.mrb[0].mxu0 %v2373
      %v2935 = vpop.f32.mrb[0].mxu0
      %v2936 = vadd.f32 0.0, %v2935
      %v2937 = vpop.f32.mrb[0].mxu0
      %2938 = vmatprep.mubr.f32.mxu0 %v2410
      %2939 = vmatmul.mubr.f32.gmra.mrb[0].mxu0 %v2374
      %v2940 = vpop.f32.mrb[0].mxu0
      %v2941 = vadd.f32 0.0, %v2940
      %v2942 = vpop.f32.mrb[0].mxu0
      %2943 = vmatprep.mubr.f32.mxu0 %v2411
      %2944 = vmatmul.mubr.f32.gmra.mrb[0].mxu0 %v2375
      %v2945 = vpop.f32.mrb[0].mxu0
      %v2946 = vadd.f32 0.0, %v2945
      %v2947 = vpop.f32.mrb[0].mxu0
      %2948 = vmatprep.mubr.f32.mxu0 %v2412
      %2949 = vmatmul.mubr.f32.gmra.mrb[0].mxu0 %v2376
      %v2950 = vpop.f32.mrb[0].mxu0
      %v2951 = vadd.f32 0.0, %v2950
      %v2952 = vpop.f32.mrb[0].mxu0
      %2953 = vmatprep.mubr.f32.mxu0 %v2413
      %2954 = vmatmul.mubr.f32.gmra.mrb[0].mxu0 %v2377
      %v2955 = vpop.f32.mrb[0].mxu0
      %v2956 = vadd.f32 0.0, %v2955
      %v2957 = vpop.f32.mrb[0].mxu0
      %2958 = vmatprep.mubr.f32.mxu0 %v2414
      %2959 = vmatmul.mubr.f32.gmra.mrb[0].mxu0 %v2378
      %v2960 = vpop.f32.mrb[0].mxu0
      %v2961 = vadd.f32 0.0, %v2960
      %v2962 = vpop.f32.mrb[0].mxu0
      %2963 = vmatprep.mubr.f32.mxu0 %v2415
      %2964 = vmatmul.mubr.f32.gmra.mrb[0].mxu0 %v2379
      %v2965 = vpop.f32.mrb[0].mxu0
      %v2966 = vadd.f32 0.0, %v2965
      %v2967 = vpop.f32.mrb[0].mxu0
      %2968 = vmatprep.mubr.f32.mxu0 %v2416
      %2969 = vmatmul.mubr.f32.gmra.mrb[0].mxu0 %v2380
      %v2970 = vpop.f32.mrb[0].mxu0
      %v2971 = vadd.f32 0.0, %v2970
      %v2972 = vpop.f32.mrb[0].mxu0
      %2973 = vmatprep.mubr.f32.mxu0 %v2417
      %2974 = vmatmul.mubr.f32.gmra.mrb[0].mxu0 %v2381
      %v2975 = vpop.f32.mrb[0].mxu0
      %v2976 = vadd.f32 0.0, %v2975
      %v2977 = vpop.f32.mrb[0].mxu0
      %2978 = vmatprep.mubr.f32.mxu0 %v2418
      %2979 = vmatmul.mubr.f32.gmra.mrb[0].mxu0 %v2382
      %v2980 = vpop.f32.mrb[0].mxu0
      %v2981 = vadd.f32 0.0, %v2980
      %v2982 = vpop.f32.mrb[0].mxu0
      %2983 = vmatprep.mubr.f32.mxu0 %v2419
      %2984 = vmatmul.mubr.f32.gmra.mrb[0].mxu0 %v2383
      %v2985 = vpop.f32.mrb[0].mxu0
      %v2986 = vadd.f32 0.0, %v2985
      %v2987 = vpop.f32.mrb[0].mxu0
      %2988 = vmatprep.mubr.f32.mxu0 %v2420
      %2989 = vmatmul.mubr.f32.gmra.mrb[0].mxu0 %v2384
      %v2990 = vpop.f32.mrb[0].mxu0
      %v2991 = vadd.f32 0.0, %v2990
      %v2992 = vpop.f32.mrb[0].mxu0
      %2993 = vdwg.mxu0
      %2994 = vmatprep.subr.mxu0 0.0
      %2995 = vmatpush1.msra.mxu0 %v2637
      %2996 = vmatprep.subr.mxu0 0.0
      %2997 = vmatpush1.msra.mxu0 %v2638
      %2998 = vmatprep.subr.mxu0 0.0
      %2999 = vmatpush1.msra.mxu0 %v2639
      %3000 = vmatprep.subr.mxu0 0.0
      %3001 = vmatpush1.msra.mxu0 %v2640
      %3002 = vmatprep.subr.mxu0 0.0
      %3003 = vmatpush1.msra.mxu0 %v2641
      %3004 = vmatprep.subr.mxu0 0.0
      %3005 = vmatpush1.msra.mxu0 %v2642
      %3006 = vmatprep.subr.mxu0 0.0
      %3007 = vmatpush1.msra.mxu0 %v2643
      %3008 = vmatprep.subr.mxu0 0.0
      %3009 = vmatpush1.msra.mxu0 %v2644
      %3010 = vmatprep.subr.mxu0 0.0
      %3011 = vmatpush1.msra.mxu0 %v2645
      %3012 = vmatprep.subr.mxu0 0.0
      %3013 = vmatpush1.msra.mxu0 %v2646
      %3014 = vmatprep.subr.mxu0 0.0
      %3015 = vmatpush1.msra.mxu0 %v2647
      %3016 = vmatprep.subr.mxu0 0.0
      %3017 = vmatpush1.msra.mxu0 %v2648
      %3018 = vmatprep.subr.mxu0 0.0
      %3019 = vmatpush1.msra.mxu0 %v2649
      %3020 = vmatprep.subr.mxu0 0.0
      %3021 = vmatpush1.msra.mxu0 %v2650
      %3022 = vmatprep.subr.mxu0 0.0
      %3023 = vmatpush1.msra.mxu0 %v2651
      %3024 = vmatprep.subr.mxu0 0.0
      %3025 = vmatpush1.msra.mxu0 %v2652
      %3026 = vmatprep.subr.mxu0 0.0
      %3027 = vmatpush1.msra.mxu0 %v2653
      %3028 = vmatprep.subr.mxu0 0.0
      %3029 = vmatpush1.msra.mxu0 %v2654
      %3030 = vmatprep.subr.mxu0 0.0
      %3031 = vmatpush1.msra.mxu0 %v2655
      %3032 = vmatprep.subr.mxu0 0.0
      %3033 = vmatpush1.msra.mxu0 %v2656
      %3034 = vmatprep.subr.mxu0 0.0
      %3035 = vmatpush1.msra.mxu0 %v2657
      %3036 = vmatprep.subr.mxu0 0.0
      %3037 = vmatpush1.msra.mxu0 %v2658
      %3038 = vmatprep.subr.mxu0 0.0
      %3039 = vmatpush1.msra.mxu0 %v2659
      %3040 = vmatprep.subr.mxu0 0.0
      %3041 = vmatpush1.msra.mxu0 %v2660
      %3042 = vmatprep.subr.mxu0 0.0
      %3043 = vmatpush1.msra.mxu0 %v2661
      %3044 = vmatprep.subr.mxu0 0.0
      %3045 = vmatpush1.msra.mxu0 %v2662
      %3046 = vmatprep.subr.mxu0 0.0
      %3047 = vmatpush1.msra.mxu0 %v2663
      %3048 = vmatprep.subr.mxu0 0.0
      %3049 = vmatpush1.msra.mxu0 %v2664
      %3050 = vmatprep.subr.mxu0 0.0
      %3051 = vmatpush1.msra.mxu0 %v2665
      %3052 = vmatprep.subr.mxu0 0.0
      %3053 = vmatpush1.msra.mxu0 %v2666
      %3054 = vmatprep.subr.mxu0 0.0
      %3055 = vmatpush1.msra.mxu0 %v2667
      %3056 = vmatprep.subr.mxu0 0.0
      %3057 = vmatpush1.msra.mxu0 %v2668
      %3058 = vmatprep.mubr.f32.mxu0 %v2423
      %3059 = vmatmul.mubr.f32.gmra.mrb[0].mxu0 %v2421
      %v3060 = vpop.f32.mrb[0].mxu0
      %v3061 = vadd.f32 %v2816, %v3060
      %v3062 = vpop.f32.mrb[0].mxu0
      %3063 = vmatprep.mubr.f32.mxu0 %v2424
      %3064 = vmatmul.mubr.f32.gmra.mrb[0].mxu0 %v2422
      %v3065 = vpop.f32.mrb[0].mxu0
      %v3066 = vadd.f32 %v2821, %v3065
      %v3067 = vpop.f32.mrb[0].mxu0
      %3068 = vmatprep.mubr.f32.mxu0 %v2425
      %3069 = vmatmul.mubr.f32.gmra.mrb[0].mxu0 %v2423
      %v3070 = vpop.f32.mrb[0].mxu0
      %v3071 = vadd.f32 %v2826, %v3070
      %v3072 = vpop.f32.mrb[0].mxu0
      %3073 = vmatprep.mubr.f32.mxu0 %v2426
      %3074 = vmatmul.mubr.f32.gmra.mrb[0].mxu0 %v2424
      %v3075 = vpop.f32.mrb[0].mxu0
      %v3076 = vadd.f32 %v2831, %v3075
      %v3077 = vpop.f32.mrb[0].mxu0
      %3078 = vmatprep.mubr.f32.mxu0 %v2427
      %3079 = vmatmul.mubr.f32.gmra.mrb[0].mxu0 %v2425
      %v3080 = vpop.f32.mrb[0].mxu0
      %v3081 = vadd.f32 %v2836, %v3080
      %v3082 = vpop.f32.mrb[0].mxu0
      %3083 = vmatprep.mubr.f32.mxu0 %v2428
      %3084 = vmatmul.mubr.f32.gmra.mrb[0].mxu0 %v2426
      %v3085 = vpop.f32.mrb[0].mxu0
      %v3086 = vadd.f32 %v2841, %v3085
      %v3087 = vpop.f32.mrb[0].mxu0
      %3088 = vmatprep.mubr.f32.mxu0 %v2429
      %3089 = vmatmul.mubr.f32.gmra.mrb[0].mxu0 %v2427
      %v3090 = vpop.f32.mrb[0].mxu0
      %v3091 = vadd.f32 %v2846, %v3090
      %v3092 = vpop.f32.mrb[0].mxu0
      %3093 = vmatprep.mubr.f32.mxu0 %v2430
      %3094 = vmatmul.mubr.f32.gmra.mrb[0].mxu0 %v2428
      %v3095 = vpop.f32.mrb[0].mxu0
      %v3096 = vadd.f32 %v2851, %v3095
      %v3097 = vpop.f32.mrb[0].mxu0
      %3098 = vmatprep.mubr.f32.mxu0 %v2431
      %3099 = vmatmul.mubr.f32.gmra.mrb[0].mxu0 %v2429
      %v3100 = vpop.f32.mrb[0].mxu0
      %v3101 = vadd.f32 %v2856, %v3100
      %v3102 = vpop.f32.mrb[0].mxu0
      %3103 = vmatprep.mubr.f32.mxu0 %v2432
      %3104 = vmatmul.mubr.f32.gmra.mrb[0].mxu0 %v2430
      %v3105 = vpop.f32.mrb[0].mxu0
      %v3106 = vadd.f32 %v2861, %v3105
      %v3107 = vpop.f32.mrb[0].mxu0
      %3108 = vmatprep.mubr.f32.mxu0 %v2433
      %3109 = vmatmul.mubr.f32.gmra.mrb[0].mxu0 %v2431
      %v3110 = vpop.f32.mrb[0].mxu0
      %v3111 = vadd.f32 %v2866, %v3110
      %v3112 = vpop.f32.mrb[0].mxu0
      %3113 = vmatprep.mubr.f32.mxu0 %v2434
      %3114 = vmatmul.mubr.f32.gmra.mrb[0].mxu0 %v2432
      %v3115 = vpop.f32.mrb[0].mxu0
      %v3116 = vadd.f32 %v2871, %v3115
      %v3117 = vpop.f32.mrb[0].mxu0
      %3118 = vmatprep.mubr.f32.mxu0 %v2435
      %3119 = vmatmul.mubr.f32.gmra.mrb[0].mxu0 %v2433
      %v3120 = vpop.f32.mrb[0].mxu0
      %v3121 = vadd.f32 %v2876, %v3120
      %v3122 = vpop.f32.mrb[0].mxu0
      %3123 = vmatprep.mubr.f32.mxu0 %v2436
      %3124 = vmatmul.mubr.f32.gmra.mrb[0].mxu0 %v2434
      %v3125 = vpop.f32.mrb[0].mxu0
      %v3126 = vadd.f32 %v2881, %v3125
      %v3127 = vpop.f32.mrb[0].mxu0
      %3128 = vmatprep.mubr.f32.mxu0 %v2437
      %3129 = vmatmul.mubr.f32.gmra.mrb[0].mxu0 %v2435
      %v3130 = vpop.f32.mrb[0].mxu0
      %v3131 = vadd.f32 %v2886, %v3130
      %v3132 = vpop.f32.mrb[0].mxu0
      %3133 = vmatprep.mubr.f32.mxu0 %v2438
      %3134 = vmatmul.mubr.f32.gmra.mrb[0].mxu0 %v2436
      %v3135 = vpop.f32.mrb[0].mxu0
      %v3136 = vadd.f32 %v2891, %v3135
      %v3137 = vpop.f32.mrb[0].mxu0
      %3138 = vmatprep.mubr.f32.mxu0 %v2439
      %3139 = vmatmul.mubr.f32.gmra.mrb[0].mxu0 %v2437
      %v3140 = vpop.f32.mrb[0].mxu0
      %v3141 = vadd.f32 %v2896, %v3140
      %v3142 = vpop.f32.mrb[0].mxu0
      %3143 = vmatprep.mubr.f32.mxu0 %v2440
      %3144 = vmatmul.mubr.f32.gmra.mrb[0].mxu0 %v2438
      %v3145 = vpop.f32.mrb[0].mxu0
      %v3146 = vadd.f32 %v2901, %v3145
      %v3147 = vpop.f32.mrb[0].mxu0
      %3148 = vmatprep.mubr.f32.mxu0 %v2441
      %3149 = vmatmul.mubr.f32.gmra.mrb[0].mxu0 %v2439
      %v3150 = vpop.f32.mrb[0].mxu0
      %v3151 = vadd.f32 %v2906, %v3150
      %v3152 = vpop.f32.mrb[0].mxu0
      %3153 = vmatprep.mubr.f32.mxu0 %v2442
      %3154 = vmatmul.mubr.f32.gmra.mrb[0].mxu0 %v2440
      %v3155 = vpop.f32.mrb[0].mxu0
      %v3156 = vadd.f32 %v2911, %v3155
      %v3157 = vpop.f32.mrb[0].mxu0
      %3158 = vmatprep.mubr.f32.mxu0 %v2443
      %3159 = vmatmul.mubr.f32.gmra.mrb[0].mxu0 %v2441
      %v3160 = vpop.f32.mrb[0].mxu0
      %v3161 = vadd.f32 %v2916, %v3160
      %v3162 = vpop.f32.mrb[0].mxu0
      %3163 = vmatprep.mubr.f32.mxu0 %v2444
      %3164 = vmatmul.mubr.f32.gmra.mrb[0].mxu0 %v2442
      %v3165 = vpop.f32.mrb[0].mxu0
      %v3166 = vadd.f32 %v2921, %v3165
      %v3167 = vpop.f32.mrb[0].mxu0
      %3168 = vmatprep.mubr.f32.mxu0 %v2445
      %3169 = vmatmul.mubr.f32.gmra.mrb[0].mxu0 %v2443
      %v3170 = vpop.f32.mrb[0].mxu0
      %v3171 = vadd.f32 %v2926, %v3170
      %v3172 = vpop.f32.mrb[0].mxu0
      %3173 = vmatprep.mubr.f32.mxu0 %v2446
      %3174 = vmatmul.mubr.f32.gmra.mrb[0].mxu0 %v2444
      %v3175 = vpop.f32.mrb[0].mxu0
      %v3176 = vadd.f32 %v2931, %v3175
      %v3177 = vpop.f32.mrb[0].mxu0
      %3178 = vmatprep.mubr.f32.mxu0 %v2447
      %3179 = vmatmul.mubr.f32.gmra.mrb[0].mxu0 %v2445
      %v3180 = vpop.f32.mrb[0].mxu0
      %v3181 = vadd.f32 %v2936, %v3180
      %v3182 = vpop.f32.mrb[0].mxu0
      %3183 = vmatprep.mubr.f32.mxu0 %v2448
      %3184 = vmatmul.mubr.f32.gmra.mrb[0].mxu0 %v2446
      %v3185 = vpop.f32.mrb[0].mxu0
      %v3186 = vadd.f32 %v2941, %v3185
      %v3187 = vpop.f32.mrb[0].mxu0
      %3188 = vmatprep.mubr.f32.mxu0 %v2449
      %3189 = vmatmul.mubr.f32.gmra.mrb[0].mxu0 %v2447
      %v3190 = vpop.f32.mrb[0].mxu0
      %v3191 = vadd.f32 %v2946, %v3190
      %v3192 = vpop.f32.mrb[0].mxu0
      %3193 = vmatprep.mubr.f32.mxu0 %v2450
      %3194 = vmatmul.mubr.f32.gmra.mrb[0].mxu0 %v2448
      %v3195 = vpop.f32.mrb[0].mxu0
      %v3196 = vadd.f32 %v2951, %v3195
      %v3197 = vpop.f32.mrb[0].mxu0
      %3198 = vmatprep.mubr.f32.mxu0 %v2451
      %3199 = vmatmul.mubr.f32.gmra.mrb[0].mxu0 %v2449
      %v3200 = vpop.f32.mrb[0].mxu0
      %v3201 = vadd.f32 %v2956, %v3200
      %v3202 = vpop.f32.mrb[0].mxu0
      %3203 = vmatprep.mubr.f32.mxu0 %v2452
      %3204 = vmatmul.mubr.f32.gmra.mrb[0].mxu0 %v2450
      %v3205 = vpop.f32.mrb[0].mxu0
      %v3206 = vadd.f32 %v2961, %v3205
      %v3207 = vpop.f32.mrb[0].mxu0
      %3208 = vmatprep.mubr.f32.mxu0 %v2453
      %3209 = vmatmul.mubr.f32.gmra.mrb[0].mxu0 %v2451
      %v3210 = vpop.f32.mrb[0].mxu0
      %v3211 = vadd.f32 %v2966, %v3210
      %v3212 = vpop.f32.mrb[0].mxu0
      %3213 = vmatprep.mubr.f32.mxu0 %v2454
      %3214 = vmatmul.mubr.f32.gmra.mrb[0].mxu0 %v2452
      %v3215 = vpop.f32.mrb[0].mxu0
      %v3216 = vadd.f32 %v2971, %v3215
      %v3217 = vpop.f32.mrb[0].mxu0
      %3218 = vmatprep.mubr.f32.mxu0 %v2455
      %3219 = vmatmul.mubr.f32.gmra.mrb[0].mxu0 %v2453
      %v3220 = vpop.f32.mrb[0].mxu0
      %v3221 = vadd.f32 %v2976, %v3220
      %v3222 = vpop.f32.mrb[0].mxu0
      %3223 = vmatprep.mubr.f32.mxu0 %v2456
      %3224 = vmatmul.mubr.f32.gmra.mrb[0].mxu0 %v2454
      %v3225 = vpop.f32.mrb[0].mxu0
      %v3226 = vadd.f32 %v2981, %v3225
      %v3227 = vpop.f32.mrb[0].mxu0
      %3228 = vmatprep.mubr.f32.mxu0 %v2457
      %3229 = vmatmul.mubr.f32.gmra.mrb[0].mxu0 %v2455
      %v3230 = vpop.f32.mrb[0].mxu0
      %v3231 = vadd.f32 %v2986, %v3230
      %v3232 = vpop.f32.mrb[0].mxu0
      %3233 = vmatprep.mubr.f32.mxu0 %v2458
      %3234 = vmatmul.mubr.f32.gmra.mrb[0].mxu0 %v2456
      %v3235 = vpop.f32.mrb[0].mxu0
      %v3236 = vadd.f32 %v2991, %v3235
      %v3237 = vpop.f32.mrb[0].mxu0
      %3238 = vdwg.mxu0
      %3239 = vmatprep.subr.mxu0 0.0
      %3240 = vmatpush1.msra.mxu0 %v2669
      %3241 = vmatprep.subr.mxu0 0.0
      %3242 = vmatpush1.msra.mxu0 %v2670
      %3243 = vmatprep.subr.mxu0 0.0
      %3244 = vmatpush1.msra.mxu0 %v2671
      %3245 = vmatprep.subr.mxu0 0.0
      %3246 = vmatpush1.msra.mxu0 %v2672
      %3247 = vmatprep.subr.mxu0 0.0
      %3248 = vmatpush1.msra.mxu0 %v2673
      %3249 = vmatprep.subr.mxu0 0.0
      %3250 = vmatpush1.msra.mxu0 %v2674
      %3251 = vmatprep.subr.mxu0 0.0
      %3252 = vmatpush1.msra.mxu0 %v2675
      %3253 = vmatprep.subr.mxu0 0.0
      %3254 = vmatpush1.msra.mxu0 %v2676
      %3255 = vmatprep.subr.mxu0 0.0
      %3256 = vmatpush1.msra.mxu0 %v2677
      %3257 = vmatprep.subr.mxu0 0.0
      %3258 = vmatpush1.msra.mxu0 %v2678
      %3259 = vmatprep.subr.mxu0 0.0
      %3260 = vmatpush1.msra.mxu0 %v2679
      %3261 = vmatprep.subr.mxu0 0.0
      %3262 = vmatpush1.msra.mxu0 %v2680
      %3263 = vmatprep.subr.mxu0 0.0
      %3264 = vmatpush1.msra.mxu0 %v2681
      %3265 = vmatprep.subr.mxu0 0.0
      %3266 = vmatpush1.msra.mxu0 %v2682
      %3267 = vmatprep.subr.mxu0 0.0
      %3268 = vmatpush1.msra.mxu0 %v2683
      %3269 = vmatprep.subr.mxu0 0.0
      %3270 = vmatpush1.msra.mxu0 %v2684
      %3271 = vmatprep.subr.mxu0 0.0
      %3272 = vmatpush1.msra.mxu0 %v2685
      %3273 = vmatprep.subr.mxu0 0.0
      %3274 = vmatpush1.msra.mxu0 %v2686
      %3275 = vmatprep.subr.mxu0 0.0
      %3276 = vmatpush1.msra.mxu0 %v2687
      %3277 = vmatprep.subr.mxu0 0.0
      %3278 = vmatpush1.msra.mxu0 %v2688
      %3279 = vmatprep.subr.mxu0 0.0
      %3280 = vmatpush1.msra.mxu0 %v2689
      %3281 = vmatprep.subr.mxu0 0.0
      %3282 = vmatpush1.msra.mxu0 %v2690
      %3283 = vmatprep.subr.mxu0 0.0
      %3284 = vmatpush1.msra.mxu0 %v2691
      %3285 = vmatprep.subr.mxu0 0.0
      %3286 = vmatpush1.msra.mxu0 %v2692
      %3287 = vmatprep.subr.mxu0 0.0
      %3288 = vmatpush1.msra.mxu0 %v2693
      %3289 = vmatprep.subr.mxu0 0.0
      %3290 = vmatpush1.msra.mxu0 %v2694
      %3291 = vmatprep.subr.mxu0 0.0
      %3292 = vmatpush1.msra.mxu0 %v2695
      %3293 = vmatprep.subr.mxu0 0.0
      %3294 = vmatpush1.msra.mxu0 %v2696
      %3295 = vmatprep.subr.mxu0 0.0
      %3296 = vmatpush1.msra.mxu0 %v2697
      %3297 = vmatprep.subr.mxu0 0.0
      %3298 = vmatpush1.msra.mxu0 %v2698
      %3299 = vmatprep.subr.mxu0 0.0
      %3300 = vmatpush1.msra.mxu0 %v2699
      %3301 = vmatprep.subr.mxu0 0.0
      %3302 = vmatpush1.msra.mxu0 %v2700
      %3303 = vmatprep.mubr.f32.mxu0 %v2495
      %3304 = vmatmul.mubr.f32.gmra.mrb[0].mxu0 %v2459
      %v3305 = vpop.f32.mrb[0].mxu0
      %v3306 = vadd.f32 %v3061, %v3305
      %v3307 = vpop.f32.mrb[0].mxu0
      %3308 = vmatprep.mubr.f32.mxu0 %v2496
      %3309 = vmatmul.mubr.f32.gmra.mrb[0].mxu0 %v2460
      %v3310 = vpop.f32.mrb[0].mxu0
      %v3311 = vadd.f32 %v3066, %v3310
      %v3312 = vpop.f32.mrb[0].mxu0
      %3313 = vmatprep.mubr.f32.mxu0 %v2497
      %3314 = vmatmul.mubr.f32.gmra.mrb[0].mxu0 %v2461
      %v3315 = vpop.f32.mrb[0].mxu0
      %v3316 = vadd.f32 %v3071, %v3315
      %v3317 = vpop.f32.mrb[0].mxu0
      %3318 = vmatprep.mubr.f32.mxu0 %v2498
      %3319 = vmatmul.mubr.f32.gmra.mrb[0].mxu0 %v2462
      %v3320 = vpop.f32.mrb[0].mxu0
      %v3321 = vadd.f32 %v3076, %v3320
      %v3322 = vpop.f32.mrb[0].mxu0
      %3323 = vmatprep.mubr.f32.mxu0 %v2499
      %3324 = vmatmul.mubr.f32.gmra.mrb[0].mxu0 %v2463
      %v3325 = vpop.f32.mrb[0].mxu0
      %v3326 = vadd.f32 %v3081, %v3325
      %v3327 = vpop.f32.mrb[0].mxu0
      %3328 = vmatprep.mubr.f32.mxu0 %v2500
      %3329 = vmatmul.mubr.f32.gmra.mrb[0].mxu0 %v2464
      %v3330 = vpop.f32.mrb[0].mxu0
      %v3331 = vadd.f32 %v3086, %v3330
      %v3332 = vpop.f32.mrb[0].mxu0
      %3333 = vmatprep.mubr.f32.mxu0 %v2501
      %3334 = vmatmul.mubr.f32.gmra.mrb[0].mxu0 %v2465
      %v3335 = vpop.f32.mrb[0].mxu0
      %v3336 = vadd.f32 %v3091, %v3335
      %v3337 = vpop.f32.mrb[0].mxu0
      %3338 = vmatprep.mubr.f32.mxu0 %v2502
      %3339 = vmatmul.mubr.f32.gmra.mrb[0].mxu0 %v2466
      %v3340 = vpop.f32.mrb[0].mxu0
      %v3341 = vadd.f32 %v3096, %v3340
      %v3342 = vpop.f32.mrb[0].mxu0
      %3343 = vmatprep.mubr.f32.mxu0 %v2503
      %3344 = vmatmul.mubr.f32.gmra.mrb[0].mxu0 %v2467
      %v3345 = vpop.f32.mrb[0].mxu0
      %v3346 = vadd.f32 %v3101, %v3345
      %v3347 = vpop.f32.mrb[0].mxu0
      %3348 = vmatprep.mubr.f32.mxu0 %v2504
      %3349 = vmatmul.mubr.f32.gmra.mrb[0].mxu0 %v2468
      %v3350 = vpop.f32.mrb[0].mxu0
      %v3351 = vadd.f32 %v3106, %v3350
      %v3352 = vpop.f32.mrb[0].mxu0
      %3353 = vmatprep.mubr.f32.mxu0 %v2505
      %3354 = vmatmul.mubr.f32.gmra.mrb[0].mxu0 %v2469
      %v3355 = vpop.f32.mrb[0].mxu0
      %v3356 = vadd.f32 %v3111, %v3355
      %v3357 = vpop.f32.mrb[0].mxu0
      %3358 = vmatprep.mubr.f32.mxu0 %v2506
      %3359 = vmatmul.mubr.f32.gmra.mrb[0].mxu0 %v2470
      %v3360 = vpop.f32.mrb[0].mxu0
      %v3361 = vadd.f32 %v3116, %v3360
      %v3362 = vpop.f32.mrb[0].mxu0
      %3363 = vmatprep.mubr.f32.mxu0 %v2507
      %3364 = vmatmul.mubr.f32.gmra.mrb[0].mxu0 %v2471
      %v3365 = vpop.f32.mrb[0].mxu0
      %v3366 = vadd.f32 %v3121, %v3365
      %v3367 = vpop.f32.mrb[0].mxu0
      %3368 = vmatprep.mubr.f32.mxu0 %v2508
      %3369 = vmatmul.mubr.f32.gmra.mrb[0].mxu0 %v2472
      %v3370 = vpop.f32.mrb[0].mxu0
      %v3371 = vadd.f32 %v3126, %v3370
      %v3372 = vpop.f32.mrb[0].mxu0
      %3373 = vmatprep.mubr.f32.mxu0 %v2509
      %3374 = vmatmul.mubr.f32.gmra.mrb[0].mxu0 %v2473
      %v3375 = vpop.f32.mrb[0].mxu0
      %v3376 = vadd.f32 %v3131, %v3375
      %v3377 = vpop.f32.mrb[0].mxu0
      %3378 = vmatprep.mubr.f32.mxu0 %v2510
      %3379 = vmatmul.mubr.f32.gmra.mrb[0].mxu0 %v2474
      %v3380 = vpop.f32.mrb[0].mxu0
      %v3381 = vadd.f32 %v3136, %v3380
      %v3382 = vpop.f32.mrb[0].mxu0
      %3383 = vmatprep.mubr.f32.mxu0 %v2511
      %3384 = vmatmul.mubr.f32.gmra.mrb[0].mxu0 %v2475
      %v3385 = vpop.f32.mrb[0].mxu0
      %v3386 = vadd.f32 %v3141, %v3385
      %v3387 = vpop.f32.mrb[0].mxu0
      %3388 = vmatprep.mubr.f32.mxu0 %v2512
      %3389 = vmatmul.mubr.f32.gmra.mrb[0].mxu0 %v2476
      %v3390 = vpop.f32.mrb[0].mxu0
      %v3391 = vadd.f32 %v3146, %v3390
      %v3392 = vpop.f32.mrb[0].mxu0
      %3393 = vmatprep.mubr.f32.mxu0 %v2513
      %3394 = vmatmul.mubr.f32.gmra.mrb[0].mxu0 %v2477
      %v3395 = vpop.f32.mrb[0].mxu0
      %v3396 = vadd.f32 %v3151, %v3395
      %v3397 = vpop.f32.mrb[0].mxu0
      %3398 = vmatprep.mubr.f32.mxu0 %v2514
      %3399 = vmatmul.mubr.f32.gmra.mrb[0].mxu0 %v2478
      %v3400 = vpop.f32.mrb[0].mxu0
      %v3401 = vadd.f32 %v3156, %v3400
      %v3402 = vpop.f32.mrb[0].mxu0
      %3403 = vmatprep.mubr.f32.mxu0 %v2515
      %3404 = vmatmul.mubr.f32.gmra.mrb[0].mxu0 %v2479
      %v3405 = vpop.f32.mrb[0].mxu0
      %v3406 = vadd.f32 %v3161, %v3405
      %v3407 = vpop.f32.mrb[0].mxu0
      %3408 = vmatprep.mubr.f32.mxu0 %v2516
      %3409 = vmatmul.mubr.f32.gmra.mrb[0].mxu0 %v2480
      %v3410 = vpop.f32.mrb[0].mxu0
      %v3411 = vadd.f32 %v3166, %v3410
      %v3412 = vpop.f32.mrb[0].mxu0
      %3413 = vmatprep.mubr.f32.mxu0 %v2517
      %3414 = vmatmul.mubr.f32.gmra.mrb[0].mxu0 %v2481
      %v3415 = vpop.f32.mrb[0].mxu0
      %v3416 = vadd.f32 %v3171, %v3415
      %v3417 = vpop.f32.mrb[0].mxu0
      %3418 = vmatprep.mubr.f32.mxu0 %v2518
      %3419 = vmatmul.mubr.f32.gmra.mrb[0].mxu0 %v2482
      %v3420 = vpop.f32.mrb[0].mxu0
      %v3421 = vadd.f32 %v3176, %v3420
      %v3422 = vpop.f32.mrb[0].mxu0
      %3423 = vmatprep.mubr.f32.mxu0 %v2519
      %3424 = vmatmul.mubr.f32.gmra.mrb[0].mxu0 %v2483
      %v3425 = vpop.f32.mrb[0].mxu0
      %v3426 = vadd.f32 %v3181, %v3425
      %v3427 = vpop.f32.mrb[0].mxu0
      %3428 = vmatprep.mubr.f32.mxu0 %v2520
      %3429 = vmatmul.mubr.f32.gmra.mrb[0].mxu0 %v2484
      %v3430 = vpop.f32.mrb[0].mxu0
      %v3431 = vadd.f32 %v3186, %v3430
      %v3432 = vpop.f32.mrb[0].mxu0
      %3433 = vmatprep.mubr.f32.mxu0 %v2521
      %3434 = vmatmul.mubr.f32.gmra.mrb[0].mxu0 %v2485
      %v3435 = vpop.f32.mrb[0].mxu0
      %v3436 = vadd.f32 %v3191, %v3435
      %v3437 = vpop.f32.mrb[0].mxu0
      %3438 = vmatprep.mubr.f32.mxu0 %v2522
      %3439 = vmatmul.mubr.f32.gmra.mrb[0].mxu0 %v2486
      %v3440 = vpop.f32.mrb[0].mxu0
      %v3441 = vadd.f32 %v3196, %v3440
      %v3442 = vpop.f32.mrb[0].mxu0
      %3443 = vmatprep.mubr.f32.mxu0 %v2523
      %3444 = vmatmul.mubr.f32.gmra.mrb[0].mxu0 %v2487
      %v3445 = vpop.f32.mrb[0].mxu0
      %v3446 = vadd.f32 %v3201, %v3445
      %v3447 = vpop.f32.mrb[0].mxu0
      %3448 = vmatprep.mubr.f32.mxu0 %v2524
      %3449 = vmatmul.mubr.f32.gmra.mrb[0].mxu0 %v2488
      %v3450 = vpop.f32.mrb[0].mxu0
      %v3451 = vadd.f32 %v3206, %v3450
      %v3452 = vpop.f32.mrb[0].mxu0
      %3453 = vmatprep.mubr.f32.mxu0 %v2525
      %3454 = vmatmul.mubr.f32.gmra.mrb[0].mxu0 %v2489
      %v3455 = vpop.f32.mrb[0].mxu0
      %v3456 = vadd.f32 %v3211, %v3455
      %v3457 = vpop.f32.mrb[0].mxu0
      %3458 = vmatprep.mubr.f32.mxu0 %v2526
      %3459 = vmatmul.mubr.f32.gmra.mrb[0].mxu0 %v2490
      %v3460 = vpop.f32.mrb[0].mxu0
      %v3461 = vadd.f32 %v3216, %v3460
      %v3462 = vpop.f32.mrb[0].mxu0
      %3463 = vmatprep.mubr.f32.mxu0 %v2527
      %3464 = vmatmul.mubr.f32.gmra.mrb[0].mxu0 %v2491
      %v3465 = vpop.f32.mrb[0].mxu0
      %v3466 = vadd.f32 %v3221, %v3465
      %v3467 = vpop.f32.mrb[0].mxu0
      %3468 = vmatprep.mubr.f32.mxu0 %v2528
      %3469 = vmatmul.mubr.f32.gmra.mrb[0].mxu0 %v2492
      %v3470 = vpop.f32.mrb[0].mxu0
      %v3471 = vadd.f32 %v3226, %v3470
      %v3472 = vpop.f32.mrb[0].mxu0
      %3473 = vmatprep.mubr.f32.mxu0 %v2529
      %3474 = vmatmul.mubr.f32.gmra.mrb[0].mxu0 %v2493
      %v3475 = vpop.f32.mrb[0].mxu0
      %v3476 = vadd.f32 %v3231, %v3475
      %v3477 = vpop.f32.mrb[0].mxu0
      %3478 = vmatprep.mubr.f32.mxu0 %v2530
      %3479 = vmatmul.mubr.f32.gmra.mrb[0].mxu0 %v2494
      %v3480 = vpop.f32.mrb[0].mxu0
      %v3481 = vadd.f32 %v3236, %v3480
      %v3482 = vpop.f32.mrb[0].mxu0
      %3483 = vdwg.mxu0
      %3484 = vmatprep.subr.mxu0 0.0
      %3485 = vmatpush1.msra.mxu0 %v2701
      %3486 = vmatprep.subr.mxu0 0.0
      %3487 = vmatpush1.msra.mxu0 %v2702
      %3488 = vmatprep.subr.mxu0 0.0
      %3489 = vmatpush1.msra.mxu0 %v2703
      %3490 = vmatprep.subr.mxu0 0.0
      %3491 = vmatpush1.msra.mxu0 %v2704
      %3492 = vmatprep.subr.mxu0 0.0
      %3493 = vmatpush1.msra.mxu0 %v2705
      %3494 = vmatprep.subr.mxu0 0.0
      %3495 = vmatpush1.msra.mxu0 %v2706
      %3496 = vmatprep.subr.mxu0 0.0
      %3497 = vmatpush1.msra.mxu0 %v2707
      %3498 = vmatprep.subr.mxu0 0.0
      %3499 = vmatpush1.msra.mxu0 %v2708
      %3500 = vmatprep.subr.mxu0 0.0
      %3501 = vmatpush1.msra.mxu0 %v2709
      %3502 = vmatprep.subr.mxu0 0.0
      %3503 = vmatpush1.msra.mxu0 %v2710
      %3504 = vmatprep.subr.mxu0 0.0
      %3505 = vmatpush1.msra.mxu0 %v2711
      %3506 = vmatprep.subr.mxu0 0.0
      %3507 = vmatpush1.msra.mxu0 %v2712
      %3508 = vmatprep.subr.mxu0 0.0
      %3509 = vmatpush1.msra.mxu0 %v2713
      %3510 = vmatprep.subr.mxu0 0.0
      %3511 = vmatpush1.msra.mxu0 %v2714
      %3512 = vmatprep.subr.mxu0 0.0
      %3513 = vmatpush1.msra.mxu0 %v2715
      %3514 = vmatprep.subr.mxu0 0.0
      %3515 = vmatpush1.msra.mxu0 %v2716
      %3516 = vmatprep.subr.mxu0 0.0
      %3517 = vmatpush1.msra.mxu0 %v2717
      %3518 = vmatprep.subr.mxu0 0.0
      %3519 = vmatpush1.msra.mxu0 %v2718
      %3520 = vmatprep.subr.mxu0 0.0
      %3521 = vmatpush1.msra.mxu0 %v2719
      %3522 = vmatprep.subr.mxu0 0.0
      %3523 = vmatpush1.msra.mxu0 %v2720
      %3524 = vmatprep.subr.mxu0 0.0
      %3525 = vmatpush1.msra.mxu0 %v2721
      %3526 = vmatprep.subr.mxu0 0.0
      %3527 = vmatpush1.msra.mxu0 %v2722
      %3528 = vmatprep.subr.mxu0 0.0
      %3529 = vmatpush1.msra.mxu0 %v2723
      %3530 = vmatprep.subr.mxu0 0.0
      %3531 = vmatpush1.msra.mxu0 %v2724
      %3532 = vmatprep.subr.mxu0 0.0
      %3533 = vmatpush1.msra.mxu0 %v2725
      %3534 = vmatprep.subr.mxu0 0.0
      %3535 = vmatpush1.msra.mxu0 %v2726
      %3536 = vmatprep.subr.mxu0 0.0
      %3537 = vmatpush1.msra.mxu0 %v2727
      %3538 = vmatprep.subr.mxu0 0.0
      %3539 = vmatpush1.msra.mxu0 %v2728
      %3540 = vmatprep.subr.mxu0 0.0
      %3541 = vmatpush1.msra.mxu0 %v2729
      %3542 = vmatprep.subr.mxu0 0.0
      %3543 = vmatpush1.msra.mxu0 %v2730
      %3544 = vmatprep.subr.mxu0 0.0
      %3545 = vmatpush1.msra.mxu0 %v2731
      %3546 = vmatprep.subr.mxu0 0.0
      %3547 = vmatpush1.msra.mxu0 %v2732
      %3548 = vmatprep.mubr.f32.mxu0 %v2533
      %3549 = vmatmul.mubr.f32.gmra.mrb[0].mxu0 %v2497
      %v3550 = vpop.f32.mrb[0].mxu0
      %v3551 = vadd.f32 %v3306, %v3550
      %v3552 = vpop.f32.mrb[0].mxu0
      %3553 = vmatprep.mubr.f32.mxu0 %v2534
      %3554 = vmatmul.mubr.f32.gmra.mrb[0].mxu0 %v2498
      %v3555 = vpop.f32.mrb[0].mxu0
      %v3556 = vadd.f32 %v3311, %v3555
      %v3557 = vpop.f32.mrb[0].mxu0
      %3558 = vmatprep.mubr.f32.mxu0 %v2535
      %3559 = vmatmul.mubr.f32.gmra.mrb[0].mxu0 %v2499
      %v3560 = vpop.f32.mrb[0].mxu0
      %v3561 = vadd.f32 %v3316, %v3560
      %v3562 = vpop.f32.mrb[0].mxu0
      %3563 = vmatprep.mubr.f32.mxu0 %v2536
      %3564 = vmatmul.mubr.f32.gmra.mrb[0].mxu0 %v2500
      %v3565 = vpop.f32.mrb[0].mxu0
      %v3566 = vadd.f32 %v3321, %v3565
      %v3567 = vpop.f32.mrb[0].mxu0
      %3568 = vmatprep.mubr.f32.mxu0 %v2537
      %3569 = vmatmul.mubr.f32.gmra.mrb[0].mxu0 %v2501
      %v3570 = vpop.f32.mrb[0].mxu0
      %v3571 = vadd.f32 %v3326, %v3570
      %v3572 = vpop.f32.mrb[0].mxu0
      %3573 = vmatprep.mubr.f32.mxu0 %v2538
      %3574 = vmatmul.mubr.f32.gmra.mrb[0].mxu0 %v2502
      %v3575 = vpop.f32.mrb[0].mxu0
      %v3576 = vadd.f32 %v3331, %v3575
      %v3577 = vpop.f32.mrb[0].mxu0
      %3578 = vmatprep.mubr.f32.mxu0 %v2539
      %3579 = vmatmul.mubr.f32.gmra.mrb[0].mxu0 %v2503
      %v3580 = vpop.f32.mrb[0].mxu0
      %v3581 = vadd.f32 %v3336, %v3580
      %v3582 = vpop.f32.mrb[0].mxu0
      %3583 = vmatprep.mubr.f32.mxu0 %v2540
      %3584 = vmatmul.mubr.f32.gmra.mrb[0].mxu0 %v2504
      %v3585 = vpop.f32.mrb[0].mxu0
      %v3586 = vadd.f32 %v3341, %v3585
      %v3587 = vpop.f32.mrb[0].mxu0
      %3588 = vmatprep.mubr.f32.mxu0 %v2541
      %3589 = vmatmul.mubr.f32.gmra.mrb[0].mxu0 %v2505
      %v3590 = vpop.f32.mrb[0].mxu0
      %v3591 = vadd.f32 %v3346, %v3590
      %v3592 = vpop.f32.mrb[0].mxu0
      %3593 = vmatprep.mubr.f32.mxu0 %v2542
      %3594 = vmatmul.mubr.f32.gmra.mrb[0].mxu0 %v2506
      %v3595 = vpop.f32.mrb[0].mxu0
      %v3596 = vadd.f32 %v3351, %v3595
      %v3597 = vpop.f32.mrb[0].mxu0
      %3598 = vmatprep.mubr.f32.mxu0 %v2543
      %3599 = vmatmul.mubr.f32.gmra.mrb[0].mxu0 %v2507
      %v3600 = vpop.f32.mrb[0].mxu0
      %v3601 = vadd.f32 %v3356, %v3600
      %v3602 = vpop.f32.mrb[0].mxu0
      %3603 = vmatprep.mubr.f32.mxu0 %v2544
      %3604 = vmatmul.mubr.f32.gmra.mrb[0].mxu0 %v2508
      %v3605 = vpop.f32.mrb[0].mxu0
      %v3606 = vadd.f32 %v3361, %v3605
      %v3607 = vpop.f32.mrb[0].mxu0
      %3608 = vmatprep.mubr.f32.mxu0 %v2545
      %3609 = vmatmul.mubr.f32.gmra.mrb[0].mxu0 %v2509
      %v3610 = vpop.f32.mrb[0].mxu0
      %v3611 = vadd.f32 %v3366, %v3610
      %v3612 = vpop.f32.mrb[0].mxu0
      %3613 = vmatprep.mubr.f32.mxu0 %v2546
      %3614 = vmatmul.mubr.f32.gmra.mrb[0].mxu0 %v2510
      %v3615 = vpop.f32.mrb[0].mxu0
      %v3616 = vadd.f32 %v3371, %v3615
      %v3617 = vpop.f32.mrb[0].mxu0
      %3618 = vmatprep.mubr.f32.mxu0 %v2547
      %3619 = vmatmul.mubr.f32.gmra.mrb[0].mxu0 %v2511
      %v3620 = vpop.f32.mrb[0].mxu0
      %v3621 = vadd.f32 %v3376, %v3620
      %v3622 = vpop.f32.mrb[0].mxu0
      %3623 = vmatprep.mubr.f32.mxu0 %v2548
      %3624 = vmatmul.mubr.f32.gmra.mrb[0].mxu0 %v2512
      %v3625 = vpop.f32.mrb[0].mxu0
      %v3626 = vadd.f32 %v3381, %v3625
      %v3627 = vpop.f32.mrb[0].mxu0
      %3628 = vmatprep.mubr.f32.mxu0 %v2549
      %3629 = vmatmul.mubr.f32.gmra.mrb[0].mxu0 %v2513
      %v3630 = vpop.f32.mrb[0].mxu0
      %v3631 = vadd.f32 %v3386, %v3630
      %v3632 = vpop.f32.mrb[0].mxu0
      %3633 = vmatprep.mubr.f32.mxu0 %v2550
      %3634 = vmatmul.mubr.f32.gmra.mrb[0].mxu0 %v2514
      %v3635 = vpop.f32.mrb[0].mxu0
      %v3636 = vadd.f32 %v3391, %v3635
      %v3637 = vpop.f32.mrb[0].mxu0
      %3638 = vmatprep.mubr.f32.mxu0 %v2551
      %3639 = vmatmul.mubr.f32.gmra.mrb[0].mxu0 %v2515
      %v3640 = vpop.f32.mrb[0].mxu0
      %v3641 = vadd.f32 %v3396, %v3640
      %v3642 = vpop.f32.mrb[0].mxu0
      %3643 = vmatprep.mubr.f32.mxu0 %v2552
      %3644 = vmatmul.mubr.f32.gmra.mrb[0].mxu0 %v2516
      %v3645 = vpop.f32.mrb[0].mxu0
      %v3646 = vadd.f32 %v3401, %v3645
      %v3647 = vpop.f32.mrb[0].mxu0
      %3648 = vmatprep.mubr.f32.mxu0 %v2553
      %3649 = vmatmul.mubr.f32.gmra.mrb[0].mxu0 %v2517
      %v3650 = vpop.f32.mrb[0].mxu0
      %v3651 = vadd.f32 %v3406, %v3650
      %v3652 = vpop.f32.mrb[0].mxu0
      %3653 = vmatprep.mubr.f32.mxu0 %v2554
      %3654 = vmatmul.mubr.f32.gmra.mrb[0].mxu0 %v2518
      %v3655 = vpop.f32.mrb[0].mxu0
      %v3656 = vadd.f32 %v3411, %v3655
      %v3657 = vpop.f32.mrb[0].mxu0
      %3658 = vmatprep.mubr.f32.mxu0 %v2555
      %3659 = vmatmul.mubr.f32.gmra.mrb[0].mxu0 %v2519
      %v3660 = vpop.f32.mrb[0].mxu0
      %v3661 = vadd.f32 %v3416, %v3660
      %v3662 = vpop.f32.mrb[0].mxu0
      %3663 = vmatprep.mubr.f32.mxu0 %v2556
      %3664 = vmatmul.mubr.f32.gmra.mrb[0].mxu0 %v2520
      %v3665 = vpop.f32.mrb[0].mxu0
      %v3666 = vadd.f32 %v3421, %v3665
      %v3667 = vpop.f32.mrb[0].mxu0
      %3668 = vmatprep.mubr.f32.mxu0 %v2557
      %3669 = vmatmul.mubr.f32.gmra.mrb[0].mxu0 %v2521
      %v3670 = vpop.f32.mrb[0].mxu0
      %v3671 = vadd.f32 %v3426, %v3670
      %v3672 = vpop.f32.mrb[0].mxu0
      %3673 = vmatprep.mubr.f32.mxu0 %v2558
      %3674 = vmatmul.mubr.f32.gmra.mrb[0].mxu0 %v2522
      %v3675 = vpop.f32.mrb[0].mxu0
      %v3676 = vadd.f32 %v3431, %v3675
      %v3677 = vpop.f32.mrb[0].mxu0
      %3678 = vmatprep.mubr.f32.mxu0 %v2559
      %3679 = vmatmul.mubr.f32.gmra.mrb[0].mxu0 %v2523
      %v3680 = vpop.f32.mrb[0].mxu0
      %v3681 = vadd.f32 %v3436, %v3680
      %v3682 = vpop.f32.mrb[0].mxu0
      %3683 = vmatprep.mubr.f32.mxu0 %v2560
      %3684 = vmatmul.mubr.f32.gmra.mrb[0].mxu0 %v2524
      %v3685 = vpop.f32.mrb[0].mxu0
      %v3686 = vadd.f32 %v3441, %v3685
      %v3687 = vpop.f32.mrb[0].mxu0
      %3688 = vmatprep.mubr.f32.mxu0 %v2561
      %3689 = vmatmul.mubr.f32.gmra.mrb[0].mxu0 %v2525
      %v3690 = vpop.f32.mrb[0].mxu0
      %v3691 = vadd.f32 %v3446, %v3690
      %v3692 = vpop.f32.mrb[0].mxu0
      %3693 = vmatprep.mubr.f32.mxu0 %v2562
      %3694 = vmatmul.mubr.f32.gmra.mrb[0].mxu0 %v2526
      %v3695 = vpop.f32.mrb[0].mxu0
      %v3696 = vadd.f32 %v3451, %v3695
      %v3697 = vpop.f32.mrb[0].mxu0
      %3698 = vmatprep.mubr.f32.mxu0 %v2563
      %3699 = vmatmul.mubr.f32.gmra.mrb[0].mxu0 %v2527
      %v3700 = vpop.f32.mrb[0].mxu0
      %v3701 = vadd.f32 %v3456, %v3700
      %v3702 = vpop.f32.mrb[0].mxu0
      %3703 = vmatprep.mubr.f32.mxu0 %v2564
      %3704 = vmatmul.mubr.f32.gmra.mrb[0].mxu0 %v2528
      %v3705 = vpop.f32.mrb[0].mxu0
      %v3706 = vadd.f32 %v3461, %v3705
      %v3707 = vpop.f32.mrb[0].mxu0
      %3708 = vmatprep.mubr.f32.mxu0 %v2565
      %3709 = vmatmul.mubr.f32.gmra.mrb[0].mxu0 %v2529
      %v3710 = vpop.f32.mrb[0].mxu0
      %v3711 = vadd.f32 %v3466, %v3710
      %v3712 = vpop.f32.mrb[0].mxu0
      %3713 = vmatprep.mubr.f32.mxu0 %v2566
      %3714 = vmatmul.mubr.f32.gmra.mrb[0].mxu0 %v2530
      %v3715 = vpop.f32.mrb[0].mxu0
      %v3716 = vadd.f32 %v3471, %v3715
      %v3717 = vpop.f32.mrb[0].mxu0
      %3718 = vmatprep.mubr.f32.mxu0 %v2567
      %3719 = vmatmul.mubr.f32.gmra.mrb[0].mxu0 %v2531
      %v3720 = vpop.f32.mrb[0].mxu0
      %v3721 = vadd.f32 %v3476, %v3720
      %v3722 = vpop.f32.mrb[0].mxu0
      %3723 = vmatprep.mubr.f32.mxu0 %v2568
      %3724 = vmatmul.mubr.f32.gmra.mrb[0].mxu0 %v2532
      %v3725 = vpop.f32.mrb[0].mxu0
      %v3726 = vadd.f32 %v3481, %v3725
      %v3727 = vpop.f32.mrb[0].mxu0
      %3728 = vdwg.mxu0
      %3729 = vmatprep.subr.mxu0 0.0
      %3730 = vmatpush1.msra.mxu0 %v2733
      %3731 = vmatprep.subr.mxu0 0.0
      %3732 = vmatpush1.msra.mxu0 %v2734
      %3733 = vmatprep.subr.mxu0 0.0
      %3734 = vmatpush1.msra.mxu0 %v2735
      %3735 = vmatprep.subr.mxu0 0.0
      %3736 = vmatpush1.msra.mxu0 %v2736
      %3737 = vmatprep.subr.mxu0 0.0
      %3738 = vmatpush1.msra.mxu0 %v2737
      %3739 = vmatprep.subr.mxu0 0.0
      %3740 = vmatpush1.msra.mxu0 %v2738
      %3741 = vmatprep.subr.mxu0 0.0
      %3742 = vmatpush1.msra.mxu0 %v2739
      %3743 = vmatprep.subr.mxu0 0.0
      %3744 = vmatpush1.msra.mxu0 %v2740
      %3745 = vmatprep.subr.mxu0 0.0
      %3746 = vmatpush1.msra.mxu0 %v2741
      %3747 = vmatprep.subr.mxu0 0.0
      %3748 = vmatpush1.msra.mxu0 %v2742
      %3749 = vmatprep.subr.mxu0 0.0
      %3750 = vmatpush1.msra.mxu0 %v2743
      %3751 = vmatprep.subr.mxu0 0.0
      %3752 = vmatpush1.msra.mxu0 %v2744
      %3753 = vmatprep.subr.mxu0 0.0
      %3754 = vmatpush1.msra.mxu0 %v2745
      %3755 = vmatprep.subr.mxu0 0.0
      %3756 = vmatpush1.msra.mxu0 %v2746
      %3757 = vmatprep.subr.mxu0 0.0
      %3758 = vmatpush1.msra.mxu0 %v2747
      %3759 = vmatprep.subr.mxu0 0.0
      %3760 = vmatpush1.msra.mxu0 %v2748
      %3761 = vmatprep.subr.mxu0 0.0
      %3762 = vmatpush1.msra.mxu0 0.0
      %3763 = vmatprep.subr.mxu0 0.0
      %3764 = vmatpush1.msra.mxu0 0.0
      %3765 = vmatprep.subr.mxu0 0.0
      %3766 = vmatpush1.msra.mxu0 0.0
      %3767 = vmatprep.subr.mxu0 0.0
      %3768 = vmatpush1.msra.mxu0 0.0
      %3769 = vmatprep.subr.mxu0 0.0
      %3770 = vmatpush1.msra.mxu0 0.0
      %3771 = vmatprep.subr.mxu0 0.0
      %3772 = vmatpush1.msra.mxu0 0.0
      %3773 = vmatprep.subr.mxu0 0.0
      %3774 = vmatpush1.msra.mxu0 0.0
      %3775 = vmatprep.subr.mxu0 0.0
      %3776 = vmatpush1.msra.mxu0 0.0
      %3777 = vmatprep.subr.mxu0 0.0
      %3778 = vmatpush1.msra.mxu0 0.0
      %3779 = vmatprep.subr.mxu0 0.0
      %3780 = vmatpush1.msra.mxu0 0.0
      %3781 = vmatprep.subr.mxu0 0.0
      %3782 = vmatpush1.msra.mxu0 0.0
      %3783 = vmatprep.subr.mxu0 0.0
      %3784 = vmatpush1.msra.mxu0 0.0
      %3785 = vmatprep.subr.mxu0 0.0
      %3786 = vmatpush1.msra.mxu0 0.0
      %3787 = vmatprep.subr.mxu0 0.0
      %3788 = vmatpush1.msra.mxu0 0.0
      %3789 = vmatprep.subr.mxu0 0.0
      %3790 = vmatpush1.msra.mxu0 0.0
      %3791 = vmatprep.subr.mxu0 0.0
      %3792 = vmatpush1.msra.mxu0 0.0
      %3793 = vmatprep.mubr.f32.mxu0 0.0
      %3794 = vmatmul.mubr.f32.gmra.mrb[0].mxu0 %v2569
      %v3795 = vpop.f32.mrb[0].mxu0
      %v3796 = vadd.f32 %v3551, %v3795
      %v3797 = vpop.f32.mrb[0].mxu0
      %3798 = vmatprep.mubr.f32.mxu0 0.0
      %3799 = vmatmul.mubr.f32.gmra.mrb[0].mxu0 %v2570
      %v3800 = vpop.f32.mrb[0].mxu0
      %v3801 = vadd.f32 %v3556, %v3800
      %v3802 = vpop.f32.mrb[0].mxu0
      %3803 = vmatprep.mubr.f32.mxu0 0.0
      %3804 = vmatmul.mubr.f32.gmra.mrb[0].mxu0 %v2571
      %v3805 = vpop.f32.mrb[0].mxu0
      %v3806 = vadd.f32 %v3561, %v3805
      %v3807 = vpop.f32.mrb[0].mxu0
      %3808 = vmatprep.mubr.f32.mxu0 0.0
      %3809 = vmatmul.mubr.f32.gmra.mrb[0].mxu0 %v2572
      %v3810 = vpop.f32.mrb[0].mxu0
      %v3811 = vadd.f32 %v3566, %v3810
      %v3812 = vpop.f32.mrb[0].mxu0
      %3813 = vmatprep.mubr.f32.mxu0 0.0
      %3814 = vmatmul.mubr.f32.gmra.mrb[0].mxu0 %v2573
      %v3815 = vpop.f32.mrb[0].mxu0
      %v3816 = vadd.f32 %v3571, %v3815
      %v3817 = vpop.f32.mrb[0].mxu0
      %3818 = vmatprep.mubr.f32.mxu0 0.0
      %3819 = vmatmul.mubr.f32.gmra.mrb[0].mxu0 %v2574
      %v3820 = vpop.f32.mrb[0].mxu0
      %v3821 = vadd.f32 %v3576, %v3820
      %v3822 = vpop.f32.mrb[0].mxu0
      %3823 = vmatprep.mubr.f32.mxu0 0.0
      %3824 = vmatmul.mubr.f32.gmra.mrb[0].mxu0 %v2575
      %v3825 = vpop.f32.mrb[0].mxu0
      %v3826 = vadd.f32 %v3581, %v3825
      %v3827 = vpop.f32.mrb[0].mxu0
      %3828 = vmatprep.mubr.f32.mxu0 0.0
      %3829 = vmatmul.mubr.f32.gmra.mrb[0].mxu0 %v2576
      %v3830 = vpop.f32.mrb[0].mxu0
      %v3831 = vadd.f32 %v3586, %v3830
      %v3832 = vpop.f32.mrb[0].mxu0
      %3833 = vmatprep.mubr.f32.mxu0 0.0
      %3834 = vmatmul.mubr.f32.gmra.mrb[0].mxu0 %v2577
      %v3835 = vpop.f32.mrb[0].mxu0
      %v3836 = vadd.f32 %v3591, %v3835
      %v3837 = vpop.f32.mrb[0].mxu0
      %3838 = vmatprep.mubr.f32.mxu0 0.0
      %3839 = vmatmul.mubr.f32.gmra.mrb[0].mxu0 %v2578
      %v3840 = vpop.f32.mrb[0].mxu0
      %v3841 = vadd.f32 %v3596, %v3840
      %v3842 = vpop.f32.mrb[0].mxu0
      %3843 = vmatprep.mubr.f32.mxu0 0.0
      %3844 = vmatmul.mubr.f32.gmra.mrb[0].mxu0 %v2579
      %v3845 = vpop.f32.mrb[0].mxu0
      %v3846 = vadd.f32 %v3601, %v3845
      %v3847 = vpop.f32.mrb[0].mxu0
      %3848 = vmatprep.mubr.f32.mxu0 0.0
      %3849 = vmatmul.mubr.f32.gmra.mrb[0].mxu0 %v2580
      %v3850 = vpop.f32.mrb[0].mxu0
      %v3851 = vadd.f32 %v3606, %v3850
      %v3852 = vpop.f32.mrb[0].mxu0
      %3853 = vmatprep.mubr.f32.mxu0 0.0
      %3854 = vmatmul.mubr.f32.gmra.mrb[0].mxu0 %v2581
      %v3855 = vpop.f32.mrb[0].mxu0
      %v3856 = vadd.f32 %v3611, %v3855
      %v3857 = vpop.f32.mrb[0].mxu0
      %3858 = vmatprep.mubr.f32.mxu0 0.0
      %3859 = vmatmul.mubr.f32.gmra.mrb[0].mxu0 %v2582
      %v3860 = vpop.f32.mrb[0].mxu0
      %v3861 = vadd.f32 %v3616, %v3860
      %v3862 = vpop.f32.mrb[0].mxu0
      %3863 = vmatprep.mubr.f32.mxu0 0.0
      %3864 = vmatmul.mubr.f32.gmra.mrb[0].mxu0 %v2583
      %v3865 = vpop.f32.mrb[0].mxu0
      %v3866 = vadd.f32 %v3621, %v3865
      %v3867 = vpop.f32.mrb[0].mxu0
      %3868 = vmatprep.mubr.f32.mxu0 0.0
      %3869 = vmatmul.mubr.f32.gmra.mrb[0].mxu0 %v2584
      %v3870 = vpop.f32.mrb[0].mxu0
      %v3871 = vadd.f32 %v3626, %v3870
      %v3872 = vpop.f32.mrb[0].mxu0
      %3873 = vmatprep.mubr.f32.mxu0 0.0
      %3874 = vmatmul.mubr.f32.gmra.mrb[0].mxu0 %v2585
      %v3875 = vpop.f32.mrb[0].mxu0
      %v3876 = vadd.f32 %v3631, %v3875
      %v3877 = vpop.f32.mrb[0].mxu0
      %3878 = vmatprep.mubr.f32.mxu0 0.0
      %3879 = vmatmul.mubr.f32.gmra.mrb[0].mxu0 %v2586
      %v3880 = vpop.f32.mrb[0].mxu0
      %v3881 = vadd.f32 %v3636, %v3880
      %v3882 = vpop.f32.mrb[0].mxu0
      %3883 = vmatprep.mubr.f32.mxu0 0.0
      %3884 = vmatmul.mubr.f32.gmra.mrb[0].mxu0 %v2587
      %v3885 = vpop.f32.mrb[0].mxu0
      %v3886 = vadd.f32 %v3641, %v3885
      %v3887 = vpop.f32.mrb[0].mxu0
      %3888 = vmatprep.mubr.f32.mxu0 0.0
      %3889 = vmatmul.mubr.f32.gmra.mrb[0].mxu0 %v2588
      %v3890 = vpop.f32.mrb[0].mxu0
      %v3891 = vadd.f32 %v3646, %v3890
      %v3892 = vpop.f32.mrb[0].mxu0
      %3893 = vmatprep.mubr.f32.mxu0 0.0
      %3894 = vmatmul.mubr.f32.gmra.mrb[0].mxu0 %v2589
      %v3895 = vpop.f32.mrb[0].mxu0
      %v3896 = vadd.f32 %v3651, %v3895
      %v3897 = vpop.f32.mrb[0].mxu0
      %3898 = vmatprep.mubr.f32.mxu0 0.0
      %3899 = vmatmul.mubr.f32.gmra.mrb[0].mxu0 %v2590
      %v3900 = vpop.f32.mrb[0].mxu0
      %v3901 = vadd.f32 %v3656, %v3900
      %v3902 = vpop.f32.mrb[0].mxu0
      %3903 = vmatprep.mubr.f32.mxu0 0.0
      %3904 = vmatmul.mubr.f32.gmra.mrb[0].mxu0 %v2591
      %v3905 = vpop.f32.mrb[0].mxu0
      %v3906 = vadd.f32 %v3661, %v3905
      %v3907 = vpop.f32.mrb[0].mxu0
      %3908 = vmatprep.mubr.f32.mxu0 0.0
      %3909 = vmatmul.mubr.f32.gmra.mrb[0].mxu0 %v2592
      %v3910 = vpop.f32.mrb[0].mxu0
      %v3911 = vadd.f32 %v3666, %v3910
      %v3912 = vpop.f32.mrb[0].mxu0
      %3913 = vmatprep.mubr.f32.mxu0 0.0
      %3914 = vmatmul.mubr.f32.gmra.mrb[0].mxu0 %v2593
      %v3915 = vpop.f32.mrb[0].mxu0
      %v3916 = vadd.f32 %v3671, %v3915
      %v3917 = vpop.f32.mrb[0].mxu0
      %3918 = vmatprep.mubr.f32.mxu0 0.0
      %3919 = vmatmul.mubr.f32.gmra.mrb[0].mxu0 %v2594
      %v3920 = vpop.f32.mrb[0].mxu0
      %v3921 = vadd.f32 %v3676, %v3920
      %v3922 = vpop.f32.mrb[0].mxu0
      %3923 = vmatprep.mubr.f32.mxu0 0.0
      %3924 = vmatmul.mubr.f32.gmra.mrb[0].mxu0 %v2595
      %v3925 = vpop.f32.mrb[0].mxu0
      %v3926 = vadd.f32 %v3681, %v3925
      %v3927 = vpop.f32.mrb[0].mxu0
      %3928 = vmatprep.mubr.f32.mxu0 0.0
      %3929 = vmatmul.mubr.f32.gmra.mrb[0].mxu0 %v2596
      %v3930 = vpop.f32.mrb[0].mxu0
      %v3931 = vadd.f32 %v3686, %v3930
      %v3932 = vpop.f32.mrb[0].mxu0
      %3933 = vmatprep.mubr.f32.mxu0 0.0
      %3934 = vmatmul.mubr.f32.gmra.mrb[0].mxu0 %v2597
      %v3935 = vpop.f32.mrb[0].mxu0
      %v3936 = vadd.f32 %v3691, %v3935
      %v3937 = vpop.f32.mrb[0].mxu0
      %3938 = vmatprep.mubr.f32.mxu0 0.0
      %3939 = vmatmul.mubr.f32.gmra.mrb[0].mxu0 %v2598
      %v3940 = vpop.f32.mrb[0].mxu0
      %v3941 = vadd.f32 %v3696, %v3940
      %v3942 = vpop.f32.mrb[0].mxu0
      %3943 = vmatprep.mubr.f32.mxu0 0.0
      %3944 = vmatmul.mubr.f32.gmra.mrb[0].mxu0 %v2599
      %v3945 = vpop.f32.mrb[0].mxu0
      %v3946 = vadd.f32 %v3701, %v3945
      %v3947 = vpop.f32.mrb[0].mxu0
      %3948 = vmatprep.mubr.f32.mxu0 0.0
      %3949 = vmatmul.mubr.f32.gmra.mrb[0].mxu0 %v2600
      %v3950 = vpop.f32.mrb[0].mxu0
      %v3951 = vadd.f32 %v3706, %v3950
      %v3952 = vpop.f32.mrb[0].mxu0
      %3953 = vmatprep.mubr.f32.mxu0 0.0
      %3954 = vmatmul.mubr.f32.gmra.mrb[0].mxu0 %v2601
      %v3955 = vpop.f32.mrb[0].mxu0
      %v3956 = vadd.f32 %v3711, %v3955
      %v3957 = vpop.f32.mrb[0].mxu0
      %3958 = vmatprep.mubr.f32.mxu0 0.0
      %3959 = vmatmul.mubr.f32.gmra.mrb[0].mxu0 %v2602
      %v3960 = vpop.f32.mrb[0].mxu0
      %v3961 = vadd.f32 %v3716, %v3960
      %v3962 = vpop.f32.mrb[0].mxu0
      %3963 = vmatprep.mubr.f32.mxu0 0.0
      %3964 = vmatmul.mubr.f32.gmra.mrb[0].mxu0 %v2603
      %v3965 = vpop.f32.mrb[0].mxu0
      %v3966 = vadd.f32 %v3721, %v3965
      %v3967 = vpop.f32.mrb[0].mxu0
      %3968 = vmatprep.mubr.f32.mxu0 0.0
      %3969 = vmatmul.mubr.f32.gmra.mrb[0].mxu0 %v2604
      %v3970 = vpop.f32.mrb[0].mxu0
      %v3971 = vadd.f32 %v3726, %v3970
      %v3972 = vpop.f32.mrb[0].mxu0
      %3973 = vdwg.mxu0
      %v3974 = vld [vmem:[%s5] sm:$0x1]
      %v3976 = vlaneseq
      %v3977 = vshrl.u32 %v3976, 7
      %v3978 = vsub.s32 0, %v3977
      %v3979 = vrot.slane %v3974, %v3978
      %v3981 = vmul.f32 %v3796, %v3979
      %v3982 = vmul.f32 %v3801, %v3979
      %v3983 = vmul.f32 %v3806, %v3979
      %v3984 = vmul.f32 %v3811, %v3979
      %v3985 = vmul.f32 %v3816, %v3979
      %v3986 = vmul.f32 %v3821, %v3979
      %v3987 = vmul.f32 %v3826, %v3979
      %v3988 = vmul.f32 %v3831, %v3979
      %v3989 = vmul.f32 %v3836, %v3979
      %v3990 = vmul.f32 %v3841, %v3979
      %v3991 = vmul.f32 %v3846, %v3979
      %v3992 = vmul.f32 %v3851, %v3979
      %v3993 = vmul.f32 %v3856, %v3979
      %v3994 = vmul.f32 %v3861, %v3979
      %v3995 = vmul.f32 %v3866, %v3979
      %v3996 = vmul.f32 %v3871, %v3979
      %v3997 = vmul.f32 %v3876, %v3979
      %v3998 = vmul.f32 %v3881, %v3979
      %v3999 = vmul.f32 %v3886, %v3979
      %v4000 = vmul.f32 %v3891, %v3979
      %v4001 = vmul.f32 %v3896, %v3979
      %v4002 = vmul.f32 %v3901, %v3979
      %v4003 = vmul.f32 %v3906, %v3979
      %v4004 = vmul.f32 %v3911, %v3979
      %v4005 = vmul.f32 %v3916, %v3979
      %v4006 = vmul.f32 %v3921, %v3979
      %v4007 = vmul.f32 %v3926, %v3979
      %v4008 = vmul.f32 %v3931, %v3979
      %v4009 = vmul.f32 %v3936, %v3979
      %v4010 = vmul.f32 %v3941, %v3979
      %v4011 = vmul.f32 %v3946, %v3979
      %v4012 = vmul.f32 %v3951, %v3979
      %v4013 = vmul.f32 %v3956, %v3979
      %v4014 = vmul.f32 %v3961, %v3979
      %v4015 = vmul.f32 %v3966, %v3979
      %v4016 = vmul.f32 %v3971, %v3979
      %v4017 = vld [vmem:[%s6] sm:$0x1]
      %v4019 = vlaneseq
      %v4020 = vshrl.u32 %v4019, 7
      %v4021 = vsub.s32 0, %v4020
      %v4022 = vrot.slane %v4017, %v4021
      %v4024 = vadd.f32 %v3981, %v4022
      %v4025 = vadd.f32 %v3982, %v4022
      %v4026 = vadd.f32 %v3983, %v4022
      %v4027 = vadd.f32 %v3984, %v4022
      %v4028 = vadd.f32 %v3985, %v4022
      %v4029 = vadd.f32 %v3986, %v4022
      %v4030 = vadd.f32 %v3987, %v4022
      %v4031 = vadd.f32 %v3988, %v4022
      %v4032 = vadd.f32 %v3989, %v4022
      %v4033 = vadd.f32 %v3990, %v4022
      %v4034 = vadd.f32 %v3991, %v4022
      %v4035 = vadd.f32 %v3992, %v4022
      %v4036 = vadd.f32 %v3993, %v4022
      %v4037 = vadd.f32 %v3994, %v4022
      %v4038 = vadd.f32 %v3995, %v4022
      %v4039 = vadd.f32 %v3996, %v4022
      %v4040 = vadd.f32 %v3997, %v4022
      %v4041 = vadd.f32 %v3998, %v4022
      %v4042 = vadd.f32 %v3999, %v4022
      %v4043 = vadd.f32 %v4000, %v4022
      %v4044 = vadd.f32 %v4001, %v4022
      %v4045 = vadd.f32 %v4002, %v4022
      %v4046 = vadd.f32 %v4003, %v4022
      %v4047 = vadd.f32 %v4004, %v4022
      %v4048 = vadd.f32 %v4005, %v4022
      %v4049 = vadd.f32 %v4006, %v4022
      %v4050 = vadd.f32 %v4007, %v4022
      %v4051 = vadd.f32 %v4008, %v4022
      %v4052 = vadd.f32 %v4009, %v4022
      %v4053 = vadd.f32 %v4010, %v4022
      %v4054 = vadd.f32 %v4011, %v4022
      %v4055 = vadd.f32 %v4012, %v4022
      %v4056 = vadd.f32 %v4013, %v4022
      %v4057 = vadd.f32 %v4014, %v4022
      %v4058 = vadd.f32 %v4015, %v4022
      %v4059 = vadd.f32 %v4016, %v4022
      %v4060 = vld [vmem:[%s300 + $0x13] sm:$0xff]
      %v4061 = vld [vmem:[%s300 + $0x1b] sm:$0xff]
      %v4062 = vld [vmem:[%s300 + $0x23] sm:$0xff]
      %v4063 = vld [vmem:[%s300 + $0x2b] sm:$0xff]
      %v4064 = vld [vmem:[%s300 + $0x33] sm:$0xff]
      %v4065 = vld [vmem:[%s300 + $0x3b] sm:$0xff]
      %v4066 = vld [vmem:[%s300 + $0x43] sm:$0xff]
      %v4067 = vld [vmem:[%s300 + $0x4b] sm:$0xff]
      %v4068 = vld [vmem:[%s300 + $0x53] sm:$0xff]
      %v4069 = vld [vmem:[%s300 + $0x5b] sm:$0xff]
      %v4070 = vld [vmem:[%s300 + $0x63] sm:$0xff]
      %v4071 = vld [vmem:[%s300 + $0x6b] sm:$0xff]
      %v4072 = vld [vmem:[%s300 + $0x73] sm:$0xff]
      %v4073 = vld [vmem:[%s300 + $0x7b] sm:$0xff]
      %v4074 = vld [vmem:[%s300 + $0x83] sm:$0xff]
      %v4075 = vld [vmem:[%s300 + $0x8b] sm:$0xff]
      %v4076 = vld [vmem:[%s300 + $0x93] sm:$0xff]
      %v4077 = vld [vmem:[%s300 + $0x9b] sm:$0xff]
      %v4078 = vld [vmem:[%s300 + $0xa3] sm:$0xff]
      %v4079 = vld [vmem:[%s300 + $0xab] sm:$0xff]
      %v4080 = vld [vmem:[%s300 + $0xb3] sm:$0xff]
      %v4081 = vld [vmem:[%s300 + $0xbb] sm:$0xff]
      %v4082 = vld [vmem:[%s300 + $0xc3] sm:$0xff]
      %v4083 = vld [vmem:[%s300 + $0xcb] sm:$0xff]
      %v4084 = vld [vmem:[%s300 + $0xd3] sm:$0xff]
      %v4085 = vld [vmem:[%s300 + $0xdb] sm:$0xff]
      %v4086 = vld [vmem:[%s300 + $0xe3] sm:$0xff]
      %v4087 = vld [vmem:[%s300 + $0xeb] sm:$0xff]
      %v4088 = vld [vmem:[%s300 + $0xf3] sm:$0xff]
      %v4089 = vld [vmem:[%s300 + $0xfb] sm:$0xff]
      %v4090 = vld [vmem:[%s300 + $0x103] sm:$0xff]
      %v4091 = vld [vmem:[%s300 + $0x10b] sm:$0xff]
      %v4092 = vld [vmem:[%s300 + $0x113] sm:$0xff]
      %v4093 = vld [vmem:[%s300 + $0x11b] sm:$0xff]
      %v4094 = vld [vmem:[%s300 + $0x123] sm:$0xff]
      %v4095 = vld [vmem:[%s300 + $0x12b] sm:$0xff]
      %v4096 = vadd.f32 %v4024, %v4060
      %v4097 = vadd.f32 %v4025, %v4061
      %v4098 = vadd.f32 %v4026, %v4062
      %v4099 = vadd.f32 %v4027, %v4063
      %v4100 = vadd.f32 %v4028, %v4064
      %v4101 = vadd.f32 %v4029, %v4065
      %v4102 = vadd.f32 %v4030, %v4066
      %v4103 = vadd.f32 %v4031, %v4067
      %v4104 = vadd.f32 %v4032, %v4068
      %v4105 = vadd.f32 %v4033, %v4069
      %v4106 = vadd.f32 %v4034, %v4070
      %v4107 = vadd.f32 %v4035, %v4071
      %v4108 = vadd.f32 %v4036, %v4072
      %v4109 = vadd.f32 %v4037, %v4073
      %v4110 = vadd.f32 %v4038, %v4074
      %v4111 = vadd.f32 %v4039, %v4075
      %v4112 = vadd.f32 %v4040, %v4076
      %v4113 = vadd.f32 %v4041, %v4077
      %v4114 = vadd.f32 %v4042, %v4078
      %v4115 = vadd.f32 %v4043, %v4079
      %v4116 = vadd.f32 %v4044, %v4080
      %v4117 = vadd.f32 %v4045, %v4081
      %v4118 = vadd.f32 %v4046, %v4082
      %v4119 = vadd.f32 %v4047, %v4083
      %v4120 = vadd.f32 %v4048, %v4084
      %v4121 = vadd.f32 %v4049, %v4085
      %v4122 = vadd.f32 %v4050, %v4086
      %v4123 = vadd.f32 %v4051, %v4087
      %v4124 = vadd.f32 %v4052, %v4088
      %v4125 = vadd.f32 %v4053, %v4089
      %v4126 = vadd.f32 %v4054, %v4090
      %v4127 = vadd.f32 %v4055, %v4091
      %v4128 = vadd.f32 %v4056, %v4092
      %v4129 = vadd.f32 %v4057, %v4093
      %v4130 = vadd.f32 %v4058, %v4094
      %v4131 = vadd.f32 %v4059, %v4095
      %v4132 = vmax.f32 %v4096, 0.0
      %v4133 = vmax.f32 %v4097, 0.0
      %v4134 = vmax.f32 %v4098, 0.0
      %v4135 = vmax.f32 %v4099, 0.0
      %v4136 = vmax.f32 %v4100, 0.0
      %v4137 = vmax.f32 %v4101, 0.0
      %v4138 = vmax.f32 %v4102, 0.0
      %v4139 = vmax.f32 %v4103, 0.0
      %v4140 = vmax.f32 %v4104, 0.0
      %v4141 = vmax.f32 %v4105, 0.0
      %v4142 = vmax.f32 %v4106, 0.0
      %v4143 = vmax.f32 %v4107, 0.0
      %v4144 = vmax.f32 %v4108, 0.0
      %v4145 = vmax.f32 %v4109, 0.0
      %v4146 = vmax.f32 %v4110, 0.0
      %v4147 = vmax.f32 %v4111, 0.0
      %v4148 = vmax.f32 %v4112, 0.0
      %v4149 = vmax.f32 %v4113, 0.0
      %v4150 = vmax.f32 %v4114, 0.0
      %v4151 = vmax.f32 %v4115, 0.0
      %v4152 = vmax.f32 %v4116, 0.0
      %v4153 = vmax.f32 %v4117, 0.0
      %v4154 = vmax.f32 %v4118, 0.0
      %v4155 = vmax.f32 %v4119, 0.0
      %v4156 = vmax.f32 %v4120, 0.0
      %v4157 = vmax.f32 %v4121, 0.0
      %v4158 = vmax.f32 %v4122, 0.0
      %v4159 = vmax.f32 %v4123, 0.0
      %v4160 = vmax.f32 %v4124, 0.0
      %v4161 = vmax.f32 %v4125, 0.0
      %v4162 = vmax.f32 %v4126, 0.0
      %v4163 = vmax.f32 %v4127, 0.0
      %v4164 = vmax.f32 %v4128, 0.0
      %v4165 = vmax.f32 %v4129, 0.0
      %v4166 = vmax.f32 %v4130, 0.0
      %v4167 = vmax.f32 %v4131, 0.0
      %4168 = vst [vmem:[%s305] sm:$0xff] %v4132
      %4169 = vst [vmem:[%s305 + $0x8] sm:$0xff] %v4133
      %4170 = vst [vmem:[%s305 + $0x10] sm:$0xff] %v4134
      %4171 = vst [vmem:[%s305 + $0x18] sm:$0xff] %v4135
      %4172 = vst [vmem:[%s305 + $0x20] sm:$0xff] %v4136
      %4173 = vst [vmem:[%s305 + $0x28] sm:$0xff] %v4137
      %4174 = vst [vmem:[%s305 + $0x30] sm:$0xff] %v4138
      %4175 = vst [vmem:[%s305 + $0x38] sm:$0xff] %v4139
      %4176 = vst [vmem:[%s305 + $0x40] sm:$0xff] %v4140
      %4177 = vst [vmem:[%s305 + $0x48] sm:$0xff] %v4141
      %4178 = vst [vmem:[%s305 + $0x50] sm:$0xff] %v4142
      %4179 = vst [vmem:[%s305 + $0x58] sm:$0xff] %v4143
      %4180 = vst [vmem:[%s305 + $0x60] sm:$0xff] %v4144
      %4181 = vst [vmem:[%s305 + $0x68] sm:$0xff] %v4145
      %4182 = vst [vmem:[%s305 + $0x70] sm:$0xff] %v4146
      %4183 = vst [vmem:[%s305 + $0x78] sm:$0xff] %v4147
      %4184 = vst [vmem:[%s305 + $0x80] sm:$0xff] %v4148
      %4185 = vst [vmem:[%s305 + $0x88] sm:$0xff] %v4149
      %4186 = vst [vmem:[%s305 + $0x90] sm:$0xff] %v4150
      %4187 = vst [vmem:[%s305 + $0x98] sm:$0xff] %v4151
      %4188 = vst [vmem:[%s305 + $0xa0] sm:$0xff] %v4152
      %4189 = vst [vmem:[%s305 + $0xa8] sm:$0xff] %v4153
      %4190 = vst [vmem:[%s305 + $0xb0] sm:$0xff] %v4154
      %4191 = vst [vmem:[%s305 + $0xb8] sm:$0xff] %v4155
      %4192 = vst [vmem:[%s305 + $0xc0] sm:$0xff] %v4156
      %4193 = vst [vmem:[%s305 + $0xc8] sm:$0xff] %v4157
      %4194 = vst [vmem:[%s305 + $0xd0] sm:$0xff] %v4158
      %4195 = vst [vmem:[%s305 + $0xd8] sm:$0xff] %v4159
      %4196 = vst [vmem:[%s305 + $0xe0] sm:$0xff] %v4160
      %4197 = vst [vmem:[%s305 + $0xe8] sm:$0xff] %v4161
      %4198 = vst [vmem:[%s305 + $0xf0] sm:$0xff] %v4162
      %4199 = vst [vmem:[%s305 + $0xf8] sm:$0xff] %v4163
      %4200 = vst [vmem:[%s305 + $0x100] sm:$0xff] %v4164
      %4201 = vst [vmem:[%s305 + $0x108] sm:$0xff] %v4165
      %4202 = vst [vmem:[%s305 + $0x110] sm:$0xff] %v4166
      %4203 = vst [vmem:[%s305 + $0x118] sm:$0xff] %v4167
      %p4204 = scmp.lt.s32.totalorder %s19, 1
      %s4205 = scalar_select %p4204, %s19, 1
      %s4206 = smul.addr %s4205, 36
      %s4207 = smul.addr %s4206, 8
      %s4208 = scalar_lea.vmem %s8, %s4207
      // Predicated region
      $region53: #{basic_block_forward.1} parent=51 // pred_check
        %p4209 = pneg %p210
      $region54: #{basic_block_forward.1} parent=51 // pred_check_branch
        %4211 = sbr.rel (%p4209) target = $region56
      $region55: #{basic_block_forward.1} parent=51 // pred_region
        _
      $region56: #{basic_block_forward.1} parent=51 // pred_fallthru
        _
    $region52: #{basic_block_forward.1} parent=5 // pred_fallthru
      _
    %p4212 = scmp.le.s32.totalorder 2, %s14
    // Predicated region
    $region57: #{basic_block_forward.1} parent=5 // pred_check
      %p4213 = pneg %p4212
    $region58: #{basic_block_forward.1} parent=5 // pred_check_branch
      %4215 = sbr.rel (%p4213) target = $region60
    $region59: #{basic_block_forward.1} parent=5 // pred_region
      %s4216 = ssub.s32 %s14, 2
      // Predicated region
      $region61: #{basic_block_forward.1} parent=59 // pred_check
        %p4217 = pneg %p216
      $region62: #{basic_block_forward.1} parent=59 // pred_check_branch
        %4219 = sbr.rel (%p4217) target = $region64
      $region63: #{basic_block_forward.1} parent=59 // pred_region
        %p4220 = scmp.lt.s32.totalorder %s20, 1
        %s4221 = scalar_select %p4220, %s20, 1
        %s4222 = smul.addr %s4221, 36
        %s4223 = smul.addr %s4222, 8
        %s4224 = scalar_lea.vmem %s8, %s4223
      $region64: #{basic_block_forward.1} parent=59 // pred_fallthru
        _
    $region60: #{basic_block_forward.1} parent=5 // pred_fallthru
      _
  $region6: #{basic_block_forward.1} parent=0 // loop_footer
    %s18 = sadd.s32 1, %s14
  $region7: #{basic_block_forward.1} parent=0 // loop_footer_branch
    %13 = sbr.rel target = $region3
  $region8: #{basic_block_forward.1} parent=0 // loop_exit
    _

// kernel: tile.8
$region0: #{tile.8}
  #allocation0 [shape = 's32[1]{0}', space=sflag, size = 0x4, scoped, tag = 'scoped memory for tile.8']
  %s0 = inlined_call_operand.vmem [shape: f32[18], index: 0, kind: input, shape index: {}]
  %s1 = inlined_call_operand.vmem [shape: f32[16,18], index: 1, kind: output, shape index: {}]
  // Predicated region
  $region2: #{tile.8} parent=0 // pred_check
    _
  $region3: #{tile.8} parent=0 // pred_check_branch
    %3 = sbr.rel (0) target = $region5
  $region4: #{tile.8} parent=0 // pred_region
    _
  $region5: #{tile.8} parent=0 // pred_fallthru
    _
  %v4 = vld [vmem:[%s0] ss:$0 sm:$0xff]
  %5 = vst [vmem:[%s1] sm:$0xff] %v4
  %s6 = scalar_lea.vmem %s1, 8
  %7 = vst [vmem:[%s6] sm:$0xff] %v4

// kernel: tile.0
$region0: #{tile.0}
  %s0 = inlined_call_operand.vmem [shape: f32[16,18], index: 0, kind: input, shape index: {}]
  %s1 = inlined_call_operand.vmem [shape: f32[288,1], index: 1, kind: output, shape index: {}]
  %v2 = vld [vmem:[%s0] sm:$0xff]
  %vm3 = vcmask 7168
  %4 = vst.msk [vmem:[%s1] ss:$18 sm:$0xff] %vm3, %v2
  %s5 = scalar_lea.vmem %s0, 8
  %v6 = vld [vmem:[%s5] sm:$0xff]
  %vm7 = vcmask 7168
  %s8 = scalar_lea.vmem %s1, 144
  %9 = vst.msk [vmem:[%s8] ss:$18 sm:$0xff] %vm7, %v6
  %v10 = vld.sshfl [vmem:[%s0] sm:$0xff pattern:$0xf6d4b290]
  %11 = vrot.lane.b32.xlu0 %v10, 127
  %v12 = vpop.permute.xlu0 %11
  %vm13 = vcmask 7168
  %s14 = scalar_lea.vmem %s1, 1
  %15 = vst.msk [vmem:[%s14] ss:$162 sm:$0x3] %vm13, %v12
  %s16 = scalar_lea.vmem %s1, 4294967009
  %17 = vst.msk [vmem:[%s16] ss:$162 sm:$0xc] %vm13, %v12
  %s18 = scalar_lea.vmem %s1, 4294966721
  %19 = vst.msk [vmem:[%s18] ss:$162 sm:$0x30] %vm13, %v12
  %s20 = scalar_lea.vmem %s1, 4294966433
  %21 = vst.msk [vmem:[%s20] ss:$162 sm:$0xc0] %vm13, %v12
  %s22 = scalar_lea.vmem %s0, 1
  %v23 = vld.sshfl [vmem:[%s22] sm:$0xff pattern:$0x6d4b2907]
  %24 = vrot.lane.b32.xlu0 %v23, 127
  %v25 = vpop.permute.xlu0 %24
  %vm26 = vcmask 7168
  %s27 = scalar_lea.vmem %s1, 145
  %28 = vst.msk [vmem:[%s27] ss:$-126 sm:$0x3] %vm26, %v25
  %s29 = scalar_lea.vmem %s1, 433
  %30 = vst.msk [vmem:[%s29] ss:$-126 sm:$0xc] %vm26, %v25
  %s31 = scalar_lea.vmem %s1, 721
  %32 = vst.msk [vmem:[%s31] ss:$-126 sm:$0x30] %vm26, %v25
  %s33 = scalar_lea.vmem %s1, 1009
  %34 = vst.msk [vmem:[%s33] ss:$-126 sm:$0xc0] %vm26, %v25
  %v35 = vld.sshfl [vmem:[%s0] sm:$0xff pattern:$0x6d4b2907]
  %36 = vrot.lane.b32.xlu0 %v35, 126
  %v37 = vpop.permute.xlu0 %36
  %vm38 = vcmask 7168
  %s39 = scalar_lea.vmem %s1, 128
  %40 = vst.msk [vmem:[%s39] ss:$-126 sm:$0x3] %vm38, %v37
  %s41 = scalar_lea.vmem %s1, 416
  %42 = vst.msk [vmem:[%s41] ss:$-126 sm:$0xc] %vm38, %v37
  %s43 = scalar_lea.vmem %s1, 704
  %44 = vst.msk [vmem:[%s43] ss:$-126 sm:$0x30] %vm38, %v37
  %s45 = scalar_lea.vmem %s1, 992
  %46 = vst.msk [vmem:[%s45] ss:$-126 sm:$0xc0] %vm38, %v37
  %s47 = scalar_lea.vmem %s0, 1
  %v48 = vld.sshfl [vmem:[%s47] sm:$0xff pattern:$0xd4b2907e]
  %49 = vrot.lane.b32.xlu0 %v48, 126
  %v50 = vpop.permute.xlu0 %49
  %vm51 = vcmask 7168
  %s52 = scalar_lea.vmem %s1, 272
  %53 = vst.msk [vmem:[%s52] ss:$-126 sm:$0x7] %vm51, %v50
  %s54 = scalar_lea.vmem %s1, 560
  %55 = vst.msk [vmem:[%s54] ss:$-126 sm:$0x18] %vm51, %v50
  %s56 = scalar_lea.vmem %s1, 848
  %57 = vst.msk [vmem:[%s56] ss:$-126 sm:$0x60] %vm51, %v50
  %s58 = scalar_lea.vmem %s1, 247
  %59 = vst.msk [vmem:[%s58] sm:$0x80] %vm51, %v50
  %v60 = vld.sshfl [vmem:[%s0] sm:$0xff pattern:$0x6d4b2907]
  %61 = vrot.lane.b32.xlu0 %v60, 125
  %v62 = vpop.permute.xlu0 %61
  %vm63 = vcmask 7168
  %s64 = scalar_lea.vmem %s1, 129
  %65 = vst.msk [vmem:[%s64] ss:$-126 sm:$0x3] %vm63, %v62
  %s66 = scalar_lea.vmem %s1, 417
  %67 = vst.msk [vmem:[%s66] ss:$-126 sm:$0xc] %vm63, %v62
  %s68 = scalar_lea.vmem %s1, 705
  %69 = vst.msk [vmem:[%s68] ss:$-126 sm:$0x30] %vm63, %v62
  %s70 = scalar_lea.vmem %s1, 993
  %71 = vst.msk [vmem:[%s70] ss:$-126 sm:$0xc0] %vm63, %v62
  %s72 = scalar_lea.vmem %s0, 1
  %v73 = vld.sshfl [vmem:[%s72] sm:$0xff pattern:$0xd4b2907e]
  %74 = vrot.lane.b32.xlu0 %v73, 125
  %v75 = vpop.permute.xlu0 %74
  %vm76 = vcmask 7168
  %s77 = scalar_lea.vmem %s1, 273
  %78 = vst.msk [vmem:[%s77] ss:$-126 sm:$0x7] %vm76, %v75
  %s79 = scalar_lea.vmem %s1, 561
  %80 = vst.msk [vmem:[%s79] ss:$-126 sm:$0x18] %vm76, %v75
  %s81 = scalar_lea.vmem %s1, 849
  %82 = vst.msk [vmem:[%s81] ss:$-126 sm:$0x60] %vm76, %v75
  %s83 = scalar_lea.vmem %s1, 248
  %84 = vst.msk [vmem:[%s83] sm:$0x80] %vm76, %v75
  %v85 = vld.sshfl [vmem:[%s0] sm:$0xff pattern:$0xd4b2907e]
  %86 = vrot.lane.b32.xlu0 %v85, 124
  %v87 = vpop.permute.xlu0 %86
  %vm88 = vcmask 7168
  %s89 = scalar_lea.vmem %s1, 256
  %90 = vst.msk [vmem:[%s89] ss:$-126 sm:$0x7] %vm88, %v87
  %s91 = scalar_lea.vmem %s1, 544
  %92 = vst.msk [vmem:[%s91] ss:$-126 sm:$0x18] %vm88, %v87
  %s93 = scalar_lea.vmem %s1, 832
  %94 = vst.msk [vmem:[%s93] ss:$-126 sm:$0x60] %vm88, %v87
  %s95 = scalar_lea.vmem %s1, 231
  %96 = vst.msk [vmem:[%s95] sm:$0x80] %vm88, %v87
  %s97 = scalar_lea.vmem %s0, 1
  %v98 = vld.sshfl [vmem:[%s97] sm:$0xff pattern:$0x4b2907e5]
  %99 = vrot.lane.b32.xlu0 %v98, 124
  %v100 = vpop.permute.xlu0 %99
  %vm101 = vcmask 7168
  %s102 = scalar_lea.vmem %s1, 112
  %103 = vst.msk [vmem:[%s102] ss:$162 sm:$0x3] %vm101, %v100
  %s104 = scalar_lea.vmem %s1, 400
  %105 = vst.msk [vmem:[%s104] ss:$-126 sm:$0xc] %vm101, %v100
  %s106 = scalar_lea.vmem %s1, 688
  %107 = vst.msk [vmem:[%s106] ss:$-126 sm:$0x30] %vm101, %v100
  %s108 = scalar_lea.vmem %s1, 976
  %109 = vst.msk [vmem:[%s108] ss:$-126 sm:$0xc0] %vm101, %v100
  %v110 = vld.sshfl [vmem:[%s0] sm:$0xff pattern:$0xd4b2907e]
  %111 = vrot.lane.b32.xlu0 %v110, 123
  %v112 = vpop.permute.xlu0 %111
  %vm113 = vcmask 7168
  %s114 = scalar_lea.vmem %s1, 257
  %115 = vst.msk [vmem:[%s114] ss:$-126 sm:$0x7] %vm113, %v112
  %s116 = scalar_lea.vmem %s1, 545
  %117 = vst.msk [vmem:[%s116] ss:$-126 sm:$0x18] %vm113, %v112
  %s118 = scalar_lea.vmem %s1, 833
  %119 = vst.msk [vmem:[%s118] ss:$-126 sm:$0x60] %vm113, %v112
  %s120 = scalar_lea.vmem %s1, 232
  %121 = vst.msk [vmem:[%s120] sm:$0x80] %vm113, %v112
  %s122 = scalar_lea.vmem %s0, 1
  %v123 = vld.sshfl [vmem:[%s122] sm:$0xff pattern:$0x4b2907e5]
  %124 = vrot.lane.b32.xlu0 %v123, 123
  %v125 = vpop.permute.xlu0 %124
  %vm126 = vcmask 7168
  %s127 = scalar_lea.vmem %s1, 113
  %128 = vst.msk [vmem:[%s127] ss:$162 sm:$0x3] %vm126, %v125
  %s129 = scalar_lea.vmem %s1, 401
  %130 = vst.msk [vmem:[%s129] ss:$-126 sm:$0xc] %vm126, %v125
  %s131 = scalar_lea.vmem %s1, 689
  %132 = vst.msk [vmem:[%s131] ss:$-126 sm:$0x30] %vm126, %v125
  %s133 = scalar_lea.vmem %s1, 977
  %134 = vst.msk [vmem:[%s133] ss:$-126 sm:$0xc0] %vm126, %v125
  %v135 = vld.sshfl [vmem:[%s0] sm:$0xff pattern:$0x4b2907e5]
  %136 = vrot.lane.b32.xlu0 %v135, 122
  %v137 = vpop.permute.xlu0 %136
  %vm138 = vcmask 7168
  %s139 = scalar_lea.vmem %s1, 96
  %140 = vst.msk [vmem:[%s139] ss:$162 sm:$0x3] %vm138, %v137
  %s141 = scalar_lea.vmem %s1, 384
  %142 = vst.msk [vmem:[%s141] ss:$-126 sm:$0xc] %vm138, %v137
  %s143 = scalar_lea.vmem %s1, 672
  %144 = vst.msk [vmem:[%s143] ss:$-126 sm:$0x30] %vm138, %v137
  %s145 = scalar_lea.vmem %s1, 960
  %146 = vst.msk [vmem:[%s145] ss:$-126 sm:$0xc0] %vm138, %v137
  %s147 = scalar_lea.vmem %s0, 1
  %v148 = vld.sshfl [vmem:[%s147] sm:$0xff pattern:$0xb2907e5c]
  %149 = vrot.lane.b32.xlu0 %v148, 122
  %v150 = vpop.permute.xlu0 %149
  %vm151 = vcmask 7168
  %s152 = scalar_lea.vmem %s1, 240
  %153 = vst.msk [vmem:[%s152] ss:$-126 sm:$0x3] %vm151, %v150
  %s154 = scalar_lea.vmem %s1, 528
  %155 = vst.msk [vmem:[%s154] ss:$-126 sm:$0x1c] %vm151, %v150
  %s156 = scalar_lea.vmem %s1, 816
  %157 = vst.msk [vmem:[%s156] ss:$-126 sm:$0x60] %vm151, %v150
  %s158 = scalar_lea.vmem %s1, 215
  %159 = vst.msk [vmem:[%s158] sm:$0x80] %vm151, %v150
  %v160 = vld.sshfl [vmem:[%s0] sm:$0xff pattern:$0x4b2907e5]
  %161 = vrot.lane.b32.xlu0 %v160, 121
  %v162 = vpop.permute.xlu0 %161
  %vm163 = vcmask 7168
  %s164 = scalar_lea.vmem %s1, 97
  %165 = vst.msk [vmem:[%s164] ss:$162 sm:$0x3] %vm163, %v162
  %s166 = scalar_lea.vmem %s1, 385
  %167 = vst.msk [vmem:[%s166] ss:$-126 sm:$0xc] %vm163, %v162
  %s168 = scalar_lea.vmem %s1, 673
  %169 = vst.msk [vmem:[%s168] ss:$-126 sm:$0x30] %vm163, %v162
  %s170 = scalar_lea.vmem %s1, 961
  %171 = vst.msk [vmem:[%s170] ss:$-126 sm:$0xc0] %vm163, %v162
  %s172 = scalar_lea.vmem %s0, 1
  %v173 = vld.sshfl [vmem:[%s172] sm:$0xff pattern:$0xb2907e5c]
  %174 = vrot.lane.b32.xlu0 %v173, 121
  %v175 = vpop.permute.xlu0 %174
  %vm176 = vcmask 7168
  %s177 = scalar_lea.vmem %s1, 241
  %178 = vst.msk [vmem:[%s177] ss:$-126 sm:$0x3] %vm176, %v175
  %s179 = scalar_lea.vmem %s1, 529
  %180 = vst.msk [vmem:[%s179] ss:$-126 sm:$0x1c] %vm176, %v175
  %s181 = scalar_lea.vmem %s1, 817
  %182 = vst.msk [vmem:[%s181] ss:$-126 sm:$0x60] %vm176, %v175
  %s183 = scalar_lea.vmem %s1, 216
  %184 = vst.msk [vmem:[%s183] sm:$0x80] %vm176, %v175
  %v185 = vld.sshfl [vmem:[%s0] sm:$0xff pattern:$0xb2907e5c]
  %186 = vrot.lane.b32.xlu0 %v185, 120
  %v187 = vpop.permute.xlu0 %186
  %vm188 = vcmask 7168
  %s189 = scalar_lea.vmem %s1, 224
  %190 = vst.msk [vmem:[%s189] ss:$-126 sm:$0x3] %vm188, %v187
  %s191 = scalar_lea.vmem %s1, 512
  %192 = vst.msk [vmem:[%s191] ss:$-126 sm:$0x1c] %vm188, %v187
  %s193 = scalar_lea.vmem %s1, 800
  %194 = vst.msk [vmem:[%s193] ss:$-126 sm:$0x60] %vm188, %v187
  %s195 = scalar_lea.vmem %s1, 199
  %196 = vst.msk [vmem:[%s195] sm:$0x80] %vm188, %v187
  %s197 = scalar_lea.vmem %s0, 1
  %v198 = vld.sshfl [vmem:[%s197] sm:$0xff pattern:$0x2907e5c3]
  %199 = vrot.lane.b32.xlu0 %v198, 120
  %v200 = vpop.permute.xlu0 %199
  %vm201 = vcmask 7168
  %s202 = scalar_lea.vmem %s1, 80
  %203 = vst.msk [vmem:[%s202] ss:$162 sm:$0x3] %vm201, %v200
  %s204 = scalar_lea.vmem %s1, 4294967088
  %205 = vst.msk [vmem:[%s204] ss:$162 sm:$0xc] %vm201, %v200
  %s206 = scalar_lea.vmem %s1, 656
  %207 = vst.msk [vmem:[%s206] ss:$-126 sm:$0x30] %vm201, %v200
  %s208 = scalar_lea.vmem %s1, 944
  %209 = vst.msk [vmem:[%s208] ss:$-126 sm:$0xc0] %vm201, %v200
  %v210 = vld.sshfl [vmem:[%s0] sm:$0xff pattern:$0xb2907e5c]
  %211 = vrot.lane.b32.xlu0 %v210, 119
  %v212 = vpop.permute.xlu0 %211
  %vm213 = vcmask 7168
  %s214 = scalar_lea.vmem %s1, 225
  %215 = vst.msk [vmem:[%s214] ss:$-126 sm:$0x3] %vm213, %v212
  %s216 = scalar_lea.vmem %s1, 513
  %217 = vst.msk [vmem:[%s216] ss:$-126 sm:$0x1c] %vm213, %v212
  %s218 = scalar_lea.vmem %s1, 801
  %219 = vst.msk [vmem:[%s218] ss:$-126 sm:$0x60] %vm213, %v212
  %s220 = scalar_lea.vmem %s1, 200
  %221 = vst.msk [vmem:[%s220] sm:$0x80] %vm213, %v212
  %s222 = scalar_lea.vmem %s0, 1
  %v223 = vld.sshfl [vmem:[%s222] sm:$0xff pattern:$0x2907e5c3]
  %224 = vrot.lane.b32.xlu0 %v223, 119
  %v225 = vpop.permute.xlu0 %224
  %vm226 = vcmask 7168
  %s227 = scalar_lea.vmem %s1, 81
  %228 = vst.msk [vmem:[%s227] ss:$162 sm:$0x3] %vm226, %v225
  %s229 = scalar_lea.vmem %s1, 4294967089
  %230 = vst.msk [vmem:[%s229] ss:$162 sm:$0xc] %vm226, %v225
  %s231 = scalar_lea.vmem %s1, 657
  %232 = vst.msk [vmem:[%s231] ss:$-126 sm:$0x30] %vm226, %v225
  %s233 = scalar_lea.vmem %s1, 945
  %234 = vst.msk [vmem:[%s233] ss:$-126 sm:$0xc0] %vm226, %v225
  %v235 = vld.sshfl [vmem:[%s0] sm:$0xff pattern:$0x2907e5c3]
  %236 = vrot.lane.b32.xlu0 %v235, 118
  %v237 = vpop.permute.xlu0 %236
  %vm238 = vcmask 7168
  %s239 = scalar_lea.vmem %s1, 64
  %240 = vst.msk [vmem:[%s239] ss:$162 sm:$0x3] %vm238, %v237
  %s241 = scalar_lea.vmem %s1, 4294967072
  %242 = vst.msk [vmem:[%s241] ss:$162 sm:$0xc] %vm238, %v237
  %s243 = scalar_lea.vmem %s1, 640
  %244 = vst.msk [vmem:[%s243] ss:$-126 sm:$0x30] %vm238, %v237
  %s245 = scalar_lea.vmem %s1, 928
  %246 = vst.msk [vmem:[%s245] ss:$-126 sm:$0xc0] %vm238, %v237
  %s247 = scalar_lea.vmem %s0, 1
  %v248 = vld.sshfl [vmem:[%s247] sm:$0xff pattern:$0x907e5c3a]
  %249 = vrot.lane.b32.xlu0 %v248, 118
  %v250 = vpop.permute.xlu0 %249
  %vm251 = vcmask 7168
  %s252 = scalar_lea.vmem %s1, 208
  %253 = vst.msk [vmem:[%s252] ss:$-126 sm:$0x3] %vm251, %v250
  %s254 = scalar_lea.vmem %s1, 496
  %255 = vst.msk [vmem:[%s254] ss:$-126 sm:$0xc] %vm251, %v250
  %s256 = scalar_lea.vmem %s1, 784
  %257 = vst.msk [vmem:[%s256] ss:$-126 sm:$0x70] %vm251, %v250
  %s258 = scalar_lea.vmem %s1, 183
  %259 = vst.msk [vmem:[%s258] sm:$0x80] %vm251, %v250
  %v260 = vld.sshfl [vmem:[%s0] sm:$0xff pattern:$0x2907e5c3]
  %261 = vrot.lane.b32.xlu0 %v260, 117
  %v262 = vpop.permute.xlu0 %261
  %vm263 = vcmask 7168
  %s264 = scalar_lea.vmem %s1, 65
  %265 = vst.msk [vmem:[%s264] ss:$162 sm:$0x3] %vm263, %v262
  %s266 = scalar_lea.vmem %s1, 4294967073
  %267 = vst.msk [vmem:[%s266] ss:$162 sm:$0xc] %vm263, %v262
  %s268 = scalar_lea.vmem %s1, 641
  %269 = vst.msk [vmem:[%s268] ss:$-126 sm:$0x30] %vm263, %v262
  %s270 = scalar_lea.vmem %s1, 929
  %271 = vst.msk [vmem:[%s270] ss:$-126 sm:$0xc0] %vm263, %v262
  %s272 = scalar_lea.vmem %s0, 1
  %v273 = vld.sshfl [vmem:[%s272] sm:$0xff pattern:$0x907e5c3a]
  %274 = vrot.lane.b32.xlu0 %v273, 117
  %v275 = vpop.permute.xlu0 %274
  %vm276 = vcmask 7168
  %s277 = scalar_lea.vmem %s1, 209
  %278 = vst.msk [vmem:[%s277] ss:$-126 sm:$0x3] %vm276, %v275
  %s279 = scalar_lea.vmem %s1, 497
  %280 = vst.msk [vmem:[%s279] ss:$-126 sm:$0xc] %vm276, %v275
  %s281 = scalar_lea.vmem %s1, 785
  %282 = vst.msk [vmem:[%s281] ss:$-126 sm:$0x70] %vm276, %v275
  %s283 = scalar_lea.vmem %s1, 184
  %284 = vst.msk [vmem:[%s283] sm:$0x80] %vm276, %v275
  %v285 = vld.sshfl [vmem:[%s0] sm:$0xff pattern:$0x907e5c3a]
  %286 = vrot.lane.b32.xlu0 %v285, 116
  %v287 = vpop.permute.xlu0 %286
  %vm288 = vcmask 7168
  %s289 = scalar_lea.vmem %s1, 192
  %290 = vst.msk [vmem:[%s289] ss:$-126 sm:$0x3] %vm288, %v287
  %s291 = scalar_lea.vmem %s1, 480
  %292 = vst.msk [vmem:[%s291] ss:$-126 sm:$0xc] %vm288, %v287
  %s293 = scalar_lea.vmem %s1, 768
  %294 = vst.msk [vmem:[%s293] ss:$-126 sm:$0x70] %vm288, %v287
  %s295 = scalar_lea.vmem %s1, 167
  %296 = vst.msk [vmem:[%s295] sm:$0x80] %vm288, %v287
  %s297 = scalar_lea.vmem %s0, 1
  %v298 = vld.sshfl [vmem:[%s297] sm:$0xff pattern:$0x7e5c3a1]
  %299 = vrot.lane.b32.xlu0 %v298, 116
  %v300 = vpop.permute.xlu0 %299
  %vm301 = vcmask 7168
  %s302 = scalar_lea.vmem %s1, 48
  %303 = vst.msk [vmem:[%s302] ss:$162 sm:$0x3] %vm301, %v300
  %s304 = scalar_lea.vmem %s1, 4294967056
  %305 = vst.msk [vmem:[%s304] ss:$162 sm:$0xc] %vm301, %v300
  %s306 = scalar_lea.vmem %s1, 4294966768
  %307 = vst.msk [vmem:[%s306] ss:$162 sm:$0x30] %vm301, %v300
  %s308 = scalar_lea.vmem %s1, 912
  %309 = vst.msk [vmem:[%s308] ss:$-126 sm:$0xc0] %vm301, %v300
  %v310 = vld.sshfl [vmem:[%s0] sm:$0xff pattern:$0x907e5c3a]
  %311 = vrot.lane.b32.xlu0 %v310, 115
  %v312 = vpop.permute.xlu0 %311
  %vm313 = vcmask 7168
  %s314 = scalar_lea.vmem %s1, 193
  %315 = vst.msk [vmem:[%s314] ss:$-126 sm:$0x3] %vm313, %v312
  %s316 = scalar_lea.vmem %s1, 481
  %317 = vst.msk [vmem:[%s316] ss:$-126 sm:$0xc] %vm313, %v312
  %s318 = scalar_lea.vmem %s1, 769
  %319 = vst.msk [vmem:[%s318] ss:$-126 sm:$0x70] %vm313, %v312
  %s320 = scalar_lea.vmem %s1, 168
  %321 = vst.msk [vmem:[%s320] sm:$0x80] %vm313, %v312
  %s322 = scalar_lea.vmem %s0, 1
  %v323 = vld.sshfl [vmem:[%s322] sm:$0xff pattern:$0x7e5c3a1]
  %324 = vrot.lane.b32.xlu0 %v323, 115
  %v325 = vpop.permute.xlu0 %324
  %vm326 = vcmask 7168
  %s327 = scalar_lea.vmem %s1, 49
  %328 = vst.msk [vmem:[%s327] ss:$162 sm:$0x3] %vm326, %v325
  %s329 = scalar_lea.vmem %s1, 4294967057
  %330 = vst.msk [vmem:[%s329] ss:$162 sm:$0xc] %vm326, %v325
  %s331 = scalar_lea.vmem %s1, 4294966769
  %332 = vst.msk [vmem:[%s331] ss:$162 sm:$0x30] %vm326, %v325
  %s333 = scalar_lea.vmem %s1, 913
  %334 = vst.msk [vmem:[%s333] ss:$-126 sm:$0xc0] %vm326, %v325
  %v335 = vld.sshfl [vmem:[%s0] sm:$0xff pattern:$0x7e5c3a1]
  %336 = vrot.lane.b32.xlu0 %v335, 114
  %v337 = vpop.permute.xlu0 %336
  %vm338 = vcmask 7168
  %s339 = scalar_lea.vmem %s1, 32
  %340 = vst.msk [vmem:[%s339] ss:$162 sm:$0x3] %vm338, %v337
  %s341 = scalar_lea.vmem %s1, 4294967040
  %342 = vst.msk [vmem:[%s341] ss:$162 sm:$0xc] %vm338, %v337
  %s343 = scalar_lea.vmem %s1, 4294966752
  %344 = vst.msk [vmem:[%s343] ss:$162 sm:$0x30] %vm338, %v337
  %s345 = scalar_lea.vmem %s1, 896
  %346 = vst.msk [vmem:[%s345] ss:$-126 sm:$0xc0] %vm338, %v337
  %s347 = scalar_lea.vmem %s0, 2
  %v348 = vld.sshfl [vmem:[%s347] sm:$0xff pattern:$0x6d4b2907]
  %349 = vrot.lane.b32.xlu0 %v348, 114
  %v350 = vpop.permute.xlu0 %349
  %vm351 = vcmask 7168
  %s352 = scalar_lea.vmem %s1, 176
  %353 = vst.msk [vmem:[%s352] ss:$-126 sm:$0x3] %vm351, %v350
  %s354 = scalar_lea.vmem %s1, 464
  %355 = vst.msk [vmem:[%s354] ss:$-126 sm:$0xc] %vm351, %v350
  %s356 = scalar_lea.vmem %s1, 752
  %357 = vst.msk [vmem:[%s356] ss:$-126 sm:$0x30] %vm351, %v350
  %s358 = scalar_lea.vmem %s1, 1040
  %359 = vst.msk [vmem:[%s358] ss:$-126 sm:$0xc0] %vm351, %v350
  %v360 = vld.sshfl [vmem:[%s0] sm:$0xff pattern:$0x7e5c3a1]
  %361 = vrot.lane.b32.xlu0 %v360, 113
  %v362 = vpop.permute.xlu0 %361
  %vm363 = vcmask 7168
  %s364 = scalar_lea.vmem %s1, 33
  %365 = vst.msk [vmem:[%s364] ss:$162 sm:$0x3] %vm363, %v362
  %s366 = scalar_lea.vmem %s1, 4294967041
  %367 = vst.msk [vmem:[%s366] ss:$162 sm:$0xc] %vm363, %v362
  %s368 = scalar_lea.vmem %s1, 4294966753
  %369 = vst.msk [vmem:[%s368] ss:$162 sm:$0x30] %vm363, %v362
  %s370 = scalar_lea.vmem %s1, 897
  %371 = vst.msk [vmem:[%s370] ss:$-126 sm:$0xc0] %vm363, %v362
  %s372 = scalar_lea.vmem %s0, 2
  %v373 = vld.sshfl [vmem:[%s372] sm:$0xff pattern:$0x6d4b2907]
  %374 = vrot.lane.b32.xlu0 %v373, 113
  %v375 = vpop.permute.xlu0 %374
  %vm376 = vcmask 7168
  %s377 = scalar_lea.vmem %s1, 177
  %378 = vst.msk [vmem:[%s377] ss:$-126 sm:$0x3] %vm376, %v375
  %s379 = scalar_lea.vmem %s1, 465
  %380 = vst.msk [vmem:[%s379] ss:$-126 sm:$0xc] %vm376, %v375
  %s381 = scalar_lea.vmem %s1, 753
  %382 = vst.msk [vmem:[%s381] ss:$-126 sm:$0x30] %vm376, %v375
  %s383 = scalar_lea.vmem %s1, 1041
  %384 = vst.msk [vmem:[%s383] ss:$-126 sm:$0xc0] %vm376, %v375
  %s385 = scalar_lea.vmem %s0, 1
  %v386 = vld.sshfl [vmem:[%s385] sm:$0xff pattern:$0x6d4b2907]
  %387 = vrot.lane.b32.xlu0 %v386, 112
  %v388 = vpop.permute.xlu0 %387
  %vm389 = vcmask 7168
  %s390 = scalar_lea.vmem %s1, 160
  %391 = vst.msk [vmem:[%s390] ss:$-126 sm:$0x3] %vm389, %v388
  %s392 = scalar_lea.vmem %s1, 448
  %393 = vst.msk [vmem:[%s392] ss:$-126 sm:$0xc] %vm389, %v388
  %s394 = scalar_lea.vmem %s1, 736
  %395 = vst.msk [vmem:[%s394] ss:$-126 sm:$0x30] %vm389, %v388
  %s396 = scalar_lea.vmem %s1, 1024
  %397 = vst.msk [vmem:[%s396] ss:$-126 sm:$0xc0] %vm389, %v388
  %v398 = vld.sshfl [vmem:[%s0] sm:$0xff pattern:$0xf6d4b290]
  %399 = vrot.lane.b32.xlu0 %v398, 112
  %v400 = vpop.permute.xlu0 %399
  %vm401 = vcmask 7168
  %s402 = scalar_lea.vmem %s1, 16
  %403 = vst.msk [vmem:[%s402] ss:$162 sm:$0x3] %vm401, %v400
  %s404 = scalar_lea.vmem %s1, 4294967024
  %405 = vst.msk [vmem:[%s404] ss:$162 sm:$0xc] %vm401, %v400
  %s406 = scalar_lea.vmem %s1, 4294966736
  %407 = vst.msk [vmem:[%s406] ss:$162 sm:$0x30] %vm401, %v400
  %s408 = scalar_lea.vmem %s1, 4294966448
  %409 = vst.msk [vmem:[%s408] ss:$162 sm:$0xc0] %vm401, %v400
  %s410 = scalar_lea.vmem %s0, 1
  %v411 = vld.sshfl [vmem:[%s410] sm:$0xff pattern:$0x6d4b2907]
  %412 = vrot.lane.b32.xlu0 %v411, 111
  %v413 = vpop.permute.xlu0 %412
  %vm414 = vcmask 7168
  %s415 = scalar_lea.vmem %s1, 161
  %416 = vst.msk [vmem:[%s415] ss:$-126 sm:$0x3] %vm414, %v413
  %s417 = scalar_lea.vmem %s1, 449
  %418 = vst.msk [vmem:[%s417] ss:$-126 sm:$0xc] %vm414, %v413
  %s419 = scalar_lea.vmem %s1, 737
  %420 = vst.msk [vmem:[%s419] ss:$-126 sm:$0x30] %vm414, %v413
  %s421 = scalar_lea.vmem %s1, 1025
  %422 = vst.msk [vmem:[%s421] ss:$-126 sm:$0xc0] %vm414, %v413
  %v423 = vld.sshfl [vmem:[%s0] sm:$0xff pattern:$0xf6d4b290]
  %424 = vrot.lane.b32.xlu0 %v423, 111
  %v425 = vpop.permute.xlu0 %424
  %vm426 = vcmask 7168
  %s427 = scalar_lea.vmem %s1, 17
  %428 = vst.msk [vmem:[%s427] ss:$162 sm:$0x3] %vm426, %v425
  %s429 = scalar_lea.vmem %s1, 4294967025
  %430 = vst.msk [vmem:[%s429] ss:$162 sm:$0xc] %vm426, %v425
  %s431 = scalar_lea.vmem %s1, 4294966737
  %432 = vst.msk [vmem:[%s431] ss:$162 sm:$0x30] %vm426, %v425
  %s433 = scalar_lea.vmem %s1, 4294966449
  %434 = vst.msk [vmem:[%s433] ss:$162 sm:$0xc0] %vm426, %v425

// kernel: basic_block_forward.1
$region0: #{basic_block_forward.1}
  #allocation0 [shape = 'u32[]', space=smem, size = 0x4, offset = 0x4, fixed_abs, tag = 'smem constant byte address 0x4 - core index']
  #allocation1 [shape = 'u32[144,128]{1,0:T(1,128)}', space=vmem, size = 0x12000, scoped, tag = 'internal scratch']
  #allocation2 [shape = 'f32[342,128]{1,0:T(8,128)}', space=vmem, size = 0x2b000, scoped, tag = 'scratch operand']
  %s0 = inlined_call_operand.vmem [shape: f32[2,342,128], index: 0, kind: input, shape index: {}]
  %s1 = inlined_call_operand.vmem [shape: f32[1152,128], index: 1, kind: input, shape index: {}]
  %s2 = inlined_call_operand.vmem [shape: f32[1152,128], index: 2, kind: input, shape index: {}]
  %s3 = inlined_call_operand.vmem [shape: f32[1,128], index: 3, kind: input, shape index: {}]
  %s4 = inlined_call_operand.vmem [shape: f32[1,128], index: 4, kind: input, shape index: {}]
  %s5 = inlined_call_operand.vmem [shape: f32[1,128], index: 5, kind: input, shape index: {}]
  %s6 = inlined_call_operand.vmem [shape: f32[1,128], index: 6, kind: input, shape index: {}]
  %s7 = inlined_call_operand.vmem [shape: f32[288,1], index: 7, kind: input, shape index: {}]
  %s8 = inlined_call_operand.vmem [shape: f32[2,288,128], index: 8, kind: output, shape index: {}]
  %s9 = sld [smem:[#allocation0]]
  $region65: #{basic_block_forward.1} parent=0
    _
  %s11 = ssub.s32 1, %s9
  %s12 = scalar_select 0, %s11, %s9
  loop: start=0, step=1, limit=4
  $region2: #{basic_block_forward.1} parent=0 // loop_pre_header
    _
  $region3: #{basic_block_forward.1} parent=0 // loop_header
    %s14 = sphi 0, %s18
    %p15 = scmp.ge.s32.totalorder %s14, 4
    %s24 = sphi 0, %s26
    %s27 = sphi 0, %s24
    %s28 = sphi 0, %s27
    %s44 = sphi 0, %s28
    %s48 = sphi 0, %s48
    %s50 = sphi 0, %s48
    %s51 = sphi 0, %s50
    %s65 = sphi 0, %s51
    %s69 = sphi 0, %s69
    %s71 = sphi 0, %s69
    %s72 = sphi 0, %s71
    %s86 = sphi 0, %s72
    %s90 = sphi 0, %s90
    %s92 = sphi 0, %s90
    %s93 = sphi 0, %s92
    %s107 = sphi 0, %s93
    %s111 = sphi 0, %s111
    %s113 = sphi 0, %s111
    %s114 = sphi 0, %s113
    %s128 = sphi 0, %s114
    %s132 = sphi 0, %s132
    %s134 = sphi 0, %s132
    %s135 = sphi 0, %s134
    %s149 = sphi 0, %s135
    %s153 = sphi 0, %s153
    %s155 = sphi 0, %s153
    %s156 = sphi 0, %s155
    %s170 = sphi 0, %s156
    %s174 = sphi 0, %s174
    %s176 = sphi 0, %s174
    %s177 = sphi 0, %s176
    %s191 = sphi 0, %s177
    %s197 = sphi 0, %s199
    %s200 = sphi 0, %s197
    %s201 = sphi 0, %s200
    %s217 = sphi 0, %s201
  $region4: #{basic_block_forward.1} parent=0 // loop_header_branch
    %17 = sbr.rel (%p15) target = $region8
  $region5: #{basic_block_forward.1} parent=0 // loop_body
    %s19 = ssub.s32 %s14, 1
    %s20 = ssub.s32 %s14, 2
    %s21 = sadd.s32 %s14, 1
    %s22 = ssub.s32 %s14, %s21
    %p23 = scmp.eq.s32.totalorder %s22, 0
    %s25 = sadd.s32 %s24, 1
    %s26 = scalar_select %p23, %s24, %s25
    %p29 = pneg %p23
    %p30 = scmp.eq.s32.totalorder %s14, 1
    %p31 = por %p29, %p30
    %p32 = scmp.ne.s32.totalorder %s24, %s27
    %p33 = scmp.eq.s32.totalorder %s14, 0
    %p34 = por %p32, %p33
    %p35 = scmp.ne.s32.totalorder %s24, %s27
    %p36 = scmp.eq.s32.totalorder %s19, 1
    %p37 = por %p35, %p36
    %p38 = scmp.ne.s32.totalorder %s27, %s28
    %p39 = scmp.eq.s32.totalorder %s19, 0
    %p40 = por %p38, %p39
    %p41 = scmp.ne.s32.totalorder %s27, %s28
    %p42 = scmp.eq.s32.totalorder %s20, 1
    %p43 = por %p41, %p42
    %p45 = scmp.ne.s32.totalorder %s28, %s44
    %p46 = scmp.eq.s32.totalorder %s20, 0
    %p47 = por %p45, %p46
    %s49 = sadd.s32 %s48, 1
    %p52 = scmp.eq.s32.totalorder %s14, 1
    %p53 = scmp.ne.s32.totalorder %s48, %s50
    %p54 = scmp.eq.s32.totalorder %s14, 0
    %p55 = por %p53, %p54
    %p56 = scmp.ne.s32.totalorder %s48, %s50
    %p57 = scmp.eq.s32.totalorder %s19, 1
    %p58 = por %p56, %p57
    %p59 = scmp.ne.s32.totalorder %s50, %s51
    %p60 = scmp.eq.s32.totalorder %s19, 0
    %p61 = por %p59, %p60
    %p62 = scmp.ne.s32.totalorder %s50, %s51
    %p63 = scmp.eq.s32.totalorder %s20, 1
    %p64 = por %p62, %p63
    %p66 = scmp.ne.s32.totalorder %s51, %s65
    %p67 = scmp.eq.s32.totalorder %s20, 0
    %p68 = por %p66, %p67
    %s70 = sadd.s32 %s69, 1
    %p73 = scmp.eq.s32.totalorder %s14, 1
    %p74 = scmp.ne.s32.totalorder %s69, %s71
    %p75 = scmp.eq.s32.totalorder %s14, 0
    %p76 = por %p74, %p75
    %p77 = scmp.ne.s32.totalorder %s69, %s71
    %p78 = scmp.eq.s32.totalorder %s19, 1
    %p79 = por %p77, %p78
    %p80 = scmp.ne.s32.totalorder %s71, %s72
    %p81 = scmp.eq.s32.totalorder %s19, 0
    %p82 = por %p80, %p81
    %p83 = scmp.ne.s32.totalorder %s71, %s72
    %p84 = scmp.eq.s32.totalorder %s20, 1
    %p85 = por %p83, %p84
    %p87 = scmp.ne.s32.totalorder %s72, %s86
    %p88 = scmp.eq.s32.totalorder %s20, 0
    %p89 = por %p87, %p88
    %s91 = sadd.s32 %s90, 1
    %p94 = scmp.eq.s32.totalorder %s14, 1
    %p95 = scmp.ne.s32.totalorder %s90, %s92
    %p96 = scmp.eq.s32.totalorder %s14, 0
    %p97 = por %p95, %p96
    %p98 = scmp.ne.s32.totalorder %s90, %s92
    %p99 = scmp.eq.s32.totalorder %s19, 1
    %p100 = por %p98, %p99
    %p101 = scmp.ne.s32.totalorder %s92, %s93
    %p102 = scmp.eq.s32.totalorder %s19, 0
    %p103 = por %p101, %p102
    %p104 = scmp.ne.s32.totalorder %s92, %s93
    %p105 = scmp.eq.s32.totalorder %s20, 1
    %p106 = por %p104, %p105
    %p108 = scmp.ne.s32.totalorder %s93, %s107
    %p109 = scmp.eq.s32.totalorder %s20, 0
    %p110 = por %p108, %p109
    %s112 = sadd.s32 %s111, 1
    %p115 = scmp.eq.s32.totalorder %s14, 1
    %p116 = scmp.ne.s32.totalorder %s111, %s113
    %p117 = scmp.eq.s32.totalorder %s14, 0
    %p118 = por %p116, %p117
    %p119 = scmp.ne.s32.totalorder %s111, %s113
    %p120 = scmp.eq.s32.totalorder %s19, 1
    %p121 = por %p119, %p120
    %p122 = scmp.ne.s32.totalorder %s113, %s114
    %p123 = scmp.eq.s32.totalorder %s19, 0
    %p124 = por %p122, %p123
    %p125 = scmp.ne.s32.totalorder %s113, %s114
    %p126 = scmp.eq.s32.totalorder %s20, 1
    %p127 = por %p125, %p126
    %p129 = scmp.ne.s32.totalorder %s114, %s128
    %p130 = scmp.eq.s32.totalorder %s20, 0
    %p131 = por %p129, %p130
    %s133 = sadd.s32 %s132, 1
    %p136 = scmp.eq.s32.totalorder %s14, 1
    %p137 = scmp.ne.s32.totalorder %s132, %s134
    %p138 = scmp.eq.s32.totalorder %s14, 0
    %p139 = por %p137, %p138
    %p140 = scmp.ne.s32.totalorder %s132, %s134
    %p141 = scmp.eq.s32.totalorder %s19, 1
    %p142 = por %p140, %p141
    %p143 = scmp.ne.s32.totalorder %s134, %s135
    %p144 = scmp.eq.s32.totalorder %s19, 0
    %p145 = por %p143, %p144
    %p146 = scmp.ne.s32.totalorder %s134, %s135
    %p147 = scmp.eq.s32.totalorder %s20, 1
    %p148 = por %p146, %p147
    %p150 = scmp.ne.s32.totalorder %s135, %s149
    %p151 = scmp.eq.s32.totalorder %s20, 0
    %p152 = por %p150, %p151
    %s154 = sadd.s32 %s153, 1
    %p157 = scmp.eq.s32.totalorder %s14, 1
    %p158 = scmp.ne.s32.totalorder %s153, %s155
    %p159 = scmp.eq.s32.totalorder %s14, 0
    %p160 = por %p158, %p159
    %p161 = scmp.ne.s32.totalorder %s153, %s155
    %p162 = scmp.eq.s32.totalorder %s19, 1
    %p163 = por %p161, %p162
    %p164 = scmp.ne.s32.totalorder %s155, %s156
    %p165 = scmp.eq.s32.totalorder %s19, 0
    %p166 = por %p164, %p165
    %p167 = scmp.ne.s32.totalorder %s155, %s156
    %p168 = scmp.eq.s32.totalorder %s20, 1
    %p169 = por %p167, %p168
    %p171 = scmp.ne.s32.totalorder %s156, %s170
    %p172 = scmp.eq.s32.totalorder %s20, 0
    %p173 = por %p171, %p172
    %s175 = sadd.s32 %s174, 1
    %p178 = scmp.eq.s32.totalorder %s14, 1
    %p179 = scmp.ne.s32.totalorder %s174, %s176
    %p180 = scmp.eq.s32.totalorder %s14, 0
    %p181 = por %p179, %p180
    %p182 = scmp.ne.s32.totalorder %s174, %s176
    %p183 = scmp.eq.s32.totalorder %s19, 1
    %p184 = por %p182, %p183
    %p185 = scmp.ne.s32.totalorder %s176, %s177
    %p186 = scmp.eq.s32.totalorder %s19, 0
    %p187 = por %p185, %p186
    %p188 = scmp.ne.s32.totalorder %s176, %s177
    %p189 = scmp.eq.s32.totalorder %s20, 1
    %p190 = por %p188, %p189
    %p192 = scmp.ne.s32.totalorder %s177, %s191
    %p193 = scmp.eq.s32.totalorder %s20, 0
    %p194 = por %p192, %p193
    %s195 = ssub.s32 %s14, %s21
    %p196 = scmp.eq.s32.totalorder %s195, 0
    %s198 = sadd.s32 %s197, 1
    %s199 = scalar_select %p196, %s197, %s198
    %p202 = pneg %p196
    %p203 = scmp.eq.s32.totalorder %s14, 1
    %p204 = por %p202, %p203
    %p205 = scmp.ne.s32.totalorder %s197, %s200
    %p206 = scmp.eq.s32.totalorder %s14, 0
    %p207 = por %p205, %p206
    %p208 = scmp.ne.s32.totalorder %s197, %s200
    %p209 = scmp.eq.s32.totalorder %s19, 1
    %p210 = por %p208, %p209
    %p211 = scmp.ne.s32.totalorder %s200, %s201
    %p212 = scmp.eq.s32.totalorder %s19, 0
    %p213 = por %p211, %p212
    %p214 = scmp.ne.s32.totalorder %s200, %s201
    %p215 = scmp.eq.s32.totalorder %s20, 1
    %p216 = por %p214, %p215
    %p218 = scmp.ne.s32.totalorder %s201, %s217
    %p219 = scmp.eq.s32.totalorder %s20, 0
    %p220 = por %p218, %p219
    %p221 = scmp.le.s32.totalorder 1, %s14
    %p222 = scmp.lt.s32.totalorder %s14, 3
    %p223 = pnand %p221, %p222
    %p224 = pneg %p223
    // Predicated region
    $region9: #{basic_block_forward.1} parent=5 // pred_check
      _
    $region10: #{basic_block_forward.1} parent=5 // pred_check_branch
      %226 = sbr.rel (%p223) target = $region12
    $region11: #{basic_block_forward.1} parent=5 // pred_region
      %s227 = ssub.s32 %s14, 1
      // Predicated region
      $region13: #{basic_block_forward.1} parent=11 // pred_check
        %p228 = pneg %p61
      $region14: #{basic_block_forward.1} parent=11 // pred_check_branch
        %230 = sbr.rel (%p228) target = $region16
      $region15: #{basic_block_forward.1} parent=11 // pred_region
        _
      $region16: #{basic_block_forward.1} parent=11 // pred_fallthru
        _
      // Predicated region
      $region17: #{basic_block_forward.1} parent=11 // pred_check
        %p231 = pneg %p82
      $region18: #{basic_block_forward.1} parent=11 // pred_check_branch
        %233 = sbr.rel (%p231) target = $region20
      $region19: #{basic_block_forward.1} parent=11 // pred_region
        _
      $region20: #{basic_block_forward.1} parent=11 // pred_fallthru
        _
      // Predicated region
      $region21: #{basic_block_forward.1} parent=11 // pred_check
        %p234 = pneg %p103
      $region22: #{basic_block_forward.1} parent=11 // pred_check_branch
        %236 = sbr.rel (%p234) target = $region24
      $region23: #{basic_block_forward.1} parent=11 // pred_region
        _
      $region24: #{basic_block_forward.1} parent=11 // pred_fallthru
        _
      // Predicated region
      $region25: #{basic_block_forward.1} parent=11 // pred_check
        %p237 = pneg %p124
      $region26: #{basic_block_forward.1} parent=11 // pred_check_branch
        %239 = sbr.rel (%p237) target = $region28
      $region27: #{basic_block_forward.1} parent=11 // pred_region
        _
      $region28: #{basic_block_forward.1} parent=11 // pred_fallthru
        _
      // Predicated region
      $region29: #{basic_block_forward.1} parent=11 // pred_check
        %p240 = pneg %p145
      $region30: #{basic_block_forward.1} parent=11 // pred_check_branch
        %242 = sbr.rel (%p240) target = $region32
      $region31: #{basic_block_forward.1} parent=11 // pred_region
        _
      $region32: #{basic_block_forward.1} parent=11 // pred_fallthru
        _
      // Predicated region
      $region33: #{basic_block_forward.1} parent=11 // pred_check
        %p243 = pneg %p166
      $region34: #{basic_block_forward.1} parent=11 // pred_check_branch
        %245 = sbr.rel (%p243) target = $region36
      $region35: #{basic_block_forward.1} parent=11 // pred_region
        _
      $region36: #{basic_block_forward.1} parent=11 // pred_fallthru
        _
      // Predicated region
      $region37: #{basic_block_forward.1} parent=11 // pred_check
        %p246 = pneg %p187
      $region38: #{basic_block_forward.1} parent=11 // pred_check_branch
        %248 = sbr.rel (%p246) target = $region40
      $region39: #{basic_block_forward.1} parent=11 // pred_region
        _
      $region40: #{basic_block_forward.1} parent=11 // pred_fallthru
        _
    $region12: #{basic_block_forward.1} parent=5 // pred_fallthru
      _
    %p249 = scmp.lt.s32.totalorder %s14, 2
    // Predicated region
    $region41: #{basic_block_forward.1} parent=5 // pred_check
      %p250 = pneg %p249
    $region42: #{basic_block_forward.1} parent=5 // pred_check_branch
      %252 = sbr.rel (%p250) target = $region44
    $region43: #{basic_block_forward.1} parent=5 // pred_region
      // Predicated region
      $region45: #{basic_block_forward.1} parent=43 // pred_check
        %p253 = pneg %p34
      $region46: #{basic_block_forward.1} parent=43 // pred_check_branch
        %255 = sbr.rel (%p253) target = $region48
      $region47: #{basic_block_forward.1} parent=43 // pred_region
        %p256 = scmp.lt.s32.totalorder %s14, 1
        %s257 = scalar_select %p256, %s14, 1
        %s258 = smul.addr %s257, 43
        %s259 = smul.addr %s258, 8
        %s260 = scalar_lea.vmem %s0, %s259
      $region48: #{basic_block_forward.1} parent=43 // pred_fallthru
        _
    $region44: #{basic_block_forward.1} parent=5 // pred_fallthru
      _
    %p261 = scmp.le.s32.totalorder 1, %s14
    %p262 = scmp.lt.s32.totalorder %s14, 3
    %p263 = pnand %p261, %p262
    %p264 = pneg %p263
    // Predicated region
    $region49: #{basic_block_forward.1} parent=5 // pred_check
      _
    $region50: #{basic_block_forward.1} parent=5 // pred_check_branch
      %266 = sbr.rel (%p263) target = $region52
    $region51: #{basic_block_forward.1} parent=5 // pred_region
      %s267 = ssub.s32 %s14, 1
      %p268 = scmp.lt.s32.totalorder %s19, 1
      %s269 = scalar_select %p268, %s19, 1
      %s270 = smul.addr %s269, 43
      %s271 = smul.addr %s270, 8
      %s272 = scalar_lea.vmem %s0, %s271
      %p273 = pneg %p40
      %p274 = pneg %p37
      %p275 = pneg %p61
      %p276 = pneg %p58
      %p277 = pneg %p82
      %p278 = pneg %p79
      %p279 = pneg %p103
      %p280 = pneg %p100
      %p281 = pneg %p124
      %p282 = pneg %p121
      %p283 = pneg %p145
      %p284 = pneg %p142
      %p285 = pneg %p166
      %p286 = pneg %p163
      %p287 = pneg %p187
      %p288 = pneg %p184
      %p289 = pneg %p213
      %p290 = pneg %p210
      %p291 = scmp.lt.s32.totalorder %s19, 1
      %s292 = scalar_select %p291, %s19, 1
      %s293 = smul.addr %s292, 36
      %s294 = smul.addr %s293, 8
      %s295 = scalar_lea.vmem %s8, %s294
      %p296 = scmp.lt.s32.totalorder %s19, 1
      %s297 = scalar_select %p296, %s19, 1
      %s298 = smul.addr %s297, 43
      %s299 = smul.addr %s298, 8
      %s300 = scalar_lea.vmem %s0, %s299
      %p301 = scmp.lt.s32.totalorder %s19, 1
      %s302 = scalar_select %p301, %s19, 1
      %s303 = smul.addr %s302, 36
      %s304 = smul.addr %s303, 8
      %s305 = scalar_lea.vmem %s8, %s304
      %306 = vst [vmem:[#allocation2] sm:$0xff] 0.0
      %307 = vst [vmem:[#allocation2 + $0x8] sm:$0xff] 0.0
      %308 = vst [vmem:[#allocation2 + $0x10] sm:$0x7] 0.0
      %309 = vst [vmem:[#allocation2 + $0x133] sm:$0xff] 0.0
      %310 = vst [vmem:[#allocation2 + $0x13b] sm:$0xff] 0.0
      %311 = vst [vmem:[#allocation2 + $0x143] sm:$0xff] 0.0
      %312 = vst [vmem:[#allocation2 + $0x14b] sm:$0xff] 0.0
      %313 = vst [vmem:[#allocation2 + $0x153] sm:$0x7] 0.0
      %v314 = vld [vmem:[%s300] sm:$0xff]
      %v315 = vld [vmem:[%s300 + $0x8] sm:$0xff]
      %v316 = vld [vmem:[%s300 + $0x10] sm:$0xff]
      %v317 = vld [vmem:[%s300 + $0x18] sm:$0xff]
      %v318 = vld [vmem:[%s300 + $0x20] sm:$0xff]
      %v319 = vld [vmem:[%s300 + $0x28] sm:$0xff]
      %v320 = vld [vmem:[%s300 + $0x30] sm:$0xff]
      %v321 = vld [vmem:[%s300 + $0x38] sm:$0xff]
      %v322 = vld [vmem:[%s300 + $0x40] sm:$0xff]
      %v323 = vld [vmem:[%s300 + $0x48] sm:$0xff]
      %v324 = vld [vmem:[%s300 + $0x50] sm:$0xff]
      %v325 = vld [vmem:[%s300 + $0x58] sm:$0xff]
      %v326 = vld [vmem:[%s300 + $0x60] sm:$0xff]
      %v327 = vld [vmem:[%s300 + $0x68] sm:$0xff]
      %v328 = vld [vmem:[%s300 + $0x70] sm:$0xff]
      %v329 = vld [vmem:[%s300 + $0x78] sm:$0xff]
      %v330 = vld [vmem:[%s300 + $0x80] sm:$0xff]
      %v331 = vld [vmem:[%s300 + $0x88] sm:$0xff]
      %v332 = vld [vmem:[%s300 + $0x90] sm:$0xff]
      %v333 = vld [vmem:[%s300 + $0x98] sm:$0xff]
      %v334 = vld [vmem:[%s300 + $0xa0] sm:$0xff]
      %v335 = vld [vmem:[%s300 + $0xa8] sm:$0xff]
      %v336 = vld [vmem:[%s300 + $0xb0] sm:$0xff]
      %v337 = vld [vmem:[%s300 + $0xb8] sm:$0xff]
      %v338 = vld [vmem:[%s300 + $0xc0] sm:$0xff]
      %v339 = vld [vmem:[%s300 + $0xc8] sm:$0xff]
      %v340 = vld [vmem:[%s300 + $0xd0] sm:$0xff]
      %v341 = vld [vmem:[%s300 + $0xd8] sm:$0xff]
      %v342 = vld [vmem:[%s300 + $0xe0] sm:$0xff]
      %v343 = vld [vmem:[%s300 + $0xe8] sm:$0xff]
      %v344 = vld [vmem:[%s300 + $0xf0] sm:$0xff]
      %v345 = vld [vmem:[%s300 + $0xf8] sm:$0xff]
      %v346 = vld [vmem:[%s300 + $0x100] sm:$0xff]
      %v347 = vld [vmem:[%s300 + $0x108] sm:$0xff]
      %v348 = vld [vmem:[%s300 + $0x110] sm:$0xff]
      %v349 = vld [vmem:[%s300 + $0x118] sm:$0xff]
      %v350 = vld [vmem:[%s300 + $0x1] sm:$0xff]
      %v351 = vld [vmem:[%s300 + $0x9] sm:$0xff]
      %v352 = vld [vmem:[%s300 + $0x11] sm:$0xff]
      %v353 = vld [vmem:[%s300 + $0x19] sm:$0xff]
      %v354 = vld [vmem:[%s300 + $0x21] sm:$0xff]
      %v355 = vld [vmem:[%s300 + $0x29] sm:$0xff]
      %v356 = vld [vmem:[%s300 + $0x31] sm:$0xff]
      %v357 = vld [vmem:[%s300 + $0x39] sm:$0xff]
      %v358 = vld [vmem:[%s300 + $0x41] sm:$0xff]
      %v359 = vld [vmem:[%s300 + $0x49] sm:$0xff]
      %v360 = vld [vmem:[%s300 + $0x51] sm:$0xff]
      %v361 = vld [vmem:[%s300 + $0x59] sm:$0xff]
      %v362 = vld [vmem:[%s300 + $0x61] sm:$0xff]
      %v363 = vld [vmem:[%s300 + $0x69] sm:$0xff]
      %v364 = vld [vmem:[%s300 + $0x71] sm:$0xff]
      %v365 = vld [vmem:[%s300 + $0x79] sm:$0xff]
      %v366 = vld [vmem:[%s300 + $0x81] sm:$0xff]
      %v367 = vld [vmem:[%s300 + $0x89] sm:$0xff]
      %v368 = vld [vmem:[%s300 + $0x91] sm:$0xff]
      %v369 = vld [vmem:[%s300 + $0x99] sm:$0xff]
      %v370 = vld [vmem:[%s300 + $0xa1] sm:$0xff]
      %v371 = vld [vmem:[%s300 + $0xa9] sm:$0xff]
      %v372 = vld [vmem:[%s300 + $0xb1] sm:$0xff]
      %v373 = vld [vmem:[%s300 + $0xb9] sm:$0xff]
      %v374 = vld [vmem:[%s300 + $0xc1] sm:$0xff]
      %v375 = vld [vmem:[%s300 + $0xc9] sm:$0xff]
      %v376 = vld [vmem:[%s300 + $0xd1] sm:$0xff]
      %v377 = vld [vmem:[%s300 + $0xd9] sm:$0xff]
      %v378 = vld [vmem:[%s300 + $0xe1] sm:$0xff]
      %v379 = vld [vmem:[%s300 + $0xe9] sm:$0xff]
      %v380 = vld [vmem:[%s300 + $0xf1] sm:$0xff]
      %v381 = vld [vmem:[%s300 + $0xf9] sm:$0xff]
      %v382 = vld [vmem:[%s300 + $0x101] sm:$0xff]
      %v383 = vld [vmem:[%s300 + $0x109] sm:$0xff]
      %v384 = vld [vmem:[%s300 + $0x111] sm:$0xff]
      %v385 = vld [vmem:[%s300 + $0x119] sm:$0xff]
      %v386 = vld [vmem:[%s300 + $0x2] sm:$0xff]
      %v387 = vld [vmem:[%s300 + $0xa] sm:$0xff]
      %v388 = vld [vmem:[%s300 + $0x12] sm:$0xff]
      %v389 = vld [vmem:[%s300 + $0x1a] sm:$0xff]
      %v390 = vld [vmem:[%s300 + $0x22] sm:$0xff]
      %v391 = vld [vmem:[%s300 + $0x2a] sm:$0xff]
      %v392 = vld [vmem:[%s300 + $0x32] sm:$0xff]
      %v393 = vld [vmem:[%s300 + $0x3a] sm:$0xff]
      %v394 = vld [vmem:[%s300 + $0x42] sm:$0xff]
      %v395 = vld [vmem:[%s300 + $0x4a] sm:$0xff]
      %v396 = vld [vmem:[%s300 + $0x52] sm:$0xff]
      %v397 = vld [vmem:[%s300 + $0x5a] sm:$0xff]
      %v398 = vld [vmem:[%s300 + $0x62] sm:$0xff]
      %v399 = vld [vmem:[%s300 + $0x6a] sm:$0xff]
      %v400 = vld [vmem:[%s300 + $0x72] sm:$0xff]
      %v401 = vld [vmem:[%s300 + $0x7a] sm:$0xff]
      %v402 = vld [vmem:[%s300 + $0x82] sm:$0xff]
      %v403 = vld [vmem:[%s300 + $0x8a] sm:$0xff]
      %v404 = vld [vmem:[%s300 + $0x92] sm:$0xff]
      %v405 = vld [vmem:[%s300 + $0x9a] sm:$0xff]
      %v406 = vld [vmem:[%s300 + $0xa2] sm:$0xff]
      %v407 = vld [vmem:[%s300 + $0xaa] sm:$0xff]
      %v408 = vld [vmem:[%s300 + $0xb2] sm:$0xff]
      %v409 = vld [vmem:[%s300 + $0xba] sm:$0xff]
      %v410 = vld [vmem:[%s300 + $0xc2] sm:$0xff]
      %v411 = vld [vmem:[%s300 + $0xca] sm:$0xff]
      %v412 = vld [vmem:[%s300 + $0xd2] sm:$0xff]
      %v413 = vld [vmem:[%s300 + $0xda] sm:$0xff]
      %v414 = vld [vmem:[%s300 + $0xe2] sm:$0xff]
      %v415 = vld [vmem:[%s300 + $0xea] sm:$0xff]
      %v416 = vld [vmem:[%s300 + $0xf2] sm:$0xff]
      %v417 = vld [vmem:[%s300 + $0xfa] sm:$0xff]
      %v418 = vld [vmem:[%s300 + $0x102] sm:$0xff]
      %v419 = vld [vmem:[%s300 + $0x10a] sm:$0xff]
      %v420 = vld [vmem:[%s300 + $0x112] sm:$0xff]
      %v421 = vld [vmem:[%s300 + $0x11a] sm:$0xff]
      %v422 = vld [vmem:[%s300 + $0x122] sm:$0xff]
      %v423 = vld [vmem:[%s300 + $0x12a] sm:$0xff]
      %v424 = vld [vmem:[%s300 + $0x13] sm:$0xff]
      %v425 = vld [vmem:[%s300 + $0x1b] sm:$0xff]
      %v426 = vld [vmem:[%s300 + $0x23] sm:$0xff]
      %v427 = vld [vmem:[%s300 + $0x2b] sm:$0xff]
      %v428 = vld [vmem:[%s300 + $0x33] sm:$0xff]
      %v429 = vld [vmem:[%s300 + $0x3b] sm:$0xff]
      %v430 = vld [vmem:[%s300 + $0x43] sm:$0xff]
      %v431 = vld [vmem:[%s300 + $0x4b] sm:$0xff]
      %v432 = vld [vmem:[%s300 + $0x53] sm:$0xff]
      %v433 = vld [vmem:[%s300 + $0x5b] sm:$0xff]
      %v434 = vld [vmem:[%s300 + $0x63] sm:$0xff]
      %v435 = vld [vmem:[%s300 + $0x6b] sm:$0xff]
      %v436 = vld [vmem:[%s300 + $0x73] sm:$0xff]
      %v437 = vld [vmem:[%s300 + $0x7b] sm:$0xff]
      %v438 = vld [vmem:[%s300 + $0x83] sm:$0xff]
      %v439 = vld [vmem:[%s300 + $0x8b] sm:$0xff]
      %v440 = vld [vmem:[%s300 + $0x93] sm:$0xff]
      %v441 = vld [vmem:[%s300 + $0x9b] sm:$0xff]
      %v442 = vld [vmem:[%s300 + $0xa3] sm:$0xff]
      %v443 = vld [vmem:[%s300 + $0xab] sm:$0xff]
      %v444 = vld [vmem:[%s300 + $0xb3] sm:$0xff]
      %v445 = vld [vmem:[%s300 + $0xbb] sm:$0xff]
      %v446 = vld [vmem:[%s300 + $0xc3] sm:$0xff]
      %v447 = vld [vmem:[%s300 + $0xcb] sm:$0xff]
      %v448 = vld [vmem:[%s300 + $0xd3] sm:$0xff]
      %v449 = vld [vmem:[%s300 + $0xdb] sm:$0xff]
      %v450 = vld [vmem:[%s300 + $0xe3] sm:$0xff]
      %v451 = vld [vmem:[%s300 + $0xeb] sm:$0xff]
      %v452 = vld [vmem:[%s300 + $0xf3] sm:$0xff]
      %v453 = vld [vmem:[%s300 + $0xfb] sm:$0xff]
      %v454 = vld [vmem:[%s300 + $0x103] sm:$0xff]
      %v455 = vld [vmem:[%s300 + $0x10b] sm:$0xff]
      %v456 = vld [vmem:[%s300 + $0x113] sm:$0xff]
      %v457 = vld [vmem:[%s300 + $0x11b] sm:$0xff]
      %v458 = vld [vmem:[%s300 + $0x123] sm:$0xff]
      %v459 = vld [vmem:[%s300 + $0x12b] sm:$0xff]
      %v460 = vld [vmem:[%s300 + $0x14] sm:$0xff]
      %v461 = vld [vmem:[%s300 + $0x1c] sm:$0xff]
      %v462 = vld [vmem:[%s300 + $0x24] sm:$0xff]
      %v463 = vld [vmem:[%s300 + $0x2c] sm:$0xff]
      %v464 = vld [vmem:[%s300 + $0x34] sm:$0xff]
      %v465 = vld [vmem:[%s300 + $0x3c] sm:$0xff]
      %v466 = vld [vmem:[%s300 + $0x44] sm:$0xff]
      %v467 = vld [vmem:[%s300 + $0x4c] sm:$0xff]
      %v468 = vld [vmem:[%s300 + $0x54] sm:$0xff]
      %v469 = vld [vmem:[%s300 + $0x5c] sm:$0xff]
      %v470 = vld [vmem:[%s300 + $0x64] sm:$0xff]
      %v471 = vld [vmem:[%s300 + $0x6c] sm:$0xff]
      %v472 = vld [vmem:[%s300 + $0x74] sm:$0xff]
      %v473 = vld [vmem:[%s300 + $0x7c] sm:$0xff]
      %v474 = vld [vmem:[%s300 + $0x84] sm:$0xff]
      %v475 = vld [vmem:[%s300 + $0x8c] sm:$0xff]
      %v476 = vld [vmem:[%s300 + $0x94] sm:$0xff]
      %v477 = vld [vmem:[%s300 + $0x9c] sm:$0xff]
      %v478 = vld [vmem:[%s300 + $0xa4] sm:$0xff]
      %v479 = vld [vmem:[%s300 + $0xac] sm:$0xff]
      %v480 = vld [vmem:[%s300 + $0xb4] sm:$0xff]
      %v481 = vld [vmem:[%s300 + $0xbc] sm:$0xff]
      %v482 = vld [vmem:[%s300 + $0xc4] sm:$0xff]
      %v483 = vld [vmem:[%s300 + $0xcc] sm:$0xff]
      %v484 = vld [vmem:[%s300 + $0xd4] sm:$0xff]
      %v485 = vld [vmem:[%s300 + $0xdc] sm:$0xff]
      %v486 = vld [vmem:[%s300 + $0xe4] sm:$0xff]
      %v487 = vld [vmem:[%s300 + $0xec] sm:$0xff]
      %v488 = vld [vmem:[%s300 + $0xf4] sm:$0xff]
      %v489 = vld [vmem:[%s300 + $0xfc] sm:$0xff]
      %v490 = vld [vmem:[%s300 + $0x104] sm:$0xff]
      %v491 = vld [vmem:[%s300 + $0x10c] sm:$0xff]
      %v492 = vld [vmem:[%s300 + $0x114] sm:$0xff]
      %v493 = vld [vmem:[%s300 + $0x11c] sm:$0xff]
      %v494 = vld [vmem:[%s300 + $0x124] sm:$0xff]
      %v495 = vld [vmem:[%s300 + $0x12c] sm:$0xff]
      %v496 = vld [vmem:[%s300 + $0x134] sm:$0xff]
      %v497 = vld [vmem:[%s300 + $0x13c] sm:$0xff]
      %v498 = vld [vmem:[%s300 + $0x25] sm:$0xff]
      %v499 = vld [vmem:[%s300 + $0x2d] sm:$0xff]
      %v500 = vld [vmem:[%s300 + $0x35] sm:$0xff]
      %v501 = vld [vmem:[%s300 + $0x3d] sm:$0xff]
      %v502 = vld [vmem:[%s300 + $0x45] sm:$0xff]
      %v503 = vld [vmem:[%s300 + $0x4d] sm:$0xff]
      %v504 = vld [vmem:[%s300 + $0x55] sm:$0xff]
      %v505 = vld [vmem:[%s300 + $0x5d] sm:$0xff]
      %v506 = vld [vmem:[%s300 + $0x65] sm:$0xff]
      %v507 = vld [vmem:[%s300 + $0x6d] sm:$0xff]
      %v508 = vld [vmem:[%s300 + $0x75] sm:$0xff]
      %v509 = vld [vmem:[%s300 + $0x7d] sm:$0xff]
      %v510 = vld [vmem:[%s300 + $0x85] sm:$0xff]
      %v511 = vld [vmem:[%s300 + $0x8d] sm:$0xff]
      %v512 = vld [vmem:[%s300 + $0x95] sm:$0xff]
      %v513 = vld [vmem:[%s300 + $0x9d] sm:$0xff]
      %v514 = vld [vmem:[%s300 + $0xa5] sm:$0xff]
      %v515 = vld [vmem:[%s300 + $0xad] sm:$0xff]
      %v516 = vld [vmem:[%s300 + $0xb5] sm:$0xff]
      %v517 = vld [vmem:[%s300 + $0xbd] sm:$0xff]
      %v518 = vld [vmem:[%s300 + $0xc5] sm:$0xff]
      %v519 = vld [vmem:[%s300 + $0xcd] sm:$0xff]
      %v520 = vld [vmem:[%s300 + $0xd5] sm:$0xff]
      %v521 = vld [vmem:[%s300 + $0xdd] sm:$0xff]
      %v522 = vld [vmem:[%s300 + $0xe5] sm:$0xff]
      %v523 = vld [vmem:[%s300 + $0xed] sm:$0xff]
      %v524 = vld [vmem:[%s300 + $0xf5] sm:$0xff]
      %v525 = vld [vmem:[%s300 + $0xfd] sm:$0xff]
      %v526 = vld [vmem:[%s300 + $0x105] sm:$0xff]
      %v527 = vld [vmem:[%s300 + $0x10d] sm:$0xff]
      %v528 = vld [vmem:[%s300 + $0x115] sm:$0xff]
      %v529 = vld [vmem:[%s300 + $0x11d] sm:$0xff]
      %v530 = vld [vmem:[%s300 + $0x125] sm:$0xff]
      %v531 = vld [vmem:[%s300 + $0x12d] sm:$0xff]
      %v532 = vld [vmem:[%s300 + $0x135] sm:$0xff]
      %v533 = vld [vmem:[%s300 + $0x13d] sm:$0xff]
      %v534 = vld [vmem:[%s300 + $0x26] sm:$0xff]
      %v535 = vld [vmem:[%s300 + $0x2e] sm:$0xff]
      %v536 = vld [vmem:[%s300 + $0x36] sm:$0xff]
      %v537 = vld [vmem:[%s300 + $0x3e] sm:$0xff]
      %v538 = vld [vmem:[%s300 + $0x46] sm:$0xff]
      %v539 = vld [vmem:[%s300 + $0x4e] sm:$0xff]
      %v540 = vld [vmem:[%s300 + $0x56] sm:$0xff]
      %v541 = vld [vmem:[%s300 + $0x5e] sm:$0xff]
      %v542 = vld [vmem:[%s300 + $0x66] sm:$0xff]
      %v543 = vld [vmem:[%s300 + $0x6e] sm:$0xff]
      %v544 = vld [vmem:[%s300 + $0x76] sm:$0xff]
      %v545 = vld [vmem:[%s300 + $0x7e] sm:$0xff]
      %v546 = vld [vmem:[%s300 + $0x86] sm:$0xff]
      %v547 = vld [vmem:[%s300 + $0x8e] sm:$0xff]
      %v548 = vld [vmem:[%s300 + $0x96] sm:$0xff]
      %v549 = vld [vmem:[%s300 + $0x9e] sm:$0xff]
      %v550 = vld [vmem:[%s300 + $0xa6] sm:$0xff]
      %v551 = vld [vmem:[%s300 + $0xae] sm:$0xff]
      %v552 = vld [vmem:[%s300 + $0xb6] sm:$0xff]
      %v553 = vld [vmem:[%s300 + $0xbe] sm:$0xff]
      %v554 = vld [vmem:[%s300 + $0xc6] sm:$0xff]
      %v555 = vld [vmem:[%s300 + $0xce] sm:$0xff]
      %v556 = vld [vmem:[%s300 + $0xd6] sm:$0xff]
      %v557 = vld [vmem:[%s300 + $0xde] sm:$0xff]
      %v558 = vld [vmem:[%s300 + $0xe6] sm:$0xff]
      %v559 = vld [vmem:[%s300 + $0xee] sm:$0xff]
      %v560 = vld [vmem:[%s300 + $0xf6] sm:$0xff]
      %v561 = vld [vmem:[%s300 + $0xfe] sm:$0xff]
      %v562 = vld [vmem:[%s300 + $0x106] sm:$0xff]
      %v563 = vld [vmem:[%s300 + $0x10e] sm:$0xff]
      %v564 = vld [vmem:[%s300 + $0x116] sm:$0xff]
      %v565 = vld [vmem:[%s300 + $0x11e] sm:$0xff]
      %v566 = vld [vmem:[%s300 + $0x126] sm:$0xff]
      %v567 = vld [vmem:[%s300 + $0x12e] sm:$0xff]
      %v568 = vld [vmem:[%s300 + $0x136] sm:$0xff]
      %v569 = vld [vmem:[%s300 + $0x13e] sm:$0xff]
      %v570 = vld [vmem:[%s1] sm:$0xff]
      %v571 = vld [vmem:[%s1 + $0x8] sm:$0xff]
      %v572 = vld [vmem:[%s1 + $0x10] sm:$0xff]
      %v573 = vld [vmem:[%s1 + $0x18] sm:$0xff]
      %v574 = vld [vmem:[%s1 + $0x20] sm:$0xff]
      %v575 = vld [vmem:[%s1 + $0x28] sm:$0xff]
      %v576 = vld [vmem:[%s1 + $0x30] sm:$0xff]
      %v577 = vld [vmem:[%s1 + $0x38] sm:$0xff]
      %v578 = vld [vmem:[%s1 + $0x40] sm:$0xff]
      %v579 = vld [vmem:[%s1 + $0x48] sm:$0xff]
      %v580 = vld [vmem:[%s1 + $0x50] sm:$0xff]
      %v581 = vld [vmem:[%s1 + $0x58] sm:$0xff]
      %v582 = vld [vmem:[%s1 + $0x60] sm:$0xff]
      %v583 = vld [vmem:[%s1 + $0x68] sm:$0xff]
      %v584 = vld [vmem:[%s1 + $0x70] sm:$0xff]
      %v585 = vld [vmem:[%s1 + $0x78] sm:$0xff]
      %v586 = vld [vmem:[%s1 + $0x80] sm:$0xff]
      %v587 = vld [vmem:[%s1 + $0x88] sm:$0xff]
      %v588 = vld [vmem:[%s1 + $0x90] sm:$0xff]
      %v589 = vld [vmem:[%s1 + $0x98] sm:$0xff]
      %v590 = vld [vmem:[%s1 + $0xa0] sm:$0xff]
      %v591 = vld [vmem:[%s1 + $0xa8] sm:$0xff]
      %v592 = vld [vmem:[%s1 + $0xb0] sm:$0xff]
      %v593 = vld [vmem:[%s1 + $0xb8] sm:$0xff]
      %v594 = vld [vmem:[%s1 + $0xc0] sm:$0xff]
      %v595 = vld [vmem:[%s1 + $0xc8] sm:$0xff]
      %v596 = vld [vmem:[%s1 + $0xd0] sm:$0xff]
      %v597 = vld [vmem:[%s1 + $0xd8] sm:$0xff]
      %v598 = vld [vmem:[%s1 + $0xe0] sm:$0xff]
      %v599 = vld [vmem:[%s1 + $0xe8] sm:$0xff]
      %v600 = vld [vmem:[%s1 + $0xf0] sm:$0xff]
      %v601 = vld [vmem:[%s1 + $0xf8] sm:$0xff]
      %v602 = vld [vmem:[%s1 + $0x100] sm:$0xff]
      %v603 = vld [vmem:[%s1 + $0x108] sm:$0xff]
      %v604 = vld [vmem:[%s1 + $0x110] sm:$0xff]
      %v605 = vld [vmem:[%s1 + $0x118] sm:$0xff]
      %v606 = vld [vmem:[%s1 + $0x120] sm:$0xff]
      %v607 = vld [vmem:[%s1 + $0x128] sm:$0xff]
      %v608 = vld [vmem:[%s1 + $0x130] sm:$0xff]
      %v609 = vld [vmem:[%s1 + $0x138] sm:$0xff]
      %v610 = vld [vmem:[%s1 + $0x140] sm:$0xff]
      %v611 = vld [vmem:[%s1 + $0x148] sm:$0xff]
      %v612 = vld [vmem:[%s1 + $0x150] sm:$0xff]
      %v613 = vld [vmem:[%s1 + $0x158] sm:$0xff]
      %v614 = vld [vmem:[%s1 + $0x160] sm:$0xff]
      %v615 = vld [vmem:[%s1 + $0x168] sm:$0xff]
      %v616 = vld [vmem:[%s1 + $0x170] sm:$0xff]
      %v617 = vld [vmem:[%s1 + $0x178] sm:$0xff]
      %v618 = vld [vmem:[%s1 + $0x180] sm:$0xff]
      %v619 = vld [vmem:[%s1 + $0x188] sm:$0xff]
      %v620 = vld [vmem:[%s1 + $0x190] sm:$0xff]
      %v621 = vld [vmem:[%s1 + $0x198] sm:$0xff]
      %v622 = vld [vmem:[%s1 + $0x1a0] sm:$0xff]
      %v623 = vld [vmem:[%s1 + $0x1a8] sm:$0xff]
      %v624 = vld [vmem:[%s1 + $0x1b0] sm:$0xff]
      %v625 = vld [vmem:[%s1 + $0x1b8] sm:$0xff]
      %v626 = vld [vmem:[%s1 + $0x1c0] sm:$0xff]
      %v627 = vld [vmem:[%s1 + $0x1c8] sm:$0xff]
      %v628 = vld [vmem:[%s1 + $0x1d0] sm:$0xff]
      %v629 = vld [vmem:[%s1 + $0x1d8] sm:$0xff]
      %v630 = vld [vmem:[%s1 + $0x1e0] sm:$0xff]
      %v631 = vld [vmem:[%s1 + $0x1e8] sm:$0xff]
      %v632 = vld [vmem:[%s1 + $0x1f0] sm:$0xff]
      %v633 = vld [vmem:[%s1 + $0x1f8] sm:$0xff]
      %v634 = vld [vmem:[%s1 + $0x200] sm:$0xff]
      %v635 = vld [vmem:[%s1 + $0x208] sm:$0xff]
      %v636 = vld [vmem:[%s1 + $0x210] sm:$0xff]
      %v637 = vld [vmem:[%s1 + $0x218] sm:$0xff]
      %v638 = vld [vmem:[%s1 + $0x220] sm:$0xff]
      %v639 = vld [vmem:[%s1 + $0x228] sm:$0xff]
      %v640 = vld [vmem:[%s1 + $0x230] sm:$0xff]
      %v641 = vld [vmem:[%s1 + $0x238] sm:$0xff]
      %v642 = vld [vmem:[%s1 + $0x240] sm:$0xff]
      %v643 = vld [vmem:[%s1 + $0x248] sm:$0xff]
      %v644 = vld [vmem:[%s1 + $0x250] sm:$0xff]
      %v645 = vld [vmem:[%s1 + $0x258] sm:$0xff]
      %v646 = vld [vmem:[%s1 + $0x260] sm:$0xff]
      %v647 = vld [vmem:[%s1 + $0x268] sm:$0xff]
      %v648 = vld [vmem:[%s1 + $0x270] sm:$0xff]
      %v649 = vld [vmem:[%s1 + $0x278] sm:$0xff]
      %v650 = vld [vmem:[%s1 + $0x280] sm:$0xff]
      %v651 = vld [vmem:[%s1 + $0x288] sm:$0xff]
      %v652 = vld [vmem:[%s1 + $0x290] sm:$0xff]
      %v653 = vld [vmem:[%s1 + $0x298] sm:$0xff]
      %v654 = vld [vmem:[%s1 + $0x2a0] sm:$0xff]
      %v655 = vld [vmem:[%s1 + $0x2a8] sm:$0xff]
      %v656 = vld [vmem:[%s1 + $0x2b0] sm:$0xff]
      %v657 = vld [vmem:[%s1 + $0x2b8] sm:$0xff]
      %v658 = vld [vmem:[%s1 + $0x2c0] sm:$0xff]
      %v659 = vld [vmem:[%s1 + $0x2c8] sm:$0xff]
      %v660 = vld [vmem:[%s1 + $0x2d0] sm:$0xff]
      %v661 = vld [vmem:[%s1 + $0x2d8] sm:$0xff]
      %v662 = vld [vmem:[%s1 + $0x2e0] sm:$0xff]
      %v663 = vld [vmem:[%s1 + $0x2e8] sm:$0xff]
      %v664 = vld [vmem:[%s1 + $0x2f0] sm:$0xff]
      %v665 = vld [vmem:[%s1 + $0x2f8] sm:$0xff]
      %v666 = vld [vmem:[%s1 + $0x300] sm:$0xff]
      %v667 = vld [vmem:[%s1 + $0x308] sm:$0xff]
      %v668 = vld [vmem:[%s1 + $0x310] sm:$0xff]
      %v669 = vld [vmem:[%s1 + $0x318] sm:$0xff]
      %v670 = vld [vmem:[%s1 + $0x320] sm:$0xff]
      %v671 = vld [vmem:[%s1 + $0x328] sm:$0xff]
      %v672 = vld [vmem:[%s1 + $0x330] sm:$0xff]
      %v673 = vld [vmem:[%s1 + $0x338] sm:$0xff]
      %v674 = vld [vmem:[%s1 + $0x340] sm:$0xff]
      %v675 = vld [vmem:[%s1 + $0x348] sm:$0xff]
      %v676 = vld [vmem:[%s1 + $0x350] sm:$0xff]
      %v677 = vld [vmem:[%s1 + $0x358] sm:$0xff]
      %v678 = vld [vmem:[%s1 + $0x360] sm:$0xff]
      %v679 = vld [vmem:[%s1 + $0x368] sm:$0xff]
      %v680 = vld [vmem:[%s1 + $0x370] sm:$0xff]
      %v681 = vld [vmem:[%s1 + $0x378] sm:$0xff]
      %v682 = vld [vmem:[%s1 + $0x380] sm:$0xff]
      %v683 = vld [vmem:[%s1 + $0x388] sm:$0xff]
      %v684 = vld [vmem:[%s1 + $0x390] sm:$0xff]
      %v685 = vld [vmem:[%s1 + $0x398] sm:$0xff]
      %v686 = vld [vmem:[%s1 + $0x3a0] sm:$0xff]
      %v687 = vld [vmem:[%s1 + $0x3a8] sm:$0xff]
      %v688 = vld [vmem:[%s1 + $0x3b0] sm:$0xff]
      %v689 = vld [vmem:[%s1 + $0x3b8] sm:$0xff]
      %v690 = vld [vmem:[%s1 + $0x3c0] sm:$0xff]
      %v691 = vld [vmem:[%s1 + $0x3c8] sm:$0xff]
      %v692 = vld [vmem:[%s1 + $0x3d0] sm:$0xff]
      %v693 = vld [vmem:[%s1 + $0x3d8] sm:$0xff]
      %v694 = vld [vmem:[%s1 + $0x3e0] sm:$0xff]
      %v695 = vld [vmem:[%s1 + $0x3e8] sm:$0xff]
      %v696 = vld [vmem:[%s1 + $0x3f0] sm:$0xff]
      %v697 = vld [vmem:[%s1 + $0x3f8] sm:$0xff]
      %v698 = vld [vmem:[%s1 + $0x400] sm:$0xff]
      %v699 = vld [vmem:[%s1 + $0x408] sm:$0xff]
      %v700 = vld [vmem:[%s1 + $0x410] sm:$0xff]
      %v701 = vld [vmem:[%s1 + $0x418] sm:$0xff]
      %v702 = vld [vmem:[%s1 + $0x420] sm:$0xff]
      %v703 = vld [vmem:[%s1 + $0x428] sm:$0xff]
      %v704 = vld [vmem:[%s1 + $0x430] sm:$0xff]
      %v705 = vld [vmem:[%s1 + $0x438] sm:$0xff]
      %v706 = vld [vmem:[%s1 + $0x440] sm:$0xff]
      %v707 = vld [vmem:[%s1 + $0x448] sm:$0xff]
      %v708 = vld [vmem:[%s1 + $0x450] sm:$0xff]
      %v709 = vld [vmem:[%s1 + $0x458] sm:$0xff]
      %v710 = vld [vmem:[%s1 + $0x460] sm:$0xff]
      %v711 = vld [vmem:[%s1 + $0x468] sm:$0xff]
      %v712 = vld [vmem:[%s1 + $0x470] sm:$0xff]
      %v713 = vld [vmem:[%s1 + $0x478] sm:$0xff]
      %714 = vmatprep.subr.mxu0 0.0
      %715 = vmatpush1.msra.mxu0 %v570
      %716 = vmatprep.subr.mxu0 0.0
      %717 = vmatpush1.msra.mxu0 %v571
      %718 = vmatprep.subr.mxu0 0.0
      %719 = vmatpush1.msra.mxu0 %v572
      %720 = vmatprep.subr.mxu0 0.0
      %721 = vmatpush1.msra.mxu0 %v573
      %722 = vmatprep.subr.mxu0 0.0
      %723 = vmatpush1.msra.mxu0 %v574
      %724 = vmatprep.subr.mxu0 0.0
      %725 = vmatpush1.msra.mxu0 %v575
      %726 = vmatprep.subr.mxu0 0.0
      %727 = vmatpush1.msra.mxu0 %v576
      %728 = vmatprep.subr.mxu0 0.0
      %729 = vmatpush1.msra.mxu0 %v577
      %730 = vmatprep.subr.mxu0 0.0
      %731 = vmatpush1.msra.mxu0 %v578
      %732 = vmatprep.subr.mxu0 0.0
      %733 = vmatpush1.msra.mxu0 %v579
      %734 = vmatprep.subr.mxu0 0.0
      %735 = vmatpush1.msra.mxu0 %v580
      %736 = vmatprep.subr.mxu0 0.0
      %737 = vmatpush1.msra.mxu0 %v581
      %738 = vmatprep.subr.mxu0 0.0
      %739 = vmatpush1.msra.mxu0 %v582
      %740 = vmatprep.subr.mxu0 0.0
      %741 = vmatpush1.msra.mxu0 %v583
      %742 = vmatprep.subr.mxu0 0.0
      %743 = vmatpush1.msra.mxu0 %v584
      %744 = vmatprep.subr.mxu0 0.0
      %745 = vmatpush1.msra.mxu0 %v585
      %746 = vmatprep.subr.mxu0 0.0
      %747 = vmatpush1.msra.mxu0 %v586
      %748 = vmatprep.subr.mxu0 0.0
      %749 = vmatpush1.msra.mxu0 %v587
      %750 = vmatprep.subr.mxu0 0.0
      %751 = vmatpush1.msra.mxu0 %v588
      %752 = vmatprep.subr.mxu0 0.0
      %753 = vmatpush1.msra.mxu0 %v589
      %754 = vmatprep.subr.mxu0 0.0
      %755 = vmatpush1.msra.mxu0 %v590
      %756 = vmatprep.subr.mxu0 0.0
      %757 = vmatpush1.msra.mxu0 %v591
      %758 = vmatprep.subr.mxu0 0.0
      %759 = vmatpush1.msra.mxu0 %v592
      %760 = vmatprep.subr.mxu0 0.0
      %761 = vmatpush1.msra.mxu0 %v593
      %762 = vmatprep.subr.mxu0 0.0
      %763 = vmatpush1.msra.mxu0 %v594
      %764 = vmatprep.subr.mxu0 0.0
      %765 = vmatpush1.msra.mxu0 %v595
      %766 = vmatprep.subr.mxu0 0.0
      %767 = vmatpush1.msra.mxu0 %v596
      %768 = vmatprep.subr.mxu0 0.0
      %769 = vmatpush1.msra.mxu0 %v597
      %770 = vmatprep.subr.mxu0 0.0
      %771 = vmatpush1.msra.mxu0 %v598
      %772 = vmatprep.subr.mxu0 0.0
      %773 = vmatpush1.msra.mxu0 %v599
      %774 = vmatprep.subr.mxu0 0.0
      %775 = vmatpush1.msra.mxu0 %v600
      %776 = vmatprep.subr.mxu0 0.0
      %777 = vmatpush1.msra.mxu0 %v601
      %778 = vmatprep.mubr.f32.mxu0 %v350
      %779 = vmatmul.mubr.f32.gmra.mrb[0].mxu0 %v314
      %v780 = vpop.f32.mrb[0].mxu0
      %v781 = vadd.f32 0.0, %v780
      %v782 = vpop.f32.mrb[0].mxu0
      %783 = vmatprep.mubr.f32.mxu0 %v351
      %784 = vmatmul.mubr.f32.gmra.mrb[0].mxu0 %v315
      %v785 = vpop.f32.mrb[0].mxu0
      %v786 = vadd.f32 0.0, %v785
      %v787 = vpop.f32.mrb[0].mxu0
      %788 = vmatprep.mubr.f32.mxu0 %v352
      %789 = vmatmul.mubr.f32.gmra.mrb[0].mxu0 %v316
      %v790 = vpop.f32.mrb[0].mxu0
      %v791 = vadd.f32 0.0, %v790
      %v792 = vpop.f32.mrb[0].mxu0
      %793 = vmatprep.mubr.f32.mxu0 %v353
      %794 = vmatmul.mubr.f32.gmra.mrb[0].mxu0 %v317
      %v795 = vpop.f32.mrb[0].mxu0
      %v796 = vadd.f32 0.0, %v795
      %v797 = vpop.f32.mrb[0].mxu0
      %798 = vmatprep.mubr.f32.mxu0 %v354
      %799 = vmatmul.mubr.f32.gmra.mrb[0].mxu0 %v318
      %v800 = vpop.f32.mrb[0].mxu0
      %v801 = vadd.f32 0.0, %v800
      %v802 = vpop.f32.mrb[0].mxu0
      %803 = vmatprep.mubr.f32.mxu0 %v355
      %804 = vmatmul.mubr.f32.gmra.mrb[0].mxu0 %v319
      %v805 = vpop.f32.mrb[0].mxu0
      %v806 = vadd.f32 0.0, %v805
      %v807 = vpop.f32.mrb[0].mxu0
      %808 = vmatprep.mubr.f32.mxu0 %v356
      %809 = vmatmul.mubr.f32.gmra.mrb[0].mxu0 %v320
      %v810 = vpop.f32.mrb[0].mxu0
      %v811 = vadd.f32 0.0, %v810
      %v812 = vpop.f32.mrb[0].mxu0
      %813 = vmatprep.mubr.f32.mxu0 %v357
      %814 = vmatmul.mubr.f32.gmra.mrb[0].mxu0 %v321
      %v815 = vpop.f32.mrb[0].mxu0
      %v816 = vadd.f32 0.0, %v815
      %v817 = vpop.f32.mrb[0].mxu0
      %818 = vmatprep.mubr.f32.mxu0 %v358
      %819 = vmatmul.mubr.f32.gmra.mrb[0].mxu0 %v322
      %v820 = vpop.f32.mrb[0].mxu0
      %v821 = vadd.f32 0.0, %v820
      %v822 = vpop.f32.mrb[0].mxu0
      %823 = vmatprep.mubr.f32.mxu0 %v359
      %824 = vmatmul.mubr.f32.gmra.mrb[0].mxu0 %v323
      %v825 = vpop.f32.mrb[0].mxu0
      %v826 = vadd.f32 0.0, %v825
      %v827 = vpop.f32.mrb[0].mxu0
      %828 = vmatprep.mubr.f32.mxu0 %v360
      %829 = vmatmul.mubr.f32.gmra.mrb[0].mxu0 %v324
      %v830 = vpop.f32.mrb[0].mxu0
      %v831 = vadd.f32 0.0, %v830
      %v832 = vpop.f32.mrb[0].mxu0
      %833 = vmatprep.mubr.f32.mxu0 %v361
      %834 = vmatmul.mubr.f32.gmra.mrb[0].mxu0 %v325
      %v835 = vpop.f32.mrb[0].mxu0
      %v836 = vadd.f32 0.0, %v835
      %v837 = vpop.f32.mrb[0].mxu0
      %838 = vmatprep.mubr.f32.mxu0 %v362
      %839 = vmatmul.mubr.f32.gmra.mrb[0].mxu0 %v326
      %v840 = vpop.f32.mrb[0].mxu0
      %v841 = vadd.f32 0.0, %v840
      %v842 = vpop.f32.mrb[0].mxu0
      %843 = vmatprep.mubr.f32.mxu0 %v363
      %844 = vmatmul.mubr.f32.gmra.mrb[0].mxu0 %v327
      %v845 = vpop.f32.mrb[0].mxu0
      %v846 = vadd.f32 0.0, %v845
      %v847 = vpop.f32.mrb[0].mxu0
      %848 = vmatprep.mubr.f32.mxu0 %v364
      %849 = vmatmul.mubr.f32.gmra.mrb[0].mxu0 %v328
      %v850 = vpop.f32.mrb[0].mxu0
      %v851 = vadd.f32 0.0, %v850
      %v852 = vpop.f32.mrb[0].mxu0
      %853 = vmatprep.mubr.f32.mxu0 %v365
      %854 = vmatmul.mubr.f32.gmra.mrb[0].mxu0 %v329
      %v855 = vpop.f32.mrb[0].mxu0
      %v856 = vadd.f32 0.0, %v855
      %v857 = vpop.f32.mrb[0].mxu0
      %858 = vmatprep.mubr.f32.mxu0 %v366
      %859 = vmatmul.mubr.f32.gmra.mrb[0].mxu0 %v330
      %v860 = vpop.f32.mrb[0].mxu0
      %v861 = vadd.f32 0.0, %v860
      %v862 = vpop.f32.mrb[0].mxu0
      %863 = vmatprep.mubr.f32.mxu0 %v367
      %864 = vmatmul.mubr.f32.gmra.mrb[0].mxu0 %v331
      %v865 = vpop.f32.mrb[0].mxu0
      %v866 = vadd.f32 0.0, %v865
      %v867 = vpop.f32.mrb[0].mxu0
      %868 = vmatprep.mubr.f32.mxu0 %v368
      %869 = vmatmul.mubr.f32.gmra.mrb[0].mxu0 %v332
      %v870 = vpop.f32.mrb[0].mxu0
      %v871 = vadd.f32 0.0, %v870
      %v872 = vpop.f32.mrb[0].mxu0
      %873 = vmatprep.mubr.f32.mxu0 %v369
      %874 = vmatmul.mubr.f32.gmra.mrb[0].mxu0 %v333
      %v875 = vpop.f32.mrb[0].mxu0
      %v876 = vadd.f32 0.0, %v875
      %v877 = vpop.f32.mrb[0].mxu0
      %878 = vmatprep.mubr.f32.mxu0 %v370
      %879 = vmatmul.mubr.f32.gmra.mrb[0].mxu0 %v334
      %v880 = vpop.f32.mrb[0].mxu0
      %v881 = vadd.f32 0.0, %v880
      %v882 = vpop.f32.mrb[0].mxu0
      %883 = vmatprep.mubr.f32.mxu0 %v371
      %884 = vmatmul.mubr.f32.gmra.mrb[0].mxu0 %v335
      %v885 = vpop.f32.mrb[0].mxu0
      %v886 = vadd.f32 0.0, %v885
      %v887 = vpop.f32.mrb[0].mxu0
      %888 = vmatprep.mubr.f32.mxu0 %v372
      %889 = vmatmul.mubr.f32.gmra.mrb[0].mxu0 %v336
      %v890 = vpop.f32.mrb[0].mxu0
      %v891 = vadd.f32 0.0, %v890
      %v892 = vpop.f32.mrb[0].mxu0
      %893 = vmatprep.mubr.f32.mxu0 %v373
      %894 = vmatmul.mubr.f32.gmra.mrb[0].mxu0 %v337
      %v895 = vpop.f32.mrb[0].mxu0
      %v896 = vadd.f32 0.0, %v895
      %v897 = vpop.f32.mrb[0].mxu0
      %898 = vmatprep.mubr.f32.mxu0 %v374
      %899 = vmatmul.mubr.f32.gmra.mrb[0].mxu0 %v338
      %v900 = vpop.f32.mrb[0].mxu0
      %v901 = vadd.f32 0.0, %v900
      %v902 = vpop.f32.mrb[0].mxu0
      %903 = vmatprep.mubr.f32.mxu0 %v375
      %904 = vmatmul.mubr.f32.gmra.mrb[0].mxu0 %v339
      %v905 = vpop.f32.mrb[0].mxu0
      %v906 = vadd.f32 0.0, %v905
      %v907 = vpop.f32.mrb[0].mxu0
      %908 = vmatprep.mubr.f32.mxu0 %v376
      %909 = vmatmul.mubr.f32.gmra.mrb[0].mxu0 %v340
      %v910 = vpop.f32.mrb[0].mxu0
      %v911 = vadd.f32 0.0, %v910
      %v912 = vpop.f32.mrb[0].mxu0
      %913 = vmatprep.mubr.f32.mxu0 %v377
      %914 = vmatmul.mubr.f32.gmra.mrb[0].mxu0 %v341
      %v915 = vpop.f32.mrb[0].mxu0
      %v916 = vadd.f32 0.0, %v915
      %v917 = vpop.f32.mrb[0].mxu0
      %918 = vmatprep.mubr.f32.mxu0 %v378
      %919 = vmatmul.mubr.f32.gmra.mrb[0].mxu0 %v342
      %v920 = vpop.f32.mrb[0].mxu0
      %v921 = vadd.f32 0.0, %v920
      %v922 = vpop.f32.mrb[0].mxu0
      %923 = vmatprep.mubr.f32.mxu0 %v379
      %924 = vmatmul.mubr.f32.gmra.mrb[0].mxu0 %v343
      %v925 = vpop.f32.mrb[0].mxu0
      %v926 = vadd.f32 0.0, %v925
      %v927 = vpop.f32.mrb[0].mxu0
      %928 = vmatprep.mubr.f32.mxu0 %v380
      %929 = vmatmul.mubr.f32.gmra.mrb[0].mxu0 %v344
      %v930 = vpop.f32.mrb[0].mxu0
      %v931 = vadd.f32 0.0, %v930
      %v932 = vpop.f32.mrb[0].mxu0
      %933 = vmatprep.mubr.f32.mxu0 %v381
      %934 = vmatmul.mubr.f32.gmra.mrb[0].mxu0 %v345
      %v935 = vpop.f32.mrb[0].mxu0
      %v936 = vadd.f32 0.0, %v935
      %v937 = vpop.f32.mrb[0].mxu0
      %938 = vmatprep.mubr.f32.mxu0 %v382
      %939 = vmatmul.mubr.f32.gmra.mrb[0].mxu0 %v346
      %v940 = vpop.f32.mrb[0].mxu0
      %v941 = vadd.f32 0.0, %v940
      %v942 = vpop.f32.mrb[0].mxu0
      %943 = vmatprep.mubr.f32.mxu0 %v383
      %944 = vmatmul.mubr.f32.gmra.mrb[0].mxu0 %v347
      %v945 = vpop.f32.mrb[0].mxu0
      %v946 = vadd.f32 0.0, %v945
      %v947 = vpop.f32.mrb[0].mxu0
      %948 = vmatprep.mubr.f32.mxu0 %v384
      %949 = vmatmul.mubr.f32.gmra.mrb[0].mxu0 %v348
      %v950 = vpop.f32.mrb[0].mxu0
      %v951 = vadd.f32 0.0, %v950
      %v952 = vpop.f32.mrb[0].mxu0
      %953 = vmatprep.mubr.f32.mxu0 %v385
      %954 = vmatmul.mubr.f32.gmra.mrb[0].mxu0 %v349
      %v955 = vpop.f32.mrb[0].mxu0
      %v956 = vadd.f32 0.0, %v955
      %v957 = vpop.f32.mrb[0].mxu0
      %958 = vdwg.mxu0
      %959 = vmatprep.subr.mxu0 0.0
      %960 = vmatpush1.msra.mxu0 %v602
      %961 = vmatprep.subr.mxu0 0.0
      %962 = vmatpush1.msra.mxu0 %v603
      %963 = vmatprep.subr.mxu0 0.0
      %964 = vmatpush1.msra.mxu0 %v604
      %965 = vmatprep.subr.mxu0 0.0
      %966 = vmatpush1.msra.mxu0 %v605
      %967 = vmatprep.subr.mxu0 0.0
      %968 = vmatpush1.msra.mxu0 %v606
      %969 = vmatprep.subr.mxu0 0.0
      %970 = vmatpush1.msra.mxu0 %v607
      %971 = vmatprep.subr.mxu0 0.0
      %972 = vmatpush1.msra.mxu0 %v608
      %973 = vmatprep.subr.mxu0 0.0
      %974 = vmatpush1.msra.mxu0 %v609
      %975 = vmatprep.subr.mxu0 0.0
      %976 = vmatpush1.msra.mxu0 %v610
      %977 = vmatprep.subr.mxu0 0.0
      %978 = vmatpush1.msra.mxu0 %v611
      %979 = vmatprep.subr.mxu0 0.0
      %980 = vmatpush1.msra.mxu0 %v612
      %981 = vmatprep.subr.mxu0 0.0
      %982 = vmatpush1.msra.mxu0 %v613
      %983 = vmatprep.subr.mxu0 0.0
      %984 = vmatpush1.msra.mxu0 %v614
      %985 = vmatprep.subr.mxu0 0.0
      %986 = vmatpush1.msra.mxu0 %v615
      %987 = vmatprep.subr.mxu0 0.0
      %988 = vmatpush1.msra.mxu0 %v616
      %989 = vmatprep.subr.mxu0 0.0
      %990 = vmatpush1.msra.mxu0 %v617
      %991 = vmatprep.subr.mxu0 0.0
      %992 = vmatpush1.msra.mxu0 %v618
      %993 = vmatprep.subr.mxu0 0.0
      %994 = vmatpush1.msra.mxu0 %v619
      %995 = vmatprep.subr.mxu0 0.0
      %996 = vmatpush1.msra.mxu0 %v620
      %997 = vmatprep.subr.mxu0 0.0
      %998 = vmatpush1.msra.mxu0 %v621
      %999 = vmatprep.subr.mxu0 0.0
      %1000 = vmatpush1.msra.mxu0 %v622
      %1001 = vmatprep.subr.mxu0 0.0
      %1002 = vmatpush1.msra.mxu0 %v623
      %1003 = vmatprep.subr.mxu0 0.0
      %1004 = vmatpush1.msra.mxu0 %v624
      %1005 = vmatprep.subr.mxu0 0.0
      %1006 = vmatpush1.msra.mxu0 %v625
      %1007 = vmatprep.subr.mxu0 0.0
      %1008 = vmatpush1.msra.mxu0 %v626
      %1009 = vmatprep.subr.mxu0 0.0
      %1010 = vmatpush1.msra.mxu0 %v627
      %1011 = vmatprep.subr.mxu0 0.0
      %1012 = vmatpush1.msra.mxu0 %v628
      %1013 = vmatprep.subr.mxu0 0.0
      %1014 = vmatpush1.msra.mxu0 %v629
      %1015 = vmatprep.subr.mxu0 0.0
      %1016 = vmatpush1.msra.mxu0 %v630
      %1017 = vmatprep.subr.mxu0 0.0
      %1018 = vmatpush1.msra.mxu0 %v631
      %1019 = vmatprep.subr.mxu0 0.0
      %1020 = vmatpush1.msra.mxu0 %v632
      %1021 = vmatprep.subr.mxu0 0.0
      %1022 = vmatpush1.msra.mxu0 %v633
      %1023 = vmatprep.mubr.f32.mxu0 %v388
      %1024 = vmatmul.mubr.f32.gmra.mrb[0].mxu0 %v386
      %v1025 = vpop.f32.mrb[0].mxu0
      %v1026 = vadd.f32 %v781, %v1025
      %v1027 = vpop.f32.mrb[0].mxu0
      %1028 = vmatprep.mubr.f32.mxu0 %v389
      %1029 = vmatmul.mubr.f32.gmra.mrb[0].mxu0 %v387
      %v1030 = vpop.f32.mrb[0].mxu0
      %v1031 = vadd.f32 %v786, %v1030
      %v1032 = vpop.f32.mrb[0].mxu0
      %1033 = vmatprep.mubr.f32.mxu0 %v390
      %1034 = vmatmul.mubr.f32.gmra.mrb[0].mxu0 %v388
      %v1035 = vpop.f32.mrb[0].mxu0
      %v1036 = vadd.f32 %v791, %v1035
      %v1037 = vpop.f32.mrb[0].mxu0
      %1038 = vmatprep.mubr.f32.mxu0 %v391
      %1039 = vmatmul.mubr.f32.gmra.mrb[0].mxu0 %v389
      %v1040 = vpop.f32.mrb[0].mxu0
      %v1041 = vadd.f32 %v796, %v1040
      %v1042 = vpop.f32.mrb[0].mxu0
      %1043 = vmatprep.mubr.f32.mxu0 %v392
      %1044 = vmatmul.mubr.f32.gmra.mrb[0].mxu0 %v390
      %v1045 = vpop.f32.mrb[0].mxu0
      %v1046 = vadd.f32 %v801, %v1045
      %v1047 = vpop.f32.mrb[0].mxu0
      %1048 = vmatprep.mubr.f32.mxu0 %v393
      %1049 = vmatmul.mubr.f32.gmra.mrb[0].mxu0 %v391
      %v1050 = vpop.f32.mrb[0].mxu0
      %v1051 = vadd.f32 %v806, %v1050
      %v1052 = vpop.f32.mrb[0].mxu0
      %1053 = vmatprep.mubr.f32.mxu0 %v394
      %1054 = vmatmul.mubr.f32.gmra.mrb[0].mxu0 %v392
      %v1055 = vpop.f32.mrb[0].mxu0
      %v1056 = vadd.f32 %v811, %v1055
      %v1057 = vpop.f32.mrb[0].mxu0
      %1058 = vmatprep.mubr.f32.mxu0 %v395
      %1059 = vmatmul.mubr.f32.gmra.mrb[0].mxu0 %v393
      %v1060 = vpop.f32.mrb[0].mxu0
      %v1061 = vadd.f32 %v816, %v1060
      %v1062 = vpop.f32.mrb[0].mxu0
      %1063 = vmatprep.mubr.f32.mxu0 %v396
      %1064 = vmatmul.mubr.f32.gmra.mrb[0].mxu0 %v394
      %v1065 = vpop.f32.mrb[0].mxu0
      %v1066 = vadd.f32 %v821, %v1065
      %v1067 = vpop.f32.mrb[0].mxu0
      %1068 = vmatprep.mubr.f32.mxu0 %v397
      %1069 = vmatmul.mubr.f32.gmra.mrb[0].mxu0 %v395
      %v1070 = vpop.f32.mrb[0].mxu0
      %v1071 = vadd.f32 %v826, %v1070
      %v1072 = vpop.f32.mrb[0].mxu0
      %1073 = vmatprep.mubr.f32.mxu0 %v398
      %1074 = vmatmul.mubr.f32.gmra.mrb[0].mxu0 %v396
      %v1075 = vpop.f32.mrb[0].mxu0
      %v1076 = vadd.f32 %v831, %v1075
      %v1077 = vpop.f32.mrb[0].mxu0
      %1078 = vmatprep.mubr.f32.mxu0 %v399
      %1079 = vmatmul.mubr.f32.gmra.mrb[0].mxu0 %v397
      %v1080 = vpop.f32.mrb[0].mxu0
      %v1081 = vadd.f32 %v836, %v1080
      %v1082 = vpop.f32.mrb[0].mxu0
      %1083 = vmatprep.mubr.f32.mxu0 %v400
      %1084 = vmatmul.mubr.f32.gmra.mrb[0].mxu0 %v398
      %v1085 = vpop.f32.mrb[0].mxu0
      %v1086 = vadd.f32 %v841, %v1085
      %v1087 = vpop.f32.mrb[0].mxu0
      %1088 = vmatprep.mubr.f32.mxu0 %v401
      %1089 = vmatmul.mubr.f32.gmra.mrb[0].mxu0 %v399
      %v1090 = vpop.f32.mrb[0].mxu0
      %v1091 = vadd.f32 %v846, %v1090
      %v1092 = vpop.f32.mrb[0].mxu0
      %1093 = vmatprep.mubr.f32.mxu0 %v402
      %1094 = vmatmul.mubr.f32.gmra.mrb[0].mxu0 %v400
      %v1095 = vpop.f32.mrb[0].mxu0
      %v1096 = vadd.f32 %v851, %v1095
      %v1097 = vpop.f32.mrb[0].mxu0
      %1098 = vmatprep.mubr.f32.mxu0 %v403
      %1099 = vmatmul.mubr.f32.gmra.mrb[0].mxu0 %v401
      %v1100 = vpop.f32.mrb[0].mxu0
      %v1101 = vadd.f32 %v856, %v1100
      %v1102 = vpop.f32.mrb[0].mxu0
      %1103 = vmatprep.mubr.f32.mxu0 %v404
      %1104 = vmatmul.mubr.f32.gmra.mrb[0].mxu0 %v402
      %v1105 = vpop.f32.mrb[0].mxu0
      %v1106 = vadd.f32 %v861, %v1105
      %v1107 = vpop.f32.mrb[0].mxu0
      %1108 = vmatprep.mubr.f32.mxu0 %v405
      %1109 = vmatmul.mubr.f32.gmra.mrb[0].mxu0 %v403
      %v1110 = vpop.f32.mrb[0].mxu0
      %v1111 = vadd.f32 %v866, %v1110
      %v1112 = vpop.f32.mrb[0].mxu0
      %1113 = vmatprep.mubr.f32.mxu0 %v406
      %1114 = vmatmul.mubr.f32.gmra.mrb[0].mxu0 %v404
      %v1115 = vpop.f32.mrb[0].mxu0
      %v1116 = vadd.f32 %v871, %v1115
      %v1117 = vpop.f32.mrb[0].mxu0
      %1118 = vmatprep.mubr.f32.mxu0 %v407
      %1119 = vmatmul.mubr.f32.gmra.mrb[0].mxu0 %v405
      %v1120 = vpop.f32.mrb[0].mxu0
      %v1121 = vadd.f32 %v876, %v1120
      %v1122 = vpop.f32.mrb[0].mxu0
      %1123 = vmatprep.mubr.f32.mxu0 %v408
      %1124 = vmatmul.mubr.f32.gmra.mrb[0].mxu0 %v406
      %v1125 = vpop.f32.mrb[0].mxu0
      %v1126 = vadd.f32 %v881, %v1125
      %v1127 = vpop.f32.mrb[0].mxu0
      %1128 = vmatprep.mubr.f32.mxu0 %v409
      %1129 = vmatmul.mubr.f32.gmra.mrb[0].mxu0 %v407
      %v1130 = vpop.f32.mrb[0].mxu0
      %v1131 = vadd.f32 %v886, %v1130
      %v1132 = vpop.f32.mrb[0].mxu0
      %1133 = vmatprep.mubr.f32.mxu0 %v410
      %1134 = vmatmul.mubr.f32.gmra.mrb[0].mxu0 %v408
      %v1135 = vpop.f32.mrb[0].mxu0
      %v1136 = vadd.f32 %v891, %v1135
      %v1137 = vpop.f32.mrb[0].mxu0
      %1138 = vmatprep.mubr.f32.mxu0 %v411
      %1139 = vmatmul.mubr.f32.gmra.mrb[0].mxu0 %v409
      %v1140 = vpop.f32.mrb[0].mxu0
      %v1141 = vadd.f32 %v896, %v1140
      %v1142 = vpop.f32.mrb[0].mxu0
      %1143 = vmatprep.mubr.f32.mxu0 %v412
      %1144 = vmatmul.mubr.f32.gmra.mrb[0].mxu0 %v410
      %v1145 = vpop.f32.mrb[0].mxu0
      %v1146 = vadd.f32 %v901, %v1145
      %v1147 = vpop.f32.mrb[0].mxu0
      %1148 = vmatprep.mubr.f32.mxu0 %v413
      %1149 = vmatmul.mubr.f32.gmra.mrb[0].mxu0 %v411
      %v1150 = vpop.f32.mrb[0].mxu0
      %v1151 = vadd.f32 %v906, %v1150
      %v1152 = vpop.f32.mrb[0].mxu0
      %1153 = vmatprep.mubr.f32.mxu0 %v414
      %1154 = vmatmul.mubr.f32.gmra.mrb[0].mxu0 %v412
      %v1155 = vpop.f32.mrb[0].mxu0
      %v1156 = vadd.f32 %v911, %v1155
      %v1157 = vpop.f32.mrb[0].mxu0
      %1158 = vmatprep.mubr.f32.mxu0 %v415
      %1159 = vmatmul.mubr.f32.gmra.mrb[0].mxu0 %v413
      %v1160 = vpop.f32.mrb[0].mxu0
      %v1161 = vadd.f32 %v916, %v1160
      %v1162 = vpop.f32.mrb[0].mxu0
      %1163 = vmatprep.mubr.f32.mxu0 %v416
      %1164 = vmatmul.mubr.f32.gmra.mrb[0].mxu0 %v414
      %v1165 = vpop.f32.mrb[0].mxu0
      %v1166 = vadd.f32 %v921, %v1165
      %v1167 = vpop.f32.mrb[0].mxu0
      %1168 = vmatprep.mubr.f32.mxu0 %v417
      %1169 = vmatmul.mubr.f32.gmra.mrb[0].mxu0 %v415
      %v1170 = vpop.f32.mrb[0].mxu0
      %v1171 = vadd.f32 %v926, %v1170
      %v1172 = vpop.f32.mrb[0].mxu0
      %1173 = vmatprep.mubr.f32.mxu0 %v418
      %1174 = vmatmul.mubr.f32.gmra.mrb[0].mxu0 %v416
      %v1175 = vpop.f32.mrb[0].mxu0
      %v1176 = vadd.f32 %v931, %v1175
      %v1177 = vpop.f32.mrb[0].mxu0
      %1178 = vmatprep.mubr.f32.mxu0 %v419
      %1179 = vmatmul.mubr.f32.gmra.mrb[0].mxu0 %v417
      %v1180 = vpop.f32.mrb[0].mxu0
      %v1181 = vadd.f32 %v936, %v1180
      %v1182 = vpop.f32.mrb[0].mxu0
      %1183 = vmatprep.mubr.f32.mxu0 %v420
      %1184 = vmatmul.mubr.f32.gmra.mrb[0].mxu0 %v418
      %v1185 = vpop.f32.mrb[0].mxu0
      %v1186 = vadd.f32 %v941, %v1185
      %v1187 = vpop.f32.mrb[0].mxu0
      %1188 = vmatprep.mubr.f32.mxu0 %v421
      %1189 = vmatmul.mubr.f32.gmra.mrb[0].mxu0 %v419
      %v1190 = vpop.f32.mrb[0].mxu0
      %v1191 = vadd.f32 %v946, %v1190
      %v1192 = vpop.f32.mrb[0].mxu0
      %1193 = vmatprep.mubr.f32.mxu0 %v422
      %1194 = vmatmul.mubr.f32.gmra.mrb[0].mxu0 %v420
      %v1195 = vpop.f32.mrb[0].mxu0
      %v1196 = vadd.f32 %v951, %v1195
      %v1197 = vpop.f32.mrb[0].mxu0
      %1198 = vmatprep.mubr.f32.mxu0 %v423
      %1199 = vmatmul.mubr.f32.gmra.mrb[0].mxu0 %v421
      %v1200 = vpop.f32.mrb[0].mxu0
      %v1201 = vadd.f32 %v956, %v1200
      %v1202 = vpop.f32.mrb[0].mxu0
      %1203 = vdwg.mxu0
      %1204 = vmatprep.subr.mxu0 0.0
      %1205 = vmatpush1.msra.mxu0 %v634
      %1206 = vmatprep.subr.mxu0 0.0
      %1207 = vmatpush1.msra.mxu0 %v635
      %1208 = vmatprep.subr.mxu0 0.0
      %1209 = vmatpush1.msra.mxu0 %v636
      %1210 = vmatprep.subr.mxu0 0.0
      %1211 = vmatpush1.msra.mxu0 %v637
      %1212 = vmatprep.subr.mxu0 0.0
      %1213 = vmatpush1.msra.mxu0 %v638
      %1214 = vmatprep.subr.mxu0 0.0
      %1215 = vmatpush1.msra.mxu0 %v639
      %1216 = vmatprep.subr.mxu0 0.0
      %1217 = vmatpush1.msra.mxu0 %v640
      %1218 = vmatprep.subr.mxu0 0.0
      %1219 = vmatpush1.msra.mxu0 %v641
      %1220 = vmatprep.subr.mxu0 0.0
      %1221 = vmatpush1.msra.mxu0 %v642
      %1222 = vmatprep.subr.mxu0 0.0
      %1223 = vmatpush1.msra.mxu0 %v643
      %1224 = vmatprep.subr.mxu0 0.0
      %1225 = vmatpush1.msra.mxu0 %v644
      %1226 = vmatprep.subr.mxu0 0.0
      %1227 = vmatpush1.msra.mxu0 %v645
      %1228 = vmatprep.subr.mxu0 0.0
      %1229 = vmatpush1.msra.mxu0 %v646
      %1230 = vmatprep.subr.mxu0 0.0
      %1231 = vmatpush1.msra.mxu0 %v647
      %1232 = vmatprep.subr.mxu0 0.0
      %1233 = vmatpush1.msra.mxu0 %v648
      %1234 = vmatprep.subr.mxu0 0.0
      %1235 = vmatpush1.msra.mxu0 %v649
      %1236 = vmatprep.subr.mxu0 0.0
      %1237 = vmatpush1.msra.mxu0 %v650
      %1238 = vmatprep.subr.mxu0 0.0
      %1239 = vmatpush1.msra.mxu0 %v651
      %1240 = vmatprep.subr.mxu0 0.0
      %1241 = vmatpush1.msra.mxu0 %v652
      %1242 = vmatprep.subr.mxu0 0.0
      %1243 = vmatpush1.msra.mxu0 %v653
      %1244 = vmatprep.subr.mxu0 0.0
      %1245 = vmatpush1.msra.mxu0 %v654
      %1246 = vmatprep.subr.mxu0 0.0
      %1247 = vmatpush1.msra.mxu0 %v655
      %1248 = vmatprep.subr.mxu0 0.0
      %1249 = vmatpush1.msra.mxu0 %v656
      %1250 = vmatprep.subr.mxu0 0.0
      %1251 = vmatpush1.msra.mxu0 %v657
      %1252 = vmatprep.subr.mxu0 0.0
      %1253 = vmatpush1.msra.mxu0 %v658
      %1254 = vmatprep.subr.mxu0 0.0
      %1255 = vmatpush1.msra.mxu0 %v659
      %1256 = vmatprep.subr.mxu0 0.0
      %1257 = vmatpush1.msra.mxu0 %v660
      %1258 = vmatprep.subr.mxu0 0.0
      %1259 = vmatpush1.msra.mxu0 %v661
      %1260 = vmatprep.subr.mxu0 0.0
      %1261 = vmatpush1.msra.mxu0 %v662
      %1262 = vmatprep.subr.mxu0 0.0
      %1263 = vmatpush1.msra.mxu0 %v663
      %1264 = vmatprep.subr.mxu0 0.0
      %1265 = vmatpush1.msra.mxu0 %v664
      %1266 = vmatprep.subr.mxu0 0.0
      %1267 = vmatpush1.msra.mxu0 %v665
      %1268 = vmatprep.mubr.f32.mxu0 %v460
      %1269 = vmatmul.mubr.f32.gmra.mrb[0].mxu0 %v424
      %v1270 = vpop.f32.mrb[0].mxu0
      %v1271 = vadd.f32 %v1026, %v1270
      %v1272 = vpop.f32.mrb[0].mxu0
      %1273 = vmatprep.mubr.f32.mxu0 %v461
      %1274 = vmatmul.mubr.f32.gmra.mrb[0].mxu0 %v425
      %v1275 = vpop.f32.mrb[0].mxu0
      %v1276 = vadd.f32 %v1031, %v1275
      %v1277 = vpop.f32.mrb[0].mxu0
      %1278 = vmatprep.mubr.f32.mxu0 %v462
      %1279 = vmatmul.mubr.f32.gmra.mrb[0].mxu0 %v426
      %v1280 = vpop.f32.mrb[0].mxu0
      %v1281 = vadd.f32 %v1036, %v1280
      %v1282 = vpop.f32.mrb[0].mxu0
      %1283 = vmatprep.mubr.f32.mxu0 %v463
      %1284 = vmatmul.mubr.f32.gmra.mrb[0].mxu0 %v427
      %v1285 = vpop.f32.mrb[0].mxu0
      %v1286 = vadd.f32 %v1041, %v1285
      %v1287 = vpop.f32.mrb[0].mxu0
      %1288 = vmatprep.mubr.f32.mxu0 %v464
      %1289 = vmatmul.mubr.f32.gmra.mrb[0].mxu0 %v428
      %v1290 = vpop.f32.mrb[0].mxu0
      %v1291 = vadd.f32 %v1046, %v1290
      %v1292 = vpop.f32.mrb[0].mxu0
      %1293 = vmatprep.mubr.f32.mxu0 %v465
      %1294 = vmatmul.mubr.f32.gmra.mrb[0].mxu0 %v429
      %v1295 = vpop.f32.mrb[0].mxu0
      %v1296 = vadd.f32 %v1051, %v1295
      %v1297 = vpop.f32.mrb[0].mxu0
      %1298 = vmatprep.mubr.f32.mxu0 %v466
      %1299 = vmatmul.mubr.f32.gmra.mrb[0].mxu0 %v430
      %v1300 = vpop.f32.mrb[0].mxu0
      %v1301 = vadd.f32 %v1056, %v1300
      %v1302 = vpop.f32.mrb[0].mxu0
      %1303 = vmatprep.mubr.f32.mxu0 %v467
      %1304 = vmatmul.mubr.f32.gmra.mrb[0].mxu0 %v431
      %v1305 = vpop.f32.mrb[0].mxu0
      %v1306 = vadd.f32 %v1061, %v1305
      %v1307 = vpop.f32.mrb[0].mxu0
      %1308 = vmatprep.mubr.f32.mxu0 %v468
      %1309 = vmatmul.mubr.f32.gmra.mrb[0].mxu0 %v432
      %v1310 = vpop.f32.mrb[0].mxu0
      %v1311 = vadd.f32 %v1066, %v1310
      %v1312 = vpop.f32.mrb[0].mxu0
      %1313 = vmatprep.mubr.f32.mxu0 %v469
      %1314 = vmatmul.mubr.f32.gmra.mrb[0].mxu0 %v433
      %v1315 = vpop.f32.mrb[0].mxu0
      %v1316 = vadd.f32 %v1071, %v1315
      %v1317 = vpop.f32.mrb[0].mxu0
      %1318 = vmatprep.mubr.f32.mxu0 %v470
      %1319 = vmatmul.mubr.f32.gmra.mrb[0].mxu0 %v434
      %v1320 = vpop.f32.mrb[0].mxu0
      %v1321 = vadd.f32 %v1076, %v1320
      %v1322 = vpop.f32.mrb[0].mxu0
      %1323 = vmatprep.mubr.f32.mxu0 %v471
      %1324 = vmatmul.mubr.f32.gmra.mrb[0].mxu0 %v435
      %v1325 = vpop.f32.mrb[0].mxu0
      %v1326 = vadd.f32 %v1081, %v1325
      %v1327 = vpop.f32.mrb[0].mxu0
      %1328 = vmatprep.mubr.f32.mxu0 %v472
      %1329 = vmatmul.mubr.f32.gmra.mrb[0].mxu0 %v436
      %v1330 = vpop.f32.mrb[0].mxu0
      %v1331 = vadd.f32 %v1086, %v1330
      %v1332 = vpop.f32.mrb[0].mxu0
      %1333 = vmatprep.mubr.f32.mxu0 %v473
      %1334 = vmatmul.mubr.f32.gmra.mrb[0].mxu0 %v437
      %v1335 = vpop.f32.mrb[0].mxu0
      %v1336 = vadd.f32 %v1091, %v1335
      %v1337 = vpop.f32.mrb[0].mxu0
      %1338 = vmatprep.mubr.f32.mxu0 %v474
      %1339 = vmatmul.mubr.f32.gmra.mrb[0].mxu0 %v438
      %v1340 = vpop.f32.mrb[0].mxu0
      %v1341 = vadd.f32 %v1096, %v1340
      %v1342 = vpop.f32.mrb[0].mxu0
      %1343 = vmatprep.mubr.f32.mxu0 %v475
      %1344 = vmatmul.mubr.f32.gmra.mrb[0].mxu0 %v439
      %v1345 = vpop.f32.mrb[0].mxu0
      %v1346 = vadd.f32 %v1101, %v1345
      %v1347 = vpop.f32.mrb[0].mxu0
      %1348 = vmatprep.mubr.f32.mxu0 %v476
      %1349 = vmatmul.mubr.f32.gmra.mrb[0].mxu0 %v440
      %v1350 = vpop.f32.mrb[0].mxu0
      %v1351 = vadd.f32 %v1106, %v1350
      %v1352 = vpop.f32.mrb[0].mxu0
      %1353 = vmatprep.mubr.f32.mxu0 %v477
      %1354 = vmatmul.mubr.f32.gmra.mrb[0].mxu0 %v441
      %v1355 = vpop.f32.mrb[0].mxu0
      %v1356 = vadd.f32 %v1111, %v1355
      %v1357 = vpop.f32.mrb[0].mxu0
      %1358 = vmatprep.mubr.f32.mxu0 %v478
      %1359 = vmatmul.mubr.f32.gmra.mrb[0].mxu0 %v442
      %v1360 = vpop.f32.mrb[0].mxu0
      %v1361 = vadd.f32 %v1116, %v1360
      %v1362 = vpop.f32.mrb[0].mxu0
      %1363 = vmatprep.mubr.f32.mxu0 %v479
      %1364 = vmatmul.mubr.f32.gmra.mrb[0].mxu0 %v443
      %v1365 = vpop.f32.mrb[0].mxu0
      %v1366 = vadd.f32 %v1121, %v1365
      %v1367 = vpop.f32.mrb[0].mxu0
      %1368 = vmatprep.mubr.f32.mxu0 %v480
      %1369 = vmatmul.mubr.f32.gmra.mrb[0].mxu0 %v444
      %v1370 = vpop.f32.mrb[0].mxu0
      %v1371 = vadd.f32 %v1126, %v1370
      %v1372 = vpop.f32.mrb[0].mxu0
      %1373 = vmatprep.mubr.f32.mxu0 %v481
      %1374 = vmatmul.mubr.f32.gmra.mrb[0].mxu0 %v445
      %v1375 = vpop.f32.mrb[0].mxu0
      %v1376 = vadd.f32 %v1131, %v1375
      %v1377 = vpop.f32.mrb[0].mxu0
      %1378 = vmatprep.mubr.f32.mxu0 %v482
      %1379 = vmatmul.mubr.f32.gmra.mrb[0].mxu0 %v446
      %v1380 = vpop.f32.mrb[0].mxu0
      %v1381 = vadd.f32 %v1136, %v1380
      %v1382 = vpop.f32.mrb[0].mxu0
      %1383 = vmatprep.mubr.f32.mxu0 %v483
      %1384 = vmatmul.mubr.f32.gmra.mrb[0].mxu0 %v447
      %v1385 = vpop.f32.mrb[0].mxu0
      %v1386 = vadd.f32 %v1141, %v1385
      %v1387 = vpop.f32.mrb[0].mxu0
      %1388 = vmatprep.mubr.f32.mxu0 %v484
      %1389 = vmatmul.mubr.f32.gmra.mrb[0].mxu0 %v448
      %v1390 = vpop.f32.mrb[0].mxu0
      %v1391 = vadd.f32 %v1146, %v1390
      %v1392 = vpop.f32.mrb[0].mxu0
      %1393 = vmatprep.mubr.f32.mxu0 %v485
      %1394 = vmatmul.mubr.f32.gmra.mrb[0].mxu0 %v449
      %v1395 = vpop.f32.mrb[0].mxu0
      %v1396 = vadd.f32 %v1151, %v1395
      %v1397 = vpop.f32.mrb[0].mxu0
      %1398 = vmatprep.mubr.f32.mxu0 %v486
      %1399 = vmatmul.mubr.f32.gmra.mrb[0].mxu0 %v450
      %v1400 = vpop.f32.mrb[0].mxu0
      %v1401 = vadd.f32 %v1156, %v1400
      %v1402 = vpop.f32.mrb[0].mxu0
      %1403 = vmatprep.mubr.f32.mxu0 %v487
      %1404 = vmatmul.mubr.f32.gmra.mrb[0].mxu0 %v451
      %v1405 = vpop.f32.mrb[0].mxu0
      %v1406 = vadd.f32 %v1161, %v1405
      %v1407 = vpop.f32.mrb[0].mxu0
      %1408 = vmatprep.mubr.f32.mxu0 %v488
      %1409 = vmatmul.mubr.f32.gmra.mrb[0].mxu0 %v452
      %v1410 = vpop.f32.mrb[0].mxu0
      %v1411 = vadd.f32 %v1166, %v1410
      %v1412 = vpop.f32.mrb[0].mxu0
      %1413 = vmatprep.mubr.f32.mxu0 %v489
      %1414 = vmatmul.mubr.f32.gmra.mrb[0].mxu0 %v453
      %v1415 = vpop.f32.mrb[0].mxu0
      %v1416 = vadd.f32 %v1171, %v1415
      %v1417 = vpop.f32.mrb[0].mxu0
      %1418 = vmatprep.mubr.f32.mxu0 %v490
      %1419 = vmatmul.mubr.f32.gmra.mrb[0].mxu0 %v454
      %v1420 = vpop.f32.mrb[0].mxu0
      %v1421 = vadd.f32 %v1176, %v1420
      %v1422 = vpop.f32.mrb[0].mxu0
      %1423 = vmatprep.mubr.f32.mxu0 %v491
      %1424 = vmatmul.mubr.f32.gmra.mrb[0].mxu0 %v455
      %v1425 = vpop.f32.mrb[0].mxu0
      %v1426 = vadd.f32 %v1181, %v1425
      %v1427 = vpop.f32.mrb[0].mxu0
      %1428 = vmatprep.mubr.f32.mxu0 %v492
      %1429 = vmatmul.mubr.f32.gmra.mrb[0].mxu0 %v456
      %v1430 = vpop.f32.mrb[0].mxu0
      %v1431 = vadd.f32 %v1186, %v1430
      %v1432 = vpop.f32.mrb[0].mxu0
      %1433 = vmatprep.mubr.f32.mxu0 %v493
      %1434 = vmatmul.mubr.f32.gmra.mrb[0].mxu0 %v457
      %v1435 = vpop.f32.mrb[0].mxu0
      %v1436 = vadd.f32 %v1191, %v1435
      %v1437 = vpop.f32.mrb[0].mxu0
      %1438 = vmatprep.mubr.f32.mxu0 %v494
      %1439 = vmatmul.mubr.f32.gmra.mrb[0].mxu0 %v458
      %v1440 = vpop.f32.mrb[0].mxu0
      %v1441 = vadd.f32 %v1196, %v1440
      %v1442 = vpop.f32.mrb[0].mxu0
      %1443 = vmatprep.mubr.f32.mxu0 %v495
      %1444 = vmatmul.mubr.f32.gmra.mrb[0].mxu0 %v459
      %v1445 = vpop.f32.mrb[0].mxu0
      %v1446 = vadd.f32 %v1201, %v1445
      %v1447 = vpop.f32.mrb[0].mxu0
      %1448 = vdwg.mxu0
      %1449 = vmatprep.subr.mxu0 0.0
      %1450 = vmatpush1.msra.mxu0 %v666
      %1451 = vmatprep.subr.mxu0 0.0
      %1452 = vmatpush1.msra.mxu0 %v667
      %1453 = vmatprep.subr.mxu0 0.0
      %1454 = vmatpush1.msra.mxu0 %v668
      %1455 = vmatprep.subr.mxu0 0.0
      %1456 = vmatpush1.msra.mxu0 %v669
      %1457 = vmatprep.subr.mxu0 0.0
      %1458 = vmatpush1.msra.mxu0 %v670
      %1459 = vmatprep.subr.mxu0 0.0
      %1460 = vmatpush1.msra.mxu0 %v671
      %1461 = vmatprep.subr.mxu0 0.0
      %1462 = vmatpush1.msra.mxu0 %v672
      %1463 = vmatprep.subr.mxu0 0.0
      %1464 = vmatpush1.msra.mxu0 %v673
      %1465 = vmatprep.subr.mxu0 0.0
      %1466 = vmatpush1.msra.mxu0 %v674
      %1467 = vmatprep.subr.mxu0 0.0
      %1468 = vmatpush1.msra.mxu0 %v675
      %1469 = vmatprep.subr.mxu0 0.0
      %1470 = vmatpush1.msra.mxu0 %v676
      %1471 = vmatprep.subr.mxu0 0.0
      %1472 = vmatpush1.msra.mxu0 %v677
      %1473 = vmatprep.subr.mxu0 0.0
      %1474 = vmatpush1.msra.mxu0 %v678
      %1475 = vmatprep.subr.mxu0 0.0
      %1476 = vmatpush1.msra.mxu0 %v679
      %1477 = vmatprep.subr.mxu0 0.0
      %1478 = vmatpush1.msra.mxu0 %v680
      %1479 = vmatprep.subr.mxu0 0.0
      %1480 = vmatpush1.msra.mxu0 %v681
      %1481 = vmatprep.subr.mxu0 0.0
      %1482 = vmatpush1.msra.mxu0 %v682
      %1483 = vmatprep.subr.mxu0 0.0
      %1484 = vmatpush1.msra.mxu0 %v683
      %1485 = vmatprep.subr.mxu0 0.0
      %1486 = vmatpush1.msra.mxu0 %v684
      %1487 = vmatprep.subr.mxu0 0.0
      %1488 = vmatpush1.msra.mxu0 %v685
      %1489 = vmatprep.subr.mxu0 0.0
      %1490 = vmatpush1.msra.mxu0 %v686
      %1491 = vmatprep.subr.mxu0 0.0
      %1492 = vmatpush1.msra.mxu0 %v687
      %1493 = vmatprep.subr.mxu0 0.0
      %1494 = vmatpush1.msra.mxu0 %v688
      %1495 = vmatprep.subr.mxu0 0.0
      %1496 = vmatpush1.msra.mxu0 %v689
      %1497 = vmatprep.subr.mxu0 0.0
      %1498 = vmatpush1.msra.mxu0 %v690
      %1499 = vmatprep.subr.mxu0 0.0
      %1500 = vmatpush1.msra.mxu0 %v691
      %1501 = vmatprep.subr.mxu0 0.0
      %1502 = vmatpush1.msra.mxu0 %v692
      %1503 = vmatprep.subr.mxu0 0.0
      %1504 = vmatpush1.msra.mxu0 %v693
      %1505 = vmatprep.subr.mxu0 0.0
      %1506 = vmatpush1.msra.mxu0 %v694
      %1507 = vmatprep.subr.mxu0 0.0
      %1508 = vmatpush1.msra.mxu0 %v695
      %1509 = vmatprep.subr.mxu0 0.0
      %1510 = vmatpush1.msra.mxu0 %v696
      %1511 = vmatprep.subr.mxu0 0.0
      %1512 = vmatpush1.msra.mxu0 %v697
      %1513 = vmatprep.mubr.f32.mxu0 %v498
      %1514 = vmatmul.mubr.f32.gmra.mrb[0].mxu0 %v462
      %v1515 = vpop.f32.mrb[0].mxu0
      %v1516 = vadd.f32 %v1271, %v1515
      %v1517 = vpop.f32.mrb[0].mxu0
      %1518 = vmatprep.mubr.f32.mxu0 %v499
      %1519 = vmatmul.mubr.f32.gmra.mrb[0].mxu0 %v463
      %v1520 = vpop.f32.mrb[0].mxu0
      %v1521 = vadd.f32 %v1276, %v1520
      %v1522 = vpop.f32.mrb[0].mxu0
      %1523 = vmatprep.mubr.f32.mxu0 %v500
      %1524 = vmatmul.mubr.f32.gmra.mrb[0].mxu0 %v464
      %v1525 = vpop.f32.mrb[0].mxu0
      %v1526 = vadd.f32 %v1281, %v1525
      %v1527 = vpop.f32.mrb[0].mxu0
      %1528 = vmatprep.mubr.f32.mxu0 %v501
      %1529 = vmatmul.mubr.f32.gmra.mrb[0].mxu0 %v465
      %v1530 = vpop.f32.mrb[0].mxu0
      %v1531 = vadd.f32 %v1286, %v1530
      %v1532 = vpop.f32.mrb[0].mxu0
      %1533 = vmatprep.mubr.f32.mxu0 %v502
      %1534 = vmatmul.mubr.f32.gmra.mrb[0].mxu0 %v466
      %v1535 = vpop.f32.mrb[0].mxu0
      %v1536 = vadd.f32 %v1291, %v1535
      %v1537 = vpop.f32.mrb[0].mxu0
      %1538 = vmatprep.mubr.f32.mxu0 %v503
      %1539 = vmatmul.mubr.f32.gmra.mrb[0].mxu0 %v467
      %v1540 = vpop.f32.mrb[0].mxu0
      %v1541 = vadd.f32 %v1296, %v1540
      %v1542 = vpop.f32.mrb[0].mxu0
      %1543 = vmatprep.mubr.f32.mxu0 %v504
      %1544 = vmatmul.mubr.f32.gmra.mrb[0].mxu0 %v468
      %v1545 = vpop.f32.mrb[0].mxu0
      %v1546 = vadd.f32 %v1301, %v1545
      %v1547 = vpop.f32.mrb[0].mxu0
      %1548 = vmatprep.mubr.f32.mxu0 %v505
      %1549 = vmatmul.mubr.f32.gmra.mrb[0].mxu0 %v469
      %v1550 = vpop.f32.mrb[0].mxu0
      %v1551 = vadd.f32 %v1306, %v1550
      %v1552 = vpop.f32.mrb[0].mxu0
      %1553 = vmatprep.mubr.f32.mxu0 %v506
      %1554 = vmatmul.mubr.f32.gmra.mrb[0].mxu0 %v470
      %v1555 = vpop.f32.mrb[0].mxu0
      %v1556 = vadd.f32 %v1311, %v1555
      %v1557 = vpop.f32.mrb[0].mxu0
      %1558 = vmatprep.mubr.f32.mxu0 %v507
      %1559 = vmatmul.mubr.f32.gmra.mrb[0].mxu0 %v471
      %v1560 = vpop.f32.mrb[0].mxu0
      %v1561 = vadd.f32 %v1316, %v1560
      %v1562 = vpop.f32.mrb[0].mxu0
      %1563 = vmatprep.mubr.f32.mxu0 %v508
      %1564 = vmatmul.mubr.f32.gmra.mrb[0].mxu0 %v472
      %v1565 = vpop.f32.mrb[0].mxu0
      %v1566 = vadd.f32 %v1321, %v1565
      %v1567 = vpop.f32.mrb[0].mxu0
      %1568 = vmatprep.mubr.f32.mxu0 %v509
      %1569 = vmatmul.mubr.f32.gmra.mrb[0].mxu0 %v473
      %v1570 = vpop.f32.mrb[0].mxu0
      %v1571 = vadd.f32 %v1326, %v1570
      %v1572 = vpop.f32.mrb[0].mxu0
      %1573 = vmatprep.mubr.f32.mxu0 %v510
      %1574 = vmatmul.mubr.f32.gmra.mrb[0].mxu0 %v474
      %v1575 = vpop.f32.mrb[0].mxu0
      %v1576 = vadd.f32 %v1331, %v1575
      %v1577 = vpop.f32.mrb[0].mxu0
      %1578 = vmatprep.mubr.f32.mxu0 %v511
      %1579 = vmatmul.mubr.f32.gmra.mrb[0].mxu0 %v475
      %v1580 = vpop.f32.mrb[0].mxu0
      %v1581 = vadd.f32 %v1336, %v1580
      %v1582 = vpop.f32.mrb[0].mxu0
      %1583 = vmatprep.mubr.f32.mxu0 %v512
      %1584 = vmatmul.mubr.f32.gmra.mrb[0].mxu0 %v476
      %v1585 = vpop.f32.mrb[0].mxu0
      %v1586 = vadd.f32 %v1341, %v1585
      %v1587 = vpop.f32.mrb[0].mxu0
      %1588 = vmatprep.mubr.f32.mxu0 %v513
      %1589 = vmatmul.mubr.f32.gmra.mrb[0].mxu0 %v477
      %v1590 = vpop.f32.mrb[0].mxu0
      %v1591 = vadd.f32 %v1346, %v1590
      %v1592 = vpop.f32.mrb[0].mxu0
      %1593 = vmatprep.mubr.f32.mxu0 %v514
      %1594 = vmatmul.mubr.f32.gmra.mrb[0].mxu0 %v478
      %v1595 = vpop.f32.mrb[0].mxu0
      %v1596 = vadd.f32 %v1351, %v1595
      %v1597 = vpop.f32.mrb[0].mxu0
      %1598 = vmatprep.mubr.f32.mxu0 %v515
      %1599 = vmatmul.mubr.f32.gmra.mrb[0].mxu0 %v479
      %v1600 = vpop.f32.mrb[0].mxu0
      %v1601 = vadd.f32 %v1356, %v1600
      %v1602 = vpop.f32.mrb[0].mxu0
      %1603 = vmatprep.mubr.f32.mxu0 %v516
      %1604 = vmatmul.mubr.f32.gmra.mrb[0].mxu0 %v480
      %v1605 = vpop.f32.mrb[0].mxu0
      %v1606 = vadd.f32 %v1361, %v1605
      %v1607 = vpop.f32.mrb[0].mxu0
      %1608 = vmatprep.mubr.f32.mxu0 %v517
      %1609 = vmatmul.mubr.f32.gmra.mrb[0].mxu0 %v481
      %v1610 = vpop.f32.mrb[0].mxu0
      %v1611 = vadd.f32 %v1366, %v1610
      %v1612 = vpop.f32.mrb[0].mxu0
      %1613 = vmatprep.mubr.f32.mxu0 %v518
      %1614 = vmatmul.mubr.f32.gmra.mrb[0].mxu0 %v482
      %v1615 = vpop.f32.mrb[0].mxu0
      %v1616 = vadd.f32 %v1371, %v1615
      %v1617 = vpop.f32.mrb[0].mxu0
      %1618 = vmatprep.mubr.f32.mxu0 %v519
      %1619 = vmatmul.mubr.f32.gmra.mrb[0].mxu0 %v483
      %v1620 = vpop.f32.mrb[0].mxu0
      %v1621 = vadd.f32 %v1376, %v1620
      %v1622 = vpop.f32.mrb[0].mxu0
      %1623 = vmatprep.mubr.f32.mxu0 %v520
      %1624 = vmatmul.mubr.f32.gmra.mrb[0].mxu0 %v484
      %v1625 = vpop.f32.mrb[0].mxu0
      %v1626 = vadd.f32 %v1381, %v1625
      %v1627 = vpop.f32.mrb[0].mxu0
      %1628 = vmatprep.mubr.f32.mxu0 %v521
      %1629 = vmatmul.mubr.f32.gmra.mrb[0].mxu0 %v485
      %v1630 = vpop.f32.mrb[0].mxu0
      %v1631 = vadd.f32 %v1386, %v1630
      %v1632 = vpop.f32.mrb[0].mxu0
      %1633 = vmatprep.mubr.f32.mxu0 %v522
      %1634 = vmatmul.mubr.f32.gmra.mrb[0].mxu0 %v486
      %v1635 = vpop.f32.mrb[0].mxu0
      %v1636 = vadd.f32 %v1391, %v1635
      %v1637 = vpop.f32.mrb[0].mxu0
      %1638 = vmatprep.mubr.f32.mxu0 %v523
      %1639 = vmatmul.mubr.f32.gmra.mrb[0].mxu0 %v487
      %v1640 = vpop.f32.mrb[0].mxu0
      %v1641 = vadd.f32 %v1396, %v1640
      %v1642 = vpop.f32.mrb[0].mxu0
      %1643 = vmatprep.mubr.f32.mxu0 %v524
      %1644 = vmatmul.mubr.f32.gmra.mrb[0].mxu0 %v488
      %v1645 = vpop.f32.mrb[0].mxu0
      %v1646 = vadd.f32 %v1401, %v1645
      %v1647 = vpop.f32.mrb[0].mxu0
      %1648 = vmatprep.mubr.f32.mxu0 %v525
      %1649 = vmatmul.mubr.f32.gmra.mrb[0].mxu0 %v489
      %v1650 = vpop.f32.mrb[0].mxu0
      %v1651 = vadd.f32 %v1406, %v1650
      %v1652 = vpop.f32.mrb[0].mxu0
      %1653 = vmatprep.mubr.f32.mxu0 %v526
      %1654 = vmatmul.mubr.f32.gmra.mrb[0].mxu0 %v490
      %v1655 = vpop.f32.mrb[0].mxu0
      %v1656 = vadd.f32 %v1411, %v1655
      %v1657 = vpop.f32.mrb[0].mxu0
      %1658 = vmatprep.mubr.f32.mxu0 %v527
      %1659 = vmatmul.mubr.f32.gmra.mrb[0].mxu0 %v491
      %v1660 = vpop.f32.mrb[0].mxu0
      %v1661 = vadd.f32 %v1416, %v1660
      %v1662 = vpop.f32.mrb[0].mxu0
      %1663 = vmatprep.mubr.f32.mxu0 %v528
      %1664 = vmatmul.mubr.f32.gmra.mrb[0].mxu0 %v492
      %v1665 = vpop.f32.mrb[0].mxu0
      %v1666 = vadd.f32 %v1421, %v1665
      %v1667 = vpop.f32.mrb[0].mxu0
      %1668 = vmatprep.mubr.f32.mxu0 %v529
      %1669 = vmatmul.mubr.f32.gmra.mrb[0].mxu0 %v493
      %v1670 = vpop.f32.mrb[0].mxu0
      %v1671 = vadd.f32 %v1426, %v1670
      %v1672 = vpop.f32.mrb[0].mxu0
      %1673 = vmatprep.mubr.f32.mxu0 %v530
      %1674 = vmatmul.mubr.f32.gmra.mrb[0].mxu0 %v494
      %v1675 = vpop.f32.mrb[0].mxu0
      %v1676 = vadd.f32 %v1431, %v1675
      %v1677 = vpop.f32.mrb[0].mxu0
      %1678 = vmatprep.mubr.f32.mxu0 %v531
      %1679 = vmatmul.mubr.f32.gmra.mrb[0].mxu0 %v495
      %v1680 = vpop.f32.mrb[0].mxu0
      %v1681 = vadd.f32 %v1436, %v1680
      %v1682 = vpop.f32.mrb[0].mxu0
      %1683 = vmatprep.mubr.f32.mxu0 %v532
      %1684 = vmatmul.mubr.f32.gmra.mrb[0].mxu0 %v496
      %v1685 = vpop.f32.mrb[0].mxu0
      %v1686 = vadd.f32 %v1441, %v1685
      %v1687 = vpop.f32.mrb[0].mxu0
      %1688 = vmatprep.mubr.f32.mxu0 %v533
      %1689 = vmatmul.mubr.f32.gmra.mrb[0].mxu0 %v497
      %v1690 = vpop.f32.mrb[0].mxu0
      %v1691 = vadd.f32 %v1446, %v1690
      %v1692 = vpop.f32.mrb[0].mxu0
      %1693 = vdwg.mxu0
      %1694 = vmatprep.subr.mxu0 0.0
      %1695 = vmatpush1.msra.mxu0 %v698
      %1696 = vmatprep.subr.mxu0 0.0
      %1697 = vmatpush1.msra.mxu0 %v699
      %1698 = vmatprep.subr.mxu0 0.0
      %1699 = vmatpush1.msra.mxu0 %v700
      %1700 = vmatprep.subr.mxu0 0.0
      %1701 = vmatpush1.msra.mxu0 %v701
      %1702 = vmatprep.subr.mxu0 0.0
      %1703 = vmatpush1.msra.mxu0 %v702
      %1704 = vmatprep.subr.mxu0 0.0
      %1705 = vmatpush1.msra.mxu0 %v703
      %1706 = vmatprep.subr.mxu0 0.0
      %1707 = vmatpush1.msra.mxu0 %v704
      %1708 = vmatprep.subr.mxu0 0.0
      %1709 = vmatpush1.msra.mxu0 %v705
      %1710 = vmatprep.subr.mxu0 0.0
      %1711 = vmatpush1.msra.mxu0 %v706
      %1712 = vmatprep.subr.mxu0 0.0
      %1713 = vmatpush1.msra.mxu0 %v707
      %1714 = vmatprep.subr.mxu0 0.0
      %1715 = vmatpush1.msra.mxu0 %v708
      %1716 = vmatprep.subr.mxu0 0.0
      %1717 = vmatpush1.msra.mxu0 %v709
      %1718 = vmatprep.subr.mxu0 0.0
      %1719 = vmatpush1.msra.mxu0 %v710
      %1720 = vmatprep.subr.mxu0 0.0
      %1721 = vmatpush1.msra.mxu0 %v711
      %1722 = vmatprep.subr.mxu0 0.0
      %1723 = vmatpush1.msra.mxu0 %v712
      %1724 = vmatprep.subr.mxu0 0.0
      %1725 = vmatpush1.msra.mxu0 %v713
      %1726 = vmatprep.subr.mxu0 0.0
      %1727 = vmatpush1.msra.mxu0 0.0
      %1728 = vmatprep.subr.mxu0 0.0
      %1729 = vmatpush1.msra.mxu0 0.0
      %1730 = vmatprep.subr.mxu0 0.0
      %1731 = vmatpush1.msra.mxu0 0.0
      %1732 = vmatprep.subr.mxu0 0.0
      %1733 = vmatpush1.msra.mxu0 0.0
      %1734 = vmatprep.subr.mxu0 0.0
      %1735 = vmatpush1.msra.mxu0 0.0
      %1736 = vmatprep.subr.mxu0 0.0
      %1737 = vmatpush1.msra.mxu0 0.0
      %1738 = vmatprep.subr.mxu0 0.0
      %1739 = vmatpush1.msra.mxu0 0.0
      %1740 = vmatprep.subr.mxu0 0.0
      %1741 = vmatpush1.msra.mxu0 0.0
      %1742 = vmatprep.subr.mxu0 0.0
      %1743 = vmatpush1.msra.mxu0 0.0
      %1744 = vmatprep.subr.mxu0 0.0
      %1745 = vmatpush1.msra.mxu0 0.0
      %1746 = vmatprep.subr.mxu0 0.0
      %1747 = vmatpush1.msra.mxu0 0.0
      %1748 = vmatprep.subr.mxu0 0.0
      %1749 = vmatpush1.msra.mxu0 0.0
      %1750 = vmatprep.subr.mxu0 0.0
      %1751 = vmatpush1.msra.mxu0 0.0
      %1752 = vmatprep.subr.mxu0 0.0
      %1753 = vmatpush1.msra.mxu0 0.0
      %1754 = vmatprep.subr.mxu0 0.0
      %1755 = vmatpush1.msra.mxu0 0.0
      %1756 = vmatprep.subr.mxu0 0.0
      %1757 = vmatpush1.msra.mxu0 0.0
      %1758 = vmatprep.mubr.f32.mxu0 0.0
      %1759 = vmatmul.mubr.f32.gmra.mrb[0].mxu0 %v534
      %v1760 = vpop.f32.mrb[0].mxu0
      %v1761 = vadd.f32 %v1516, %v1760
      %v1762 = vpop.f32.mrb[0].mxu0
      %1763 = vmatprep.mubr.f32.mxu0 0.0
      %1764 = vmatmul.mubr.f32.gmra.mrb[0].mxu0 %v535
      %v1765 = vpop.f32.mrb[0].mxu0
      %v1766 = vadd.f32 %v1521, %v1765
      %v1767 = vpop.f32.mrb[0].mxu0
      %1768 = vmatprep.mubr.f32.mxu0 0.0
      %1769 = vmatmul.mubr.f32.gmra.mrb[0].mxu0 %v536
      %v1770 = vpop.f32.mrb[0].mxu0
      %v1771 = vadd.f32 %v1526, %v1770
      %v1772 = vpop.f32.mrb[0].mxu0
      %1773 = vmatprep.mubr.f32.mxu0 0.0
      %1774 = vmatmul.mubr.f32.gmra.mrb[0].mxu0 %v537
      %v1775 = vpop.f32.mrb[0].mxu0
      %v1776 = vadd.f32 %v1531, %v1775
      %v1777 = vpop.f32.mrb[0].mxu0
      %1778 = vmatprep.mubr.f32.mxu0 0.0
      %1779 = vmatmul.mubr.f32.gmra.mrb[0].mxu0 %v538
      %v1780 = vpop.f32.mrb[0].mxu0
      %v1781 = vadd.f32 %v1536, %v1780
      %v1782 = vpop.f32.mrb[0].mxu0
      %1783 = vmatprep.mubr.f32.mxu0 0.0
      %1784 = vmatmul.mubr.f32.gmra.mrb[0].mxu0 %v539
      %v1785 = vpop.f32.mrb[0].mxu0
      %v1786 = vadd.f32 %v1541, %v1785
      %v1787 = vpop.f32.mrb[0].mxu0
      %1788 = vmatprep.mubr.f32.mxu0 0.0
      %1789 = vmatmul.mubr.f32.gmra.mrb[0].mxu0 %v540
      %v1790 = vpop.f32.mrb[0].mxu0
      %v1791 = vadd.f32 %v1546, %v1790
      %v1792 = vpop.f32.mrb[0].mxu0
      %1793 = vmatprep.mubr.f32.mxu0 0.0
      %1794 = vmatmul.mubr.f32.gmra.mrb[0].mxu0 %v541
      %v1795 = vpop.f32.mrb[0].mxu0
      %v1796 = vadd.f32 %v1551, %v1795
      %v1797 = vpop.f32.mrb[0].mxu0
      %1798 = vmatprep.mubr.f32.mxu0 0.0
      %1799 = vmatmul.mubr.f32.gmra.mrb[0].mxu0 %v542
      %v1800 = vpop.f32.mrb[0].mxu0
      %v1801 = vadd.f32 %v1556, %v1800
      %v1802 = vpop.f32.mrb[0].mxu0
      %1803 = vmatprep.mubr.f32.mxu0 0.0
      %1804 = vmatmul.mubr.f32.gmra.mrb[0].mxu0 %v543
      %v1805 = vpop.f32.mrb[0].mxu0
      %v1806 = vadd.f32 %v1561, %v1805
      %v1807 = vpop.f32.mrb[0].mxu0
      %1808 = vmatprep.mubr.f32.mxu0 0.0
      %1809 = vmatmul.mubr.f32.gmra.mrb[0].mxu0 %v544
      %v1810 = vpop.f32.mrb[0].mxu0
      %v1811 = vadd.f32 %v1566, %v1810
      %v1812 = vpop.f32.mrb[0].mxu0
      %1813 = vmatprep.mubr.f32.mxu0 0.0
      %1814 = vmatmul.mubr.f32.gmra.mrb[0].mxu0 %v545
      %v1815 = vpop.f32.mrb[0].mxu0
      %v1816 = vadd.f32 %v1571, %v1815
      %v1817 = vpop.f32.mrb[0].mxu0
      %1818 = vmatprep.mubr.f32.mxu0 0.0
      %1819 = vmatmul.mubr.f32.gmra.mrb[0].mxu0 %v546
      %v1820 = vpop.f32.mrb[0].mxu0
      %v1821 = vadd.f32 %v1576, %v1820
      %v1822 = vpop.f32.mrb[0].mxu0
      %1823 = vmatprep.mubr.f32.mxu0 0.0
      %1824 = vmatmul.mubr.f32.gmra.mrb[0].mxu0 %v547
      %v1825 = vpop.f32.mrb[0].mxu0
      %v1826 = vadd.f32 %v1581, %v1825
      %v1827 = vpop.f32.mrb[0].mxu0
      %1828 = vmatprep.mubr.f32.mxu0 0.0
      %1829 = vmatmul.mubr.f32.gmra.mrb[0].mxu0 %v548
      %v1830 = vpop.f32.mrb[0].mxu0
      %v1831 = vadd.f32 %v1586, %v1830
      %v1832 = vpop.f32.mrb[0].mxu0
      %1833 = vmatprep.mubr.f32.mxu0 0.0
      %1834 = vmatmul.mubr.f32.gmra.mrb[0].mxu0 %v549
      %v1835 = vpop.f32.mrb[0].mxu0
      %v1836 = vadd.f32 %v1591, %v1835
      %v1837 = vpop.f32.mrb[0].mxu0
      %1838 = vmatprep.mubr.f32.mxu0 0.0
      %1839 = vmatmul.mubr.f32.gmra.mrb[0].mxu0 %v550
      %v1840 = vpop.f32.mrb[0].mxu0
      %v1841 = vadd.f32 %v1596, %v1840
      %v1842 = vpop.f32.mrb[0].mxu0
      %1843 = vmatprep.mubr.f32.mxu0 0.0
      %1844 = vmatmul.mubr.f32.gmra.mrb[0].mxu0 %v551
      %v1845 = vpop.f32.mrb[0].mxu0
      %v1846 = vadd.f32 %v1601, %v1845
      %v1847 = vpop.f32.mrb[0].mxu0
      %1848 = vmatprep.mubr.f32.mxu0 0.0
      %1849 = vmatmul.mubr.f32.gmra.mrb[0].mxu0 %v552
      %v1850 = vpop.f32.mrb[0].mxu0
      %v1851 = vadd.f32 %v1606, %v1850
      %v1852 = vpop.f32.mrb[0].mxu0
      %1853 = vmatprep.mubr.f32.mxu0 0.0
      %1854 = vmatmul.mubr.f32.gmra.mrb[0].mxu0 %v553
      %v1855 = vpop.f32.mrb[0].mxu0
      %v1856 = vadd.f32 %v1611, %v1855
      %v1857 = vpop.f32.mrb[0].mxu0
      %1858 = vmatprep.mubr.f32.mxu0 0.0
      %1859 = vmatmul.mubr.f32.gmra.mrb[0].mxu0 %v554
      %v1860 = vpop.f32.mrb[0].mxu0
      %v1861 = vadd.f32 %v1616, %v1860
      %v1862 = vpop.f32.mrb[0].mxu0
      %1863 = vmatprep.mubr.f32.mxu0 0.0
      %1864 = vmatmul.mubr.f32.gmra.mrb[0].mxu0 %v555
      %v1865 = vpop.f32.mrb[0].mxu0
      %v1866 = vadd.f32 %v1621, %v1865
      %v1867 = vpop.f32.mrb[0].mxu0
      %1868 = vmatprep.mubr.f32.mxu0 0.0
      %1869 = vmatmul.mubr.f32.gmra.mrb[0].mxu0 %v556
      %v1870 = vpop.f32.mrb[0].mxu0
      %v1871 = vadd.f32 %v1626, %v1870
      %v1872 = vpop.f32.mrb[0].mxu0
      %1873 = vmatprep.mubr.f32.mxu0 0.0
      %1874 = vmatmul.mubr.f32.gmra.mrb[0].mxu0 %v557
      %v1875 = vpop.f32.mrb[0].mxu0
      %v1876 = vadd.f32 %v1631, %v1875
      %v1877 = vpop.f32.mrb[0].mxu0
      %1878 = vmatprep.mubr.f32.mxu0 0.0
      %1879 = vmatmul.mubr.f32.gmra.mrb[0].mxu0 %v558
      %v1880 = vpop.f32.mrb[0].mxu0
      %v1881 = vadd.f32 %v1636, %v1880
      %v1882 = vpop.f32.mrb[0].mxu0
      %1883 = vmatprep.mubr.f32.mxu0 0.0
      %1884 = vmatmul.mubr.f32.gmra.mrb[0].mxu0 %v559
      %v1885 = vpop.f32.mrb[0].mxu0
      %v1886 = vadd.f32 %v1641, %v1885
      %v1887 = vpop.f32.mrb[0].mxu0
      %1888 = vmatprep.mubr.f32.mxu0 0.0
      %1889 = vmatmul.mubr.f32.gmra.mrb[0].mxu0 %v560
      %v1890 = vpop.f32.mrb[0].mxu0
      %v1891 = vadd.f32 %v1646, %v1890
      %v1892 = vpop.f32.mrb[0].mxu0
      %1893 = vmatprep.mubr.f32.mxu0 0.0
      %1894 = vmatmul.mubr.f32.gmra.mrb[0].mxu0 %v561
      %v1895 = vpop.f32.mrb[0].mxu0
      %v1896 = vadd.f32 %v1651, %v1895
      %v1897 = vpop.f32.mrb[0].mxu0
      %1898 = vmatprep.mubr.f32.mxu0 0.0
      %1899 = vmatmul.mubr.f32.gmra.mrb[0].mxu0 %v562
      %v1900 = vpop.f32.mrb[0].mxu0
      %v1901 = vadd.f32 %v1656, %v1900
      %v1902 = vpop.f32.mrb[0].mxu0
      %1903 = vmatprep.mubr.f32.mxu0 0.0
      %1904 = vmatmul.mubr.f32.gmra.mrb[0].mxu0 %v563
      %v1905 = vpop.f32.mrb[0].mxu0
      %v1906 = vadd.f32 %v1661, %v1905
      %v1907 = vpop.f32.mrb[0].mxu0
      %1908 = vmatprep.mubr.f32.mxu0 0.0
      %1909 = vmatmul.mubr.f32.gmra.mrb[0].mxu0 %v564
      %v1910 = vpop.f32.mrb[0].mxu0
      %v1911 = vadd.f32 %v1666, %v1910
      %v1912 = vpop.f32.mrb[0].mxu0
      %1913 = vmatprep.mubr.f32.mxu0 0.0
      %1914 = vmatmul.mubr.f32.gmra.mrb[0].mxu0 %v565
      %v1915 = vpop.f32.mrb[0].mxu0
      %v1916 = vadd.f32 %v1671, %v1915
      %v1917 = vpop.f32.mrb[0].mxu0
      %1918 = vmatprep.mubr.f32.mxu0 0.0
      %1919 = vmatmul.mubr.f32.gmra.mrb[0].mxu0 %v566
      %v1920 = vpop.f32.mrb[0].mxu0
      %v1921 = vadd.f32 %v1676, %v1920
      %v1922 = vpop.f32.mrb[0].mxu0
      %1923 = vmatprep.mubr.f32.mxu0 0.0
      %1924 = vmatmul.mubr.f32.gmra.mrb[0].mxu0 %v567
      %v1925 = vpop.f32.mrb[0].mxu0
      %v1926 = vadd.f32 %v1681, %v1925
      %v1927 = vpop.f32.mrb[0].mxu0
      %1928 = vmatprep.mubr.f32.mxu0 0.0
      %1929 = vmatmul.mubr.f32.gmra.mrb[0].mxu0 %v568
      %v1930 = vpop.f32.mrb[0].mxu0
      %v1931 = vadd.f32 %v1686, %v1930
      %v1932 = vpop.f32.mrb[0].mxu0
      %1933 = vmatprep.mubr.f32.mxu0 0.0
      %1934 = vmatmul.mubr.f32.gmra.mrb[0].mxu0 %v569
      %v1935 = vpop.f32.mrb[0].mxu0
      %v1936 = vadd.f32 %v1691, %v1935
      %v1937 = vpop.f32.mrb[0].mxu0
      %1938 = vdwg.mxu0
      %v1939 = vld [vmem:[%s3] sm:$0x1]
      %v1941 = vlaneseq
      %v1942 = vshrl.u32 %v1941, 7
      %v1943 = vsub.s32 0, %v1942
      %v1944 = vrot.slane %v1939, %v1943
      %v1946 = vmul.f32 %v1761, %v1944
      %v1947 = vmul.f32 %v1766, %v1944
      %v1948 = vmul.f32 %v1771, %v1944
      %v1949 = vmul.f32 %v1776, %v1944
      %v1950 = vmul.f32 %v1781, %v1944
      %v1951 = vmul.f32 %v1786, %v1944
      %v1952 = vmul.f32 %v1791, %v1944
      %v1953 = vmul.f32 %v1796, %v1944
      %v1954 = vmul.f32 %v1801, %v1944
      %v1955 = vmul.f32 %v1806, %v1944
      %v1956 = vmul.f32 %v1811, %v1944
      %v1957 = vmul.f32 %v1816, %v1944
      %v1958 = vmul.f32 %v1821, %v1944
      %v1959 = vmul.f32 %v1826, %v1944
      %v1960 = vmul.f32 %v1831, %v1944
      %v1961 = vmul.f32 %v1836, %v1944
      %v1962 = vmul.f32 %v1841, %v1944
      %v1963 = vmul.f32 %v1846, %v1944
      %v1964 = vmul.f32 %v1851, %v1944
      %v1965 = vmul.f32 %v1856, %v1944
      %v1966 = vmul.f32 %v1861, %v1944
      %v1967 = vmul.f32 %v1866, %v1944
      %v1968 = vmul.f32 %v1871, %v1944
      %v1969 = vmul.f32 %v1876, %v1944
      %v1970 = vmul.f32 %v1881, %v1944
      %v1971 = vmul.f32 %v1886, %v1944
      %v1972 = vmul.f32 %v1891, %v1944
      %v1973 = vmul.f32 %v1896, %v1944
      %v1974 = vmul.f32 %v1901, %v1944
      %v1975 = vmul.f32 %v1906, %v1944
      %v1976 = vmul.f32 %v1911, %v1944
      %v1977 = vmul.f32 %v1916, %v1944
      %v1978 = vmul.f32 %v1921, %v1944
      %v1979 = vmul.f32 %v1926, %v1944
      %v1980 = vmul.f32 %v1931, %v1944
      %v1981 = vmul.f32 %v1936, %v1944
      %v1982 = vld [vmem:[%s4] sm:$0x1]
      %v1984 = vlaneseq
      %v1985 = vshrl.u32 %v1984, 7
      %v1986 = vsub.s32 0, %v1985
      %v1987 = vrot.slane %v1982, %v1986
      %v1989 = vadd.f32 %v1946, %v1987
      %v1990 = vadd.f32 %v1947, %v1987
      %v1991 = vadd.f32 %v1948, %v1987
      %v1992 = vadd.f32 %v1949, %v1987
      %v1993 = vadd.f32 %v1950, %v1987
      %v1994 = vadd.f32 %v1951, %v1987
      %v1995 = vadd.f32 %v1952, %v1987
      %v1996 = vadd.f32 %v1953, %v1987
      %v1997 = vadd.f32 %v1954, %v1987
      %v1998 = vadd.f32 %v1955, %v1987
      %v1999 = vadd.f32 %v1956, %v1987
      %v2000 = vadd.f32 %v1957, %v1987
      %v2001 = vadd.f32 %v1958, %v1987
      %v2002 = vadd.f32 %v1959, %v1987
      %v2003 = vadd.f32 %v1960, %v1987
      %v2004 = vadd.f32 %v1961, %v1987
      %v2005 = vadd.f32 %v1962, %v1987
      %v2006 = vadd.f32 %v1963, %v1987
      %v2007 = vadd.f32 %v1964, %v1987
      %v2008 = vadd.f32 %v1965, %v1987
      %v2009 = vadd.f32 %v1966, %v1987
      %v2010 = vadd.f32 %v1967, %v1987
      %v2011 = vadd.f32 %v1968, %v1987
      %v2012 = vadd.f32 %v1969, %v1987
      %v2013 = vadd.f32 %v1970, %v1987
      %v2014 = vadd.f32 %v1971, %v1987
      %v2015 = vadd.f32 %v1972, %v1987
      %v2016 = vadd.f32 %v1973, %v1987
      %v2017 = vadd.f32 %v1974, %v1987
      %v2018 = vadd.f32 %v1975, %v1987
      %v2019 = vadd.f32 %v1976, %v1987
      %v2020 = vadd.f32 %v1977, %v1987
      %v2021 = vadd.f32 %v1978, %v1987
      %v2022 = vadd.f32 %v1979, %v1987
      %v2023 = vadd.f32 %v1980, %v1987
      %v2024 = vadd.f32 %v1981, %v1987
      %v2025 = vmax.f32 %v1989, 0.0
      %v2026 = vmax.f32 %v1990, 0.0
      %v2027 = vmax.f32 %v1991, 0.0
      %v2028 = vmax.f32 %v1992, 0.0
      %v2029 = vmax.f32 %v1993, 0.0
      %v2030 = vmax.f32 %v1994, 0.0
      %v2031 = vmax.f32 %v1995, 0.0
      %v2032 = vmax.f32 %v1996, 0.0
      %v2033 = vmax.f32 %v1997, 0.0
      %v2034 = vmax.f32 %v1998, 0.0
      %v2035 = vmax.f32 %v1999, 0.0
      %v2036 = vmax.f32 %v2000, 0.0
      %v2037 = vmax.f32 %v2001, 0.0
      %v2038 = vmax.f32 %v2002, 0.0
      %v2039 = vmax.f32 %v2003, 0.0
      %v2040 = vmax.f32 %v2004, 0.0
      %v2041 = vmax.f32 %v2005, 0.0
      %v2042 = vmax.f32 %v2006, 0.0
      %v2043 = vmax.f32 %v2007, 0.0
      %v2044 = vmax.f32 %v2008, 0.0
      %v2045 = vmax.f32 %v2009, 0.0
      %v2046 = vmax.f32 %v2010, 0.0
      %v2047 = vmax.f32 %v2011, 0.0
      %v2048 = vmax.f32 %v2012, 0.0
      %v2049 = vmax.f32 %v2013, 0.0
      %v2050 = vmax.f32 %v2014, 0.0
      %v2051 = vmax.f32 %v2015, 0.0
      %v2052 = vmax.f32 %v2016, 0.0
      %v2053 = vmax.f32 %v2017, 0.0
      %v2054 = vmax.f32 %v2018, 0.0
      %v2055 = vmax.f32 %v2019, 0.0
      %v2056 = vmax.f32 %v2020, 0.0
      %v2057 = vmax.f32 %v2021, 0.0
      %v2058 = vmax.f32 %v2022, 0.0
      %v2059 = vmax.f32 %v2023, 0.0
      %v2060 = vmax.f32 %v2024, 0.0
      %v2061 = vld [vmem:[%s7] sm:$0xff]
      %v2062 = vld [vmem:[%s7 + $0x8] sm:$0xff]
      %v2063 = vld [vmem:[%s7 + $0x10] sm:$0xff]
      %v2064 = vld [vmem:[%s7 + $0x18] sm:$0xff]
      %v2065 = vld [vmem:[%s7 + $0x20] sm:$0xff]
      %v2066 = vld [vmem:[%s7 + $0x28] sm:$0xff]
      %v2067 = vld [vmem:[%s7 + $0x30] sm:$0xff]
      %v2068 = vld [vmem:[%s7 + $0x38] sm:$0xff]
      %v2069 = vld [vmem:[%s7 + $0x40] sm:$0xff]
      %v2070 = vld [vmem:[%s7 + $0x48] sm:$0xff]
      %v2071 = vld [vmem:[%s7 + $0x50] sm:$0xff]
      %v2072 = vld [vmem:[%s7 + $0x58] sm:$0xff]
      %v2073 = vld [vmem:[%s7 + $0x60] sm:$0xff]
      %v2074 = vld [vmem:[%s7 + $0x68] sm:$0xff]
      %v2075 = vld [vmem:[%s7 + $0x70] sm:$0xff]
      %v2076 = vld [vmem:[%s7 + $0x78] sm:$0xff]
      %v2077 = vld [vmem:[%s7 + $0x80] sm:$0xff]
      %v2078 = vld [vmem:[%s7 + $0x88] sm:$0xff]
      %v2079 = vld [vmem:[%s7 + $0x90] sm:$0xff]
      %v2080 = vld [vmem:[%s7 + $0x98] sm:$0xff]
      %v2081 = vld [vmem:[%s7 + $0xa0] sm:$0xff]
      %v2082 = vld [vmem:[%s7 + $0xa8] sm:$0xff]
      %v2083 = vld [vmem:[%s7 + $0xb0] sm:$0xff]
      %v2084 = vld [vmem:[%s7 + $0xb8] sm:$0xff]
      %v2085 = vld [vmem:[%s7 + $0xc0] sm:$0xff]
      %v2086 = vld [vmem:[%s7 + $0xc8] sm:$0xff]
      %v2087 = vld [vmem:[%s7 + $0xd0] sm:$0xff]
      %v2088 = vld [vmem:[%s7 + $0xd8] sm:$0xff]
      %v2089 = vld [vmem:[%s7 + $0xe0] sm:$0xff]
      %v2090 = vld [vmem:[%s7 + $0xe8] sm:$0xff]
      %v2091 = vld [vmem:[%s7 + $0xf0] sm:$0xff]
      %v2092 = vld [vmem:[%s7 + $0xf8] sm:$0xff]
      %v2093 = vld [vmem:[%s7 + $0x100] sm:$0xff]
      %v2094 = vld [vmem:[%s7 + $0x108] sm:$0xff]
      %v2095 = vld [vmem:[%s7 + $0x110] sm:$0xff]
      %v2096 = vld [vmem:[%s7 + $0x118] sm:$0xff]
      %2098 = vset.pattern.permute.xlu0 0
      %2099 = vperm.xlu0 %2098, %v2061
      %v2100 = vpop.permute.xlu0 %2099
      %2103 = vset.pattern.permute.xlu0 0
      %2104 = vperm.xlu0 %2103, %v2062
      %v2105 = vpop.permute.xlu0 %2104
      %2108 = vset.pattern.permute.xlu0 0
      %2109 = vperm.xlu0 %2108, %v2063
      %v2110 = vpop.permute.xlu0 %2109
      %2113 = vset.pattern.permute.xlu0 0
      %2114 = vperm.xlu0 %2113, %v2064
      %v2115 = vpop.permute.xlu0 %2114
      %2118 = vset.pattern.permute.xlu0 0
      %2119 = vperm.xlu0 %2118, %v2065
      %v2120 = vpop.permute.xlu0 %2119
      %2123 = vset.pattern.permute.xlu0 0
      %2124 = vperm.xlu0 %2123, %v2066
      %v2125 = vpop.permute.xlu0 %2124
      %2128 = vset.pattern.permute.xlu0 0
      %2129 = vperm.xlu0 %2128, %v2067
      %v2130 = vpop.permute.xlu0 %2129
      %2133 = vset.pattern.permute.xlu0 0
      %2134 = vperm.xlu0 %2133, %v2068
      %v2135 = vpop.permute.xlu0 %2134
      %2138 = vset.pattern.permute.xlu0 0
      %2139 = vperm.xlu0 %2138, %v2069
      %v2140 = vpop.permute.xlu0 %2139
      %2143 = vset.pattern.permute.xlu0 0
      %2144 = vperm.xlu0 %2143, %v2070
      %v2145 = vpop.permute.xlu0 %2144
      %2148 = vset.pattern.permute.xlu0 0
      %2149 = vperm.xlu0 %2148, %v2071
      %v2150 = vpop.permute.xlu0 %2149
      %2153 = vset.pattern.permute.xlu0 0
      %2154 = vperm.xlu0 %2153, %v2072
      %v2155 = vpop.permute.xlu0 %2154
      %2158 = vset.pattern.permute.xlu0 0
      %2159 = vperm.xlu0 %2158, %v2073
      %v2160 = vpop.permute.xlu0 %2159
      %2163 = vset.pattern.permute.xlu0 0
      %2164 = vperm.xlu0 %2163, %v2074
      %v2165 = vpop.permute.xlu0 %2164
      %2168 = vset.pattern.permute.xlu0 0
      %2169 = vperm.xlu0 %2168, %v2075
      %v2170 = vpop.permute.xlu0 %2169
      %2173 = vset.pattern.permute.xlu0 0
      %2174 = vperm.xlu0 %2173, %v2076
      %v2175 = vpop.permute.xlu0 %2174
      %2178 = vset.pattern.permute.xlu0 0
      %2179 = vperm.xlu0 %2178, %v2077
      %v2180 = vpop.permute.xlu0 %2179
      %2183 = vset.pattern.permute.xlu0 0
      %2184 = vperm.xlu0 %2183, %v2078
      %v2185 = vpop.permute.xlu0 %2184
      %2188 = vset.pattern.permute.xlu0 0
      %2189 = vperm.xlu0 %2188, %v2079
      %v2190 = vpop.permute.xlu0 %2189
      %2193 = vset.pattern.permute.xlu0 0
      %2194 = vperm.xlu0 %2193, %v2080
      %v2195 = vpop.permute.xlu0 %2194
      %2198 = vset.pattern.permute.xlu0 0
      %2199 = vperm.xlu0 %2198, %v2081
      %v2200 = vpop.permute.xlu0 %2199
      %2203 = vset.pattern.permute.xlu0 0
      %2204 = vperm.xlu0 %2203, %v2082
      %v2205 = vpop.permute.xlu0 %2204
      %2208 = vset.pattern.permute.xlu0 0
      %2209 = vperm.xlu0 %2208, %v2083
      %v2210 = vpop.permute.xlu0 %2209
      %2213 = vset.pattern.permute.xlu0 0
      %2214 = vperm.xlu0 %2213, %v2084
      %v2215 = vpop.permute.xlu0 %2214
      %2218 = vset.pattern.permute.xlu0 0
      %2219 = vperm.xlu0 %2218, %v2085
      %v2220 = vpop.permute.xlu0 %2219
      %2223 = vset.pattern.permute.xlu0 0
      %2224 = vperm.xlu0 %2223, %v2086
      %v2225 = vpop.permute.xlu0 %2224
      %2228 = vset.pattern.permute.xlu0 0
      %2229 = vperm.xlu0 %2228, %v2087
      %v2230 = vpop.permute.xlu0 %2229
      %2233 = vset.pattern.permute.xlu0 0
      %2234 = vperm.xlu0 %2233, %v2088
      %v2235 = vpop.permute.xlu0 %2234
      %2238 = vset.pattern.permute.xlu0 0
      %2239 = vperm.xlu0 %2238, %v2089
      %v2240 = vpop.permute.xlu0 %2239
      %2243 = vset.pattern.permute.xlu0 0
      %2244 = vperm.xlu0 %2243, %v2090
      %v2245 = vpop.permute.xlu0 %2244
      %2248 = vset.pattern.permute.xlu0 0
      %2249 = vperm.xlu0 %2248, %v2091
      %v2250 = vpop.permute.xlu0 %2249
      %2253 = vset.pattern.permute.xlu0 0
      %2254 = vperm.xlu0 %2253, %v2092
      %v2255 = vpop.permute.xlu0 %2254
      %2258 = vset.pattern.permute.xlu0 0
      %2259 = vperm.xlu0 %2258, %v2093
      %v2260 = vpop.permute.xlu0 %2259
      %2263 = vset.pattern.permute.xlu0 0
      %2264 = vperm.xlu0 %2263, %v2094
      %v2265 = vpop.permute.xlu0 %2264
      %2268 = vset.pattern.permute.xlu0 0
      %2269 = vperm.xlu0 %2268, %v2095
      %v2270 = vpop.permute.xlu0 %2269
      %2273 = vset.pattern.permute.xlu0 0
      %2274 = vperm.xlu0 %2273, %v2096
      %v2275 = vpop.permute.xlu0 %2274
      %v2277 = vmul.f32 %v2025, %v2100
      %v2278 = vmul.f32 %v2026, %v2105
      %v2279 = vmul.f32 %v2027, %v2110
      %v2280 = vmul.f32 %v2028, %v2115
      %v2281 = vmul.f32 %v2029, %v2120
      %v2282 = vmul.f32 %v2030, %v2125
      %v2283 = vmul.f32 %v2031, %v2130
      %v2284 = vmul.f32 %v2032, %v2135
      %v2285 = vmul.f32 %v2033, %v2140
      %v2286 = vmul.f32 %v2034, %v2145
      %v2287 = vmul.f32 %v2035, %v2150
      %v2288 = vmul.f32 %v2036, %v2155
      %v2289 = vmul.f32 %v2037, %v2160
      %v2290 = vmul.f32 %v2038, %v2165
      %v2291 = vmul.f32 %v2039, %v2170
      %v2292 = vmul.f32 %v2040, %v2175
      %v2293 = vmul.f32 %v2041, %v2180
      %v2294 = vmul.f32 %v2042, %v2185
      %v2295 = vmul.f32 %v2043, %v2190
      %v2296 = vmul.f32 %v2044, %v2195
      %v2297 = vmul.f32 %v2045, %v2200
      %v2298 = vmul.f32 %v2046, %v2205
      %v2299 = vmul.f32 %v2047, %v2210
      %v2300 = vmul.f32 %v2048, %v2215
      %v2301 = vmul.f32 %v2049, %v2220
      %v2302 = vmul.f32 %v2050, %v2225
      %v2303 = vmul.f32 %v2051, %v2230
      %v2304 = vmul.f32 %v2052, %v2235
      %v2305 = vmul.f32 %v2053, %v2240
      %v2306 = vmul.f32 %v2054, %v2245
      %v2307 = vmul.f32 %v2055, %v2250
      %v2308 = vmul.f32 %v2056, %v2255
      %v2309 = vmul.f32 %v2057, %v2260
      %v2310 = vmul.f32 %v2058, %v2265
      %v2311 = vmul.f32 %v2059, %v2270
      %v2312 = vmul.f32 %v2060, %v2275
      %2313 = vst [vmem:[#allocation2 + $0x13] sm:$0xff] %v2277
      %2314 = vst [vmem:[#allocation2 + $0x1b] sm:$0xff] %v2278
      %2315 = vst [vmem:[#allocation2 + $0x23] sm:$0xff] %v2279
      %2316 = vst [vmem:[#allocation2 + $0x2b] sm:$0xff] %v2280
      %2317 = vst [vmem:[#allocation2 + $0x33] sm:$0xff] %v2281
      %2318 = vst [vmem:[#allocation2 + $0x3b] sm:$0xff] %v2282
      %2319 = vst [vmem:[#allocation2 + $0x43] sm:$0xff] %v2283
      %2320 = vst [vmem:[#allocation2 + $0x4b] sm:$0xff] %v2284
      %2321 = vst [vmem:[#allocation2 + $0x53] sm:$0xff] %v2285
      %2322 = vst [vmem:[#allocation2 + $0x5b] sm:$0xff] %v2286
      %2323 = vst [vmem:[#allocation2 + $0x63] sm:$0xff] %v2287
      %2324 = vst [vmem:[#allocation2 + $0x6b] sm:$0xff] %v2288
      %2325 = vst [vmem:[#allocation2 + $0x73] sm:$0xff] %v2289
      %2326 = vst [vmem:[#allocation2 + $0x7b] sm:$0xff] %v2290
      %2327 = vst [vmem:[#allocation2 + $0x83] sm:$0xff] %v2291
      %2328 = vst [vmem:[#allocation2 + $0x8b] sm:$0xff] %v2292
      %2329 = vst [vmem:[#allocation2 + $0x93] sm:$0xff] %v2293
      %2330 = vst [vmem:[#allocation2 + $0x9b] sm:$0xff] %v2294
      %2331 = vst [vmem:[#allocation2 + $0xa3] sm:$0xff] %v2295
      %2332 = vst [vmem:[#allocation2 + $0xab] sm:$0xff] %v2296
      %2333 = vst [vmem:[#allocation2 + $0xb3] sm:$0xff] %v2297
      %2334 = vst [vmem:[#allocation2 + $0xbb] sm:$0xff] %v2298
      %2335 = vst [vmem:[#allocation2 + $0xc3] sm:$0xff] %v2299
      %2336 = vst [vmem:[#allocation2 + $0xcb] sm:$0xff] %v2300
      %2337 = vst [vmem:[#allocation2 + $0xd3] sm:$0xff] %v2301
      %2338 = vst [vmem:[#allocation2 + $0xdb] sm:$0xff] %v2302
      %2339 = vst [vmem:[#allocation2 + $0xe3] sm:$0xff] %v2303
      %2340 = vst [vmem:[#allocation2 + $0xeb] sm:$0xff] %v2304
      %2341 = vst [vmem:[#allocation2 + $0xf3] sm:$0xff] %v2305
      %2342 = vst [vmem:[#allocation2 + $0xfb] sm:$0xff] %v2306
      %2343 = vst [vmem:[#allocation2 + $0x103] sm:$0xff] %v2307
      %2344 = vst [vmem:[#allocation2 + $0x10b] sm:$0xff] %v2308
      %2345 = vst [vmem:[#allocation2 + $0x113] sm:$0xff] %v2309
      %2346 = vst [vmem:[#allocation2 + $0x11b] sm:$0xff] %v2310
      %2347 = vst [vmem:[#allocation2 + $0x123] sm:$0xff] %v2311
      %2348 = vst [vmem:[#allocation2 + $0x12b] sm:$0xff] %v2312
      %v2349 = vld [vmem:[#allocation2] sm:$0xff]
      %v2350 = vld [vmem:[#allocation2 + $0x8] sm:$0xff]
      %v2351 = vld [vmem:[#allocation2 + $0x10] sm:$0xff]
      %v2352 = vld [vmem:[#allocation2 + $0x18] sm:$0xff]
      %v2353 = vld [vmem:[#allocation2 + $0x20] sm:$0xff]
      %v2354 = vld [vmem:[#allocation2 + $0x28] sm:$0xff]
      %v2355 = vld [vmem:[#allocation2 + $0x30] sm:$0xff]
      %v2356 = vld [vmem:[#allocation2 + $0x38] sm:$0xff]
      %v2357 = vld [vmem:[#allocation2 + $0x40] sm:$0xff]
      %v2358 = vld [vmem:[#allocation2 + $0x48] sm:$0xff]
      %v2359 = vld [vmem:[#allocation2 + $0x50] sm:$0xff]
      %v2360 = vld [vmem:[#allocation2 + $0x58] sm:$0xff]
      %v2361 = vld [vmem:[#allocation2 + $0x60] sm:$0xff]
      %v2362 = vld [vmem:[#allocation2 + $0x68] sm:$0xff]
      %v2363 = vld [vmem:[#allocation2 + $0x70] sm:$0xff]
      %v2364 = vld [vmem:[#allocation2 + $0x78] sm:$0xff]
      %v2365 = vld [vmem:[#allocation2 + $0x80] sm:$0xff]
      %v2366 = vld [vmem:[#allocation2 + $0x88] sm:$0xff]
      %v2367 = vld [vmem:[#allocation2 + $0x90] sm:$0xff]
      %v2368 = vld [vmem:[#allocation2 + $0x98] sm:$0xff]
      %v2369 = vld [vmem:[#allocation2 + $0xa0] sm:$0xff]
      %v2370 = vld [vmem:[#allocation2 + $0xa8] sm:$0xff]
      %v2371 = vld [vmem:[#allocation2 + $0xb0] sm:$0xff]
      %v2372 = vld [vmem:[#allocation2 + $0xb8] sm:$0xff]
      %v2373 = vld [vmem:[#allocation2 + $0xc0] sm:$0xff]
      %v2374 = vld [vmem:[#allocation2 + $0xc8] sm:$0xff]
      %v2375 = vld [vmem:[#allocation2 + $0xd0] sm:$0xff]
      %v2376 = vld [vmem:[#allocation2 + $0xd8] sm:$0xff]
      %v2377 = vld [vmem:[#allocation2 + $0xe0] sm:$0xff]
      %v2378 = vld [vmem:[#allocation2 + $0xe8] sm:$0xff]
      %v2379 = vld [vmem:[#allocation2 + $0xf0] sm:$0xff]
      %v2380 = vld [vmem:[#allocation2 + $0xf8] sm:$0xff]
      %v2381 = vld [vmem:[#allocation2 + $0x100] sm:$0xff]
      %v2382 = vld [vmem:[#allocation2 + $0x108] sm:$0xff]
      %v2383 = vld [vmem:[#allocation2 + $0x110] sm:$0xff]
      %v2384 = vld [vmem:[#allocation2 + $0x118] sm:$0xff]
      %v2385 = vld [vmem:[#allocation2 + $0x1] sm:$0xff]
      %v2386 = vld [vmem:[#allocation2 + $0x9] sm:$0xff]
      %v2387 = vld [vmem:[#allocation2 + $0x11] sm:$0xff]
      %v2388 = vld [vmem:[#allocation2 + $0x19] sm:$0xff]
      %v2389 = vld [vmem:[#allocation2 + $0x21] sm:$0xff]
      %v2390 = vld [vmem:[#allocation2 + $0x29] sm:$0xff]
      %v2391 = vld [vmem:[#allocation2 + $0x31] sm:$0xff]
      %v2392 = vld [vmem:[#allocation2 + $0x39] sm:$0xff]
      %v2393 = vld [vmem:[#allocation2 + $0x41] sm:$0xff]
      %v2394 = vld [vmem:[#allocation2 + $0x49] sm:$0xff]
      %v2395 = vld [vmem:[#allocation2 + $0x51] sm:$0xff]
      %v2396 = vld [vmem:[#allocation2 + $0x59] sm:$0xff]
      %v2397 = vld [vmem:[#allocation2 + $0x61] sm:$0xff]
      %v2398 = vld [vmem:[#allocation2 + $0x69] sm:$0xff]
      %v2399 = vld [vmem:[#allocation2 + $0x71] sm:$0xff]
      %v2400 = vld [vmem:[#allocation2 + $0x79] sm:$0xff]
      %v2401 = vld [vmem:[#allocation2 + $0x81] sm:$0xff]
      %v2402 = vld [vmem:[#allocation2 + $0x89] sm:$0xff]
      %v2403 = vld [vmem:[#allocation2 + $0x91] sm:$0xff]
      %v2404 = vld [vmem:[#allocation2 + $0x99] sm:$0xff]
      %v2405 = vld [vmem:[#allocation2 + $0xa1] sm:$0xff]
      %v2406 = vld [vmem:[#allocation2 + $0xa9] sm:$0xff]
      %v2407 = vld [vmem:[#allocation2 + $0xb1] sm:$0xff]
      %v2408 = vld [vmem:[#allocation2 + $0xb9] sm:$0xff]
      %v2409 = vld [vmem:[#allocation2 + $0xc1] sm:$0xff]
      %v2410 = vld [vmem:[#allocation2 + $0xc9] sm:$0xff]
      %v2411 = vld [vmem:[#allocation2 + $0xd1] sm:$0xff]
      %v2412 = vld [vmem:[#allocation2 + $0xd9] sm:$0xff]
      %v2413 = vld [vmem:[#allocation2 + $0xe1] sm:$0xff]
      %v2414 = vld [vmem:[#allocation2 + $0xe9] sm:$0xff]
      %v2415 = vld [vmem:[#allocation2 + $0xf1] sm:$0xff]
      %v2416 = vld [vmem:[#allocation2 + $0xf9] sm:$0xff]
      %v2417 = vld [vmem:[#allocation2 + $0x101] sm:$0xff]
      %v2418 = vld [vmem:[#allocation2 + $0x109] sm:$0xff]
      %v2419 = vld [vmem:[#allocation2 + $0x111] sm:$0xff]
      %v2420 = vld [vmem:[#allocation2 + $0x119] sm:$0xff]
      %v2421 = vld [vmem:[#allocation2 + $0x2] sm:$0xff]
      %v2422 = vld [vmem:[#allocation2 + $0xa] sm:$0xff]
      %v2423 = vld [vmem:[#allocation2 + $0x12] sm:$0xff]
      %v2424 = vld [vmem:[#allocation2 + $0x1a] sm:$0xff]
      %v2425 = vld [vmem:[#allocation2 + $0x22] sm:$0xff]
      %v2426 = vld [vmem:[#allocation2 + $0x2a] sm:$0xff]
      %v2427 = vld [vmem:[#allocation2 + $0x32] sm:$0xff]
      %v2428 = vld [vmem:[#allocation2 + $0x3a] sm:$0xff]
      %v2429 = vld [vmem:[#allocation2 + $0x42] sm:$0xff]
      %v2430 = vld [vmem:[#allocation2 + $0x4a] sm:$0xff]
      %v2431 = vld [vmem:[#allocation2 + $0x52] sm:$0xff]
      %v2432 = vld [vmem:[#allocation2 + $0x5a] sm:$0xff]
      %v2433 = vld [vmem:[#allocation2 + $0x62] sm:$0xff]
      %v2434 = vld [vmem:[#allocation2 + $0x6a] sm:$0xff]
      %v2435 = vld [vmem:[#allocation2 + $0x72] sm:$0xff]
      %v2436 = vld [vmem:[#allocation2 + $0x7a] sm:$0xff]
      %v2437 = vld [vmem:[#allocation2 + $0x82] sm:$0xff]
      %v2438 = vld [vmem:[#allocation2 + $0x8a] sm:$0xff]
      %v2439 = vld [vmem:[#allocation2 + $0x92] sm:$0xff]
      %v2440 = vld [vmem:[#allocation2 + $0x9a] sm:$0xff]
      %v2441 = vld [vmem:[#allocation2 + $0xa2] sm:$0xff]
      %v2442 = vld [vmem:[#allocation2 + $0xaa] sm:$0xff]
      %v2443 = vld [vmem:[#allocation2 + $0xb2] sm:$0xff]
      %v2444 = vld [vmem:[#allocation2 + $0xba] sm:$0xff]
      %v2445 = vld [vmem:[#allocation2 + $0xc2] sm:$0xff]
      %v2446 = vld [vmem:[#allocation2 + $0xca] sm:$0xff]
      %v2447 = vld [vmem:[#allocation2 + $0xd2] sm:$0xff]
      %v2448 = vld [vmem:[#allocation2 + $0xda] sm:$0xff]
      %v2449 = vld [vmem:[#allocation2 + $0xe2] sm:$0xff]
      %v2450 = vld [vmem:[#allocation2 + $0xea] sm:$0xff]
      %v2451 = vld [vmem:[#allocation2 + $0xf2] sm:$0xff]
      %v2452 = vld [vmem:[#allocation2 + $0xfa] sm:$0xff]
      %v2453 = vld [vmem:[#allocation2 + $0x102] sm:$0xff]
      %v2454 = vld [vmem:[#allocation2 + $0x10a] sm:$0xff]
      %v2455 = vld [vmem:[#allocation2 + $0x112] sm:$0xff]
      %v2456 = vld [vmem:[#allocation2 + $0x11a] sm:$0xff]
      %v2457 = vld [vmem:[#allocation2 + $0x122] sm:$0xff]
      %v2458 = vld [vmem:[#allocation2 + $0x12a] sm:$0xff]
      %v2459 = vld [vmem:[#allocation2 + $0x13] sm:$0xff]
      %v2460 = vld [vmem:[#allocation2 + $0x1b] sm:$0xff]
      %v2461 = vld [vmem:[#allocation2 + $0x23] sm:$0xff]
      %v2462 = vld [vmem:[#allocation2 + $0x2b] sm:$0xff]
      %v2463 = vld [vmem:[#allocation2 + $0x33] sm:$0xff]
      %v2464 = vld [vmem:[#allocation2 + $0x3b] sm:$0xff]
      %v2465 = vld [vmem:[#allocation2 + $0x43] sm:$0xff]
      %v2466 = vld [vmem:[#allocation2 + $0x4b] sm:$0xff]
      %v2467 = vld [vmem:[#allocation2 + $0x53] sm:$0xff]
      %v2468 = vld [vmem:[#allocation2 + $0x5b] sm:$0xff]
      %v2469 = vld [vmem:[#allocation2 + $0x63] sm:$0xff]
      %v2470 = vld [vmem:[#allocation2 + $0x6b] sm:$0xff]
      %v2471 = vld [vmem:[#allocation2 + $0x73] sm:$0xff]
      %v2472 = vld [vmem:[#allocation2 + $0x7b] sm:$0xff]
      %v2473 = vld [vmem:[#allocation2 + $0x83] sm:$0xff]
      %v2474 = vld [vmem:[#allocation2 + $0x8b] sm:$0xff]
      %v2475 = vld [vmem:[#allocation2 + $0x93] sm:$0xff]
      %v2476 = vld [vmem:[#allocation2 + $0x9b] sm:$0xff]
      %v2477 = vld [vmem:[#allocation2 + $0xa3] sm:$0xff]
      %v2478 = vld [vmem:[#allocation2 + $0xab] sm:$0xff]
      %v2479 = vld [vmem:[#allocation2 + $0xb3] sm:$0xff]
      %v2480 = vld [vmem:[#allocation2 + $0xbb] sm:$0xff]
      %v2481 = vld [vmem:[#allocation2 + $0xc3] sm:$0xff]
      %v2482 = vld [vmem:[#allocation2 + $0xcb] sm:$0xff]
      %v2483 = vld [vmem:[#allocation2 + $0xd3] sm:$0xff]
      %v2484 = vld [vmem:[#allocation2 + $0xdb] sm:$0xff]
      %v2485 = vld [vmem:[#allocation2 + $0xe3] sm:$0xff]
      %v2486 = vld [vmem:[#allocation2 + $0xeb] sm:$0xff]
      %v2487 = vld [vmem:[#allocation2 + $0xf3] sm:$0xff]
      %v2488 = vld [vmem:[#allocation2 + $0xfb] sm:$0xff]
      %v2489 = vld [vmem:[#allocation2 + $0x103] sm:$0xff]
      %v2490 = vld [vmem:[#allocation2 + $0x10b] sm:$0xff]
      %v2491 = vld [vmem:[#allocation2 + $0x113] sm:$0xff]
      %v2492 = vld [vmem:[#allocation2 + $0x11b] sm:$0xff]
      %v2493 = vld [vmem:[#allocation2 + $0x123] sm:$0xff]
      %v2494 = vld [vmem:[#allocation2 + $0x12b] sm:$0xff]
      %v2495 = vld [vmem:[#allocation2 + $0x14] sm:$0xff]
      %v2496 = vld [vmem:[#allocation2 + $0x1c] sm:$0xff]
      %v2497 = vld [vmem:[#allocation2 + $0x24] sm:$0xff]
      %v2498 = vld [vmem:[#allocation2 + $0x2c] sm:$0xff]
      %v2499 = vld [vmem:[#allocation2 + $0x34] sm:$0xff]
      %v2500 = vld [vmem:[#allocation2 + $0x3c] sm:$0xff]
      %v2501 = vld [vmem:[#allocation2 + $0x44] sm:$0xff]
      %v2502 = vld [vmem:[#allocation2 + $0x4c] sm:$0xff]
      %v2503 = vld [vmem:[#allocation2 + $0x54] sm:$0xff]
      %v2504 = vld [vmem:[#allocation2 + $0x5c] sm:$0xff]
      %v2505 = vld [vmem:[#allocation2 + $0x64] sm:$0xff]
      %v2506 = vld [vmem:[#allocation2 + $0x6c] sm:$0xff]
      %v2507 = vld [vmem:[#allocation2 + $0x74] sm:$0xff]
      %v2508 = vld [vmem:[#allocation2 + $0x7c] sm:$0xff]
      %v2509 = vld [vmem:[#allocation2 + $0x84] sm:$0xff]
      %v2510 = vld [vmem:[#allocation2 + $0x8c] sm:$0xff]
      %v2511 = vld [vmem:[#allocation2 + $0x94] sm:$0xff]
      %v2512 = vld [vmem:[#allocation2 + $0x9c] sm:$0xff]
      %v2513 = vld [vmem:[#allocation2 + $0xa4] sm:$0xff]
      %v2514 = vld [vmem:[#allocation2 + $0xac] sm:$0xff]
      %v2515 = vld [vmem:[#allocation2 + $0xb4] sm:$0xff]
      %v2516 = vld [vmem:[#allocation2 + $0xbc] sm:$0xff]
      %v2517 = vld [vmem:[#allocation2 + $0xc4] sm:$0xff]
      %v2518 = vld [vmem:[#allocation2 + $0xcc] sm:$0xff]
      %v2519 = vld [vmem:[#allocation2 + $0xd4] sm:$0xff]
      %v2520 = vld [vmem:[#allocation2 + $0xdc] sm:$0xff]
      %v2521 = vld [vmem:[#allocation2 + $0xe4] sm:$0xff]
      %v2522 = vld [vmem:[#allocation2 + $0xec] sm:$0xff]
      %v2523 = vld [vmem:[#allocation2 + $0xf4] sm:$0xff]
      %v2524 = vld [vmem:[#allocation2 + $0xfc] sm:$0xff]
      %v2525 = vld [vmem:[#allocation2 + $0x104] sm:$0xff]
      %v2526 = vld [vmem:[#allocation2 + $0x10c] sm:$0xff]
      %v2527 = vld [vmem:[#allocation2 + $0x114] sm:$0xff]
      %v2528 = vld [vmem:[#allocation2 + $0x11c] sm:$0xff]
      %v2529 = vld [vmem:[#allocation2 + $0x124] sm:$0xff]
      %v2530 = vld [vmem:[#allocation2 + $0x12c] sm:$0xff]
      %v2531 = vld [vmem:[#allocation2 + $0x134] sm:$0xff]
      %v2532 = vld [vmem:[#allocation2 + $0x13c] sm:$0xff]
      %v2533 = vld [vmem:[#allocation2 + $0x25] sm:$0xff]
      %v2534 = vld [vmem:[#allocation2 + $0x2d] sm:$0xff]
      %v2535 = vld [vmem:[#allocation2 + $0x35] sm:$0xff]
      %v2536 = vld [vmem:[#allocation2 + $0x3d] sm:$0xff]
      %v2537 = vld [vmem:[#allocation2 + $0x45] sm:$0xff]
      %v2538 = vld [vmem:[#allocation2 + $0x4d] sm:$0xff]
      %v2539 = vld [vmem:[#allocation2 + $0x55] sm:$0xff]
      %v2540 = vld [vmem:[#allocation2 + $0x5d] sm:$0xff]
      %v2541 = vld [vmem:[#allocation2 + $0x65] sm:$0xff]
      %v2542 = vld [vmem:[#allocation2 + $0x6d] sm:$0xff]
      %v2543 = vld [vmem:[#allocation2 + $0x75] sm:$0xff]
      %v2544 = vld [vmem:[#allocation2 + $0x7d] sm:$0xff]
      %v2545 = vld [vmem:[#allocation2 + $0x85] sm:$0xff]
      %v2546 = vld [vmem:[#allocation2 + $0x8d] sm:$0xff]
      %v2547 = vld [vmem:[#allocation2 + $0x95] sm:$0xff]
      %v2548 = vld [vmem:[#allocation2 + $0x9d] sm:$0xff]
      %v2549 = vld [vmem:[#allocation2 + $0xa5] sm:$0xff]
      %v2550 = vld [vmem:[#allocation2 + $0xad] sm:$0xff]
      %v2551 = vld [vmem:[#allocation2 + $0xb5] sm:$0xff]
      %v2552 = vld [vmem:[#allocation2 + $0xbd] sm:$0xff]
      %v2553 = vld [vmem:[#allocation2 + $0xc5] sm:$0xff]
      %v2554 = vld [vmem:[#allocation2 + $0xcd] sm:$0xff]
      %v2555 = vld [vmem:[#allocation2 + $0xd5] sm:$0xff]
      %v2556 = vld [vmem:[#allocation2 + $0xdd] sm:$0xff]
      %v2557 = vld [vmem:[#allocation2 + $0xe5] sm:$0xff]
      %v2558 = vld [vmem:[#allocation2 + $0xed] sm:$0xff]
      %v2559 = vld [vmem:[#allocation2 + $0xf5] sm:$0xff]
      %v2560 = vld [vmem:[#allocation2 + $0xfd] sm:$0xff]
      %v2561 = vld [vmem:[#allocation2 + $0x105] sm:$0xff]
      %v2562 = vld [vmem:[#allocation2 + $0x10d] sm:$0xff]
      %v2563 = vld [vmem:[#allocation2 + $0x115] sm:$0xff]
      %v2564 = vld [vmem:[#allocation2 + $0x11d] sm:$0xff]
      %v2565 = vld [vmem:[#allocation2 + $0x125] sm:$0xff]
      %v2566 = vld [vmem:[#allocation2 + $0x12d] sm:$0xff]
      %v2567 = vld [vmem:[#allocation2 + $0x135] sm:$0xff]
      %v2568 = vld [vmem:[#allocation2 + $0x13d] sm:$0xff]
      %v2569 = vld [vmem:[#allocation2 + $0x26] sm:$0xff]
      %v2570 = vld [vmem:[#allocation2 + $0x2e] sm:$0xff]
      %v2571 = vld [vmem:[#allocation2 + $0x36] sm:$0xff]
      %v2572 = vld [vmem:[#allocation2 + $0x3e] sm:$0xff]
      %v2573 = vld [vmem:[#allocation2 + $0x46] sm:$0xff]
      %v2574 = vld [vmem:[#allocation2 + $0x4e] sm:$0xff]
      %v2575 = vld [vmem:[#allocation2 + $0x56] sm:$0xff]
      %v2576 = vld [vmem:[#allocation2 + $0x5e] sm:$0xff]
      %v2577 = vld [vmem:[#allocation2 + $0x66] sm:$0xff]
      %v2578 = vld [vmem:[#allocation2 + $0x6e] sm:$0xff]
      %v2579 = vld [vmem:[#allocation2 + $0x76] sm:$0xff]
      %v2580 = vld [vmem:[#allocation2 + $0x7e] sm:$0xff]
      %v2581 = vld [vmem:[#allocation2 + $0x86] sm:$0xff]
      %v2582 = vld [vmem:[#allocation2 + $0x8e] sm:$0xff]
      %v2583 = vld [vmem:[#allocation2 + $0x96] sm:$0xff]
      %v2584 = vld [vmem:[#allocation2 + $0x9e] sm:$0xff]
      %v2585 = vld [vmem:[#allocation2 + $0xa6] sm:$0xff]
      %v2586 = vld [vmem:[#allocation2 + $0xae] sm:$0xff]
      %v2587 = vld [vmem:[#allocation2 + $0xb6] sm:$0xff]
      %v2588 = vld [vmem:[#allocation2 + $0xbe] sm:$0xff]
      %v2589 = vld [vmem:[#allocation2 + $0xc6] sm:$0xff]
      %v2590 = vld [vmem:[#allocation2 + $0xce] sm:$0xff]
      %v2591 = vld [vmem:[#allocation2 + $0xd6] sm:$0xff]
      %v2592 = vld [vmem:[#allocation2 + $0xde] sm:$0xff]
      %v2593 = vld [vmem:[#allocation2 + $0xe6] sm:$0xff]
      %v2594 = vld [vmem:[#allocation2 + $0xee] sm:$0xff]
      %v2595 = vld [vmem:[#allocation2 + $0xf6] sm:$0xff]
      %v2596 = vld [vmem:[#allocation2 + $0xfe] sm:$0xff]
      %v2597 = vld [vmem:[#allocation2 + $0x106] sm:$0xff]
      %v2598 = vld [vmem:[#allocation2 + $0x10e] sm:$0xff]
      %v2599 = vld [vmem:[#allocation2 + $0x116] sm:$0xff]
      %v2600 = vld [vmem:[#allocation2 + $0x11e] sm:$0xff]
      %v2601 = vld [vmem:[#allocation2 + $0x126] sm:$0xff]
      %v2602 = vld [vmem:[#allocation2 + $0x12e] sm:$0xff]
      %v2603 = vld [vmem:[#allocation2 + $0x136] sm:$0xff]
      %v2604 = vld [vmem:[#allocation2 + $0x13e] sm:$0xff]
      %v2605 = vld [vmem:[%s2] sm:$0xff]
      %v2606 = vld [vmem:[%s2 + $0x8] sm:$0xff]
      %v2607 = vld [vmem:[%s2 + $0x10] sm:$0xff]
      %v2608 = vld [vmem:[%s2 + $0x18] sm:$0xff]
      %v2609 = vld [vmem:[%s2 + $0x20] sm:$0xff]
      %v2610 = vld [vmem:[%s2 + $0x28] sm:$0xff]
      %v2611 = vld [vmem:[%s2 + $0x30] sm:$0xff]
      %v2612 = vld [vmem:[%s2 + $0x38] sm:$0xff]
      %v2613 = vld [vmem:[%s2 + $0x40] sm:$0xff]
      %v2614 = vld [vmem:[%s2 + $0x48] sm:$0xff]
      %v2615 = vld [vmem:[%s2 + $0x50] sm:$0xff]
      %v2616 = vld [vmem:[%s2 + $0x58] sm:$0xff]
      %v2617 = vld [vmem:[%s2 + $0x60] sm:$0xff]
      %v2618 = vld [vmem:[%s2 + $0x68] sm:$0xff]
      %v2619 = vld [vmem:[%s2 + $0x70] sm:$0xff]
      %v2620 = vld [vmem:[%s2 + $0x78] sm:$0xff]
      %v2621 = vld [vmem:[%s2 + $0x80] sm:$0xff]
      %v2622 = vld [vmem:[%s2 + $0x88] sm:$0xff]
      %v2623 = vld [vmem:[%s2 + $0x90] sm:$0xff]
      %v2624 = vld [vmem:[%s2 + $0x98] sm:$0xff]
      %v2625 = vld [vmem:[%s2 + $0xa0] sm:$0xff]
      %v2626 = vld [vmem:[%s2 + $0xa8] sm:$0xff]
      %v2627 = vld [vmem:[%s2 + $0xb0] sm:$0xff]
      %v2628 = vld [vmem:[%s2 + $0xb8] sm:$0xff]
      %v2629 = vld [vmem:[%s2 + $0xc0] sm:$0xff]
      %v2630 = vld [vmem:[%s2 + $0xc8] sm:$0xff]
      %v2631 = vld [vmem:[%s2 + $0xd0] sm:$0xff]
      %v2632 = vld [vmem:[%s2 + $0xd8] sm:$0xff]
      %v2633 = vld [vmem:[%s2 + $0xe0] sm:$0xff]
      %v2634 = vld [vmem:[%s2 + $0xe8] sm:$0xff]
      %v2635 = vld [vmem:[%s2 + $0xf0] sm:$0xff]
      %v2636 = vld [vmem:[%s2 + $0xf8] sm:$0xff]
      %v2637 = vld [vmem:[%s2 + $0x100] sm:$0xff]
      %v2638 = vld [vmem:[%s2 + $0x108] sm:$0xff]
      %v2639 = vld [vmem:[%s2 + $0x110] sm:$0xff]
      %v2640 = vld [vmem:[%s2 + $0x118] sm:$0xff]
      %v2641 = vld [vmem:[%s2 + $0x120] sm:$0xff]
      %v2642 = vld [vmem:[%s2 + $0x128] sm:$0xff]
      %v2643 = vld [vmem:[%s2 + $0x130] sm:$0xff]
      %v2644 = vld [vmem:[%s2 + $0x138] sm:$0xff]
      %v2645 = vld [vmem:[%s2 + $0x140] sm:$0xff]
      %v2646 = vld [vmem:[%s2 + $0x148] sm:$0xff]
      %v2647 = vld [vmem:[%s2 + $0x150] sm:$0xff]
      %v2648 = vld [vmem:[%s2 + $0x158] sm:$0xff]
      %v2649 = vld [vmem:[%s2 + $0x160] sm:$0xff]
      %v2650 = vld [vmem:[%s2 + $0x168] sm:$0xff]
      %v2651 = vld [vmem:[%s2 + $0x170] sm:$0xff]
      %v2652 = vld [vmem:[%s2 + $0x178] sm:$0xff]
      %v2653 = vld [vmem:[%s2 + $0x180] sm:$0xff]
      %v2654 = vld [vmem:[%s2 + $0x188] sm:$0xff]
      %v2655 = vld [vmem:[%s2 + $0x190] sm:$0xff]
      %v2656 = vld [vmem:[%s2 + $0x198] sm:$0xff]
      %v2657 = vld [vmem:[%s2 + $0x1a0] sm:$0xff]
      %v2658 = vld [vmem:[%s2 + $0x1a8] sm:$0xff]
      %v2659 = vld [vmem:[%s2 + $0x1b0] sm:$0xff]
      %v2660 = vld [vmem:[%s2 + $0x1b8] sm:$0xff]
      %v2661 = vld [vmem:[%s2 + $0x1c0] sm:$0xff]
      %v2662 = vld [vmem:[%s2 + $0x1c8] sm:$0xff]
      %v2663 = vld [vmem:[%s2 + $0x1d0] sm:$0xff]
      %v2664 = vld [vmem:[%s2 + $0x1d8] sm:$0xff]
      %v2665 = vld [vmem:[%s2 + $0x1e0] sm:$0xff]
      %v2666 = vld [vmem:[%s2 + $0x1e8] sm:$0xff]
      %v2667 = vld [vmem:[%s2 + $0x1f0] sm:$0xff]
      %v2668 = vld [vmem:[%s2 + $0x1f8] sm:$0xff]
      %v2669 = vld [vmem:[%s2 + $0x200] sm:$0xff]
      %v2670 = vld [vmem:[%s2 + $0x208] sm:$0xff]
      %v2671 = vld [vmem:[%s2 + $0x210] sm:$0xff]
      %v2672 = vld [vmem:[%s2 + $0x218] sm:$0xff]
      %v2673 = vld [vmem:[%s2 + $0x220] sm:$0xff]
      %v2674 = vld [vmem:[%s2 + $0x228] sm:$0xff]
      %v2675 = vld [vmem:[%s2 + $0x230] sm:$0xff]
      %v2676 = vld [vmem:[%s2 + $0x238] sm:$0xff]
      %v2677 = vld [vmem:[%s2 + $0x240] sm:$0xff]
      %v2678 = vld [vmem:[%s2 + $0x248] sm:$0xff]
      %v2679 = vld [vmem:[%s2 + $0x250] sm:$0xff]
      %v2680 = vld [vmem:[%s2 + $0x258] sm:$0xff]
      %v2681 = vld [vmem:[%s2 + $0x260] sm:$0xff]
      %v2682 = vld [vmem:[%s2 + $0x268] sm:$0xff]
      %v2683 = vld [vmem:[%s2 + $0x270] sm:$0xff]
      %v2684 = vld [vmem:[%s2 + $0x278] sm:$0xff]
      %v2685 = vld [vmem:[%s2 + $0x280] sm:$0xff]
      %v2686 = vld [vmem:[%s2 + $0x288] sm:$0xff]
      %v2687 = vld [vmem:[%s2 + $0x290] sm:$0xff]
      %v2688 = vld [vmem:[%s2 + $0x298] sm:$0xff]
      %v2689 = vld [vmem:[%s2 + $0x2a0] sm:$0xff]
      %v2690 = vld [vmem:[%s2 + $0x2a8] sm:$0xff]
      %v2691 = vld [vmem:[%s2 + $0x2b0] sm:$0xff]
      %v2692 = vld [vmem:[%s2 + $0x2b8] sm:$0xff]
      %v2693 = vld [vmem:[%s2 + $0x2c0] sm:$0xff]
      %v2694 = vld [vmem:[%s2 + $0x2c8] sm:$0xff]
      %v2695 = vld [vmem:[%s2 + $0x2d0] sm:$0xff]
      %v2696 = vld [vmem:[%s2 + $0x2d8] sm:$0xff]
      %v2697 = vld [vmem:[%s2 + $0x2e0] sm:$0xff]
      %v2698 = vld [vmem:[%s2 + $0x2e8] sm:$0xff]
      %v2699 = vld [vmem:[%s2 + $0x2f0] sm:$0xff]
      %v2700 = vld [vmem:[%s2 + $0x2f8] sm:$0xff]
      %v2701 = vld [vmem:[%s2 + $0x300] sm:$0xff]
      %v2702 = vld [vmem:[%s2 + $0x308] sm:$0xff]
      %v2703 = vld [vmem:[%s2 + $0x310] sm:$0xff]
      %v2704 = vld [vmem:[%s2 + $0x318] sm:$0xff]
      %v2705 = vld [vmem:[%s2 + $0x320] sm:$0xff]
      %v2706 = vld [vmem:[%s2 + $0x328] sm:$0xff]
      %v2707 = vld [vmem:[%s2 + $0x330] sm:$0xff]
      %v2708 = vld [vmem:[%s2 + $0x338] sm:$0xff]
      %v2709 = vld [vmem:[%s2 + $0x340] sm:$0xff]
      %v2710 = vld [vmem:[%s2 + $0x348] sm:$0xff]
      %v2711 = vld [vmem:[%s2 + $0x350] sm:$0xff]
      %v2712 = vld [vmem:[%s2 + $0x358] sm:$0xff]
      %v2713 = vld [vmem:[%s2 + $0x360] sm:$0xff]
      %v2714 = vld [vmem:[%s2 + $0x368] sm:$0xff]
      %v2715 = vld [vmem:[%s2 + $0x370] sm:$0xff]
      %v2716 = vld [vmem:[%s2 + $0x378] sm:$0xff]
      %v2717 = vld [vmem:[%s2 + $0x380] sm:$0xff]
      %v2718 = vld [vmem:[%s2 + $0x388] sm:$0xff]
      %v2719 = vld [vmem:[%s2 + $0x390] sm:$0xff]
      %v2720 = vld [vmem:[%s2 + $0x398] sm:$0xff]
      %v2721 = vld [vmem:[%s2 + $0x3a0] sm:$0xff]
      %v2722 = vld [vmem:[%s2 + $0x3a8] sm:$0xff]
      %v2723 = vld [vmem:[%s2 + $0x3b0] sm:$0xff]
      %v2724 = vld [vmem:[%s2 + $0x3b8] sm:$0xff]
      %v2725 = vld [vmem:[%s2 + $0x3c0] sm:$0xff]
      %v2726 = vld [vmem:[%s2 + $0x3c8] sm:$0xff]
      %v2727 = vld [vmem:[%s2 + $0x3d0] sm:$0xff]
      %v2728 = vld [vmem:[%s2 + $0x3d8] sm:$0xff]
      %v2729 = vld [vmem:[%s2 + $0x3e0] sm:$0xff]
      %v2730 = vld [vmem:[%s2 + $0x3e8] sm:$0xff]
      %v2731 = vld [vmem:[%s2 + $0x3f0] sm:$0xff]
      %v2732 = vld [vmem:[%s2 + $0x3f8] sm:$0xff]
      %v2733 = vld [vmem:[%s2 + $0x400] sm:$0xff]
      %v2734 = vld [vmem:[%s2 + $0x408] sm:$0xff]
      %v2735 = vld [vmem:[%s2 + $0x410] sm:$0xff]
      %v2736 = vld [vmem:[%s2 + $0x418] sm:$0xff]
      %v2737 = vld [vmem:[%s2 + $0x420] sm:$0xff]
      %v2738 = vld [vmem:[%s2 + $0x428] sm:$0xff]
      %v2739 = vld [vmem:[%s2 + $0x430] sm:$0xff]
      %v2740 = vld [vmem:[%s2 + $0x438] sm:$0xff]
      %v2741 = vld [vmem:[%s2 + $0x440] sm:$0xff]
      %v2742 = vld [vmem:[%s2 + $0x448] sm:$0xff]
      %v2743 = vld [vmem:[%s2 + $0x450] sm:$0xff]
      %v2744 = vld [vmem:[%s2 + $0x458] sm:$0xff]
      %v2745 = vld [vmem:[%s2 + $0x460] sm:$0xff]
      %v2746 = vld [vmem:[%s2 + $0x468] sm:$0xff]
      %v2747 = vld [vmem:[%s2 + $0x470] sm:$0xff]
      %v2748 = vld [vmem:[%s2 + $0x478] sm:$0xff]
      %2749 = vmatprep.subr.mxu0 0.0
      %2750 = vmatpush1.msra.mxu0 %v2605
      %2751 = vmatprep.subr.mxu0 0.0
      %2752 = vmatpush1.msra.mxu0 %v2606
      %2753 = vmatprep.subr.mxu0 0.0
      %2754 = vmatpush1.msra.mxu0 %v2607
      %2755 = vmatprep.subr.mxu0 0.0
      %2756 = vmatpush1.msra.mxu0 %v2608
      %2757 = vmatprep.subr.mxu0 0.0
      %2758 = vmatpush1.msra.mxu0 %v2609
      %2759 = vmatprep.subr.mxu0 0.0
      %2760 = vmatpush1.msra.mxu0 %v2610
      %2761 = vmatprep.subr.mxu0 0.0
      %2762 = vmatpush1.msra.mxu0 %v2611
      %2763 = vmatprep.subr.mxu0 0.0
      %2764 = vmatpush1.msra.mxu0 %v2612
      %2765 = vmatprep.subr.mxu0 0.0
      %2766 = vmatpush1.msra.mxu0 %v2613
      %2767 = vmatprep.subr.mxu0 0.0
      %2768 = vmatpush1.msra.mxu0 %v2614
      %2769 = vmatprep.subr.mxu0 0.0
      %2770 = vmatpush1.msra.mxu0 %v2615
      %2771 = vmatprep.subr.mxu0 0.0
      %2772 = vmatpush1.msra.mxu0 %v2616
      %2773 = vmatprep.subr.mxu0 0.0
      %2774 = vmatpush1.msra.mxu0 %v2617
      %2775 = vmatprep.subr.mxu0 0.0
      %2776 = vmatpush1.msra.mxu0 %v2618
      %2777 = vmatprep.subr.mxu0 0.0
      %2778 = vmatpush1.msra.mxu0 %v2619
      %2779 = vmatprep.subr.mxu0 0.0
      %2780 = vmatpush1.msra.mxu0 %v2620
      %2781 = vmatprep.subr.mxu0 0.0
      %2782 = vmatpush1.msra.mxu0 %v2621
      %2783 = vmatprep.subr.mxu0 0.0
      %2784 = vmatpush1.msra.mxu0 %v2622
      %2785 = vmatprep.subr.mxu0 0.0
      %2786 = vmatpush1.msra.mxu0 %v2623
      %2787 = vmatprep.subr.mxu0 0.0
      %2788 = vmatpush1.msra.mxu0 %v2624
      %2789 = vmatprep.subr.mxu0 0.0
      %2790 = vmatpush1.msra.mxu0 %v2625
      %2791 = vmatprep.subr.mxu0 0.0
      %2792 = vmatpush1.msra.mxu0 %v2626
      %2793 = vmatprep.subr.mxu0 0.0
      %2794 = vmatpush1.msra.mxu0 %v2627
      %2795 = vmatprep.subr.mxu0 0.0
      %2796 = vmatpush1.msra.mxu0 %v2628
      %2797 = vmatprep.subr.mxu0 0.0
      %2798 = vmatpush1.msra.mxu0 %v2629
      %2799 = vmatprep.subr.mxu0 0.0
      %2800 = vmatpush1.msra.mxu0 %v2630
      %2801 = vmatprep.subr.mxu0 0.0
      %2802 = vmatpush1.msra.mxu0 %v2631
      %2803 = vmatprep.subr.mxu0 0.0
      %2804 = vmatpush1.msra.mxu0 %v2632
      %2805 = vmatprep.subr.mxu0 0.0
      %2806 = vmatpush1.msra.mxu0 %v2633
      %2807 = vmatprep.subr.mxu0 0.0
      %2808 = vmatpush1.msra.mxu0 %v2634
      %2809 = vmatprep.subr.mxu0 0.0
      %2810 = vmatpush1.msra.mxu0 %v2635
      %2811 = vmatprep.subr.mxu0 0.0
      %2812 = vmatpush1.msra.mxu0 %v2636
      %2813 = vmatprep.mubr.f32.mxu0 %v2385
      %2814 = vmatmul.mubr.f32.gmra.mrb[0].mxu0 %v2349
      %v2815 = vpop.f32.mrb[0].mxu0
      %v2816 = vadd.f32 0.0, %v2815
      %v2817 = vpop.f32.mrb[0].mxu0
      %2818 = vmatprep.mubr.f32.mxu0 %v2386
      %2819 = vmatmul.mubr.f32.gmra.mrb[0].mxu0 %v2350
      %v2820 = vpop.f32.mrb[0].mxu0
      %v2821 = vadd.f32 0.0, %v2820
      %v2822 = vpop.f32.mrb[0].mxu0
      %2823 = vmatprep.mubr.f32.mxu0 %v2387
      %2824 = vmatmul.mubr.f32.gmra.mrb[0].mxu0 %v2351
      %v2825 = vpop.f32.mrb[0].mxu0
      %v2826 = vadd.f32 0.0, %v2825
      %v2827 = vpop.f32.mrb[0].mxu0
      %2828 = vmatprep.mubr.f32.mxu0 %v2388
      %2829 = vmatmul.mubr.f32.gmra.mrb[0].mxu0 %v2352
      %v2830 = vpop.f32.mrb[0].mxu0
      %v2831 = vadd.f32 0.0, %v2830
      %v2832 = vpop.f32.mrb[0].mxu0
      %2833 = vmatprep.mubr.f32.mxu0 %v2389
      %2834 = vmatmul.mubr.f32.gmra.mrb[0].mxu0 %v2353
      %v2835 = vpop.f32.mrb[0].mxu0
      %v2836 = vadd.f32 0.0, %v2835
      %v2837 = vpop.f32.mrb[0].mxu0
      %2838 = vmatprep.mubr.f32.mxu0 %v2390
      %2839 = vmatmul.mubr.f32.gmra.mrb[0].mxu0 %v2354
      %v2840 = vpop.f32.mrb[0].mxu0
      %v2841 = vadd.f32 0.0, %v2840
      %v2842 = vpop.f32.mrb[0].mxu0
      %2843 = vmatprep.mubr.f32.mxu0 %v2391
      %2844 = vmatmul.mubr.f32.gmra.mrb[0].mxu0 %v2355
      %v2845 = vpop.f32.mrb[0].mxu0
      %v2846 = vadd.f32 0.0, %v2845
      %v2847 = vpop.f32.mrb[0].mxu0
      %2848 = vmatprep.mubr.f32.mxu0 %v2392
      %2849 = vmatmul.mubr.f32.gmra.mrb[0].mxu0 %v2356
      %v2850 = vpop.f32.mrb[0].mxu0
      %v2851 = vadd.f32 0.0, %v2850
      %v2852 = vpop.f32.mrb[0].mxu0
      %2853 = vmatprep.mubr.f32.mxu0 %v2393
      %2854 = vmatmul.mubr.f32.gmra.mrb[0].mxu0 %v2357
      %v2855 = vpop.f32.mrb[0].mxu0
      %v2856 = vadd.f32 0.0, %v2855
      %v2857 = vpop.f32.mrb[0].mxu0
      %2858 = vmatprep.mubr.f32.mxu0 %v2394
      %2859 = vmatmul.mubr.f32.gmra.mrb[0].mxu0 %v2358
      %v2860 = vpop.f32.mrb[0].mxu0
      %v2861 = vadd.f32 0.0, %v2860
      %v2862 = vpop.f32.mrb[0].mxu0
      %2863 = vmatprep.mubr.f32.mxu0 %v2395
      %2864 = vmatmul.mubr.f32.gmra.mrb[0].mxu0 %v2359
      %v2865 = vpop.f32.mrb[0].mxu0
      %v2866 = vadd.f32 0.0, %v2865
      %v2867 = vpop.f32.mrb[0].mxu0
      %2868 = vmatprep.mubr.f32.mxu0 %v2396
      %2869 = vmatmul.mubr.f32.gmra.mrb[0].mxu0 %v2360
      %v2870 = vpop.f32.mrb[0].mxu0
      %v2871 = vadd.f32 0.0, %v2870
      %v2872 = vpop.f32.mrb[0].mxu0
      %2873 = vmatprep.mubr.f32.mxu0 %v2397
      %2874 = vmatmul.mubr.f32.gmra.mrb[0].mxu0 %v2361
      %v2875 = vpop.f32.mrb[0].mxu0
      %v2876 = vadd.f32 0.0, %v2875
      %v2877 = vpop.f32.mrb[0].mxu0
      %2878 = vmatprep.mubr.f32.mxu0 %v2398
      %2879 = vmatmul.mubr.f32.gmra.mrb[0].mxu0 %v2362
      %v2880 = vpop.f32.mrb[0].mxu0
      %v2881 = vadd.f32 0.0, %v2880
      %v2882 = vpop.f32.mrb[0].mxu0
      %2883 = vmatprep.mubr.f32.mxu0 %v2399
      %2884 = vmatmul.mubr.f32.gmra.mrb[0].mxu0 %v2363
      %v2885 = vpop.f32.mrb[0].mxu0
      %v2886 = vadd.f32 0.0, %v2885
      %v2887 = vpop.f32.mrb[0].mxu0
      %2888 = vmatprep.mubr.f32.mxu0 %v2400
      %2889 = vmatmul.mubr.f32.gmra.mrb[0].mxu0 %v2364
      %v2890 = vpop.f32.mrb[0].mxu0
      %v2891 = vadd.f32 0.0, %v2890
      %v2892 = vpop.f32.mrb[0].mxu0
      %2893 = vmatprep.mubr.f32.mxu0 %v2401
      %2894 = vmatmul.mubr.f32.gmra.mrb[0].mxu0 %v2365
      %v2895 = vpop.f32.mrb[0].mxu0
      %v2896 = vadd.f32 0.0, %v2895
      %v2897 = vpop.f32.mrb[0].mxu0
      %2898 = vmatprep.mubr.f32.mxu0 %v2402
      %2899 = vmatmul.mubr.f32.gmra.mrb[0].mxu0 %v2366
      %v2900 = vpop.f32.mrb[0].mxu0
      %v2901 = vadd.f32 0.0, %v2900
      %v2902 = vpop.f32.mrb[0].mxu0
      %2903 = vmatprep.mubr.f32.mxu0 %v2403
      %2904 = vmatmul.mubr.f32.gmra.mrb[0].mxu0 %v2367
      %v2905 = vpop.f32.mrb[0].mxu0
      %v2906 = vadd.f32 0.0, %v2905
      %v2907 = vpop.f32.mrb[0].mxu0
      %2908 = vmatprep.mubr.f32.mxu0 %v2404
      %2909 = vmatmul.mubr.f32.gmra.mrb[0].mxu0 %v2368
      %v2910 = vpop.f32.mrb[0].mxu0
      %v2911 = vadd.f32 0.0, %v2910
      %v2912 = vpop.f32.mrb[0].mxu0
      %2913 = vmatprep.mubr.f32.mxu0 %v2405
      %2914 = vmatmul.mubr.f32.gmra.mrb[0].mxu0 %v2369
      %v2915 = vpop.f32.mrb[0].mxu0
      %v2916 = vadd.f32 0.0, %v2915
      %v2917 = vpop.f32.mrb[0].mxu0
      %2918 = vmatprep.mubr.f32.mxu0 %v2406
      %2919 = vmatmul.mubr.f32.gmra.mrb[0].mxu0 %v2370
      %v2920 = vpop.f32.mrb[0].mxu0
      %v2921 = vadd.f32 0.0, %v2920
      %v2922 = vpop.f32.mrb[0].mxu0
      %2923 = vmatprep.mubr.f32.mxu0 %v2407
      %2924 = vmatmul.mubr.f32.gmra.mrb[0].mxu0 %v2371
      %v2925 = vpop.f32.mrb[0].mxu0
      %v2926 = vadd.f32 0.0, %v2925
      %v2927 = vpop.f32.mrb[0].mxu0
      %2928 = vmatprep.mubr.f32.mxu0 %v2408
      %2929 = vmatmul.mubr.f32.gmra.mrb[0].mxu0 %v2372
      %v2930 = vpop.f32.mrb[0].mxu0
      %v2931 = vadd.f32 0.0, %v2930
      %v2932 = vpop.f32.mrb[0].mxu0
      %2933 = vmatprep.mubr.f32.mxu0 %v2409
      %2934 = vmatmul.mubr.f32.gmra.mrb[0].mxu0 %v2373
      %v2935 = vpop.f32.mrb[0].mxu0
      %v2936 = vadd.f32 0.0, %v2935
      %v2937 = vpop.f32.mrb[0].mxu0
      %2938 = vmatprep.mubr.f32.mxu0 %v2410
      %2939 = vmatmul.mubr.f32.gmra.mrb[0].mxu0 %v2374
      %v2940 = vpop.f32.mrb[0].mxu0
      %v2941 = vadd.f32 0.0, %v2940
      %v2942 = vpop.f32.mrb[0].mxu0
      %2943 = vmatprep.mubr.f32.mxu0 %v2411
      %2944 = vmatmul.mubr.f32.gmra.mrb[0].mxu0 %v2375
      %v2945 = vpop.f32.mrb[0].mxu0
      %v2946 = vadd.f32 0.0, %v2945
      %v2947 = vpop.f32.mrb[0].mxu0
      %2948 = vmatprep.mubr.f32.mxu0 %v2412
      %2949 = vmatmul.mubr.f32.gmra.mrb[0].mxu0 %v2376
      %v2950 = vpop.f32.mrb[0].mxu0
      %v2951 = vadd.f32 0.0, %v2950
      %v2952 = vpop.f32.mrb[0].mxu0
      %2953 = vmatprep.mubr.f32.mxu0 %v2413
      %2954 = vmatmul.mubr.f32.gmra.mrb[0].mxu0 %v2377
      %v2955 = vpop.f32.mrb[0].mxu0
      %v2956 = vadd.f32 0.0, %v2955
      %v2957 = vpop.f32.mrb[0].mxu0
      %2958 = vmatprep.mubr.f32.mxu0 %v2414
      %2959 = vmatmul.mubr.f32.gmra.mrb[0].mxu0 %v2378
      %v2960 = vpop.f32.mrb[0].mxu0
      %v2961 = vadd.f32 0.0, %v2960
      %v2962 = vpop.f32.mrb[0].mxu0
      %2963 = vmatprep.mubr.f32.mxu0 %v2415
      %2964 = vmatmul.mubr.f32.gmra.mrb[0].mxu0 %v2379
      %v2965 = vpop.f32.mrb[0].mxu0
      %v2966 = vadd.f32 0.0, %v2965
      %v2967 = vpop.f32.mrb[0].mxu0
      %2968 = vmatprep.mubr.f32.mxu0 %v2416
      %2969 = vmatmul.mubr.f32.gmra.mrb[0].mxu0 %v2380
      %v2970 = vpop.f32.mrb[0].mxu0
      %v2971 = vadd.f32 0.0, %v2970
      %v2972 = vpop.f32.mrb[0].mxu0
      %2973 = vmatprep.mubr.f32.mxu0 %v2417
      %2974 = vmatmul.mubr.f32.gmra.mrb[0].mxu0 %v2381
      %v2975 = vpop.f32.mrb[0].mxu0
      %v2976 = vadd.f32 0.0, %v2975
      %v2977 = vpop.f32.mrb[0].mxu0
      %2978 = vmatprep.mubr.f32.mxu0 %v2418
      %2979 = vmatmul.mubr.f32.gmra.mrb[0].mxu0 %v2382
      %v2980 = vpop.f32.mrb[0].mxu0
      %v2981 = vadd.f32 0.0, %v2980
      %v2982 = vpop.f32.mrb[0].mxu0
      %2983 = vmatprep.mubr.f32.mxu0 %v2419
      %2984 = vmatmul.mubr.f32.gmra.mrb[0].mxu0 %v2383
      %v2985 = vpop.f32.mrb[0].mxu0
      %v2986 = vadd.f32 0.0, %v2985
      %v2987 = vpop.f32.mrb[0].mxu0
      %2988 = vmatprep.mubr.f32.mxu0 %v2420
      %2989 = vmatmul.mubr.f32.gmra.mrb[0].mxu0 %v2384
      %v2990 = vpop.f32.mrb[0].mxu0
      %v2991 = vadd.f32 0.0, %v2990
      %v2992 = vpop.f32.mrb[0].mxu0
      %2993 = vdwg.mxu0
      %2994 = vmatprep.subr.mxu0 0.0
      %2995 = vmatpush1.msra.mxu0 %v2637
      %2996 = vmatprep.subr.mxu0 0.0
      %2997 = vmatpush1.msra.mxu0 %v2638
      %2998 = vmatprep.subr.mxu0 0.0
      %2999 = vmatpush1.msra.mxu0 %v2639
      %3000 = vmatprep.subr.mxu0 0.0
      %3001 = vmatpush1.msra.mxu0 %v2640
      %3002 = vmatprep.subr.mxu0 0.0
      %3003 = vmatpush1.msra.mxu0 %v2641
      %3004 = vmatprep.subr.mxu0 0.0
      %3005 = vmatpush1.msra.mxu0 %v2642
      %3006 = vmatprep.subr.mxu0 0.0
      %3007 = vmatpush1.msra.mxu0 %v2643
      %3008 = vmatprep.subr.mxu0 0.0
      %3009 = vmatpush1.msra.mxu0 %v2644
      %3010 = vmatprep.subr.mxu0 0.0
      %3011 = vmatpush1.msra.mxu0 %v2645
      %3012 = vmatprep.subr.mxu0 0.0
      %3013 = vmatpush1.msra.mxu0 %v2646
      %3014 = vmatprep.subr.mxu0 0.0
      %3015 = vmatpush1.msra.mxu0 %v2647
      %3016 = vmatprep.subr.mxu0 0.0
      %3017 = vmatpush1.msra.mxu0 %v2648
      %3018 = vmatprep.subr.mxu0 0.0
      %3019 = vmatpush1.msra.mxu0 %v2649
      %3020 = vmatprep.subr.mxu0 0.0
      %3021 = vmatpush1.msra.mxu0 %v2650
      %3022 = vmatprep.subr.mxu0 0.0
      %3023 = vmatpush1.msra.mxu0 %v2651
      %3024 = vmatprep.subr.mxu0 0.0
      %3025 = vmatpush1.msra.mxu0 %v2652
      %3026 = vmatprep.subr.mxu0 0.0
      %3027 = vmatpush1.msra.mxu0 %v2653
      %3028 = vmatprep.subr.mxu0 0.0
      %3029 = vmatpush1.msra.mxu0 %v2654
      %3030 = vmatprep.subr.mxu0 0.0
      %3031 = vmatpush1.msra.mxu0 %v2655
      %3032 = vmatprep.subr.mxu0 0.0
      %3033 = vmatpush1.msra.mxu0 %v2656
      %3034 = vmatprep.subr.mxu0 0.0
      %3035 = vmatpush1.msra.mxu0 %v2657
      %3036 = vmatprep.subr.mxu0 0.0
      %3037 = vmatpush1.msra.mxu0 %v2658
      %3038 = vmatprep.subr.mxu0 0.0
      %3039 = vmatpush1.msra.mxu0 %v2659
      %3040 = vmatprep.subr.mxu0 0.0
      %3041 = vmatpush1.msra.mxu0 %v2660
      %3042 = vmatprep.subr.mxu0 0.0
      %3043 = vmatpush1.msra.mxu0 %v2661
      %3044 = vmatprep.subr.mxu0 0.0
      %3045 = vmatpush1.msra.mxu0 %v2662
      %3046 = vmatprep.subr.mxu0 0.0
      %3047 = vmatpush1.msra.mxu0 %v2663
      %3048 = vmatprep.subr.mxu0 0.0
      %3049 = vmatpush1.msra.mxu0 %v2664
      %3050 = vmatprep.subr.mxu0 0.0
      %3051 = vmatpush1.msra.mxu0 %v2665
      %3052 = vmatprep.subr.mxu0 0.0
      %3053 = vmatpush1.msra.mxu0 %v2666
      %3054 = vmatprep.subr.mxu0 0.0
      %3055 = vmatpush1.msra.mxu0 %v2667
      %3056 = vmatprep.subr.mxu0 0.0
      %3057 = vmatpush1.msra.mxu0 %v2668
      %3058 = vmatprep.mubr.f32.mxu0 %v2423
      %3059 = vmatmul.mubr.f32.gmra.mrb[0].mxu0 %v2421
      %v3060 = vpop.f32.mrb[0].mxu0
      %v3061 = vadd.f32 %v2816, %v3060
      %v3062 = vpop.f32.mrb[0].mxu0
      %3063 = vmatprep.mubr.f32.mxu0 %v2424
      %3064 = vmatmul.mubr.f32.gmra.mrb[0].mxu0 %v2422
      %v3065 = vpop.f32.mrb[0].mxu0
      %v3066 = vadd.f32 %v2821, %v3065
      %v3067 = vpop.f32.mrb[0].mxu0
      %3068 = vmatprep.mubr.f32.mxu0 %v2425
      %3069 = vmatmul.mubr.f32.gmra.mrb[0].mxu0 %v2423
      %v3070 = vpop.f32.mrb[0].mxu0
      %v3071 = vadd.f32 %v2826, %v3070
      %v3072 = vpop.f32.mrb[0].mxu0
      %3073 = vmatprep.mubr.f32.mxu0 %v2426
      %3074 = vmatmul.mubr.f32.gmra.mrb[0].mxu0 %v2424
      %v3075 = vpop.f32.mrb[0].mxu0
      %v3076 = vadd.f32 %v2831, %v3075
      %v3077 = vpop.f32.mrb[0].mxu0
      %3078 = vmatprep.mubr.f32.mxu0 %v2427
      %3079 = vmatmul.mubr.f32.gmra.mrb[0].mxu0 %v2425
      %v3080 = vpop.f32.mrb[0].mxu0
      %v3081 = vadd.f32 %v2836, %v3080
      %v3082 = vpop.f32.mrb[0].mxu0
      %3083 = vmatprep.mubr.f32.mxu0 %v2428
      %3084 = vmatmul.mubr.f32.gmra.mrb[0].mxu0 %v2426
      %v3085 = vpop.f32.mrb[0].mxu0
      %v3086 = vadd.f32 %v2841, %v3085
      %v3087 = vpop.f32.mrb[0].mxu0
      %3088 = vmatprep.mubr.f32.mxu0 %v2429
      %3089 = vmatmul.mubr.f32.gmra.mrb[0].mxu0 %v2427
      %v3090 = vpop.f32.mrb[0].mxu0
      %v3091 = vadd.f32 %v2846, %v3090
      %v3092 = vpop.f32.mrb[0].mxu0
      %3093 = vmatprep.mubr.f32.mxu0 %v2430
      %3094 = vmatmul.mubr.f32.gmra.mrb[0].mxu0 %v2428
      %v3095 = vpop.f32.mrb[0].mxu0
      %v3096 = vadd.f32 %v2851, %v3095
      %v3097 = vpop.f32.mrb[0].mxu0
      %3098 = vmatprep.mubr.f32.mxu0 %v2431
      %3099 = vmatmul.mubr.f32.gmra.mrb[0].mxu0 %v2429
      %v3100 = vpop.f32.mrb[0].mxu0
      %v3101 = vadd.f32 %v2856, %v3100
      %v3102 = vpop.f32.mrb[0].mxu0
      %3103 = vmatprep.mubr.f32.mxu0 %v2432
      %3104 = vmatmul.mubr.f32.gmra.mrb[0].mxu0 %v2430
      %v3105 = vpop.f32.mrb[0].mxu0
      %v3106 = vadd.f32 %v2861, %v3105
      %v3107 = vpop.f32.mrb[0].mxu0
      %3108 = vmatprep.mubr.f32.mxu0 %v2433
      %3109 = vmatmul.mubr.f32.gmra.mrb[0].mxu0 %v2431
      %v3110 = vpop.f32.mrb[0].mxu0
      %v3111 = vadd.f32 %v2866, %v3110
      %v3112 = vpop.f32.mrb[0].mxu0
      %3113 = vmatprep.mubr.f32.mxu0 %v2434
      %3114 = vmatmul.mubr.f32.gmra.mrb[0].mxu0 %v2432
      %v3115 = vpop.f32.mrb[0].mxu0
      %v3116 = vadd.f32 %v2871, %v3115
      %v3117 = vpop.f32.mrb[0].mxu0
      %3118 = vmatprep.mubr.f32.mxu0 %v2435
      %3119 = vmatmul.mubr.f32.gmra.mrb[0].mxu0 %v2433
      %v3120 = vpop.f32.mrb[0].mxu0
      %v3121 = vadd.f32 %v2876, %v3120
      %v3122 = vpop.f32.mrb[0].mxu0
      %3123 = vmatprep.mubr.f32.mxu0 %v2436
      %3124 = vmatmul.mubr.f32.gmra.mrb[0].mxu0 %v2434
      %v3125 = vpop.f32.mrb[0].mxu0
      %v3126 = vadd.f32 %v2881, %v3125
      %v3127 = vpop.f32.mrb[0].mxu0
      %3128 = vmatprep.mubr.f32.mxu0 %v2437
      %3129 = vmatmul.mubr.f32.gmra.mrb[0].mxu0 %v2435
      %v3130 = vpop.f32.mrb[0].mxu0
      %v3131 = vadd.f32 %v2886, %v3130
      %v3132 = vpop.f32.mrb[0].mxu0
      %3133 = vmatprep.mubr.f32.mxu0 %v2438
      %3134 = vmatmul.mubr.f32.gmra.mrb[0].mxu0 %v2436
      %v3135 = vpop.f32.mrb[0].mxu0
      %v3136 = vadd.f32 %v2891, %v3135
      %v3137 = vpop.f32.mrb[0].mxu0
      %3138 = vmatprep.mubr.f32.mxu0 %v2439
      %3139 = vmatmul.mubr.f32.gmra.mrb[0].mxu0 %v2437
      %v3140 = vpop.f32.mrb[0].mxu0
      %v3141 = vadd.f32 %v2896, %v3140
      %v3142 = vpop.f32.mrb[0].mxu0
      %3143 = vmatprep.mubr.f32.mxu0 %v2440
      %3144 = vmatmul.mubr.f32.gmra.mrb[0].mxu0 %v2438
      %v3145 = vpop.f32.mrb[0].mxu0
      %v3146 = vadd.f32 %v2901, %v3145
      %v3147 = vpop.f32.mrb[0].mxu0
      %3148 = vmatprep.mubr.f32.mxu0 %v2441
      %3149 = vmatmul.mubr.f32.gmra.mrb[0].mxu0 %v2439
      %v3150 = vpop.f32.mrb[0].mxu0
      %v3151 = vadd.f32 %v2906, %v3150
      %v3152 = vpop.f32.mrb[0].mxu0
      %3153 = vmatprep.mubr.f32.mxu0 %v2442
      %3154 = vmatmul.mubr.f32.gmra.mrb[0].mxu0 %v2440
      %v3155 = vpop.f32.mrb[0].mxu0
      %v3156 = vadd.f32 %v2911, %v3155
      %v3157 = vpop.f32.mrb[0].mxu0
      %3158 = vmatprep.mubr.f32.mxu0 %v2443
      %3159 = vmatmul.mubr.f32.gmra.mrb[0].mxu0 %v2441
      %v3160 = vpop.f32.mrb[0].mxu0
      %v3161 = vadd.f32 %v2916, %v3160
      %v3162 = vpop.f32.mrb[0].mxu0
      %3163 = vmatprep.mubr.f32.mxu0 %v2444
      %3164 = vmatmul.mubr.f32.gmra.mrb[0].mxu0 %v2442
      %v3165 = vpop.f32.mrb[0].mxu0
      %v3166 = vadd.f32 %v2921, %v3165
      %v3167 = vpop.f32.mrb[0].mxu0
      %3168 = vmatprep.mubr.f32.mxu0 %v2445
      %3169 = vmatmul.mubr.f32.gmra.mrb[0].mxu0 %v2443
      %v3170 = vpop.f32.mrb[0].mxu0
      %v3171 = vadd.f32 %v2926, %v3170
      %v3172 = vpop.f32.mrb[0].mxu0
      %3173 = vmatprep.mubr.f32.mxu0 %v2446
      %3174 = vmatmul.mubr.f32.gmra.mrb[0].mxu0 %v2444
      %v3175 = vpop.f32.mrb[0].mxu0
      %v3176 = vadd.f32 %v2931, %v3175
      %v3177 = vpop.f32.mrb[0].mxu0
      %3178 = vmatprep.mubr.f32.mxu0 %v2447
      %3179 = vmatmul.mubr.f32.gmra.mrb[0].mxu0 %v2445
      %v3180 = vpop.f32.mrb[0].mxu0
      %v3181 = vadd.f32 %v2936, %v3180
      %v3182 = vpop.f32.mrb[0].mxu0
      %3183 = vmatprep.mubr.f32.mxu0 %v2448
      %3184 = vmatmul.mubr.f32.gmra.mrb[0].mxu0 %v2446
      %v3185 = vpop.f32.mrb[0].mxu0
      %v3186 = vadd.f32 %v2941, %v3185
      %v3187 = vpop.f32.mrb[0].mxu0
      %3188 = vmatprep.mubr.f32.mxu0 %v2449
      %3189 = vmatmul.mubr.f32.gmra.mrb[0].mxu0 %v2447
      %v3190 = vpop.f32.mrb[0].mxu0
      %v3191 = vadd.f32 %v2946, %v3190
      %v3192 = vpop.f32.mrb[0].mxu0
      %3193 = vmatprep.mubr.f32.mxu0 %v2450
      %3194 = vmatmul.mubr.f32.gmra.mrb[0].mxu0 %v2448
      %v3195 = vpop.f32.mrb[0].mxu0
      %v3196 = vadd.f32 %v2951, %v3195
      %v3197 = vpop.f32.mrb[0].mxu0
      %3198 = vmatprep.mubr.f32.mxu0 %v2451
      %3199 = vmatmul.mubr.f32.gmra.mrb[0].mxu0 %v2449
      %v3200 = vpop.f32.mrb[0].mxu0
      %v3201 = vadd.f32 %v2956, %v3200
      %v3202 = vpop.f32.mrb[0].mxu0
      %3203 = vmatprep.mubr.f32.mxu0 %v2452
      %3204 = vmatmul.mubr.f32.gmra.mrb[0].mxu0 %v2450
      %v3205 = vpop.f32.mrb[0].mxu0
      %v3206 = vadd.f32 %v2961, %v3205
      %v3207 = vpop.f32.mrb[0].mxu0
      %3208 = vmatprep.mubr.f32.mxu0 %v2453
      %3209 = vmatmul.mubr.f32.gmra.mrb[0].mxu0 %v2451
      %v3210 = vpop.f32.mrb[0].mxu0
      %v3211 = vadd.f32 %v2966, %v3210
      %v3212 = vpop.f32.mrb[0].mxu0
      %3213 = vmatprep.mubr.f32.mxu0 %v2454
      %3214 = vmatmul.mubr.f32.gmra.mrb[0].mxu0 %v2452
      %v3215 = vpop.f32.mrb[0].mxu0
      %v3216 = vadd.f32 %v2971, %v3215
      %v3217 = vpop.f32.mrb[0].mxu0
      %3218 = vmatprep.mubr.f32.mxu0 %v2455
      %3219 = vmatmul.mubr.f32.gmra.mrb[0].mxu0 %v2453
      %v3220 = vpop.f32.mrb[0].mxu0
      %v3221 = vadd.f32 %v2976, %v3220
      %v3222 = vpop.f32.mrb[0].mxu0
      %3223 = vmatprep.mubr.f32.mxu0 %v2456
      %3224 = vmatmul.mubr.f32.gmra.mrb[0].mxu0 %v2454
      %v3225 = vpop.f32.mrb[0].mxu0
      %v3226 = vadd.f32 %v2981, %v3225
      %v3227 = vpop.f32.mrb[0].mxu0
      %3228 = vmatprep.mubr.f32.mxu0 %v2457
      %3229 = vmatmul.mubr.f32.gmra.mrb[0].mxu0 %v2455
      %v3230 = vpop.f32.mrb[0].mxu0
      %v3231 = vadd.f32 %v2986, %v3230
      %v3232 = vpop.f32.mrb[0].mxu0
      %3233 = vmatprep.mubr.f32.mxu0 %v2458
      %3234 = vmatmul.mubr.f32.gmra.mrb[0].mxu0 %v2456
      %v3235 = vpop.f32.mrb[0].mxu0
      %v3236 = vadd.f32 %v2991, %v3235
      %v3237 = vpop.f32.mrb[0].mxu0
      %3238 = vdwg.mxu0
      %3239 = vmatprep.subr.mxu0 0.0
      %3240 = vmatpush1.msra.mxu0 %v2669
      %3241 = vmatprep.subr.mxu0 0.0
      %3242 = vmatpush1.msra.mxu0 %v2670
      %3243 = vmatprep.subr.mxu0 0.0
      %3244 = vmatpush1.msra.mxu0 %v2671
      %3245 = vmatprep.subr.mxu0 0.0
      %3246 = vmatpush1.msra.mxu0 %v2672
      %3247 = vmatprep.subr.mxu0 0.0
      %3248 = vmatpush1.msra.mxu0 %v2673
      %3249 = vmatprep.subr.mxu0 0.0
      %3250 = vmatpush1.msra.mxu0 %v2674
      %3251 = vmatprep.subr.mxu0 0.0
      %3252 = vmatpush1.msra.mxu0 %v2675
      %3253 = vmatprep.subr.mxu0 0.0
      %3254 = vmatpush1.msra.mxu0 %v2676
      %3255 = vmatprep.subr.mxu0 0.0
      %3256 = vmatpush1.msra.mxu0 %v2677
      %3257 = vmatprep.subr.mxu0 0.0
      %3258 = vmatpush1.msra.mxu0 %v2678
      %3259 = vmatprep.subr.mxu0 0.0
      %3260 = vmatpush1.msra.mxu0 %v2679
      %3261 = vmatprep.subr.mxu0 0.0
      %3262 = vmatpush1.msra.mxu0 %v2680
      %3263 = vmatprep.subr.mxu0 0.0
      %3264 = vmatpush1.msra.mxu0 %v2681
      %3265 = vmatprep.subr.mxu0 0.0
      %3266 = vmatpush1.msra.mxu0 %v2682
      %3267 = vmatprep.subr.mxu0 0.0
      %3268 = vmatpush1.msra.mxu0 %v2683
      %3269 = vmatprep.subr.mxu0 0.0
      %3270 = vmatpush1.msra.mxu0 %v2684
      %3271 = vmatprep.subr.mxu0 0.0
      %3272 = vmatpush1.msra.mxu0 %v2685
      %3273 = vmatprep.subr.mxu0 0.0
      %3274 = vmatpush1.msra.mxu0 %v2686
      %3275 = vmatprep.subr.mxu0 0.0
      %3276 = vmatpush1.msra.mxu0 %v2687
      %3277 = vmatprep.subr.mxu0 0.0
      %3278 = vmatpush1.msra.mxu0 %v2688
      %3279 = vmatprep.subr.mxu0 0.0
      %3280 = vmatpush1.msra.mxu0 %v2689
      %3281 = vmatprep.subr.mxu0 0.0
      %3282 = vmatpush1.msra.mxu0 %v2690
      %3283 = vmatprep.subr.mxu0 0.0
      %3284 = vmatpush1.msra.mxu0 %v2691
      %3285 = vmatprep.subr.mxu0 0.0
      %3286 = vmatpush1.msra.mxu0 %v2692
      %3287 = vmatprep.subr.mxu0 0.0
      %3288 = vmatpush1.msra.mxu0 %v2693
      %3289 = vmatprep.subr.mxu0 0.0
      %3290 = vmatpush1.msra.mxu0 %v2694
      %3291 = vmatprep.subr.mxu0 0.0
      %3292 = vmatpush1.msra.mxu0 %v2695
      %3293 = vmatprep.subr.mxu0 0.0
      %3294 = vmatpush1.msra.mxu0 %v2696
      %3295 = vmatprep.subr.mxu0 0.0
      %3296 = vmatpush1.msra.mxu0 %v2697
      %3297 = vmatprep.subr.mxu0 0.0
      %3298 = vmatpush1.msra.mxu0 %v2698
      %3299 = vmatprep.subr.mxu0 0.0
      %3300 = vmatpush1.msra.mxu0 %v2699
      %3301 = vmatprep.subr.mxu0 0.0
      %3302 = vmatpush1.msra.mxu0 %v2700
      %3303 = vmatprep.mubr.f32.mxu0 %v2495
      %3304 = vmatmul.mubr.f32.gmra.mrb[0].mxu0 %v2459
      %v3305 = vpop.f32.mrb[0].mxu0
      %v3306 = vadd.f32 %v3061, %v3305
      %v3307 = vpop.f32.mrb[0].mxu0
      %3308 = vmatprep.mubr.f32.mxu0 %v2496
      %3309 = vmatmul.mubr.f32.gmra.mrb[0].mxu0 %v2460
      %v3310 = vpop.f32.mrb[0].mxu0
      %v3311 = vadd.f32 %v3066, %v3310
      %v3312 = vpop.f32.mrb[0].mxu0
      %3313 = vmatprep.mubr.f32.mxu0 %v2497
      %3314 = vmatmul.mubr.f32.gmra.mrb[0].mxu0 %v2461
      %v3315 = vpop.f32.mrb[0].mxu0
      %v3316 = vadd.f32 %v3071, %v3315
      %v3317 = vpop.f32.mrb[0].mxu0
      %3318 = vmatprep.mubr.f32.mxu0 %v2498
      %3319 = vmatmul.mubr.f32.gmra.mrb[0].mxu0 %v2462
      %v3320 = vpop.f32.mrb[0].mxu0
      %v3321 = vadd.f32 %v3076, %v3320
      %v3322 = vpop.f32.mrb[0].mxu0
      %3323 = vmatprep.mubr.f32.mxu0 %v2499
      %3324 = vmatmul.mubr.f32.gmra.mrb[0].mxu0 %v2463
      %v3325 = vpop.f32.mrb[0].mxu0
      %v3326 = vadd.f32 %v3081, %v3325
      %v3327 = vpop.f32.mrb[0].mxu0
      %3328 = vmatprep.mubr.f32.mxu0 %v2500
      %3329 = vmatmul.mubr.f32.gmra.mrb[0].mxu0 %v2464
      %v3330 = vpop.f32.mrb[0].mxu0
      %v3331 = vadd.f32 %v3086, %v3330
      %v3332 = vpop.f32.mrb[0].mxu0
      %3333 = vmatprep.mubr.f32.mxu0 %v2501
      %3334 = vmatmul.mubr.f32.gmra.mrb[0].mxu0 %v2465
      %v3335 = vpop.f32.mrb[0].mxu0
      %v3336 = vadd.f32 %v3091, %v3335
      %v3337 = vpop.f32.mrb[0].mxu0
      %3338 = vmatprep.mubr.f32.mxu0 %v2502
      %3339 = vmatmul.mubr.f32.gmra.mrb[0].mxu0 %v2466
      %v3340 = vpop.f32.mrb[0].mxu0
      %v3341 = vadd.f32 %v3096, %v3340
      %v3342 = vpop.f32.mrb[0].mxu0
      %3343 = vmatprep.mubr.f32.mxu0 %v2503
      %3344 = vmatmul.mubr.f32.gmra.mrb[0].mxu0 %v2467
      %v3345 = vpop.f32.mrb[0].mxu0
      %v3346 = vadd.f32 %v3101, %v3345
      %v3347 = vpop.f32.mrb[0].mxu0
      %3348 = vmatprep.mubr.f32.mxu0 %v2504
      %3349 = vmatmul.mubr.f32.gmra.mrb[0].mxu0 %v2468
      %v3350 = vpop.f32.mrb[0].mxu0
      %v3351 = vadd.f32 %v3106, %v3350
      %v3352 = vpop.f32.mrb[0].mxu0
      %3353 = vmatprep.mubr.f32.mxu0 %v2505
      %3354 = vmatmul.mubr.f32.gmra.mrb[0].mxu0 %v2469
      %v3355 = vpop.f32.mrb[0].mxu0
      %v3356 = vadd.f32 %v3111, %v3355
      %v3357 = vpop.f32.mrb[0].mxu0
      %3358 = vmatprep.mubr.f32.mxu0 %v2506
      %3359 = vmatmul.mubr.f32.gmra.mrb[0].mxu0 %v2470
      %v3360 = vpop.f32.mrb[0].mxu0
      %v3361 = vadd.f32 %v3116, %v3360
      %v3362 = vpop.f32.mrb[0].mxu0
      %3363 = vmatprep.mubr.f32.mxu0 %v2507
      %3364 = vmatmul.mubr.f32.gmra.mrb[0].mxu0 %v2471
      %v3365 = vpop.f32.mrb[0].mxu0
      %v3366 = vadd.f32 %v3121, %v3365
      %v3367 = vpop.f32.mrb[0].mxu0
      %3368 = vmatprep.mubr.f32.mxu0 %v2508
      %3369 = vmatmul.mubr.f32.gmra.mrb[0].mxu0 %v2472
      %v3370 = vpop.f32.mrb[0].mxu0
      %v3371 = vadd.f32 %v3126, %v3370
      %v3372 = vpop.f32.mrb[0].mxu0
      %3373 = vmatprep.mubr.f32.mxu0 %v2509
      %3374 = vmatmul.mubr.f32.gmra.mrb[0].mxu0 %v2473
      %v3375 = vpop.f32.mrb[0].mxu0
      %v3376 = vadd.f32 %v3131, %v3375
      %v3377 = vpop.f32.mrb[0].mxu0
      %3378 = vmatprep.mubr.f32.mxu0 %v2510
      %3379 = vmatmul.mubr.f32.gmra.mrb[0].mxu0 %v2474
      %v3380 = vpop.f32.mrb[0].mxu0
      %v3381 = vadd.f32 %v3136, %v3380
      %v3382 = vpop.f32.mrb[0].mxu0
      %3383 = vmatprep.mubr.f32.mxu0 %v2511
      %3384 = vmatmul.mubr.f32.gmra.mrb[0].mxu0 %v2475
      %v3385 = vpop.f32.mrb[0].mxu0
      %v3386 = vadd.f32 %v3141, %v3385
      %v3387 = vpop.f32.mrb[0].mxu0
      %3388 = vmatprep.mubr.f32.mxu0 %v2512
      %3389 = vmatmul.mubr.f32.gmra.mrb[0].mxu0 %v2476
      %v3390 = vpop.f32.mrb[0].mxu0
      %v3391 = vadd.f32 %v3146, %v3390
      %v3392 = vpop.f32.mrb[0].mxu0
      %3393 = vmatprep.mubr.f32.mxu0 %v2513
      %3394 = vmatmul.mubr.f32.gmra.mrb[0].mxu0 %v2477
      %v3395 = vpop.f32.mrb[0].mxu0
      %v3396 = vadd.f32 %v3151, %v3395
      %v3397 = vpop.f32.mrb[0].mxu0
      %3398 = vmatprep.mubr.f32.mxu0 %v2514
      %3399 = vmatmul.mubr.f32.gmra.mrb[0].mxu0 %v2478
      %v3400 = vpop.f32.mrb[0].mxu0
      %v3401 = vadd.f32 %v3156, %v3400
      %v3402 = vpop.f32.mrb[0].mxu0
      %3403 = vmatprep.mubr.f32.mxu0 %v2515
      %3404 = vmatmul.mubr.f32.gmra.mrb[0].mxu0 %v2479
      %v3405 = vpop.f32.mrb[0].mxu0
      %v3406 = vadd.f32 %v3161, %v3405
      %v3407 = vpop.f32.mrb[0].mxu0
      %3408 = vmatprep.mubr.f32.mxu0 %v2516
      %3409 = vmatmul.mubr.f32.gmra.mrb[0].mxu0 %v2480
      %v3410 = vpop.f32.mrb[0].mxu0
      %v3411 = vadd.f32 %v3166, %v3410
      %v3412 = vpop.f32.mrb[0].mxu0
      %3413 = vmatprep.mubr.f32.mxu0 %v2517
      %3414 = vmatmul.mubr.f32.gmra.mrb[0].mxu0 %v2481
      %v3415 = vpop.f32.mrb[0].mxu0
      %v3416 = vadd.f32 %v3171, %v3415
      %v3417 = vpop.f32.mrb[0].mxu0
      %3418 = vmatprep.mubr.f32.mxu0 %v2518
      %3419 = vmatmul.mubr.f32.gmra.mrb[0].mxu0 %v2482
      %v3420 = vpop.f32.mrb[0].mxu0
      %v3421 = vadd.f32 %v3176, %v3420
      %v3422 = vpop.f32.mrb[0].mxu0
      %3423 = vmatprep.mubr.f32.mxu0 %v2519
      %3424 = vmatmul.mubr.f32.gmra.mrb[0].mxu0 %v2483
      %v3425 = vpop.f32.mrb[0].mxu0
      %v3426 = vadd.f32 %v3181, %v3425
      %v3427 = vpop.f32.mrb[0].mxu0
      %3428 = vmatprep.mubr.f32.mxu0 %v2520
      %3429 = vmatmul.mubr.f32.gmra.mrb[0].mxu0 %v2484
      %v3430 = vpop.f32.mrb[0].mxu0
      %v3431 = vadd.f32 %v3186, %v3430
      %v3432 = vpop.f32.mrb[0].mxu0
      %3433 = vmatprep.mubr.f32.mxu0 %v2521
      %3434 = vmatmul.mubr.f32.gmra.mrb[0].mxu0 %v2485
      %v3435 = vpop.f32.mrb[0].mxu0
      %v3436 = vadd.f32 %v3191, %v3435
      %v3437 = vpop.f32.mrb[0].mxu0
      %3438 = vmatprep.mubr.f32.mxu0 %v2522
      %3439 = vmatmul.mubr.f32.gmra.mrb[0].mxu0 %v2486
      %v3440 = vpop.f32.mrb[0].mxu0
      %v3441 = vadd.f32 %v3196, %v3440
      %v3442 = vpop.f32.mrb[0].mxu0
      %3443 = vmatprep.mubr.f32.mxu0 %v2523
      %3444 = vmatmul.mubr.f32.gmra.mrb[0].mxu0 %v2487
      %v3445 = vpop.f32.mrb[0].mxu0
      %v3446 = vadd.f32 %v3201, %v3445
      %v3447 = vpop.f32.mrb[0].mxu0
      %3448 = vmatprep.mubr.f32.mxu0 %v2524
      %3449 = vmatmul.mubr.f32.gmra.mrb[0].mxu0 %v2488
      %v3450 = vpop.f32.mrb[0].mxu0
      %v3451 = vadd.f32 %v3206, %v3450
      %v3452 = vpop.f32.mrb[0].mxu0
      %3453 = vmatprep.mubr.f32.mxu0 %v2525
      %3454 = vmatmul.mubr.f32.gmra.mrb[0].mxu0 %v2489
      %v3455 = vpop.f32.mrb[0].mxu0
      %v3456 = vadd.f32 %v3211, %v3455
      %v3457 = vpop.f32.mrb[0].mxu0
      %3458 = vmatprep.mubr.f32.mxu0 %v2526
      %3459 = vmatmul.mubr.f32.gmra.mrb[0].mxu0 %v2490
      %v3460 = vpop.f32.mrb[0].mxu0
      %v3461 = vadd.f32 %v3216, %v3460
      %v3462 = vpop.f32.mrb[0].mxu0
      %3463 = vmatprep.mubr.f32.mxu0 %v2527
      %3464 = vmatmul.mubr.f32.gmra.mrb[0].mxu0 %v2491
      %v3465 = vpop.f32.mrb[0].mxu0
      %v3466 = vadd.f32 %v3221, %v3465
      %v3467 = vpop.f32.mrb[0].mxu0
      %3468 = vmatprep.mubr.f32.mxu0 %v2528
      %3469 = vmatmul.mubr.f32.gmra.mrb[0].mxu0 %v2492
      %v3470 = vpop.f32.mrb[0].mxu0
      %v3471 = vadd.f32 %v3226, %v3470
      %v3472 = vpop.f32.mrb[0].mxu0
      %3473 = vmatprep.mubr.f32.mxu0 %v2529
      %3474 = vmatmul.mubr.f32.gmra.mrb[0].mxu0 %v2493
      %v3475 = vpop.f32.mrb[0].mxu0
      %v3476 = vadd.f32 %v3231, %v3475
      %v3477 = vpop.f32.mrb[0].mxu0
      %3478 = vmatprep.mubr.f32.mxu0 %v2530
      %3479 = vmatmul.mubr.f32.gmra.mrb[0].mxu0 %v2494
      %v3480 = vpop.f32.mrb[0].mxu0
      %v3481 = vadd.f32 %v3236, %v3480
      %v3482 = vpop.f32.mrb[0].mxu0
      %3483 = vdwg.mxu0
      %3484 = vmatprep.subr.mxu0 0.0
      %3485 = vmatpush1.msra.mxu0 %v2701
      %3486 = vmatprep.subr.mxu0 0.0
      %3487 = vmatpush1.msra.mxu0 %v2702
      %3488 = vmatprep.subr.mxu0 0.0
      %3489 = vmatpush1.msra.mxu0 %v2703
      %3490 = vmatprep.subr.mxu0 0.0
      %3491 = vmatpush1.msra.mxu0 %v2704
      %3492 = vmatprep.subr.mxu0 0.0
      %3493 = vmatpush1.msra.mxu0 %v2705
      %3494 = vmatprep.subr.mxu0 0.0
      %3495 = vmatpush1.msra.mxu0 %v2706
      %3496 = vmatprep.subr.mxu0 0.0
      %3497 = vmatpush1.msra.mxu0 %v2707
      %3498 = vmatprep.subr.mxu0 0.0
      %3499 = vmatpush1.msra.mxu0 %v2708
      %3500 = vmatprep.subr.mxu0 0.0
      %3501 = vmatpush1.msra.mxu0 %v2709
      %3502 = vmatprep.subr.mxu0 0.0
      %3503 = vmatpush1.msra.mxu0 %v2710
      %3504 = vmatprep.subr.mxu0 0.0
      %3505 = vmatpush1.msra.mxu0 %v2711
      %3506 = vmatprep.subr.mxu0 0.0
      %3507 = vmatpush1.msra.mxu0 %v2712
      %3508 = vmatprep.subr.mxu0 0.0
      %3509 = vmatpush1.msra.mxu0 %v2713
      %3510 = vmatprep.subr.mxu0 0.0
      %3511 = vmatpush1.msra.mxu0 %v2714
      %3512 = vmatprep.subr.mxu0 0.0
      %3513 = vmatpush1.msra.mxu0 %v2715
      %3514 = vmatprep.subr.mxu0 0.0
      %3515 = vmatpush1.msra.mxu0 %v2716
      %3516 = vmatprep.subr.mxu0 0.0
      %3517 = vmatpush1.msra.mxu0 %v2717
      %3518 = vmatprep.subr.mxu0 0.0
      %3519 = vmatpush1.msra.mxu0 %v2718
      %3520 = vmatprep.subr.mxu0 0.0
      %3521 = vmatpush1.msra.mxu0 %v2719
      %3522 = vmatprep.subr.mxu0 0.0
      %3523 = vmatpush1.msra.mxu0 %v2720
      %3524 = vmatprep.subr.mxu0 0.0
      %3525 = vmatpush1.msra.mxu0 %v2721
      %3526 = vmatprep.subr.mxu0 0.0
      %3527 = vmatpush1.msra.mxu0 %v2722
      %3528 = vmatprep.subr.mxu0 0.0
      %3529 = vmatpush1.msra.mxu0 %v2723
      %3530 = vmatprep.subr.mxu0 0.0
      %3531 = vmatpush1.msra.mxu0 %v2724
      %3532 = vmatprep.subr.mxu0 0.0
      %3533 = vmatpush1.msra.mxu0 %v2725
      %3534 = vmatprep.subr.mxu0 0.0
      %3535 = vmatpush1.msra.mxu0 %v2726
      %3536 = vmatprep.subr.mxu0 0.0
      %3537 = vmatpush1.msra.mxu0 %v2727
      %3538 = vmatprep.subr.mxu0 0.0
      %3539 = vmatpush1.msra.mxu0 %v2728
      %3540 = vmatprep.subr.mxu0 0.0
      %3541 = vmatpush1.msra.mxu0 %v2729
      %3542 = vmatprep.subr.mxu0 0.0
      %3543 = vmatpush1.msra.mxu0 %v2730
      %3544 = vmatprep.subr.mxu0 0.0
      %3545 = vmatpush1.msra.mxu0 %v2731
      %3546 = vmatprep.subr.mxu0 0.0
      %3547 = vmatpush1.msra.mxu0 %v2732
      %3548 = vmatprep.mubr.f32.mxu0 %v2533
      %3549 = vmatmul.mubr.f32.gmra.mrb[0].mxu0 %v2497
      %v3550 = vpop.f32.mrb[0].mxu0
      %v3551 = vadd.f32 %v3306, %v3550
      %v3552 = vpop.f32.mrb[0].mxu0
      %3553 = vmatprep.mubr.f32.mxu0 %v2534
      %3554 = vmatmul.mubr.f32.gmra.mrb[0].mxu0 %v2498
      %v3555 = vpop.f32.mrb[0].mxu0
      %v3556 = vadd.f32 %v3311, %v3555
      %v3557 = vpop.f32.mrb[0].mxu0
      %3558 = vmatprep.mubr.f32.mxu0 %v2535
      %3559 = vmatmul.mubr.f32.gmra.mrb[0].mxu0 %v2499
      %v3560 = vpop.f32.mrb[0].mxu0
      %v3561 = vadd.f32 %v3316, %v3560
      %v3562 = vpop.f32.mrb[0].mxu0
      %3563 = vmatprep.mubr.f32.mxu0 %v2536
      %3564 = vmatmul.mubr.f32.gmra.mrb[0].mxu0 %v2500
      %v3565 = vpop.f32.mrb[0].mxu0
      %v3566 = vadd.f32 %v3321, %v3565
      %v3567 = vpop.f32.mrb[0].mxu0
      %3568 = vmatprep.mubr.f32.mxu0 %v2537
      %3569 = vmatmul.mubr.f32.gmra.mrb[0].mxu0 %v2501
      %v3570 = vpop.f32.mrb[0].mxu0
      %v3571 = vadd.f32 %v3326, %v3570
      %v3572 = vpop.f32.mrb[0].mxu0
      %3573 = vmatprep.mubr.f32.mxu0 %v2538
      %3574 = vmatmul.mubr.f32.gmra.mrb[0].mxu0 %v2502
      %v3575 = vpop.f32.mrb[0].mxu0
      %v3576 = vadd.f32 %v3331, %v3575
      %v3577 = vpop.f32.mrb[0].mxu0
      %3578 = vmatprep.mubr.f32.mxu0 %v2539
      %3579 = vmatmul.mubr.f32.gmra.mrb[0].mxu0 %v2503
      %v3580 = vpop.f32.mrb[0].mxu0
      %v3581 = vadd.f32 %v3336, %v3580
      %v3582 = vpop.f32.mrb[0].mxu0
      %3583 = vmatprep.mubr.f32.mxu0 %v2540
      %3584 = vmatmul.mubr.f32.gmra.mrb[0].mxu0 %v2504
      %v3585 = vpop.f32.mrb[0].mxu0
      %v3586 = vadd.f32 %v3341, %v3585
      %v3587 = vpop.f32.mrb[0].mxu0
      %3588 = vmatprep.mubr.f32.mxu0 %v2541
      %3589 = vmatmul.mubr.f32.gmra.mrb[0].mxu0 %v2505
      %v3590 = vpop.f32.mrb[0].mxu0
      %v3591 = vadd.f32 %v3346, %v3590
      %v3592 = vpop.f32.mrb[0].mxu0
      %3593 = vmatprep.mubr.f32.mxu0 %v2542
      %3594 = vmatmul.mubr.f32.gmra.mrb[0].mxu0 %v2506
      %v3595 = vpop.f32.mrb[0].mxu0
      %v3596 = vadd.f32 %v3351, %v3595
      %v3597 = vpop.f32.mrb[0].mxu0
      %3598 = vmatprep.mubr.f32.mxu0 %v2543
      %3599 = vmatmul.mubr.f32.gmra.mrb[0].mxu0 %v2507
      %v3600 = vpop.f32.mrb[0].mxu0
      %v3601 = vadd.f32 %v3356, %v3600
      %v3602 = vpop.f32.mrb[0].mxu0
      %3603 = vmatprep.mubr.f32.mxu0 %v2544
      %3604 = vmatmul.mubr.f32.gmra.mrb[0].mxu0 %v2508
      %v3605 = vpop.f32.mrb[0].mxu0
      %v3606 = vadd.f32 %v3361, %v3605
      %v3607 = vpop.f32.mrb[0].mxu0
      %3608 = vmatprep.mubr.f32.mxu0 %v2545
      %3609 = vmatmul.mubr.f32.gmra.mrb[0].mxu0 %v2509
      %v3610 = vpop.f32.mrb[0].mxu0
      %v3611 = vadd.f32 %v3366, %v3610
      %v3612 = vpop.f32.mrb[0].mxu0
      %3613 = vmatprep.mubr.f32.mxu0 %v2546
      %3614 = vmatmul.mubr.f32.gmra.mrb[0].mxu0 %v2510
      %v3615 = vpop.f32.mrb[0].mxu0
      %v3616 = vadd.f32 %v3371, %v3615
      %v3617 = vpop.f32.mrb[0].mxu0
      %3618 = vmatprep.mubr.f32.mxu0 %v2547
      %3619 = vmatmul.mubr.f32.gmra.mrb[0].mxu0 %v2511
      %v3620 = vpop.f32.mrb[0].mxu0
      %v3621 = vadd.f32 %v3376, %v3620
      %v3622 = vpop.f32.mrb[0].mxu0
      %3623 = vmatprep.mubr.f32.mxu0 %v2548
      %3624 = vmatmul.mubr.f32.gmra.mrb[0].mxu0 %v2512
      %v3625 = vpop.f32.mrb[0].mxu0
      %v3626 = vadd.f32 %v3381, %v3625
      %v3627 = vpop.f32.mrb[0].mxu0
      %3628 = vmatprep.mubr.f32.mxu0 %v2549
      %3629 = vmatmul.mubr.f32.gmra.mrb[0].mxu0 %v2513
      %v3630 = vpop.f32.mrb[0].mxu0
      %v3631 = vadd.f32 %v3386, %v3630
      %v3632 = vpop.f32.mrb[0].mxu0
      %3633 = vmatprep.mubr.f32.mxu0 %v2550
      %3634 = vmatmul.mubr.f32.gmra.mrb[0].mxu0 %v2514
      %v3635 = vpop.f32.mrb[0].mxu0
      %v3636 = vadd.f32 %v3391, %v3635
      %v3637 = vpop.f32.mrb[0].mxu0
      %3638 = vmatprep.mubr.f32.mxu0 %v2551
      %3639 = vmatmul.mubr.f32.gmra.mrb[0].mxu0 %v2515
      %v3640 = vpop.f32.mrb[0].mxu0
      %v3641 = vadd.f32 %v3396, %v3640
      %v3642 = vpop.f32.mrb[0].mxu0
      %3643 = vmatprep.mubr.f32.mxu0 %v2552
      %3644 = vmatmul.mubr.f32.gmra.mrb[0].mxu0 %v2516
      %v3645 = vpop.f32.mrb[0].mxu0
      %v3646 = vadd.f32 %v3401, %v3645
      %v3647 = vpop.f32.mrb[0].mxu0
      %3648 = vmatprep.mubr.f32.mxu0 %v2553
      %3649 = vmatmul.mubr.f32.gmra.mrb[0].mxu0 %v2517
      %v3650 = vpop.f32.mrb[0].mxu0
      %v3651 = vadd.f32 %v3406, %v3650
      %v3652 = vpop.f32.mrb[0].mxu0
      %3653 = vmatprep.mubr.f32.mxu0 %v2554
      %3654 = vmatmul.mubr.f32.gmra.mrb[0].mxu0 %v2518
      %v3655 = vpop.f32.mrb[0].mxu0
      %v3656 = vadd.f32 %v3411, %v3655
      %v3657 = vpop.f32.mrb[0].mxu0
      %3658 = vmatprep.mubr.f32.mxu0 %v2555
      %3659 = vmatmul.mubr.f32.gmra.mrb[0].mxu0 %v2519
      %v3660 = vpop.f32.mrb[0].mxu0
      %v3661 = vadd.f32 %v3416, %v3660
      %v3662 = vpop.f32.mrb[0].mxu0
      %3663 = vmatprep.mubr.f32.mxu0 %v2556
      %3664 = vmatmul.mubr.f32.gmra.mrb[0].mxu0 %v2520
      %v3665 = vpop.f32.mrb[0].mxu0
      %v3666 = vadd.f32 %v3421, %v3665
      %v3667 = vpop.f32.mrb[0].mxu0
      %3668 = vmatprep.mubr.f32.mxu0 %v2557
      %3669 = vmatmul.mubr.f32.gmra.mrb[0].mxu0 %v2521
      %v3670 = vpop.f32.mrb[0].mxu0
      %v3671 = vadd.f32 %v3426, %v3670
      %v3672 = vpop.f32.mrb[0].mxu0
      %3673 = vmatprep.mubr.f32.mxu0 %v2558
      %3674 = vmatmul.mubr.f32.gmra.mrb[0].mxu0 %v2522
      %v3675 = vpop.f32.mrb[0].mxu0
      %v3676 = vadd.f32 %v3431, %v3675
      %v3677 = vpop.f32.mrb[0].mxu0
      %3678 = vmatprep.mubr.f32.mxu0 %v2559
      %3679 = vmatmul.mubr.f32.gmra.mrb[0].mxu0 %v2523
      %v3680 = vpop.f32.mrb[0].mxu0
      %v3681 = vadd.f32 %v3436, %v3680
      %v3682 = vpop.f32.mrb[0].mxu0
      %3683 = vmatprep.mubr.f32.mxu0 %v2560
      %3684 = vmatmul.mubr.f32.gmra.mrb[0].mxu0 %v2524
      %v3685 = vpop.f32.mrb[0].mxu0
      %v3686 = vadd.f32 %v3441, %v3685
      %v3687 = vpop.f32.mrb[0].mxu0
      %3688 = vmatprep.mubr.f32.mxu0 %v2561
      %3689 = vmatmul.mubr.f32.gmra.mrb[0].mxu0 %v2525
      %v3690 = vpop.f32.mrb[0].mxu0
      %v3691 = vadd.f32 %v3446, %v3690
      %v3692 = vpop.f32.mrb[0].mxu0
      %3693 = vmatprep.mubr.f32.mxu0 %v2562
      %3694 = vmatmul.mubr.f32.gmra.mrb[0].mxu0 %v2526
      %v3695 = vpop.f32.mrb[0].mxu0
      %v3696 = vadd.f32 %v3451, %v3695
      %v3697 = vpop.f32.mrb[0].mxu0
      %3698 = vmatprep.mubr.f32.mxu0 %v2563
      %3699 = vmatmul.mubr.f32.gmra.mrb[0].mxu0 %v2527
      %v3700 = vpop.f32.mrb[0].mxu0
      %v3701 = vadd.f32 %v3456, %v3700
      %v3702 = vpop.f32.mrb[0].mxu0
      %3703 = vmatprep.mubr.f32.mxu0 %v2564
      %3704 = vmatmul.mubr.f32.gmra.mrb[0].mxu0 %v2528
      %v3705 = vpop.f32.mrb[0].mxu0
      %v3706 = vadd.f32 %v3461, %v3705
      %v3707 = vpop.f32.mrb[0].mxu0
      %3708 = vmatprep.mubr.f32.mxu0 %v2565
      %3709 = vmatmul.mubr.f32.gmra.mrb[0].mxu0 %v2529
      %v3710 = vpop.f32.mrb[0].mxu0
      %v3711 = vadd.f32 %v3466, %v3710
      %v3712 = vpop.f32.mrb[0].mxu0
      %3713 = vmatprep.mubr.f32.mxu0 %v2566
      %3714 = vmatmul.mubr.f32.gmra.mrb[0].mxu0 %v2530
      %v3715 = vpop.f32.mrb[0].mxu0
      %v3716 = vadd.f32 %v3471, %v3715
      %v3717 = vpop.f32.mrb[0].mxu0
      %3718 = vmatprep.mubr.f32.mxu0 %v2567
      %3719 = vmatmul.mubr.f32.gmra.mrb[0].mxu0 %v2531
      %v3720 = vpop.f32.mrb[0].mxu0
      %v3721 = vadd.f32 %v3476, %v3720
      %v3722 = vpop.f32.mrb[0].mxu0
      %3723 = vmatprep.mubr.f32.mxu0 %v2568
      %3724 = vmatmul.mubr.f32.gmra.mrb[0].mxu0 %v2532
      %v3725 = vpop.f32.mrb[0].mxu0
      %v3726 = vadd.f32 %v3481, %v3725
      %v3727 = vpop.f32.mrb[0].mxu0
      %3728 = vdwg.mxu0
      %3729 = vmatprep.subr.mxu0 0.0
      %3730 = vmatpush1.msra.mxu0 %v2733
      %3731 = vmatprep.subr.mxu0 0.0
      %3732 = vmatpush1.msra.mxu0 %v2734
      %3733 = vmatprep.subr.mxu0 0.0
      %3734 = vmatpush1.msra.mxu0 %v2735
      %3735 = vmatprep.subr.mxu0 0.0
      %3736 = vmatpush1.msra.mxu0 %v2736
      %3737 = vmatprep.subr.mxu0 0.0
      %3738 = vmatpush1.msra.mxu0 %v2737
      %3739 = vmatprep.subr.mxu0 0.0
      %3740 = vmatpush1.msra.mxu0 %v2738
      %3741 = vmatprep.subr.mxu0 0.0
      %3742 = vmatpush1.msra.mxu0 %v2739
      %3743 = vmatprep.subr.mxu0 0.0
      %3744 = vmatpush1.msra.mxu0 %v2740
      %3745 = vmatprep.subr.mxu0 0.0
      %3746 = vmatpush1.msra.mxu0 %v2741
      %3747 = vmatprep.subr.mxu0 0.0
      %3748 = vmatpush1.msra.mxu0 %v2742
      %3749 = vmatprep.subr.mxu0 0.0
      %3750 = vmatpush1.msra.mxu0 %v2743
      %3751 = vmatprep.subr.mxu0 0.0
      %3752 = vmatpush1.msra.mxu0 %v2744
      %3753 = vmatprep.subr.mxu0 0.0
      %3754 = vmatpush1.msra.mxu0 %v2745
      %3755 = vmatprep.subr.mxu0 0.0
      %3756 = vmatpush1.msra.mxu0 %v2746
      %3757 = vmatprep.subr.mxu0 0.0
      %3758 = vmatpush1.msra.mxu0 %v2747
      %3759 = vmatprep.subr.mxu0 0.0
      %3760 = vmatpush1.msra.mxu0 %v2748
      %3761 = vmatprep.subr.mxu0 0.0
      %3762 = vmatpush1.msra.mxu0 0.0
      %3763 = vmatprep.subr.mxu0 0.0
      %3764 = vmatpush1.msra.mxu0 0.0
      %3765 = vmatprep.subr.mxu0 0.0
      %3766 = vmatpush1.msra.mxu0 0.0
      %3767 = vmatprep.subr.mxu0 0.0
      %3768 = vmatpush1.msra.mxu0 0.0
      %3769 = vmatprep.subr.mxu0 0.0
      %3770 = vmatpush1.msra.mxu0 0.0
      %3771 = vmatprep.subr.mxu0 0.0
      %3772 = vmatpush1.msra.mxu0 0.0
      %3773 = vmatprep.subr.mxu0 0.0
      %3774 = vmatpush1.msra.mxu0 0.0
      %3775 = vmatprep.subr.mxu0 0.0
      %3776 = vmatpush1.msra.mxu0 0.0
      %3777 = vmatprep.subr.mxu0 0.0
      %3778 = vmatpush1.msra.mxu0 0.0
      %3779 = vmatprep.subr.mxu0 0.0
      %3780 = vmatpush1.msra.mxu0 0.0
      %3781 = vmatprep.subr.mxu0 0.0
      %3782 = vmatpush1.msra.mxu0 0.0
      %3783 = vmatprep.subr.mxu0 0.0
      %3784 = vmatpush1.msra.mxu0 0.0
      %3785 = vmatprep.subr.mxu0 0.0
      %3786 = vmatpush1.msra.mxu0 0.0
      %3787 = vmatprep.subr.mxu0 0.0
      %3788 = vmatpush1.msra.mxu0 0.0
      %3789 = vmatprep.subr.mxu0 0.0
      %3790 = vmatpush1.msra.mxu0 0.0
      %3791 = vmatprep.subr.mxu0 0.0
      %3792 = vmatpush1.msra.mxu0 0.0
      %3793 = vmatprep.mubr.f32.mxu0 0.0
      %3794 = vmatmul.mubr.f32.gmra.mrb[0].mxu0 %v2569
      %v3795 = vpop.f32.mrb[0].mxu0
      %v3796 = vadd.f32 %v3551, %v3795
      %v3797 = vpop.f32.mrb[0].mxu0
      %3798 = vmatprep.mubr.f32.mxu0 0.0
      %3799 = vmatmul.mubr.f32.gmra.mrb[0].mxu0 %v2570
      %v3800 = vpop.f32.mrb[0].mxu0
      %v3801 = vadd.f32 %v3556, %v3800
      %v3802 = vpop.f32.mrb[0].mxu0
      %3803 = vmatprep.mubr.f32.mxu0 0.0
      %3804 = vmatmul.mubr.f32.gmra.mrb[0].mxu0 %v2571
      %v3805 = vpop.f32.mrb[0].mxu0
      %v3806 = vadd.f32 %v3561, %v3805
      %v3807 = vpop.f32.mrb[0].mxu0
      %3808 = vmatprep.mubr.f32.mxu0 0.0
      %3809 = vmatmul.mubr.f32.gmra.mrb[0].mxu0 %v2572
      %v3810 = vpop.f32.mrb[0].mxu0
      %v3811 = vadd.f32 %v3566, %v3810
      %v3812 = vpop.f32.mrb[0].mxu0
      %3813 = vmatprep.mubr.f32.mxu0 0.0
      %3814 = vmatmul.mubr.f32.gmra.mrb[0].mxu0 %v2573
      %v3815 = vpop.f32.mrb[0].mxu0
      %v3816 = vadd.f32 %v3571, %v3815
      %v3817 = vpop.f32.mrb[0].mxu0
      %3818 = vmatprep.mubr.f32.mxu0 0.0
      %3819 = vmatmul.mubr.f32.gmra.mrb[0].mxu0 %v2574
      %v3820 = vpop.f32.mrb[0].mxu0
      %v3821 = vadd.f32 %v3576, %v3820
      %v3822 = vpop.f32.mrb[0].mxu0
      %3823 = vmatprep.mubr.f32.mxu0 0.0
      %3824 = vmatmul.mubr.f32.gmra.mrb[0].mxu0 %v2575
      %v3825 = vpop.f32.mrb[0].mxu0
      %v3826 = vadd.f32 %v3581, %v3825
      %v3827 = vpop.f32.mrb[0].mxu0
      %3828 = vmatprep.mubr.f32.mxu0 0.0
      %3829 = vmatmul.mubr.f32.gmra.mrb[0].mxu0 %v2576
      %v3830 = vpop.f32.mrb[0].mxu0
      %v3831 = vadd.f32 %v3586, %v3830
      %v3832 = vpop.f32.mrb[0].mxu0
      %3833 = vmatprep.mubr.f32.mxu0 0.0
      %3834 = vmatmul.mubr.f32.gmra.mrb[0].mxu0 %v2577
      %v3835 = vpop.f32.mrb[0].mxu0
      %v3836 = vadd.f32 %v3591, %v3835
      %v3837 = vpop.f32.mrb[0].mxu0
      %3838 = vmatprep.mubr.f32.mxu0 0.0
      %3839 = vmatmul.mubr.f32.gmra.mrb[0].mxu0 %v2578
      %v3840 = vpop.f32.mrb[0].mxu0
      %v3841 = vadd.f32 %v3596, %v3840
      %v3842 = vpop.f32.mrb[0].mxu0
      %3843 = vmatprep.mubr.f32.mxu0 0.0
      %3844 = vmatmul.mubr.f32.gmra.mrb[0].mxu0 %v2579
      %v3845 = vpop.f32.mrb[0].mxu0
      %v3846 = vadd.f32 %v3601, %v3845
      %v3847 = vpop.f32.mrb[0].mxu0
      %3848 = vmatprep.mubr.f32.mxu0 0.0
      %3849 = vmatmul.mubr.f32.gmra.mrb[0].mxu0 %v2580
      %v3850 = vpop.f32.mrb[0].mxu0
      %v3851 = vadd.f32 %v3606, %v3850
      %v3852 = vpop.f32.mrb[0].mxu0
      %3853 = vmatprep.mubr.f32.mxu0 0.0
      %3854 = vmatmul.mubr.f32.gmra.mrb[0].mxu0 %v2581
      %v3855 = vpop.f32.mrb[0].mxu0
      %v3856 = vadd.f32 %v3611, %v3855
      %v3857 = vpop.f32.mrb[0].mxu0
      %3858 = vmatprep.mubr.f32.mxu0 0.0
      %3859 = vmatmul.mubr.f32.gmra.mrb[0].mxu0 %v2582
      %v3860 = vpop.f32.mrb[0].mxu0
      %v3861 = vadd.f32 %v3616, %v3860
      %v3862 = vpop.f32.mrb[0].mxu0
      %3863 = vmatprep.mubr.f32.mxu0 0.0
      %3864 = vmatmul.mubr.f32.gmra.mrb[0].mxu0 %v2583
      %v3865 = vpop.f32.mrb[0].mxu0
      %v3866 = vadd.f32 %v3621, %v3865
      %v3867 = vpop.f32.mrb[0].mxu0
      %3868 = vmatprep.mubr.f32.mxu0 0.0
      %3869 = vmatmul.mubr.f32.gmra.mrb[0].mxu0 %v2584
      %v3870 = vpop.f32.mrb[0].mxu0
      %v3871 = vadd.f32 %v3626, %v3870
      %v3872 = vpop.f32.mrb[0].mxu0
      %3873 = vmatprep.mubr.f32.mxu0 0.0
      %3874 = vmatmul.mubr.f32.gmra.mrb[0].mxu0 %v2585
      %v3875 = vpop.f32.mrb[0].mxu0
      %v3876 = vadd.f32 %v3631, %v3875
      %v3877 = vpop.f32.mrb[0].mxu0
      %3878 = vmatprep.mubr.f32.mxu0 0.0
      %3879 = vmatmul.mubr.f32.gmra.mrb[0].mxu0 %v2586
      %v3880 = vpop.f32.mrb[0].mxu0
      %v3881 = vadd.f32 %v3636, %v3880
      %v3882 = vpop.f32.mrb[0].mxu0
      %3883 = vmatprep.mubr.f32.mxu0 0.0
      %3884 = vmatmul.mubr.f32.gmra.mrb[0].mxu0 %v2587
      %v3885 = vpop.f32.mrb[0].mxu0
      %v3886 = vadd.f32 %v3641, %v3885
      %v3887 = vpop.f32.mrb[0].mxu0
      %3888 = vmatprep.mubr.f32.mxu0 0.0
      %3889 = vmatmul.mubr.f32.gmra.mrb[0].mxu0 %v2588
      %v3890 = vpop.f32.mrb[0].mxu0
      %v3891 = vadd.f32 %v3646, %v3890
      %v3892 = vpop.f32.mrb[0].mxu0
      %3893 = vmatprep.mubr.f32.mxu0 0.0
      %3894 = vmatmul.mubr.f32.gmra.mrb[0].mxu0 %v2589
      %v3895 = vpop.f32.mrb[0].mxu0
      %v3896 = vadd.f32 %v3651, %v3895
      %v3897 = vpop.f32.mrb[0].mxu0
      %3898 = vmatprep.mubr.f32.mxu0 0.0
      %3899 = vmatmul.mubr.f32.gmra.mrb[0].mxu0 %v2590
      %v3900 = vpop.f32.mrb[0].mxu0
      %v3901 = vadd.f32 %v3656, %v3900
      %v3902 = vpop.f32.mrb[0].mxu0
      %3903 = vmatprep.mubr.f32.mxu0 0.0
      %3904 = vmatmul.mubr.f32.gmra.mrb[0].mxu0 %v2591
      %v3905 = vpop.f32.mrb[0].mxu0
      %v3906 = vadd.f32 %v3661, %v3905
      %v3907 = vpop.f32.mrb[0].mxu0
      %3908 = vmatprep.mubr.f32.mxu0 0.0
      %3909 = vmatmul.mubr.f32.gmra.mrb[0].mxu0 %v2592
      %v3910 = vpop.f32.mrb[0].mxu0
      %v3911 = vadd.f32 %v3666, %v3910
      %v3912 = vpop.f32.mrb[0].mxu0
      %3913 = vmatprep.mubr.f32.mxu0 0.0
      %3914 = vmatmul.mubr.f32.gmra.mrb[0].mxu0 %v2593
      %v3915 = vpop.f32.mrb[0].mxu0
      %v3916 = vadd.f32 %v3671, %v3915
      %v3917 = vpop.f32.mrb[0].mxu0
      %3918 = vmatprep.mubr.f32.mxu0 0.0
      %3919 = vmatmul.mubr.f32.gmra.mrb[0].mxu0 %v2594
      %v3920 = vpop.f32.mrb[0].mxu0
      %v3921 = vadd.f32 %v3676, %v3920
      %v3922 = vpop.f32.mrb[0].mxu0
      %3923 = vmatprep.mubr.f32.mxu0 0.0
      %3924 = vmatmul.mubr.f32.gmra.mrb[0].mxu0 %v2595
      %v3925 = vpop.f32.mrb[0].mxu0
      %v3926 = vadd.f32 %v3681, %v3925
      %v3927 = vpop.f32.mrb[0].mxu0
      %3928 = vmatprep.mubr.f32.mxu0 0.0
      %3929 = vmatmul.mubr.f32.gmra.mrb[0].mxu0 %v2596
      %v3930 = vpop.f32.mrb[0].mxu0
      %v3931 = vadd.f32 %v3686, %v3930
      %v3932 = vpop.f32.mrb[0].mxu0
      %3933 = vmatprep.mubr.f32.mxu0 0.0
      %3934 = vmatmul.mubr.f32.gmra.mrb[0].mxu0 %v2597
      %v3935 = vpop.f32.mrb[0].mxu0
      %v3936 = vadd.f32 %v3691, %v3935
      %v3937 = vpop.f32.mrb[0].mxu0
      %3938 = vmatprep.mubr.f32.mxu0 0.0
      %3939 = vmatmul.mubr.f32.gmra.mrb[0].mxu0 %v2598
      %v3940 = vpop.f32.mrb[0].mxu0
      %v3941 = vadd.f32 %v3696, %v3940
      %v3942 = vpop.f32.mrb[0].mxu0
      %3943 = vmatprep.mubr.f32.mxu0 0.0
      %3944 = vmatmul.mubr.f32.gmra.mrb[0].mxu0 %v2599
      %v3945 = vpop.f32.mrb[0].mxu0
      %v3946 = vadd.f32 %v3701, %v3945
      %v3947 = vpop.f32.mrb[0].mxu0
      %3948 = vmatprep.mubr.f32.mxu0 0.0
      %3949 = vmatmul.mubr.f32.gmra.mrb[0].mxu0 %v2600
      %v3950 = vpop.f32.mrb[0].mxu0
      %v3951 = vadd.f32 %v3706, %v3950
      %v3952 = vpop.f32.mrb[0].mxu0
      %3953 = vmatprep.mubr.f32.mxu0 0.0
      %3954 = vmatmul.mubr.f32.gmra.mrb[0].mxu0 %v2601
      %v3955 = vpop.f32.mrb[0].mxu0
      %v3956 = vadd.f32 %v3711, %v3955
      %v3957 = vpop.f32.mrb[0].mxu0
      %3958 = vmatprep.mubr.f32.mxu0 0.0
      %3959 = vmatmul.mubr.f32.gmra.mrb[0].mxu0 %v2602
      %v3960 = vpop.f32.mrb[0].mxu0
      %v3961 = vadd.f32 %v3716, %v3960
      %v3962 = vpop.f32.mrb[0].mxu0
      %3963 = vmatprep.mubr.f32.mxu0 0.0
      %3964 = vmatmul.mubr.f32.gmra.mrb[0].mxu0 %v2603
      %v3965 = vpop.f32.mrb[0].mxu0
      %v3966 = vadd.f32 %v3721, %v3965
      %v3967 = vpop.f32.mrb[0].mxu0
      %3968 = vmatprep.mubr.f32.mxu0 0.0
      %3969 = vmatmul.mubr.f32.gmra.mrb[0].mxu0 %v2604
      %v3970 = vpop.f32.mrb[0].mxu0
      %v3971 = vadd.f32 %v3726, %v3970
      %v3972 = vpop.f32.mrb[0].mxu0
      %3973 = vdwg.mxu0
      %v3974 = vld [vmem:[%s5] sm:$0x1]
      %v3976 = vlaneseq
      %v3977 = vshrl.u32 %v3976, 7
      %v3978 = vsub.s32 0, %v3977
      %v3979 = vrot.slane %v3974, %v3978
      %v3981 = vmul.f32 %v3796, %v3979
      %v3982 = vmul.f32 %v3801, %v3979
      %v3983 = vmul.f32 %v3806, %v3979
      %v3984 = vmul.f32 %v3811, %v3979
      %v3985 = vmul.f32 %v3816, %v3979
      %v3986 = vmul.f32 %v3821, %v3979
      %v3987 = vmul.f32 %v3826, %v3979
      %v3988 = vmul.f32 %v3831, %v3979
      %v3989 = vmul.f32 %v3836, %v3979
      %v3990 = vmul.f32 %v3841, %v3979
      %v3991 = vmul.f32 %v3846, %v3979
      %v3992 = vmul.f32 %v3851, %v3979
      %v3993 = vmul.f32 %v3856, %v3979
      %v3994 = vmul.f32 %v3861, %v3979
      %v3995 = vmul.f32 %v3866, %v3979
      %v3996 = vmul.f32 %v3871, %v3979
      %v3997 = vmul.f32 %v3876, %v3979
      %v3998 = vmul.f32 %v3881, %v3979
      %v3999 = vmul.f32 %v3886, %v3979
      %v4000 = vmul.f32 %v3891, %v3979
      %v4001 = vmul.f32 %v3896, %v3979
      %v4002 = vmul.f32 %v3901, %v3979
      %v4003 = vmul.f32 %v3906, %v3979
      %v4004 = vmul.f32 %v3911, %v3979
      %v4005 = vmul.f32 %v3916, %v3979
      %v4006 = vmul.f32 %v3921, %v3979
      %v4007 = vmul.f32 %v3926, %v3979
      %v4008 = vmul.f32 %v3931, %v3979
      %v4009 = vmul.f32 %v3936, %v3979
      %v4010 = vmul.f32 %v3941, %v3979
      %v4011 = vmul.f32 %v3946, %v3979
      %v4012 = vmul.f32 %v3951, %v3979
      %v4013 = vmul.f32 %v3956, %v3979
      %v4014 = vmul.f32 %v3961, %v3979
      %v4015 = vmul.f32 %v3966, %v3979
      %v4016 = vmul.f32 %v3971, %v3979
      %v4017 = vld [vmem:[%s6] sm:$0x1]
      %v4019 = vlaneseq
      %v4020 = vshrl.u32 %v4019, 7
      %v4021 = vsub.s32 0, %v4020
      %v4022 = vrot.slane %v4017, %v4021
      %v4024 = vadd.f32 %v3981, %v4022
      %v4025 = vadd.f32 %v3982, %v4022
      %v4026 = vadd.f32 %v3983, %v4022
      %v4027 = vadd.f32 %v3984, %v4022
      %v4028 = vadd.f32 %v3985, %v4022
      %v4029 = vadd.f32 %v3986, %v4022
      %v4030 = vadd.f32 %v3987, %v4022
      %v4031 = vadd.f32 %v3988, %v4022
      %v4032 = vadd.f32 %v3989, %v4022
      %v4033 = vadd.f32 %v3990, %v4022
      %v4034 = vadd.f32 %v3991, %v4022
      %v4035 = vadd.f32 %v3992, %v4022
      %v4036 = vadd.f32 %v3993, %v4022
      %v4037 = vadd.f32 %v3994, %v4022
      %v4038 = vadd.f32 %v3995, %v4022
      %v4039 = vadd.f32 %v3996, %v4022
      %v4040 = vadd.f32 %v3997, %v4022
      %v4041 = vadd.f32 %v3998, %v4022
      %v4042 = vadd.f32 %v3999, %v4022
      %v4043 = vadd.f32 %v4000, %v4022
      %v4044 = vadd.f32 %v4001, %v4022
      %v4045 = vadd.f32 %v4002, %v4022
      %v4046 = vadd.f32 %v4003, %v4022
      %v4047 = vadd.f32 %v4004, %v4022
      %v4048 = vadd.f32 %v4005, %v4022
      %v4049 = vadd.f32 %v4006, %v4022
      %v4050 = vadd.f32 %v4007, %v4022
      %v4051 = vadd.f32 %v4008, %v4022
      %v4052 = vadd.f32 %v4009, %v4022
      %v4053 = vadd.f32 %v4010, %v4022
      %v4054 = vadd.f32 %v4011, %v4022
      %v4055 = vadd.f32 %v4012, %v4022
      %v4056 = vadd.f32 %v4013, %v4022
      %v4057 = vadd.f32 %v4014, %v4022
      %v4058 = vadd.f32 %v4015, %v4022
      %v4059 = vadd.f32 %v4016, %v4022
      %v4060 = vld [vmem:[%s300 + $0x13] sm:$0xff]
      %v4061 = vld [vmem:[%s300 + $0x1b] sm:$0xff]
      %v4062 = vld [vmem:[%s300 + $0x23] sm:$0xff]
      %v4063 = vld [vmem:[%s300 + $0x2b] sm:$0xff]
      %v4064 = vld [vmem:[%s300 + $0x33] sm:$0xff]
      %v4065 = vld [vmem:[%s300 + $0x3b] sm:$0xff]
      %v4066 = vld [vmem:[%s300 + $0x43] sm:$0xff]
      %v4067 = vld [vmem:[%s300 + $0x4b] sm:$0xff]
      %v4068 = vld [vmem:[%s300 + $0x53] sm:$0xff]
      %v4069 = vld [vmem:[%s300 + $0x5b] sm:$0xff]
      %v4070 = vld [vmem:[%s300 + $0x63] sm:$0xff]
      %v4071 = vld [vmem:[%s300 + $0x6b] sm:$0xff]
      %v4072 = vld [vmem:[%s300 + $0x73] sm:$0xff]
      %v4073 = vld [vmem:[%s300 + $0x7b] sm:$0xff]
      %v4074 = vld [vmem:[%s300 + $0x83] sm:$0xff]
      %v4075 = vld [vmem:[%s300 + $0x8b] sm:$0xff]
      %v4076 = vld [vmem:[%s300 + $0x93] sm:$0xff]
      %v4077 = vld [vmem:[%s300 + $0x9b] sm:$0xff]
      %v4078 = vld [vmem:[%s300 + $0xa3] sm:$0xff]
      %v4079 = vld [vmem:[%s300 + $0xab] sm:$0xff]
      %v4080 = vld [vmem:[%s300 + $0xb3] sm:$0xff]
      %v4081 = vld [vmem:[%s300 + $0xbb] sm:$0xff]
      %v4082 = vld [vmem:[%s300 + $0xc3] sm:$0xff]
      %v4083 = vld [vmem:[%s300 + $0xcb] sm:$0xff]
      %v4084 = vld [vmem:[%s300 + $0xd3] sm:$0xff]
      %v4085 = vld [vmem:[%s300 + $0xdb] sm:$0xff]
      %v4086 = vld [vmem:[%s300 + $0xe3] sm:$0xff]
      %v4087 = vld [vmem:[%s300 + $0xeb] sm:$0xff]
      %v4088 = vld [vmem:[%s300 + $0xf3] sm:$0xff]
      %v4089 = vld [vmem:[%s300 + $0xfb] sm:$0xff]
      %v4090 = vld [vmem:[%s300 + $0x103] sm:$0xff]
      %v4091 = vld [vmem:[%s300 + $0x10b] sm:$0xff]
      %v4092 = vld [vmem:[%s300 + $0x113] sm:$0xff]
      %v4093 = vld [vmem:[%s300 + $0x11b] sm:$0xff]
      %v4094 = vld [vmem:[%s300 + $0x123] sm:$0xff]
      %v4095 = vld [vmem:[%s300 + $0x12b] sm:$0xff]
      %v4096 = vadd.f32 %v4024, %v4060
      %v4097 = vadd.f32 %v4025, %v4061
      %v4098 = vadd.f32 %v4026, %v4062
      %v4099 = vadd.f32 %v4027, %v4063
      %v4100 = vadd.f32 %v4028, %v4064
      %v4101 = vadd.f32 %v4029, %v4065
      %v4102 = vadd.f32 %v4030, %v4066
      %v4103 = vadd.f32 %v4031, %v4067
      %v4104 = vadd.f32 %v4032, %v4068
      %v4105 = vadd.f32 %v4033, %v4069
      %v4106 = vadd.f32 %v4034, %v4070
      %v4107 = vadd.f32 %v4035, %v4071
      %v4108 = vadd.f32 %v4036, %v4072
      %v4109 = vadd.f32 %v4037, %v4073
      %v4110 = vadd.f32 %v4038, %v4074
      %v4111 = vadd.f32 %v4039, %v4075
      %v4112 = vadd.f32 %v4040, %v4076
      %v4113 = vadd.f32 %v4041, %v4077
      %v4114 = vadd.f32 %v4042, %v4078
      %v4115 = vadd.f32 %v4043, %v4079
      %v4116 = vadd.f32 %v4044, %v4080
      %v4117 = vadd.f32 %v4045, %v4081
      %v4118 = vadd.f32 %v4046, %v4082
      %v4119 = vadd.f32 %v4047, %v4083
      %v4120 = vadd.f32 %v4048, %v4084
      %v4121 = vadd.f32 %v4049, %v4085
      %v4122 = vadd.f32 %v4050, %v4086
      %v4123 = vadd.f32 %v4051, %v4087
      %v4124 = vadd.f32 %v4052, %v4088
      %v4125 = vadd.f32 %v4053, %v4089
      %v4126 = vadd.f32 %v4054, %v4090
      %v4127 = vadd.f32 %v4055, %v4091
      %v4128 = vadd.f32 %v4056, %v4092
      %v4129 = vadd.f32 %v4057, %v4093
      %v4130 = vadd.f32 %v4058, %v4094
      %v4131 = vadd.f32 %v4059, %v4095
      %v4132 = vmax.f32 %v4096, 0.0
      %v4133 = vmax.f32 %v4097, 0.0
      %v4134 = vmax.f32 %v4098, 0.0
      %v4135 = vmax.f32 %v4099, 0.0
      %v4136 = vmax.f32 %v4100, 0.0
      %v4137 = vmax.f32 %v4101, 0.0
      %v4138 = vmax.f32 %v4102, 0.0
      %v4139 = vmax.f32 %v4103, 0.0
      %v4140 = vmax.f32 %v4104, 0.0
      %v4141 = vmax.f32 %v4105, 0.0
      %v4142 = vmax.f32 %v4106, 0.0
      %v4143 = vmax.f32 %v4107, 0.0
      %v4144 = vmax.f32 %v4108, 0.0
      %v4145 = vmax.f32 %v4109, 0.0
      %v4146 = vmax.f32 %v4110, 0.0
      %v4147 = vmax.f32 %v4111, 0.0
      %v4148 = vmax.f32 %v4112, 0.0
      %v4149 = vmax.f32 %v4113, 0.0
      %v4150 = vmax.f32 %v4114, 0.0
      %v4151 = vmax.f32 %v4115, 0.0
      %v4152 = vmax.f32 %v4116, 0.0
      %v4153 = vmax.f32 %v4117, 0.0
      %v4154 = vmax.f32 %v4118, 0.0
      %v4155 = vmax.f32 %v4119, 0.0
      %v4156 = vmax.f32 %v4120, 0.0
      %v4157 = vmax.f32 %v4121, 0.0
      %v4158 = vmax.f32 %v4122, 0.0
      %v4159 = vmax.f32 %v4123, 0.0
      %v4160 = vmax.f32 %v4124, 0.0
      %v4161 = vmax.f32 %v4125, 0.0
      %v4162 = vmax.f32 %v4126, 0.0
      %v4163 = vmax.f32 %v4127, 0.0
      %v4164 = vmax.f32 %v4128, 0.0
      %v4165 = vmax.f32 %v4129, 0.0
      %v4166 = vmax.f32 %v4130, 0.0
      %v4167 = vmax.f32 %v4131, 0.0
      %4168 = vst [vmem:[%s305] sm:$0xff] %v4132
      %4169 = vst [vmem:[%s305 + $0x8] sm:$0xff] %v4133
      %4170 = vst [vmem:[%s305 + $0x10] sm:$0xff] %v4134
      %4171 = vst [vmem:[%s305 + $0x18] sm:$0xff] %v4135
      %4172 = vst [vmem:[%s305 + $0x20] sm:$0xff] %v4136
      %4173 = vst [vmem:[%s305 + $0x28] sm:$0xff] %v4137
      %4174 = vst [vmem:[%s305 + $0x30] sm:$0xff] %v4138
      %4175 = vst [vmem:[%s305 + $0x38] sm:$0xff] %v4139
      %4176 = vst [vmem:[%s305 + $0x40] sm:$0xff] %v4140
      %4177 = vst [vmem:[%s305 + $0x48] sm:$0xff] %v4141
      %4178 = vst [vmem:[%s305 + $0x50] sm:$0xff] %v4142
      %4179 = vst [vmem:[%s305 + $0x58] sm:$0xff] %v4143
      %4180 = vst [vmem:[%s305 + $0x60] sm:$0xff] %v4144
      %4181 = vst [vmem:[%s305 + $0x68] sm:$0xff] %v4145
      %4182 = vst [vmem:[%s305 + $0x70] sm:$0xff] %v4146
      %4183 = vst [vmem:[%s305 + $0x78] sm:$0xff] %v4147
      %4184 = vst [vmem:[%s305 + $0x80] sm:$0xff] %v4148
      %4185 = vst [vmem:[%s305 + $0x88] sm:$0xff] %v4149
      %4186 = vst [vmem:[%s305 + $0x90] sm:$0xff] %v4150
      %4187 = vst [vmem:[%s305 + $0x98] sm:$0xff] %v4151
      %4188 = vst [vmem:[%s305 + $0xa0] sm:$0xff] %v4152
      %4189 = vst [vmem:[%s305 + $0xa8] sm:$0xff] %v4153
      %4190 = vst [vmem:[%s305 + $0xb0] sm:$0xff] %v4154
      %4191 = vst [vmem:[%s305 + $0xb8] sm:$0xff] %v4155
      %4192 = vst [vmem:[%s305 + $0xc0] sm:$0xff] %v4156
      %4193 = vst [vmem:[%s305 + $0xc8] sm:$0xff] %v4157
      %4194 = vst [vmem:[%s305 + $0xd0] sm:$0xff] %v4158
      %4195 = vst [vmem:[%s305 + $0xd8] sm:$0xff] %v4159
      %4196 = vst [vmem:[%s305 + $0xe0] sm:$0xff] %v4160
      %4197 = vst [vmem:[%s305 + $0xe8] sm:$0xff] %v4161
      %4198 = vst [vmem:[%s305 + $0xf0] sm:$0xff] %v4162
      %4199 = vst [vmem:[%s305 + $0xf8] sm:$0xff] %v4163
      %4200 = vst [vmem:[%s305 + $0x100] sm:$0xff] %v4164
      %4201 = vst [vmem:[%s305 + $0x108] sm:$0xff] %v4165
      %4202 = vst [vmem:[%s305 + $0x110] sm:$0xff] %v4166
      %4203 = vst [vmem:[%s305 + $0x118] sm:$0xff] %v4167
      %p4204 = scmp.lt.s32.totalorder %s19, 1
      %s4205 = scalar_select %p4204, %s19, 1
      %s4206 = smul.addr %s4205, 36
      %s4207 = smul.addr %s4206, 8
      %s4208 = scalar_lea.vmem %s8, %s4207
      // Predicated region
      $region53: #{basic_block_forward.1} parent=51 // pred_check
        %p4209 = pneg %p210
      $region54: #{basic_block_forward.1} parent=51 // pred_check_branch
        %4211 = sbr.rel (%p4209) target = $region56
      $region55: #{basic_block_forward.1} parent=51 // pred_region
        _
      $region56: #{basic_block_forward.1} parent=51 // pred_fallthru
        _
    $region52: #{basic_block_forward.1} parent=5 // pred_fallthru
      _
    %p4212 = scmp.le.s32.totalorder 2, %s14
    // Predicated region
    $region57: #{basic_block_forward.1} parent=5 // pred_check
      %p4213 = pneg %p4212
    $region58: #{basic_block_forward.1} parent=5 // pred_check_branch
      %4215 = sbr.rel (%p4213) target = $region60
    $region59: #{basic_block_forward.1} parent=5 // pred_region
      %s4216 = ssub.s32 %s14, 2
      // Predicated region
      $region61: #{basic_block_forward.1} parent=59 // pred_check
        %p4217 = pneg %p216
      $region62: #{basic_block_forward.1} parent=59 // pred_check_branch
        %4219 = sbr.rel (%p4217) target = $region64
      $region63: #{basic_block_forward.1} parent=59 // pred_region
        %p4220 = scmp.lt.s32.totalorder %s20, 1
        %s4221 = scalar_select %p4220, %s20, 1
        %s4222 = smul.addr %s4221, 36
        %s4223 = smul.addr %s4222, 8
        %s4224 = scalar_lea.vmem %s8, %s4223
      $region64: #{basic_block_forward.1} parent=59 // pred_fallthru
        _
    $region60: #{basic_block_forward.1} parent=5 // pred_fallthru
      _
  $region6: #{basic_block_forward.1} parent=0 // loop_footer
    %s18 = sadd.s32 1, %s14
  $region7: #{basic_block_forward.1} parent=0 // loop_footer_branch
    %13 = sbr.rel target = $region3
  $region8: #{basic_block_forward.1} parent=0 // loop_exit
    _

</llo_original>
